<compile_context>
chip_gen: v6e
topology: v6e:2x2x1
jax: 0.10.0
libtpu: 0.0.40
codegen_flags: <defaults>
</compile_context>

<pallas_src>
import functools

import jax
import jax.numpy as jnp
from jax.experimental import pallas as pl
from jax.experimental.pallas import tpu as pltpu


# ----------------------------- Pallas kernels ------------------------------ #
def _fused_matmul_kernel(a_ref, w_ref, scale_ref, bias_ref, o_ref, *, act):
    """o = act((a @ w) * scale + bias); bf16 operands, f32 accumulate."""
    acc = jnp.dot(a_ref[...], w_ref[...], preferred_element_type=jnp.float32)
    y = acc * scale_ref[...] + bias_ref[...]
    if act == "relu":
        y = jnp.maximum(y, 0.0)
    elif act == "sigmoid":
        y = jax.nn.sigmoid(y)
    o_ref[...] = y.astype(o_ref.dtype)


def fused_matmul(a, w, scale, bias, act, *, out_dtype=jnp.bfloat16):
    """act((a @ w) * scale + bias) as one Pallas call, full-array blocks."""
    m, k = a.shape
    k2, n = w.shape
    assert k == k2, (a.shape, w.shape)
    return pl.pallas_call(
        functools.partial(_fused_matmul_kernel, act=act),
        out_shape=jax.ShapeDtypeStruct((m, n), out_dtype),
        grid=(1,),
        in_specs=[
            pl.BlockSpec((m, k), lambda i: (0, 0)),
            pl.BlockSpec((k, n), lambda i: (0, 0)),
            pl.BlockSpec(scale.shape, lambda i: (0, 0)),
            pl.BlockSpec(bias.shape, lambda i: (0, 0)),
        ],
        out_specs=pl.BlockSpec((m, n), lambda i: (0, 0)),
    )(a, w, scale, bias)


def _conv4_deconv1_kernel(p_ref, w4_ref, s4_ref, b4_ref,
                          shift_ref, wd1_ref, sd1_ref, bd1_ref, o_ref):
    """Fused conv4(3x3,s2)+BN+ReLU -> deconv1(sub-pixel)+BN+ReLU.

    shift_ref[k] is an (M, M) 0/1 matrix that both row-shifts the conv4
    activation to tap (du, dv) and masks invalid (image-edge) rows, so the
    sub-pixel patch extraction is done on the MXU with aligned operands.
    """
    c4 = jnp.dot(p_ref[...], w4_ref[...], preferred_element_type=jnp.float32)
    c4 = jnp.maximum(c4 * s4_ref[...] + b4_ref[...], 0.0).astype(jnp.bfloat16)
    acc = jnp.zeros(o_ref.shape, jnp.float32)
    for k in range(4):                                    # taps (du, dv)
        tap = jnp.dot(shift_ref[k], c4, preferred_element_type=jnp.float32)
        acc = acc + jnp.dot(tap.astype(jnp.bfloat16), wd1_ref[k],
                            preferred_element_type=jnp.float32)
    y = jnp.maximum(acc * sd1_ref[...] + bd1_ref[...], 0.0)
    o_ref[...] = y.astype(o_ref.dtype)


def conv4_deconv1(p4, c4params, d1params, shift):
    m = p4.shape[0]
    nout = d1params["w"].shape[2]                          # 4*Cout lanes = 512
    return pl.pallas_call(
        _conv4_deconv1_kernel,
        out_shape=jax.ShapeDtypeStruct((m, nout), jnp.bfloat16),
        grid=(1,),
        in_specs=[
            pl.BlockSpec(p4.shape, lambda i: (0, 0)),
            pl.BlockSpec(c4params["w"].shape, lambda i: (0, 0)),
            pl.BlockSpec(c4params["scale"].shape, lambda i: (0, 0)),
            pl.BlockSpec(c4params["bias"].shape, lambda i: (0, 0)),
            pl.BlockSpec(shift.shape, lambda i: (0, 0, 0)),
            pl.BlockSpec(d1params["w"].shape, lambda i: (0, 0, 0)),
            pl.BlockSpec(d1params["scale"].shape, lambda i: (0, 0)),
            pl.BlockSpec(d1params["bias"].shape, lambda i: (0, 0)),
        ],
        out_specs=pl.BlockSpec((m, nout), lambda i: (0, 0)),
    )(p4, c4params["w"], c4params["scale"], c4params["bias"],
      shift, d1params["w"], d1params["scale"], d1params["bias"])


def _d1_shift_mats(n):
    """(4, N*16, N*16) 0/1 shift+mask matrices for deconv1's 2x2 taps.

    Built from Python lists (static in the batch size) so it folds to a
    compile-time constant under jit.
    """
    m = n * 16
    mats = []
    for du in (0, 1):
        for dv in (0, 1):
            rows = []
            for r in range(m):
                u, v = (r // 4) % 4, r % 4
                row = [0.0] * m
                if (du == 0 or u < 3) and (dv == 0 or v < 3):
                    row[r + du * 4 + dv] = 1.0
                rows.append(row)
            mats.append(rows)
    return jnp.asarray(mats, jnp.bfloat16)


# -------------------------------- parameters -------------------------------- #
def _uniform(key, shape, bound):
    return jax.random.uniform(key, shape, jnp.float32, -bound, bound)


def init_params(key):
    """Raw PyTorch-layout parameters (Conv2d/ConvTranspose2d default init)."""
    def conv_init(key, cout, cin, k):
        kw_, kb_ = jax.random.split(key)
        bound = 1.0 / jnp.sqrt(cin * k * k)
        return _uniform(kw_, (cout, cin, k, k), bound), _uniform(kb_, (cout,), bound)

    def deconv_init(key, cin, cout, k):
        kw_, kb_ = jax.random.split(key)
        bound = 1.0 / jnp.sqrt(cout * k * k)
        return _uniform(kw_, (cin, cout, k, k), bound), _uniform(kb_, (cout,), bound)

    def bn_init(c):
        # PyTorch defaults: gamma=1, beta=0, running_mean=0, running_var=1
        return (jnp.ones((c,), jnp.float32), jnp.zeros((c,), jnp.float32),
                jnp.zeros((c,), jnp.float32), jnp.ones((c,), jnp.float32), 1e-5)

    keys = jax.random.split(key, 7)
    p = {}
    p["conv1_w"], p["conv1_b"] = conv_init(keys[0], 32, 1, 5)
    p["bn1"] = bn_init(32)
    p["conv2_w"], p["conv2_b"] = conv_init(keys[1], 64, 32, 3)
    p["bn2"] = bn_init(64)
    p["conv3_w"], p["conv3_b"] = conv_init(keys[2], 128, 64, 3)
    p["bn3"] = bn_init(128)
    p["conv4_w"], p["conv4_b"] = conv_init(keys[3], 256, 128, 3)
    p["bn4"] = bn_init(256)
    p["deconv1_w"], p["deconv1_b"] = deconv_init(keys[4], 256, 128, 3)
    p["bn_1"] = bn_init(128)
    p["deconv2_w"], p["deconv2_b"] = deconv_init(keys[5], 128, 64, 3)
    p["bn_2"] = bn_init(64)
    p["deconv3_w"], p["deconv3_b"] = deconv_init(keys[6], 64, 1, 3)
    return p


def _fold_bn(conv_b, bn):
    gamma, beta, rmean, rvar, eps = bn
    scale = gamma / jnp.sqrt(rvar + eps)
    bias = (conv_b - rmean) * scale + beta
    return scale, bias


def _subpixel_weight(w_iokk):
    """PyTorch ConvTranspose2d weight (Cin, Cout, 3, 3), stride=2, pad=1
    -> (4*Cin, 4*Cout): rows = (du, dv, Cin) 2x2 input taps, cols = (a, b,
    Cout) output phases, where phase (a, b) produces output pixel (2u+a, 2v+b)."""
    cin, cout = w_iokk.shape[0], w_iokk.shape[1]
    rm = ((1, None), (2, 0))  # rm[out_parity][tap_delta] -> kernel index / None
    w4 = jnp.zeros((2, 2, cin, 2, 2, cout), jnp.float32)
    for a in (0, 1):
        for b in (0, 1):
            for du in (0, 1):
                for dv in (0, 1):
                    kp, kq = rm[a][du], rm[b][dv]
                    if kp is None or kq is None:
                        continue
                    w4 = w4.at[du, dv, :, a, b, :].set(w_iokk[:, :, kp, kq])
    return w4.reshape(4 * cin, 4 * cout)


def prepare_params(p):
    """Fold BN, reshape weights to matmul form, cast to bf16.  Runs once."""
    out = {}

    # conv1: transposed form, K zero-padded 25 -> 32.
    w1 = jnp.pad(p["conv1_w"].reshape(32, 25), ((0, 0), (0, 7)))
    s1, b1 = _fold_bn(p["conv1_b"], p["bn1"])
    out["c1"] = dict(w_t=w1.astype(jnp.bfloat16),
                     scale=s1.reshape(32, 1), bias=b1.reshape(32, 1))

    # conv2: transposed form, cols ordered (tap, cin).
    w2 = jnp.transpose(p["conv2_w"], (0, 2, 3, 1)).reshape(64, 9 * 32)
    s2, b2 = _fold_bn(p["conv2_b"], p["bn2"])
    out["c2"] = dict(w_t=w2.astype(jnp.bfloat16),
                     scale=s2.reshape(64, 1), bias=b2.reshape(64, 1))

    # conv3 / conv4: normal form, rows ordered (tap, cin).
    w3 = jnp.transpose(p["conv3_w"], (2, 3, 1, 0)).reshape(9 * 64, 128)
    s3, b3 = _fold_bn(p["conv3_b"], p["bn3"])
    out["c3"] = dict(w=w3.astype(jnp.bfloat16),
                     scale=s3.reshape(1, 128), bias=b3.reshape(1, 128))

    w4 = jnp.transpose(p["conv4_w"], (2, 3, 1, 0)).reshape(9 * 128, 256)
    s4, b4 = _fold_bn(p["conv4_b"], p["bn4"])
    out["c4"] = dict(w=w4.astype(jnp.bfloat16),
                     scale=s4.reshape(1, 256), bias=b4.reshape(1, 256))

    # deconv1: (4 taps, 256, 512) sub-pixel weight, phase-major columns.
    wd1 = _subpixel_weight(p["deconv1_w"]).reshape(4, 256, 4 * 128)
    sd1, bd1 = _fold_bn(p["deconv1_b"], p["bn_1"])
    out["d1"] = dict(w=wd1.astype(jnp.bfloat16),
                     scale=jnp.tile(sd1, 4).reshape(1, 512),
                     bias=jnp.tile(bd1, 4).reshape(1, 512))

    # deconv2: (512, 256) sub-pixel weight.
    wd2 = _subpixel_weight(p["deconv2_w"])
    sd2, bd2 = _fold_bn(p["deconv2_b"], p["bn_2"])
    out["d2"] = dict(w=wd2.astype(jnp.bfloat16),
                     scale=jnp.tile(sd2, 4).reshape(1, 256),
                     bias=jnp.tile(bd2, 4).reshape(1, 256))

    # deconv3: transposed form (4 phases, 256), no BN, sigmoid.
    wd3 = _subpixel_weight(p["deconv3_w"])                 # (256, 4)
    out["d3"] = dict(w_t=jnp.transpose(wd3).astype(jnp.bfloat16),
                     scale=jnp.ones((4, 1), jnp.float32),
                     bias=jnp.tile(p["deconv3_b"], 4).reshape(4, 1))
    return out


# -------------------------------- forward ---------------------------------- #
def auto_encoder_forward(x_nchw, pp):
    n = x_nchw.shape[0]

    # ---- conv1: 5x5 s1 p2, transposed (lane-dense out (32, N*784)) ----
    x = x_nchw.reshape(n, 28, 28)
    xp = jnp.pad(x, ((0, 0), (2, 2), (2, 2)))
    taps = [xp[:, di:di + 28, dj:dj + 28] for di in range(5) for dj in range(5)]
    p1 = jnp.stack(taps, 0).reshape(25, n * 784)
    p1 = jnp.pad(p1, ((0, 7), (0, 0))).astype(jnp.bfloat16)         # K 25 -> 32
    a1 = fused_matmul(pp["c1"]["w_t"], p1, pp["c1"]["scale"], pp["c1"]["bias"],
                      "relu")                                        # (32, N*784)

    # ---- conv2: 3x3 s2 p1, transposed; channel-major patches (no transpose) --
    a1 = a1.reshape(32, n, 28, 28)
    a1p = jnp.pad(a1, ((0, 0), (0, 0), (1, 1), (1, 1)))
    taps = [a1p[:, :, di:di + 28:2, dj:dj + 28:2]
            for di in range(3) for dj in range(3)]
    p2 = jnp.stack(taps, 0).reshape(9 * 32, n * 196)
    a2 = fused_matmul(pp["c2"]["w_t"], p2, pp["c2"]["scale"], pp["c2"]["bias"],
                      "relu")                                        # (64, N*196)

    # ---- conv3: 3x3 s2 p1, normal form (out (N*49, 128) lane-dense) ----
    a2 = a2.reshape(64, n, 14, 14)
    a2p = jnp.pad(a2, ((0, 0), (0, 0), (1, 1), (1, 1)))
    taps = [a2p[:, :, di:di + 14:2, dj:dj + 14:2]
            for di in range(3) for dj in range(3)]
    p3 = jnp.transpose(jnp.stack(taps, 0), (2, 3, 4, 0, 1)).reshape(n * 49, 576)
    a3 = fused_matmul(p3, pp["c3"]["w"], pp["c3"]["scale"], pp["c3"]["bias"],
                      "relu")                                        # (N*49, 128)

    # ---- conv4 (3x3 s2 p1) + deconv1 (s2 p1 op0), fused in one kernel ----
    a3 = a3.reshape(n, 7, 7, 128)
    a3p = jnp.pad(a3, ((0, 0), (1, 1), (1, 1), (0, 0)))
    taps = [a3p[:, di:di + 7:2, dj:dj + 7:2, :]
            for di in range(3) for dj in range(3)]
    p4 = jnp.stack(taps, 3).reshape(n * 16, 9 * 128)
    d1 = conv4_deconv1(p4, pp["c4"], pp["d1"], _d1_shift_mats(n))    # (N*16, 512)
    # depth-to-space; output_padding=0 -> crop 8 -> 7
    d1 = d1.reshape(n, 4, 4, 2, 2, 128)
    d1 = jnp.transpose(d1, (0, 1, 3, 2, 4, 5)).reshape(n, 8, 8, 128)[:, :7, :7, :]

    # ---- deconv2: sub-pixel conv, normal form (out (N*49, 256) lane-dense) ----
    d1pad = jnp.pad(d1, ((0, 0), (0, 1), (0, 1), (0, 0)))
    taps = [d1pad[:, du:du + 7, dv:dv + 7, :] for du in (0, 1) for dv in (0, 1)]
    p5 = jnp.stack(taps, 3).reshape(n * 49, 4 * 128)
    d2 = fused_matmul(p5, pp["d2"]["w"], pp["d2"]["scale"], pp["d2"]["bias"],
                      "relu")                                        # (N*49, 256)
    # depth-to-space; output_padding=1 -> no crop
    d2 = d2.reshape(n, 7, 7, 2, 2, 64)
    d2 = jnp.transpose(d2, (0, 1, 3, 2, 4, 5)).reshape(n, 14, 14, 64)

    # ---- deconv3 + sigmoid, transposed (out (4, N*196) lane-dense) ----
    d2t = jnp.transpose(d2, (3, 0, 1, 2))                            # (64,N,14,14)
    d2tp = jnp.pad(d2t, ((0, 0), (0, 0), (0, 1), (0, 1)))
    taps = [d2tp[:, :, du:du + 14, dv:dv + 14] for du in (0, 1) for dv in (0, 1)]
    p6 = jnp.stack(taps, 0).reshape(4 * 64, n * 196)
    yt = fused_matmul(pp["d3"]["w_t"], p6, pp["d3"]["scale"], pp["d3"]["bias"],
                      "sigmoid", out_dtype=jnp.float32)              # (4, N*196)
    # depth-to-space; output_padding=1 -> full 28x28
    y = yt.reshape(2, 2, n, 14, 14)                                  # (a,b,n,u,v)
    y = jnp.transpose(y, (2, 3, 0, 4, 1)).reshape(n, 28, 28)
    return y[:, None, :, :]                                          # (N,1,28,28)


if __name__ == "__main__":
    key = jax.random.PRNGKey(0)
    k_params, k_input = jax.random.split(key)
    raw_params = init_params(k_params)
    params = prepare_params(raw_params)   # folded / matmul-ready / bf16, once
    # MNIST-like input, small batch: (N=2, C=1, H=28, W=28), NCHW like PyTorch
    x = jax.random.uniform(k_input, (2, 1, 28, 28), jnp.float32)

    fwd = jax.jit(auto_encoder_forward)
    out = jax.block_until_ready(fwd(x, params))

    assert out.shape == (2, 1, 28, 28), out.shape
    assert out.dtype == jnp.float32, out.dtype
    assert bool(jnp.all((out >= 0.0) & (out <= 1.0)))  # sigmoid output range
    print("KERNEL_OK")
</pallas_src>

<mosaic_0001>
module attributes {stable_mosaic.version = 11 : i64} {
  func.func @_fused_matmul_kernel(%arg0: i32, %arg1: memref<32x32xbf16, #tpu.memory_space<vmem>>, %arg2: memref<32x1568xbf16, #tpu.memory_space<vmem>>, %arg3: memref<32x1xf32, #tpu.memory_space<vmem>>, %arg4: memref<32x1xf32, #tpu.memory_space<vmem>>, %arg5: memref<32x1568xbf16, #tpu.memory_space<vmem>>) attributes {dimension_semantics = [#tpu.dimension_semantics<arbitrary>], iteration_bounds = array<i64: 1>, scalar_prefetch = 0 : i64, scratch_operands = 0 : i64, tpu.core_type = #tpu.core_type<tc>, window_params = [{pipeline_mode = #tpu.pipeline_mode<synchronous>, transform_indices = @transform_0, window_bounds = array<i64: 32, 32>}, {pipeline_mode = #tpu.pipeline_mode<synchronous>, transform_indices = @transform_1, window_bounds = array<i64: 32, 1568>}, {pipeline_mode = #tpu.pipeline_mode<synchronous>, transform_indices = @transform_2, window_bounds = array<i64: 32, 1>}, {pipeline_mode = #tpu.pipeline_mode<synchronous>, transform_indices = @transform_3, window_bounds = array<i64: 32, 1>}, {pipeline_mode = #tpu.pipeline_mode<synchronous>, transform_indices = @transform_4, window_bounds = array<i64: 32, 1568>}]} {
    %c0 = arith.constant 0 : index
    %c0_0 = arith.constant 0 : index
    %0 = vector.load %arg1[%c0, %c0_0] : memref<32x32xbf16, #tpu.memory_space<vmem>>, vector<32x32xbf16>
    %c0_1 = arith.constant 0 : index
    %c0_2 = arith.constant 0 : index
    %1 = vector.load %arg2[%c0_1, %c0_2] : memref<32x1568xbf16, #tpu.memory_space<vmem>>, vector<32x1568xbf16>
    %cst = arith.constant dense<0.000000e+00> : vector<32x1568xf32>
    %2 = tpu.matmul %0, %1, %cst {dimension_numbers = #tpu.dot_dimension_numbers<[1], [0], [0], [1], [0, 0, 1, 1], [], []>} : vector<32x32xbf16>, vector<32x1568xbf16>, vector<32x1568xf32> -> vector<32x1568xf32>
    %c0_3 = arith.constant 0 : index
    %c0_4 = arith.constant 0 : index
    %3 = vector.load %arg3[%c0_3, %c0_4] : memref<32x1xf32, #tpu.memory_space<vmem>>, vector<32x1xf32>
    %4 = vector.broadcast %3 : vector<32x1xf32> to vector<32x1568xf32>
    %5 = arith.mulf %2, %4 : vector<32x1568xf32>
    %c0_5 = arith.constant 0 : index
    %c0_6 = arith.constant 0 : index
    %6 = vector.load %arg4[%c0_5, %c0_6] : memref<32x1xf32, #tpu.memory_space<vmem>>, vector<32x1xf32>
    %7 = vector.broadcast %6 : vector<32x1xf32> to vector<32x1568xf32>
    %8 = arith.addf %5, %7 : vector<32x1568xf32>
    %cst_7 = arith.constant 0.000000e+00 : f32
    %9 = vector.broadcast %cst_7 : f32 to vector<32x1568xf32>
    %10 = arith.maximumf %8, %9 : vector<32x1568xf32>
    %11 = arith.truncf %10 : vector<32x1568xf32> to vector<32x1568xbf16>
    %c0_8 = arith.constant 0 : index
    %c0_9 = arith.constant 0 : index
    %12 = vector.load %arg5[%c0_8, %c0_9] : memref<32x1568xbf16, #tpu.memory_space<vmem>>, vector<32x1568xbf16>
    tpu.vector_store %arg5[%c0_8, %c0_9], %11 {strides = array<i32>} : memref<32x1568xbf16, #tpu.memory_space<vmem>>, vector<32x1568xbf16>,
    return
  }
  func.func @transform_0(%arg0: i32) -> (i32, i32) {
    %c0_i32 = arith.constant 0 : i32
    %c0_i32_0 = arith.constant 0 : i32
    %c0_i32_1 = arith.constant 0 : i32
    return %c0_i32, %c0_i32_0 : i32, i32
  }
  func.func @transform_1(%arg0: i32) -> (i32, i32) {
    %c0_i32 = arith.constant 0 : i32
    %c0_i32_0 = arith.constant 0 : i32
    %c0_i32_1 = arith.constant 0 : i32
    return %c0_i32, %c0_i32_0 : i32, i32
  }
  func.func @transform_2(%arg0: i32) -> (i32, i32) {
    %c0_i32 = arith.constant 0 : i32
    %c0_i32_0 = arith.constant 0 : i32
    %c0_i32_1 = arith.constant 0 : i32
    return %c0_i32, %c0_i32_0 : i32, i32
  }
  func.func @transform_3(%arg0: i32) -> (i32, i32) {
    %c0_i32 = arith.constant 0 : i32
    %c0_i32_0 = arith.constant 0 : i32
    %c0_i32_1 = arith.constant 0 : i32
    return %c0_i32, %c0_i32_0 : i32, i32
  }
  func.func @transform_4(%arg0: i32) -> (i32, i32) {
    %c0_i32 = arith.constant 0 : i32
    %c0_i32_0 = arith.constant 0 : i32
    %c0_i32_1 = arith.constant 0 : i32
    return %c0_i32, %c0_i32_0 : i32, i32
  }
}

module attributes {stable_mosaic.version = 11 : i64} {
  func.func @_fused_matmul_kernel(%arg0: i32, %arg1: memref<64x288xbf16, #tpu.memory_space<vmem>>, %arg2: memref<288x392xbf16, #tpu.memory_space<vmem>>, %arg3: memref<64x1xf32, #tpu.memory_space<vmem>>, %arg4: memref<64x1xf32, #tpu.memory_space<vmem>>, %arg5: memref<64x392xbf16, #tpu.memory_space<vmem>>) attributes {dimension_semantics = [#tpu.dimension_semantics<arbitrary>], iteration_bounds = array<i64: 1>, scalar_prefetch = 0 : i64, scratch_operands = 0 : i64, tpu.core_type = #tpu.core_type<tc>, window_params = [{pipeline_mode = #tpu.pipeline_mode<synchronous>, transform_indices = @transform_0, window_bounds = array<i64: 64, 288>}, {pipeline_mode = #tpu.pipeline_mode<synchronous>, transform_indices = @transform_1, window_bounds = array<i64: 288, 392>}, {pipeline_mode = #tpu.pipeline_mode<synchronous>, transform_indices = @transform_2, window_bounds = array<i64: 64, 1>}, {pipeline_mode = #tpu.pipeline_mode<synchronous>, transform_indices = @transform_3, window_bounds = array<i64: 64, 1>}, {pipeline_mode = #tpu.pipeline_mode<synchronous>, transform_indices = @transform_4, window_bounds = array<i64: 64, 392>}]} {
    %c0 = arith.constant 0 : index
    %c0_0 = arith.constant 0 : index
    %0 = vector.load %arg1[%c0, %c0_0] : memref<64x288xbf16, #tpu.memory_space<vmem>>, vector<64x288xbf16>
    %c0_1 = arith.constant 0 : index
    %c0_2 = arith.constant 0 : index
    %1 = vector.load %arg2[%c0_1, %c0_2] : memref<288x392xbf16, #tpu.memory_space<vmem>>, vector<288x392xbf16>
    %cst = arith.constant dense<0.000000e+00> : vector<64x392xf32>
    %2 = tpu.matmul %0, %1, %cst {dimension_numbers = #tpu.dot_dimension_numbers<[1], [0], [0], [1], [0, 0, 1, 1], [], []>} : vector<64x288xbf16>, vector<288x392xbf16>, vector<64x392xf32> -> vector<64x392xf32>
    %c0_3 = arith.constant 0 : index
    %c0_4 = arith.constant 0 : index
    %3 = vector.load %arg3[%c0_3, %c0_4] : memref<64x1xf32, #tpu.memory_space<vmem>>, vector<64x1xf32>
    %4 = vector.broadcast %3 : vector<64x1xf32> to vector<64x392xf32>
    %5 = arith.mulf %2, %4 : vector<64x392xf32>
    %c0_5 = arith.constant 0 : index
    %c0_6 = arith.constant 0 : index
    %6 = vector.load %arg4[%c0_5, %c0_6] : memref<64x1xf32, #tpu.memory_space<vmem>>, vector<64x1xf32>
    %7 = vector.broadcast %6 : vector<64x1xf32> to vector<64x392xf32>
    %8 = arith.addf %5, %7 : vector<64x392xf32>
    %cst_7 = arith.constant 0.000000e+00 : f32
    %9 = vector.broadcast %cst_7 : f32 to vector<64x392xf32>
    %10 = arith.maximumf %8, %9 : vector<64x392xf32>
    %11 = arith.truncf %10 : vector<64x392xf32> to vector<64x392xbf16>
    %c0_8 = arith.constant 0 : index
    %c0_9 = arith.constant 0 : index
    %12 = vector.load %arg5[%c0_8, %c0_9] : memref<64x392xbf16, #tpu.memory_space<vmem>>, vector<64x392xbf16>
    tpu.vector_store %arg5[%c0_8, %c0_9], %11 {strides = array<i32>} : memref<64x392xbf16, #tpu.memory_space<vmem>>, vector<64x392xbf16>,
    return
  }
  func.func @transform_0(%arg0: i32) -> (i32, i32) {
    %c0_i32 = arith.constant 0 : i32
    %c0_i32_0 = arith.constant 0 : i32
    %c0_i32_1 = arith.constant 0 : i32
    return %c0_i32, %c0_i32_0 : i32, i32
  }
  func.func @transform_1(%arg0: i32) -> (i32, i32) {
    %c0_i32 = arith.constant 0 : i32
    %c0_i32_0 = arith.constant 0 : i32
    %c0_i32_1 = arith.constant 0 : i32
    return %c0_i32, %c0_i32_0 : i32, i32
  }
  func.func @transform_2(%arg0: i32) -> (i32, i32) {
    %c0_i32 = arith.constant 0 : i32
    %c0_i32_0 = arith.constant 0 : i32
    %c0_i32_1 = arith.constant 0 : i32
    return %c0_i32, %c0_i32_0 : i32, i32
  }
  func.func @transform_3(%arg0: i32) -> (i32, i32) {
    %c0_i32 = arith.constant 0 : i32
    %c0_i32_0 = arith.constant 0 : i32
    %c0_i32_1 = arith.constant 0 : i32
    return %c0_i32, %c0_i32_0 : i32, i32
  }
  func.func @transform_4(%arg0: i32) -> (i32, i32) {
    %c0_i32 = arith.constant 0 : i32
    %c0_i32_0 = arith.constant 0 : i32
    %c0_i32_1 = arith.constant 0 : i32
    return %c0_i32, %c0_i32_0 : i32, i32
  }
}

module attributes {stable_mosaic.version = 11 : i64} {
  func.func @_fused_matmul_kernel(%arg0: i32, %arg1: memref<98x576xbf16, #tpu.memory_space<vmem>>, %arg2: memref<576x128xbf16, #tpu.memory_space<vmem>>, %arg3: memref<1x128xf32, #tpu.memory_space<vmem>>, %arg4: memref<1x128xf32, #tpu.memory_space<vmem>>, %arg5: memref<98x128xbf16, #tpu.memory_space<vmem>>) attributes {dimension_semantics = [#tpu.dimension_semantics<arbitrary>], iteration_bounds = array<i64: 1>, scalar_prefetch = 0 : i64, scratch_operands = 0 : i64, tpu.core_type = #tpu.core_type<tc>, window_params = [{pipeline_mode = #tpu.pipeline_mode<synchronous>, transform_indices = @transform_0, window_bounds = array<i64: 98, 576>}, {pipeline_mode = #tpu.pipeline_mode<synchronous>, transform_indices = @transform_1, window_bounds = array<i64: 576, 128>}, {pipeline_mode = #tpu.pipeline_mode<synchronous>, transform_indices = @transform_2, window_bounds = array<i64: 1, 128>}, {pipeline_mode = #tpu.pipeline_mode<synchronous>, transform_indices = @transform_3, window_bounds = array<i64: 1, 128>}, {pipeline_mode = #tpu.pipeline_mode<synchronous>, transform_indices = @transform_4, window_bounds = array<i64: 98, 128>}]} {
    %c0 = arith.constant 0 : index
    %c0_0 = arith.constant 0 : index
    %0 = vector.load %arg1[%c0, %c0_0] : memref<98x576xbf16, #tpu.memory_space<vmem>>, vector<98x576xbf16>
    %c0_1 = arith.constant 0 : index
    %c0_2 = arith.constant 0 : index
    %1 = vector.load %arg2[%c0_1, %c0_2] : memref<576x128xbf16, #tpu.memory_space<vmem>>, vector<576x128xbf16>
    %cst = arith.constant dense<0.000000e+00> : vector<98x128xf32>
    %2 = tpu.matmul %0, %1, %cst {dimension_numbers = #tpu.dot_dimension_numbers<[1], [0], [0], [1], [0, 0, 1, 1], [], []>} : vector<98x576xbf16>, vector<576x128xbf16>, vector<98x128xf32> -> vector<98x128xf32>
    %c0_3 = arith.constant 0 : index
    %c0_4 = arith.constant 0 : index
    %3 = vector.load %arg3[%c0_3, %c0_4] : memref<1x128xf32, #tpu.memory_space<vmem>>, vector<1x128xf32>
    %4 = vector.broadcast %3 : vector<1x128xf32> to vector<98x128xf32>
    %5 = arith.mulf %2, %4 : vector<98x128xf32>
    %c0_5 = arith.constant 0 : index
    %c0_6 = arith.constant 0 : index
    %6 = vector.load %arg4[%c0_5, %c0_6] : memref<1x128xf32, #tpu.memory_space<vmem>>, vector<1x128xf32>
    %7 = vector.broadcast %6 : vector<1x128xf32> to vector<98x128xf32>
    %8 = arith.addf %5, %7 : vector<98x128xf32>
    %cst_7 = arith.constant 0.000000e+00 : f32
    %9 = vector.broadcast %cst_7 : f32 to vector<98x128xf32>
    %10 = arith.maximumf %8, %9 : vector<98x128xf32>
    %11 = arith.truncf %10 : vector<98x128xf32> to vector<98x128xbf16>
    %c0_8 = arith.constant 0 : index
    %c0_9 = arith.constant 0 : index
    %12 = vector.load %arg5[%c0_8, %c0_9] : memref<98x128xbf16, #tpu.memory_space<vmem>>, vector<98x128xbf16>
    tpu.vector_store %arg5[%c0_8, %c0_9], %11 {strides = array<i32>} : memref<98x128xbf16, #tpu.memory_space<vmem>>, vector<98x128xbf16>,
    return
  }
  func.func @transform_0(%arg0: i32) -> (i32, i32) {
    %c0_i32 = arith.constant 0 : i32
    %c0_i32_0 = arith.constant 0 : i32
    %c0_i32_1 = arith.constant 0 : i32
    return %c0_i32, %c0_i32_0 : i32, i32
  }
  func.func @transform_1(%arg0: i32) -> (i32, i32) {
    %c0_i32 = arith.constant 0 : i32
    %c0_i32_0 = arith.constant 0 : i32
    %c0_i32_1 = arith.constant 0 : i32
    return %c0_i32, %c0_i32_0 : i32, i32
  }
  func.func @transform_2(%arg0: i32) -> (i32, i32) {
    %c0_i32 = arith.constant 0 : i32
    %c0_i32_0 = arith.constant 0 : i32
    %c0_i32_1 = arith.constant 0 : i32
    return %c0_i32, %c0_i32_0 : i32, i32
  }
  func.func @transform_3(%arg0: i32) -> (i32, i32) {
    %c0_i32 = arith.constant 0 : i32
    %c0_i32_0 = arith.constant 0 : i32
    %c0_i32_1 = arith.constant 0 : i32
    return %c0_i32, %c0_i32_0 : i32, i32
  }
  func.func @transform_4(%arg0: i32) -> (i32, i32) {
    %c0_i32 = arith.constant 0 : i32
    %c0_i32_0 = arith.constant 0 : i32
    %c0_i32_1 = arith.constant 0 : i32
    return %c0_i32, %c0_i32_0 : i32, i32
  }
}

module attributes {stable_mosaic.version = 11 : i64} {
  func.func @_conv4_deconv1_kernel(%arg0: i32, %arg1: memref<32x1152xbf16, #tpu.memory_space<vmem>>, %arg2: memref<1152x256xbf16, #tpu.memory_space<vmem>>, %arg3: memref<1x256xf32, #tpu.memory_space<vmem>>, %arg4: memref<1x256xf32, #tpu.memory_space<vmem>>, %arg5: memref<4x32x32xbf16, #tpu.memory_space<vmem>>, %arg6: memref<4x256x512xbf16, #tpu.memory_space<vmem>>, %arg7: memref<1x512xf32, #tpu.memory_space<vmem>>, %arg8: memref<1x512xf32, #tpu.memory_space<vmem>>, %arg9: memref<32x512xbf16, #tpu.memory_space<vmem>>) attributes {dimension_semantics = [#tpu.dimension_semantics<arbitrary>], iteration_bounds = array<i64: 1>, scalar_prefetch = 0 : i64, scratch_operands = 0 : i64, tpu.core_type = #tpu.core_type<tc>, window_params = [{pipeline_mode = #tpu.pipeline_mode<synchronous>, transform_indices = @transform_0, window_bounds = array<i64: 32, 1152>}, {pipeline_mode = #tpu.pipeline_mode<synchronous>, transform_indices = @transform_1, window_bounds = array<i64: 1152, 256>}, {pipeline_mode = #tpu.pipeline_mode<synchronous>, transform_indices = @transform_2, window_bounds = array<i64: 1, 256>}, {pipeline_mode = #tpu.pipeline_mode<synchronous>, transform_indices = @transform_3, window_bounds = array<i64: 1, 256>}, {pipeline_mode = #tpu.pipeline_mode<synchronous>, transform_indices = @transform_4, window_bounds = array<i64: 4, 32, 32>}, {pipeline_mode = #tpu.pipeline_mode<synchronous>, transform_indices = @transform_5, window_bounds = array<i64: 4, 256, 512>}, {pipeline_mode = #tpu.pipeline_mode<synchronous>, transform_indices = @transform_6, window_bounds = array<i64: 1, 512>}, {pipeline_mode = #tpu.pipeline_mode<synchronous>, transform_indices = @transform_7, window_bounds = array<i64: 1, 512>}, {pipeline_mode = #tpu.pipeline_mode<synchronous>, transform_indices = @transform_8, window_bounds = array<i64: 32, 512>}]} {
    %c0 = arith.constant 0 : index
    %c0_0 = arith.constant 0 : index
    %0 = vector.load %arg1[%c0, %c0_0] : memref<32x1152xbf16, #tpu.memory_space<vmem>>, vector<32x1152xbf16>
    %c0_1 = arith.constant 0 : index
    %c0_2 = arith.constant 0 : index
    %1 = vector.load %arg2[%c0_1, %c0_2] : memref<1152x256xbf16, #tpu.memory_space<vmem>>, vector<1152x256xbf16>
    %cst = arith.constant dense<0.000000e+00> : vector<32x256xf32>
    %2 = tpu.matmul %0, %1, %cst {dimension_numbers = #tpu.dot_dimension_numbers<[1], [0], [0], [1], [0, 0, 1, 1], [], []>} : vector<32x1152xbf16>, vector<1152x256xbf16>, vector<32x256xf32> -> vector<32x256xf32>
    %c0_3 = arith.constant 0 : index
    %c0_4 = arith.constant 0 : index
    %3 = vector.load %arg3[%c0_3, %c0_4] : memref<1x256xf32, #tpu.memory_space<vmem>>, vector<1x256xf32>
    %4 = vector.broadcast %3 : vector<1x256xf32> to vector<32x256xf32>
    %5 = arith.mulf %2, %4 : vector<32x256xf32>
    %c0_5 = arith.constant 0 : index
    %c0_6 = arith.constant 0 : index
    %6 = vector.load %arg4[%c0_5, %c0_6] : memref<1x256xf32, #tpu.memory_space<vmem>>, vector<1x256xf32>
    %7 = vector.broadcast %6 : vector<1x256xf32> to vector<32x256xf32>
    %8 = arith.addf %5, %7 : vector<32x256xf32>
    %cst_7 = arith.constant 0.000000e+00 : f32
    %9 = vector.broadcast %cst_7 : f32 to vector<32x256xf32>
    %10 = arith.maximumf %8, %9 : vector<32x256xf32>
    %11 = arith.truncf %10 : vector<32x256xf32> to vector<32x256xbf16>
    %cst_8 = arith.constant 0.000000e+00 : f32
    %12 = vector.broadcast %cst_8 : f32 to vector<32x512xf32>
    %c0_9 = arith.constant 0 : index
    %c0_10 = arith.constant 0 : index
    %c0_11 = arith.constant 0 : index
    %13 = vector.load %arg5[%c0_9, %c0_10, %c0_11] : memref<4x32x32xbf16, #tpu.memory_space<vmem>>, vector<1x32x32xbf16>
    %14 = vector.shape_cast %13 : vector<1x32x32xbf16> to vector<32x32xbf16>
    %cst_12 = arith.constant dense<0.000000e+00> : vector<32x256xf32>
    %15 = tpu.matmul %14, %11, %cst_12 {dimension_numbers = #tpu.dot_dimension_numbers<[1], [0], [0], [1], [0, 0, 1, 1], [], []>} : vector<32x32xbf16>, vector<32x256xbf16>, vector<32x256xf32> -> vector<32x256xf32>
    %16 = arith.truncf %15 : vector<32x256xf32> to vector<32x256xbf16>
    %c0_13 = arith.constant 0 : index
    %c0_14 = arith.constant 0 : index
    %c0_15 = arith.constant 0 : index
    %17 = vector.load %arg6[%c0_13, %c0_14, %c0_15] : memref<4x256x512xbf16, #tpu.memory_space<vmem>>, vector<1x256x512xbf16>
    %18 = vector.shape_cast %17 : vector<1x256x512xbf16> to vector<256x512xbf16>
    %cst_16 = arith.constant dense<0.000000e+00> : vector<32x512xf32>
    %19 = tpu.matmul %16, %18, %cst_16 {dimension_numbers = #tpu.dot_dimension_numbers<[1], [0], [0], [1], [0, 0, 1, 1], [], []>} : vector<32x256xbf16>, vector<256x512xbf16>, vector<32x512xf32> -> vector<32x512xf32>
    %20 = arith.addf %12, %19 : vector<32x512xf32>
    %c1 = arith.constant 1 : index
    %c0_17 = arith.constant 0 : index
    %c0_18 = arith.constant 0 : index
    %21 = vector.load %arg5[%c1, %c0_17, %c0_18] : memref<4x32x32xbf16, #tpu.memory_space<vmem>>, vector<1x32x32xbf16>
    %22 = vector.shape_cast %21 : vector<1x32x32xbf16> to vector<32x32xbf16>
    %cst_19 = arith.constant dense<0.000000e+00> : vector<32x256xf32>
    %23 = tpu.matmul %22, %11, %cst_19 {dimension_numbers = #tpu.dot_dimension_numbers<[1], [0], [0], [1], [0, 0, 1, 1], [], []>} : vector<32x32xbf16>, vector<32x256xbf16>, vector<32x256xf32> -> vector<32x256xf32>
    %24 = arith.truncf %23 : vector<32x256xf32> to vector<32x256xbf16>
    %c1_20 = arith.constant 1 : index
    %c0_21 = arith.constant 0 : index
    %c0_22 = arith.constant 0 : index
    %25 = vector.load %arg6[%c1_20, %c0_21, %c0_22] : memref<4x256x512xbf16, #tpu.memory_space<vmem>>, vector<1x256x512xbf16>
    %26 = vector.shape_cast %25 : vector<1x256x512xbf16> to vector<256x512xbf16>
    %cst_23 = arith.constant dense<0.000000e+00> : vector<32x512xf32>
    %27 = tpu.matmul %24, %26, %cst_23 {dimension_numbers = #tpu.dot_dimension_numbers<[1], [0], [0], [1], [0, 0, 1, 1], [], []>} : vector<32x256xbf16>, vector<256x512xbf16>, vector<32x512xf32> -> vector<32x512xf32>
    %28 = arith.addf %20, %27 : vector<32x512xf32>
    %c2 = arith.constant 2 : index
    %c0_24 = arith.constant 0 : index
    %c0_25 = arith.constant 0 : index
    %29 = vector.load %arg5[%c2, %c0_24, %c0_25] : memref<4x32x32xbf16, #tpu.memory_space<vmem>>, vector<1x32x32xbf16>
    %30 = vector.shape_cast %29 : vector<1x32x32xbf16> to vector<32x32xbf16>
    %cst_26 = arith.constant dense<0.000000e+00> : vector<32x256xf32>
    %31 = tpu.matmul %30, %11, %cst_26 {dimension_numbers = #tpu.dot_dimension_numbers<[1], [0], [0], [1], [0, 0, 1, 1], [], []>} : vector<32x32xbf16>, vector<32x256xbf16>, vector<32x256xf32> -> vector<32x256xf32>
    %32 = arith.truncf %31 : vector<32x256xf32> to vector<32x256xbf16>
    %c2_27 = arith.constant 2 : index
    %c0_28 = arith.constant 0 : index
    %c0_29 = arith.constant 0 : index
    %33 = vector.load %arg6[%c2_27, %c0_28, %c0_29] : memref<4x256x512xbf16, #tpu.memory_space<vmem>>, vector<1x256x512xbf16>
    %34 = vector.shape_cast %33 : vector<1x256x512xbf16> to vector<256x512xbf16>
    %cst_30 = arith.constant dense<0.000000e+00> : vector<32x512xf32>
    %35 = tpu.matmul %32, %34, %cst_30 {dimension_numbers = #tpu.dot_dimension_numbers<[1], [0], [0], [1], [0, 0, 1, 1], [], []>} : vector<32x256xbf16>, vector<256x512xbf16>, vector<32x512xf32> -> vector<32x512xf32>
    %36 = arith.addf %28, %35 : vector<32x512xf32>
    %c3 = arith.constant 3 : index
    %c0_31 = arith.constant 0 : index
    %c0_32 = arith.constant 0 : index
    %37 = vector.load %arg5[%c3, %c0_31, %c0_32] : memref<4x32x32xbf16, #tpu.memory_space<vmem>>, vector<1x32x32xbf16>
    %38 = vector.shape_cast %37 : vector<1x32x32xbf16> to vector<32x32xbf16>
    %cst_33 = arith.constant dense<0.000000e+00> : vector<32x256xf32>
    %39 = tpu.matmul %38, %11, %cst_33 {dimension_numbers = #tpu.dot_dimension_numbers<[1], [0], [0], [1], [0, 0, 1, 1], [], []>} : vector<32x32xbf16>, vector<32x256xbf16>, vector<32x256xf32> -> vector<32x256xf32>
    %40 = arith.truncf %39 : vector<32x256xf32> to vector<32x256xbf16>
    %c3_34 = arith.constant 3 : index
    %c0_35 = arith.constant 0 : index
    %c0_36 = arith.constant 0 : index
    %41 = vector.load %arg6[%c3_34, %c0_35, %c0_36] : memref<4x256x512xbf16, #tpu.memory_space<vmem>>, vector<1x256x512xbf16>
    %42 = vector.shape_cast %41 : vector<1x256x512xbf16> to vector<256x512xbf16>
    %cst_37 = arith.constant dense<0.000000e+00> : vector<32x512xf32>
    %43 = tpu.matmul %40, %42, %cst_37 {dimension_numbers = #tpu.dot_dimension_numbers<[1], [0], [0], [1], [0, 0, 1, 1], [], []>} : vector<32x256xbf16>, vector<256x512xbf16>, vector<32x512xf32> -> vector<32x512xf32>
    %44 = arith.addf %36, %43 : vector<32x512xf32>
    %c0_38 = arith.constant 0 : index
    %c0_39 = arith.constant 0 : index
    %45 = vector.load %arg7[%c0_38, %c0_39] : memref<1x512xf32, #tpu.memory_space<vmem>>, vector<1x512xf32>
    %46 = vector.broadcast %45 : vector<1x512xf32> to vector<32x512xf32>
    %47 = arith.mulf %44, %46 : vector<32x512xf32>
    %c0_40 = arith.constant 0 : index
    %c0_41 = arith.constant 0 : index
    %48 = vector.load %arg8[%c0_40, %c0_41] : memref<1x512xf32, #tpu.memory_space<vmem>>, vector<1x512xf32>
    %49 = vector.broadcast %48 : vector<1x512xf32> to vector<32x512xf32>
    %50 = arith.addf %47, %49 : vector<32x512xf32>
    %cst_42 = arith.constant 0.000000e+00 : f32
    %51 = vector.broadcast %cst_42 : f32 to vector<32x512xf32>
    %52 = arith.maximumf %50, %51 : vector<32x512xf32>
    %53 = arith.truncf %52 : vector<32x512xf32> to vector<32x512xbf16>
    %c0_43 = arith.constant 0 : index
    %c0_44 = arith.constant 0 : index
    %54 = vector.load %arg9[%c0_43, %c0_44] : memref<32x512xbf16, #tpu.memory_space<vmem>>, vector<32x512xbf16>
    tpu.vector_store %arg9[%c0_43, %c0_44], %53 {strides = array<i32>} : memref<32x512xbf16, #tpu.memory_space<vmem>>, vector<32x512xbf16>,
    return
  }
  func.func @transform_0(%arg0: i32) -> (i32, i32) {
    %c0_i32 = arith.constant 0 : i32
    %c0_i32_0 = arith.constant 0 : i32
    %c0_i32_1 = arith.constant 0 : i32
    return %c0_i32, %c0_i32_0 : i32, i32
  }
  func.func @transform_1(%arg0: i32) -> (i32, i32) {
    %c0_i32 = arith.constant 0 : i32
    %c0_i32_0 = arith.constant 0 : i32
    %c0_i32_1 = arith.constant 0 : i32
    return %c0_i32, %c0_i32_0 : i32, i32
  }
  func.func @transform_2(%arg0: i32) -> (i32, i32) {
    %c0_i32 = arith.constant 0 : i32
    %c0_i32_0 = arith.constant 0 : i32
    %c0_i32_1 = arith.constant 0 : i32
    return %c0_i32, %c0_i32_0 : i32, i32
  }
  func.func @transform_3(%arg0: i32) -> (i32, i32) {
    %c0_i32 = arith.constant 0 : i32
    %c0_i32_0 = arith.constant 0 : i32
    %c0_i32_1 = arith.constant 0 : i32
    return %c0_i32, %c0_i32_0 : i32, i32
  }
  func.func @transform_4(%arg0: i32) -> (i32, i32, i32) {
    %c0_i32 = arith.constant 0 : i32
    %c0_i32_0 = arith.constant 0 : i32
    %c0_i32_1 = arith.constant 0 : i32
    %c0_i32_2 = arith.constant 0 : i32
    return %c0_i32, %c0_i32_0, %c0_i32_1 : i32, i32, i32
  }
  func.func @transform_5(%arg0: i32) -> (i32, i32, i32) {
    %c0_i32 = arith.constant 0 : i32
    %c0_i32_0 = arith.constant 0 : i32
    %c0_i32_1 = arith.constant 0 : i32
    %c0_i32_2 = arith.constant 0 : i32
    return %c0_i32, %c0_i32_0, %c0_i32_1 : i32, i32, i32
  }
  func.func @transform_6(%arg0: i32) -> (i32, i32) {
    %c0_i32 = arith.constant 0 : i32
    %c0_i32_0 = arith.constant 0 : i32
    %c0_i32_1 = arith.constant 0 : i32
    return %c0_i32, %c0_i32_0 : i32, i32
  }
  func.func @transform_7(%arg0: i32) -> (i32, i32) {
    %c0_i32 = arith.constant 0 : i32
    %c0_i32_0 = arith.constant 0 : i32
    %c0_i32_1 = arith.constant 0 : i32
    return %c0_i32, %c0_i32_0 : i32, i32
  }
  func.func @transform_8(%arg0: i32) -> (i32, i32) {
    %c0_i32 = arith.constant 0 : i32
    %c0_i32_0 = arith.constant 0 : i32
    %c0_i32_1 = arith.constant 0 : i32
    return %c0_i32, %c0_i32_0 : i32, i32
  }
}

module attributes {stable_mosaic.version = 11 : i64} {
  func.func @_fused_matmul_kernel(%arg0: i32, %arg1: memref<98x512xbf16, #tpu.memory_space<vmem>>, %arg2: memref<512x256xbf16, #tpu.memory_space<vmem>>, %arg3: memref<1x256xf32, #tpu.memory_space<vmem>>, %arg4: memref<1x256xf32, #tpu.memory_space<vmem>>, %arg5: memref<98x256xbf16, #tpu.memory_space<vmem>>) attributes {dimension_semantics = [#tpu.dimension_semantics<arbitrary>], iteration_bounds = array<i64: 1>, scalar_prefetch = 0 : i64, scratch_operands = 0 : i64, tpu.core_type = #tpu.core_type<tc>, window_params = [{pipeline_mode = #tpu.pipeline_mode<synchronous>, transform_indices = @transform_0, window_bounds = array<i64: 98, 512>}, {pipeline_mode = #tpu.pipeline_mode<synchronous>, transform_indices = @transform_1, window_bounds = array<i64: 512, 256>}, {pipeline_mode = #tpu.pipeline_mode<synchronous>, transform_indices = @transform_2, window_bounds = array<i64: 1, 256>}, {pipeline_mode = #tpu.pipeline_mode<synchronous>, transform_indices = @transform_3, window_bounds = array<i64: 1, 256>}, {pipeline_mode = #tpu.pipeline_mode<synchronous>, transform_indices = @transform_4, window_bounds = array<i64: 98, 256>}]} {
    %c0 = arith.constant 0 : index
    %c0_0 = arith.constant 0 : index
    %0 = vector.load %arg1[%c0, %c0_0] : memref<98x512xbf16, #tpu.memory_space<vmem>>, vector<98x512xbf16>
    %c0_1 = arith.constant 0 : index
    %c0_2 = arith.constant 0 : index
    %1 = vector.load %arg2[%c0_1, %c0_2] : memref<512x256xbf16, #tpu.memory_space<vmem>>, vector<512x256xbf16>
    %cst = arith.constant dense<0.000000e+00> : vector<98x256xf32>
    %2 = tpu.matmul %0, %1, %cst {dimension_numbers = #tpu.dot_dimension_numbers<[1], [0], [0], [1], [0, 0, 1, 1], [], []>} : vector<98x512xbf16>, vector<512x256xbf16>, vector<98x256xf32> -> vector<98x256xf32>
    %c0_3 = arith.constant 0 : index
    %c0_4 = arith.constant 0 : index
    %3 = vector.load %arg3[%c0_3, %c0_4] : memref<1x256xf32, #tpu.memory_space<vmem>>, vector<1x256xf32>
    %4 = vector.broadcast %3 : vector<1x256xf32> to vector<98x256xf32>
    %5 = arith.mulf %2, %4 : vector<98x256xf32>
    %c0_5 = arith.constant 0 : index
    %c0_6 = arith.constant 0 : index
    %6 = vector.load %arg4[%c0_5, %c0_6] : memref<1x256xf32, #tpu.memory_space<vmem>>, vector<1x256xf32>
    %7 = vector.broadcast %6 : vector<1x256xf32> to vector<98x256xf32>
    %8 = arith.addf %5, %7 : vector<98x256xf32>
    %cst_7 = arith.constant 0.000000e+00 : f32
    %9 = vector.broadcast %cst_7 : f32 to vector<98x256xf32>
    %10 = arith.maximumf %8, %9 : vector<98x256xf32>
    %11 = arith.truncf %10 : vector<98x256xf32> to vector<98x256xbf16>
    %c0_8 = arith.constant 0 : index
    %c0_9 = arith.constant 0 : index
    %12 = vector.load %arg5[%c0_8, %c0_9] : memref<98x256xbf16, #tpu.memory_space<vmem>>, vector<98x256xbf16>
    tpu.vector_store %arg5[%c0_8, %c0_9], %11 {strides = array<i32>} : memref<98x256xbf16, #tpu.memory_space<vmem>>, vector<98x256xbf16>,
    return
  }
  func.func @transform_0(%arg0: i32) -> (i32, i32) {
    %c0_i32 = arith.constant 0 : i32
    %c0_i32_0 = arith.constant 0 : i32
    %c0_i32_1 = arith.constant 0 : i32
    return %c0_i32, %c0_i32_0 : i32, i32
  }
  func.func @transform_1(%arg0: i32) -> (i32, i32) {
    %c0_i32 = arith.constant 0 : i32
    %c0_i32_0 = arith.constant 0 : i32
    %c0_i32_1 = arith.constant 0 : i32
    return %c0_i32, %c0_i32_0 : i32, i32
  }
  func.func @transform_2(%arg0: i32) -> (i32, i32) {
    %c0_i32 = arith.constant 0 : i32
    %c0_i32_0 = arith.constant 0 : i32
    %c0_i32_1 = arith.constant 0 : i32
    return %c0_i32, %c0_i32_0 : i32, i32
  }
  func.func @transform_3(%arg0: i32) -> (i32, i32) {
    %c0_i32 = arith.constant 0 : i32
    %c0_i32_0 = arith.constant 0 : i32
    %c0_i32_1 = arith.constant 0 : i32
    return %c0_i32, %c0_i32_0 : i32, i32
  }
  func.func @transform_4(%arg0: i32) -> (i32, i32) {
    %c0_i32 = arith.constant 0 : i32
    %c0_i32_0 = arith.constant 0 : i32
    %c0_i32_1 = arith.constant 0 : i32
    return %c0_i32, %c0_i32_0 : i32, i32
  }
}

module attributes {stable_mosaic.version = 11 : i64} {
  func.func @_fused_matmul_kernel(%arg0: i32, %arg1: memref<4x256xbf16, #tpu.memory_space<vmem>>, %arg2: memref<256x392xbf16, #tpu.memory_space<vmem>>, %arg3: memref<4x1xf32, #tpu.memory_space<vmem>>, %arg4: memref<4x1xf32, #tpu.memory_space<vmem>>, %arg5: memref<4x392xf32, #tpu.memory_space<vmem>>) attributes {dimension_semantics = [#tpu.dimension_semantics<arbitrary>], iteration_bounds = array<i64: 1>, scalar_prefetch = 0 : i64, scratch_operands = 0 : i64, tpu.core_type = #tpu.core_type<tc>, window_params = [{pipeline_mode = #tpu.pipeline_mode<synchronous>, transform_indices = @transform_0, window_bounds = array<i64: 4, 256>}, {pipeline_mode = #tpu.pipeline_mode<synchronous>, transform_indices = @transform_1, window_bounds = array<i64: 256, 392>}, {pipeline_mode = #tpu.pipeline_mode<synchronous>, transform_indices = @transform_2, window_bounds = array<i64: 4, 1>}, {pipeline_mode = #tpu.pipeline_mode<synchronous>, transform_indices = @transform_3, window_bounds = array<i64: 4, 1>}, {pipeline_mode = #tpu.pipeline_mode<synchronous>, transform_indices = @transform_4, window_bounds = array<i64: 4, 392>}]} {
    %c0 = arith.constant 0 : index
    %c0_0 = arith.constant 0 : index
    %0 = vector.load %arg1[%c0, %c0_0] : memref<4x256xbf16, #tpu.memory_space<vmem>>, vector<4x256xbf16>
    %c0_1 = arith.constant 0 : index
    %c0_2 = arith.constant 0 : index
    %1 = vector.load %arg2[%c0_1, %c0_2] : memref<256x392xbf16, #tpu.memory_space<vmem>>, vector<256x392xbf16>
    %cst = arith.constant dense<0.000000e+00> : vector<4x392xf32>
    %2 = tpu.matmul %0, %1, %cst {dimension_numbers = #tpu.dot_dimension_numbers<[1], [0], [0], [1], [0, 0, 1, 1], [], []>} : vector<4x256xbf16>, vector<256x392xbf16>, vector<4x392xf32> -> vector<4x392xf32>
    %c0_3 = arith.constant 0 : index
    %c0_4 = arith.constant 0 : index
    %3 = vector.load %arg3[%c0_3, %c0_4] : memref<4x1xf32, #tpu.memory_space<vmem>>, vector<4x1xf32>
    %4 = vector.broadcast %3 : vector<4x1xf32> to vector<4x392xf32>
    %5 = arith.mulf %2, %4 : vector<4x392xf32>
    %c0_5 = arith.constant 0 : index
    %c0_6 = arith.constant 0 : index
    %6 = vector.load %arg4[%c0_5, %c0_6] : memref<4x1xf32, #tpu.memory_space<vmem>>, vector<4x1xf32>
    %7 = vector.broadcast %6 : vector<4x1xf32> to vector<4x392xf32>
    %8 = arith.addf %5, %7 : vector<4x392xf32>
    %9 = arith.negf %8 : vector<4x392xf32>
    %10 = math.exp %9 : vector<4x392xf32>
    %cst_7 = arith.constant 1.000000e+00 : f32
    %11 = vector.broadcast %cst_7 : f32 to vector<4x392xf32>
    %12 = arith.addf %11, %10 : vector<4x392xf32>
    %13 = arith.divf %11, %12 : vector<4x392xf32>
    %c0_8 = arith.constant 0 : index
    %c0_9 = arith.constant 0 : index
    %14 = vector.load %arg5[%c0_8, %c0_9] : memref<4x392xf32, #tpu.memory_space<vmem>>, vector<4x392xf32>
    tpu.vector_store %arg5[%c0_8, %c0_9], %13 {strides = array<i32>} : memref<4x392xf32, #tpu.memory_space<vmem>>, vector<4x392xf32>,
    return
  }
  func.func @transform_0(%arg0: i32) -> (i32, i32) {
    %c0_i32 = arith.constant 0 : i32
    %c0_i32_0 = arith.constant 0 : i32
    %c0_i32_1 = arith.constant 0 : i32
    return %c0_i32, %c0_i32_0 : i32, i32
  }
  func.func @transform_1(%arg0: i32) -> (i32, i32) {
    %c0_i32 = arith.constant 0 : i32
    %c0_i32_0 = arith.constant 0 : i32
    %c0_i32_1 = arith.constant 0 : i32
    return %c0_i32, %c0_i32_0 : i32, i32
  }
  func.func @transform_2(%arg0: i32) -> (i32, i32) {
    %c0_i32 = arith.constant 0 : i32
    %c0_i32_0 = arith.constant 0 : i32
    %c0_i32_1 = arith.constant 0 : i32
    return %c0_i32, %c0_i32_0 : i32, i32
  }
  func.func @transform_3(%arg0: i32) -> (i32, i32) {
    %c0_i32 = arith.constant 0 : i32
    %c0_i32_0 = arith.constant 0 : i32
    %c0_i32_1 = arith.constant 0 : i32
    return %c0_i32, %c0_i32_0 : i32, i32
  }
  func.func @transform_4(%arg0: i32) -> (i32, i32) {
    %c0_i32 = arith.constant 0 : i32
    %c0_i32_0 = arith.constant 0 : i32
    %c0_i32_1 = arith.constant 0 : i32
    return %c0_i32, %c0_i32_0 : i32, i32
  }
}

</mosaic_0001>

<llo_original>
// kernel: auto_encoder_forward.6
$region0: #{auto_encoder_forward.6}
  #allocation0 [shape = 'u32[]', space=smem, size = 0x4, offset = 0x4, fixed_abs, tag = 'smem constant byte address 0x4 - core index']
  #allocation1 [shape = 'u32[144,128]{1,0:T(1,128)}', space=vmem, size = 0x12000, scoped, tag = 'internal scratch']
  %s0 = inlined_call_operand.vmem [shape: bf16[32,32], index: 0, kind: input, shape index: {}]
  %s1 = inlined_call_operand.vmem [shape: bf16[32,1568], index: 1, kind: input, shape index: {}]
  %s2 = inlined_call_operand.vmem [shape: f32[32,1], index: 2, kind: input, shape index: {}]
  %s3 = inlined_call_operand.vmem [shape: f32[32,1], index: 3, kind: input, shape index: {}]
  %s4 = inlined_call_operand.vmem [shape: bf16[32,1568], index: 4, kind: output, shape index: {}]
  %s5 = sld [smem:[#allocation0]]
  $region26: #{auto_encoder_forward.6} parent=0
    _
  %s7 = ssub.s32 1, %s5
  %s8 = scalar_select 0, %s7, %s5
  // Predicated region
  $region2: #{auto_encoder_forward.6} parent=0 // pred_check
    _
  $region3: #{auto_encoder_forward.6} parent=0 // pred_check_branch
    %10 = sbr.rel (0) target = $region5
  $region4: #{auto_encoder_forward.6} parent=0 // pred_region
    _
  $region5: #{auto_encoder_forward.6} parent=0 // pred_fallthru
    _
  // Predicated region
  $region6: #{auto_encoder_forward.6} parent=0 // pred_check
    _
  $region7: #{auto_encoder_forward.6} parent=0 // pred_check_branch
    %12 = sbr.rel (0) target = $region9
  $region8: #{auto_encoder_forward.6} parent=0 // pred_region
    _
  $region9: #{auto_encoder_forward.6} parent=0 // pred_fallthru
    _
  // Predicated region
  $region10: #{auto_encoder_forward.6} parent=0 // pred_check
    _
  $region11: #{auto_encoder_forward.6} parent=0 // pred_check_branch
    %14 = sbr.rel (0) target = $region13
  $region12: #{auto_encoder_forward.6} parent=0 // pred_region
    _
  $region13: #{auto_encoder_forward.6} parent=0 // pred_fallthru
    _
  // Predicated region
  $region14: #{auto_encoder_forward.6} parent=0 // pred_check
    _
  $region15: #{auto_encoder_forward.6} parent=0 // pred_check_branch
    %16 = sbr.rel (0) target = $region17
  $region16: #{auto_encoder_forward.6} parent=0 // pred_region
    _
  $region17: #{auto_encoder_forward.6} parent=0 // pred_fallthru
    _
  %v18 = vld [vmem:[%s0] sm:$0xf]
  %v19 = vld [vmem:[%s0 + $0x4] sm:$0xf]
  %v20 = vld [vmem:[%s0 + $0x8] sm:$0xf]
  %v21 = vld [vmem:[%s0 + $0xc] sm:$0xf]
  %v22 = vld [vmem:[%s1] sm:$0xff]
  %v23 = vld [vmem:[%s1 + $0x8] sm:$0xff]
  %v24 = vld [vmem:[%s1 + $0x10] sm:$0xff]
  %v25 = vld [vmem:[%s1 + $0x18] sm:$0xff]
  %v26 = vld [vmem:[%s1 + $0x20] sm:$0xff]
  %v27 = vld [vmem:[%s1 + $0x28] sm:$0xff]
  %v28 = vld [vmem:[%s1 + $0x30] sm:$0xf]
  %v29 = vld [vmem:[%s1 + $0x34] sm:$0xff]
  %v30 = vld [vmem:[%s1 + $0x3c] sm:$0xff]
  %v31 = vld [vmem:[%s1 + $0x44] sm:$0xff]
  %v32 = vld [vmem:[%s1 + $0x4c] sm:$0xff]
  %v33 = vld [vmem:[%s1 + $0x54] sm:$0xff]
  %v34 = vld [vmem:[%s1 + $0x5c] sm:$0xff]
  %v35 = vld [vmem:[%s1 + $0x64] sm:$0xf]
  %v36 = vld [vmem:[%s1 + $0x68] sm:$0xff]
  %v37 = vld [vmem:[%s1 + $0x70] sm:$0xff]
  %v38 = vld [vmem:[%s1 + $0x78] sm:$0xff]
  %v39 = vld [vmem:[%s1 + $0x80] sm:$0xff]
  %v40 = vld [vmem:[%s1 + $0x88] sm:$0xff]
  %v41 = vld [vmem:[%s1 + $0x90] sm:$0xff]
  %v42 = vld [vmem:[%s1 + $0x98] sm:$0xf]
  %v43 = vld [vmem:[%s1 + $0x9c] sm:$0xff]
  %v44 = vld [vmem:[%s1 + $0xa4] sm:$0xff]
  %v45 = vld [vmem:[%s1 + $0xac] sm:$0xff]
  %v46 = vld [vmem:[%s1 + $0xb4] sm:$0xff]
  %v47 = vld [vmem:[%s1 + $0xbc] sm:$0xff]
  %v48 = vld [vmem:[%s1 + $0xc4] sm:$0xff]
  %v49 = vld [vmem:[%s1 + $0xcc] sm:$0xf]
  %v54 = vunpack.c.l.b16 %v18
  %v55 = vunpack.c.l.b16 %v19
  %v56 = vunpack.c.l.b16 %v20
  %v57 = vunpack.c.l.b16 %v21
  %v58 = vpack.c.b16 %v55, %v54
  %v59 = vpack.c.b16 %v57, %v56
  %v88 = vunpack.c.l.b16 %v22
  %v89 = vunpack.c.h.b16 %v22
  %v90 = vunpack.c.l.b16 %v23
  %v91 = vunpack.c.h.b16 %v23
  %v92 = vunpack.c.l.b16 %v24
  %v93 = vunpack.c.h.b16 %v24
  %v94 = vunpack.c.l.b16 %v25
  %v95 = vunpack.c.h.b16 %v25
  %v96 = vunpack.c.l.b16 %v26
  %v97 = vunpack.c.h.b16 %v26
  %v98 = vunpack.c.l.b16 %v27
  %v99 = vunpack.c.h.b16 %v27
  %v100 = vunpack.c.l.b16 %v28
  %v101 = vunpack.c.l.b16 %v29
  %v102 = vunpack.c.h.b16 %v29
  %v103 = vunpack.c.l.b16 %v30
  %v104 = vunpack.c.h.b16 %v30
  %v105 = vunpack.c.l.b16 %v31
  %v106 = vunpack.c.h.b16 %v31
  %v107 = vunpack.c.l.b16 %v32
  %v108 = vunpack.c.h.b16 %v32
  %v109 = vunpack.c.l.b16 %v33
  %v110 = vunpack.c.h.b16 %v33
  %v111 = vunpack.c.l.b16 %v34
  %v112 = vunpack.c.h.b16 %v34
  %v113 = vunpack.c.l.b16 %v35
  %v114 = vunpack.c.l.b16 %v36
  %v115 = vunpack.c.h.b16 %v36
  %v116 = vunpack.c.l.b16 %v37
  %v117 = vunpack.c.h.b16 %v37
  %v118 = vunpack.c.l.b16 %v38
  %v119 = vunpack.c.h.b16 %v38
  %v120 = vunpack.c.l.b16 %v39
  %v121 = vunpack.c.h.b16 %v39
  %v122 = vunpack.c.l.b16 %v40
  %v123 = vunpack.c.h.b16 %v40
  %v124 = vunpack.c.l.b16 %v41
  %v125 = vunpack.c.h.b16 %v41
  %v126 = vunpack.c.l.b16 %v42
  %v127 = vunpack.c.l.b16 %v43
  %v128 = vunpack.c.h.b16 %v43
  %v129 = vunpack.c.l.b16 %v44
  %v130 = vunpack.c.h.b16 %v44
  %v131 = vunpack.c.l.b16 %v45
  %v132 = vunpack.c.h.b16 %v45
  %v133 = vunpack.c.l.b16 %v46
  %v134 = vunpack.c.h.b16 %v46
  %v135 = vunpack.c.l.b16 %v47
  %v136 = vunpack.c.h.b16 %v47
  %v137 = vunpack.c.l.b16 %v48
  %v138 = vunpack.c.h.b16 %v48
  %v139 = vunpack.c.l.b16 %v49
  %v140 = vpack.c.b16 %v101, %v88
  %v141 = vpack.c.b16 %v102, %v89
  %v142 = vpack.c.b16 %v103, %v90
  %v143 = vpack.c.b16 %v104, %v91
  %v144 = vpack.c.b16 %v105, %v92
  %v145 = vpack.c.b16 %v106, %v93
  %v146 = vpack.c.b16 %v107, %v94
  %v147 = vpack.c.b16 %v108, %v95
  %v148 = vpack.c.b16 %v109, %v96
  %v149 = vpack.c.b16 %v110, %v97
  %v150 = vpack.c.b16 %v111, %v98
  %v151 = vpack.c.b16 %v112, %v99
  %v152 = vpack.c.b16 %v113, %v100
  %v153 = vpack.c.b16 %v127, %v114
  %v154 = vpack.c.b16 %v128, %v115
  %v155 = vpack.c.b16 %v129, %v116
  %v156 = vpack.c.b16 %v130, %v117
  %v157 = vpack.c.b16 %v131, %v118
  %v158 = vpack.c.b16 %v132, %v119
  %v159 = vpack.c.b16 %v133, %v120
  %v160 = vpack.c.b16 %v134, %v121
  %v161 = vpack.c.b16 %v135, %v122
  %v162 = vpack.c.b16 %v136, %v123
  %v163 = vpack.c.b16 %v137, %v124
  %v164 = vpack.c.b16 %v138, %v125
  %v165 = vpack.c.b16 %v139, %v126
  %vm192 = vcmask 261120
  %v194 = vsel %vm192, %v58, 0
  %v197 = vsel %vm192, %v59, 0
  %199 = vmatprep.subr.bf16.mxu0 0
  %200 = vmatpush1.bf16.msra.mxu0 0
  %201 = vmatprep.subr.bf16.mxu0 0
  %202 = vmatpush1.bf16.msra.mxu0 0
  %203 = vmatprep.subr.bf16.mxu0 0
  %204 = vmatpush1.bf16.msra.mxu0 0
  %205 = vmatprep.subr.bf16.mxu0 0
  %206 = vmatpush1.bf16.msra.mxu0 0
  %207 = vmatprep.subr.bf16.mxu0 0
  %208 = vmatpush1.bf16.msra.mxu0 0
  %209 = vmatprep.subr.bf16.mxu0 0
  %210 = vmatpush1.bf16.msra.mxu0 0
  %211 = vmatprep.subr.bf16.mxu0 %v154
  %212 = vmatpush1.bf16.msra.mxu0 %v153
  %213 = vmatprep.subr.bf16.mxu0 %v141
  %214 = vmatpush1.bf16.msra.mxu0 %v140
  %215 = vmatprep.subr.bf16.mxu0 0
  %216 = vmatpush2.bf16.msra.mxu0 0
  %217 = vmatprep.subr.bf16.mxu0 0
  %218 = vmatpush2.bf16.msra.mxu0 0
  %219 = vmatprep.subr.bf16.mxu0 0
  %220 = vmatpush2.bf16.msra.mxu0 0
  %221 = vmatprep.subr.bf16.mxu0 0
  %222 = vmatpush2.bf16.msra.mxu0 0
  %223 = vmatprep.subr.bf16.mxu0 0
  %224 = vmatpush2.bf16.msra.mxu0 0
  %225 = vmatprep.subr.bf16.mxu0 0
  %226 = vmatpush2.bf16.msra.mxu0 0
  %227 = vmatprep.subr.bf16.mxu0 0
  %228 = vmatpush2.bf16.msra.mxu0 0
  %229 = vmatprep.subr.bf16.mxu0 0
  %230 = vmatpush2.bf16.msra.mxu0 0
  %231 = vmatprep.mubr.bf16.mxu0 0
  %232 = vmatmul.mubr.bf16.gmra.mxu0 %v194
  %v233 = vpop.f32.mrf.mxu0
  %v234 = vadd.f32 0.0, %v233
  %v235 = vpop.f32.mrf.mxu0
  %v236 = vadd.f32 0.0, %v235
  %v237 = vpop.f32.mrf.mxu0
  %v238 = vadd.f32 0.0, %v237
  %v239 = vpop.f32.mrf.mxu0
  %v240 = vadd.f32 0.0, %v239
  %241 = vmatprep.mubr.bf16.mxu0 0
  %242 = vmatmul.mubr.bf16.gmra.mxu0 %v197
  %v243 = vpop.f32.mrf.mxu0
  %v244 = vadd.f32 0.0, %v243
  %v245 = vpop.f32.mrf.mxu0
  %v246 = vadd.f32 0.0, %v245
  %v247 = vpop.f32.mrf.mxu0
  %v248 = vadd.f32 0.0, %v247
  %v249 = vpop.f32.mrf.mxu0
  %v250 = vadd.f32 0.0, %v249
  %251 = vdwg.mxu0
  %252 = vmatprep.subr.bf16.mxu0 0
  %253 = vmatpush1.bf16.msra.mxu0 0
  %254 = vmatprep.subr.bf16.mxu0 0
  %255 = vmatpush1.bf16.msra.mxu0 0
  %256 = vmatprep.subr.bf16.mxu0 0
  %257 = vmatpush1.bf16.msra.mxu0 0
  %258 = vmatprep.subr.bf16.mxu0 0
  %259 = vmatpush1.bf16.msra.mxu0 0
  %260 = vmatprep.subr.bf16.mxu0 0
  %261 = vmatpush1.bf16.msra.mxu0 0
  %262 = vmatprep.subr.bf16.mxu0 0
  %263 = vmatpush1.bf16.msra.mxu0 0
  %264 = vmatprep.subr.bf16.mxu0 %v156
  %265 = vmatpush1.bf16.msra.mxu0 %v155
  %266 = vmatprep.subr.bf16.mxu0 %v143
  %267 = vmatpush1.bf16.msra.mxu0 %v142
  %268 = vmatprep.subr.bf16.mxu0 0
  %269 = vmatpush2.bf16.msra.mxu0 0
  %270 = vmatprep.subr.bf16.mxu0 0
  %271 = vmatpush2.bf16.msra.mxu0 0
  %272 = vmatprep.subr.bf16.mxu0 0
  %273 = vmatpush2.bf16.msra.mxu0 0
  %274 = vmatprep.subr.bf16.mxu0 0
  %275 = vmatpush2.bf16.msra.mxu0 0
  %276 = vmatprep.subr.bf16.mxu0 0
  %277 = vmatpush2.bf16.msra.mxu0 0
  %278 = vmatprep.subr.bf16.mxu0 0
  %279 = vmatpush2.bf16.msra.mxu0 0
  %280 = vmatprep.subr.bf16.mxu0 0
  %281 = vmatpush2.bf16.msra.mxu0 0
  %282 = vmatprep.subr.bf16.mxu0 0
  %283 = vmatpush2.bf16.msra.mxu0 0
  %284 = vmatprep.mubr.bf16.mxu0 0
  %285 = vmatmul.mubr.bf16.gmra.mxu0 %v194
  %v286 = vpop.f32.mrf.mxu0
  %v287 = vadd.f32 0.0, %v286
  %v288 = vpop.f32.mrf.mxu0
  %v289 = vadd.f32 0.0, %v288
  %v290 = vpop.f32.mrf.mxu0
  %v291 = vadd.f32 0.0, %v290
  %v292 = vpop.f32.mrf.mxu0
  %v293 = vadd.f32 0.0, %v292
  %294 = vmatprep.mubr.bf16.mxu0 0
  %295 = vmatmul.mubr.bf16.gmra.mxu0 %v197
  %v296 = vpop.f32.mrf.mxu0
  %v297 = vadd.f32 0.0, %v296
  %v298 = vpop.f32.mrf.mxu0
  %v299 = vadd.f32 0.0, %v298
  %v300 = vpop.f32.mrf.mxu0
  %v301 = vadd.f32 0.0, %v300
  %v302 = vpop.f32.mrf.mxu0
  %v303 = vadd.f32 0.0, %v302
  %304 = vdwg.mxu0
  %305 = vmatprep.subr.bf16.mxu0 0
  %306 = vmatpush1.bf16.msra.mxu0 0
  %307 = vmatprep.subr.bf16.mxu0 0
  %308 = vmatpush1.bf16.msra.mxu0 0
  %309 = vmatprep.subr.bf16.mxu0 0
  %310 = vmatpush1.bf16.msra.mxu0 0
  %311 = vmatprep.subr.bf16.mxu0 0
  %312 = vmatpush1.bf16.msra.mxu0 0
  %313 = vmatprep.subr.bf16.mxu0 0
  %314 = vmatpush1.bf16.msra.mxu0 0
  %315 = vmatprep.subr.bf16.mxu0 0
  %316 = vmatpush1.bf16.msra.mxu0 0
  %317 = vmatprep.subr.bf16.mxu0 %v158
  %318 = vmatpush1.bf16.msra.mxu0 %v157
  %319 = vmatprep.subr.bf16.mxu0 %v145
  %320 = vmatpush1.bf16.msra.mxu0 %v144
  %321 = vmatprep.subr.bf16.mxu0 0
  %322 = vmatpush2.bf16.msra.mxu0 0
  %323 = vmatprep.subr.bf16.mxu0 0
  %324 = vmatpush2.bf16.msra.mxu0 0
  %325 = vmatprep.subr.bf16.mxu0 0
  %326 = vmatpush2.bf16.msra.mxu0 0
  %327 = vmatprep.subr.bf16.mxu0 0
  %328 = vmatpush2.bf16.msra.mxu0 0
  %329 = vmatprep.subr.bf16.mxu0 0
  %330 = vmatpush2.bf16.msra.mxu0 0
  %331 = vmatprep.subr.bf16.mxu0 0
  %332 = vmatpush2.bf16.msra.mxu0 0
  %333 = vmatprep.subr.bf16.mxu0 0
  %334 = vmatpush2.bf16.msra.mxu0 0
  %335 = vmatprep.subr.bf16.mxu0 0
  %336 = vmatpush2.bf16.msra.mxu0 0
  %337 = vmatprep.mubr.bf16.mxu0 0
  %338 = vmatmul.mubr.bf16.gmra.mxu0 %v194
  %v339 = vpop.f32.mrf.mxu0
  %v340 = vadd.f32 0.0, %v339
  %v341 = vpop.f32.mrf.mxu0
  %v342 = vadd.f32 0.0, %v341
  %v343 = vpop.f32.mrf.mxu0
  %v344 = vadd.f32 0.0, %v343
  %v345 = vpop.f32.mrf.mxu0
  %v346 = vadd.f32 0.0, %v345
  %347 = vmatprep.mubr.bf16.mxu0 0
  %348 = vmatmul.mubr.bf16.gmra.mxu0 %v197
  %v349 = vpop.f32.mrf.mxu0
  %v350 = vadd.f32 0.0, %v349
  %v351 = vpop.f32.mrf.mxu0
  %v352 = vadd.f32 0.0, %v351
  %v353 = vpop.f32.mrf.mxu0
  %v354 = vadd.f32 0.0, %v353
  %v355 = vpop.f32.mrf.mxu0
  %v356 = vadd.f32 0.0, %v355
  %357 = vdwg.mxu0
  %358 = vmatprep.subr.bf16.mxu0 0
  %359 = vmatpush1.bf16.msra.mxu0 0
  %360 = vmatprep.subr.bf16.mxu0 0
  %361 = vmatpush1.bf16.msra.mxu0 0
  %362 = vmatprep.subr.bf16.mxu0 0
  %363 = vmatpush1.bf16.msra.mxu0 0
  %364 = vmatprep.subr.bf16.mxu0 0
  %365 = vmatpush1.bf16.msra.mxu0 0
  %366 = vmatprep.subr.bf16.mxu0 0
  %367 = vmatpush1.bf16.msra.mxu0 0
  %368 = vmatprep.subr.bf16.mxu0 0
  %369 = vmatpush1.bf16.msra.mxu0 0
  %370 = vmatprep.subr.bf16.mxu0 %v160
  %371 = vmatpush1.bf16.msra.mxu0 %v159
  %372 = vmatprep.subr.bf16.mxu0 %v147
  %373 = vmatpush1.bf16.msra.mxu0 %v146
  %374 = vmatprep.subr.bf16.mxu0 0
  %375 = vmatpush2.bf16.msra.mxu0 0
  %376 = vmatprep.subr.bf16.mxu0 0
  %377 = vmatpush2.bf16.msra.mxu0 0
  %378 = vmatprep.subr.bf16.mxu0 0
  %379 = vmatpush2.bf16.msra.mxu0 0
  %380 = vmatprep.subr.bf16.mxu0 0
  %381 = vmatpush2.bf16.msra.mxu0 0
  %382 = vmatprep.subr.bf16.mxu0 0
  %383 = vmatpush2.bf16.msra.mxu0 0
  %384 = vmatprep.subr.bf16.mxu0 0
  %385 = vmatpush2.bf16.msra.mxu0 0
  %386 = vmatprep.subr.bf16.mxu0 0
  %387 = vmatpush2.bf16.msra.mxu0 0
  %388 = vmatprep.subr.bf16.mxu0 0
  %389 = vmatpush2.bf16.msra.mxu0 0
  %390 = vmatprep.mubr.bf16.mxu0 0
  %391 = vmatmul.mubr.bf16.gmra.mxu0 %v194
  %v392 = vpop.f32.mrf.mxu0
  %v393 = vadd.f32 0.0, %v392
  %v394 = vpop.f32.mrf.mxu0
  %v395 = vadd.f32 0.0, %v394
  %v396 = vpop.f32.mrf.mxu0
  %v397 = vadd.f32 0.0, %v396
  %v398 = vpop.f32.mrf.mxu0
  %v399 = vadd.f32 0.0, %v398
  %400 = vmatprep.mubr.bf16.mxu0 0
  %401 = vmatmul.mubr.bf16.gmra.mxu0 %v197
  %v402 = vpop.f32.mrf.mxu0
  %v403 = vadd.f32 0.0, %v402
  %v404 = vpop.f32.mrf.mxu0
  %v405 = vadd.f32 0.0, %v404
  %v406 = vpop.f32.mrf.mxu0
  %v407 = vadd.f32 0.0, %v406
  %v408 = vpop.f32.mrf.mxu0
  %v409 = vadd.f32 0.0, %v408
  %410 = vdwg.mxu0
  %411 = vmatprep.subr.bf16.mxu0 0
  %412 = vmatpush1.bf16.msra.mxu0 0
  %413 = vmatprep.subr.bf16.mxu0 0
  %414 = vmatpush1.bf16.msra.mxu0 0
  %415 = vmatprep.subr.bf16.mxu0 0
  %416 = vmatpush1.bf16.msra.mxu0 0
  %417 = vmatprep.subr.bf16.mxu0 0
  %418 = vmatpush1.bf16.msra.mxu0 0
  %419 = vmatprep.subr.bf16.mxu0 0
  %420 = vmatpush1.bf16.msra.mxu0 0
  %421 = vmatprep.subr.bf16.mxu0 0
  %422 = vmatpush1.bf16.msra.mxu0 0
  %423 = vmatprep.subr.bf16.mxu0 %v162
  %424 = vmatpush1.bf16.msra.mxu0 %v161
  %425 = vmatprep.subr.bf16.mxu0 %v149
  %426 = vmatpush1.bf16.msra.mxu0 %v148
  %427 = vmatprep.subr.bf16.mxu0 0
  %428 = vmatpush2.bf16.msra.mxu0 0
  %429 = vmatprep.subr.bf16.mxu0 0
  %430 = vmatpush2.bf16.msra.mxu0 0
  %431 = vmatprep.subr.bf16.mxu0 0
  %432 = vmatpush2.bf16.msra.mxu0 0
  %433 = vmatprep.subr.bf16.mxu0 0
  %434 = vmatpush2.bf16.msra.mxu0 0
  %435 = vmatprep.subr.bf16.mxu0 0
  %436 = vmatpush2.bf16.msra.mxu0 0
  %437 = vmatprep.subr.bf16.mxu0 0
  %438 = vmatpush2.bf16.msra.mxu0 0
  %439 = vmatprep.subr.bf16.mxu0 0
  %440 = vmatpush2.bf16.msra.mxu0 0
  %441 = vmatprep.subr.bf16.mxu0 0
  %442 = vmatpush2.bf16.msra.mxu0 0
  %443 = vmatprep.mubr.bf16.mxu0 0
  %444 = vmatmul.mubr.bf16.gmra.mxu0 %v194
  %v445 = vpop.f32.mrf.mxu0
  %v446 = vadd.f32 0.0, %v445
  %v447 = vpop.f32.mrf.mxu0
  %v448 = vadd.f32 0.0, %v447
  %v449 = vpop.f32.mrf.mxu0
  %v450 = vadd.f32 0.0, %v449
  %v451 = vpop.f32.mrf.mxu0
  %v452 = vadd.f32 0.0, %v451
  %453 = vmatprep.mubr.bf16.mxu0 0
  %454 = vmatmul.mubr.bf16.gmra.mxu0 %v197
  %v455 = vpop.f32.mrf.mxu0
  %v456 = vadd.f32 0.0, %v455
  %v457 = vpop.f32.mrf.mxu0
  %v458 = vadd.f32 0.0, %v457
  %v459 = vpop.f32.mrf.mxu0
  %v460 = vadd.f32 0.0, %v459
  %v461 = vpop.f32.mrf.mxu0
  %v462 = vadd.f32 0.0, %v461
  %463 = vdwg.mxu0
  %464 = vmatprep.subr.bf16.mxu0 0
  %465 = vmatpush1.bf16.msra.mxu0 0
  %466 = vmatprep.subr.bf16.mxu0 0
  %467 = vmatpush1.bf16.msra.mxu0 0
  %468 = vmatprep.subr.bf16.mxu0 0
  %469 = vmatpush1.bf16.msra.mxu0 0
  %470 = vmatprep.subr.bf16.mxu0 0
  %471 = vmatpush1.bf16.msra.mxu0 0
  %472 = vmatprep.subr.bf16.mxu0 0
  %473 = vmatpush1.bf16.msra.mxu0 0
  %474 = vmatprep.subr.bf16.mxu0 0
  %475 = vmatpush1.bf16.msra.mxu0 0
  %476 = vmatprep.subr.bf16.mxu0 %v164
  %477 = vmatpush1.bf16.msra.mxu0 %v163
  %478 = vmatprep.subr.bf16.mxu0 %v151
  %479 = vmatpush1.bf16.msra.mxu0 %v150
  %480 = vmatprep.subr.bf16.mxu0 0
  %481 = vmatpush2.bf16.msra.mxu0 0
  %482 = vmatprep.subr.bf16.mxu0 0
  %483 = vmatpush2.bf16.msra.mxu0 0
  %484 = vmatprep.subr.bf16.mxu0 0
  %485 = vmatpush2.bf16.msra.mxu0 0
  %486 = vmatprep.subr.bf16.mxu0 0
  %487 = vmatpush2.bf16.msra.mxu0 0
  %488 = vmatprep.subr.bf16.mxu0 0
  %489 = vmatpush2.bf16.msra.mxu0 0
  %490 = vmatprep.subr.bf16.mxu0 0
  %491 = vmatpush2.bf16.msra.mxu0 0
  %492 = vmatprep.subr.bf16.mxu0 0
  %493 = vmatpush2.bf16.msra.mxu0 0
  %494 = vmatprep.subr.bf16.mxu0 0
  %495 = vmatpush2.bf16.msra.mxu0 0
  %496 = vmatprep.mubr.bf16.mxu0 0
  %497 = vmatmul.mubr.bf16.gmra.mxu0 %v194
  %v498 = vpop.f32.mrf.mxu0
  %v499 = vadd.f32 0.0, %v498
  %v500 = vpop.f32.mrf.mxu0
  %v501 = vadd.f32 0.0, %v500
  %v502 = vpop.f32.mrf.mxu0
  %v503 = vadd.f32 0.0, %v502
  %v504 = vpop.f32.mrf.mxu0
  %v505 = vadd.f32 0.0, %v504
  %506 = vmatprep.mubr.bf16.mxu0 0
  %507 = vmatmul.mubr.bf16.gmra.mxu0 %v197
  %v508 = vpop.f32.mrf.mxu0
  %v509 = vadd.f32 0.0, %v508
  %v510 = vpop.f32.mrf.mxu0
  %v511 = vadd.f32 0.0, %v510
  %v512 = vpop.f32.mrf.mxu0
  %v513 = vadd.f32 0.0, %v512
  %v514 = vpop.f32.mrf.mxu0
  %v515 = vadd.f32 0.0, %v514
  %516 = vdwg.mxu0
  %517 = vmatprep.subr.bf16.mxu0 0
  %518 = vmatpush1.bf16.msra.mxu0 0
  %519 = vmatprep.subr.bf16.mxu0 0
  %520 = vmatpush1.bf16.msra.mxu0 0
  %521 = vmatprep.subr.bf16.mxu0 0
  %522 = vmatpush1.bf16.msra.mxu0 0
  %523 = vmatprep.subr.bf16.mxu0 0
  %524 = vmatpush1.bf16.msra.mxu0 0
  %525 = vmatprep.subr.bf16.mxu0 0
  %526 = vmatpush1.bf16.msra.mxu0 0
  %527 = vmatprep.subr.bf16.mxu0 0
  %528 = vmatpush1.bf16.msra.mxu0 0
  %529 = vmatprep.subr.bf16.mxu0 0
  %530 = vmatpush1.bf16.msra.mxu0 %v165
  %531 = vmatprep.subr.bf16.mxu0 0
  %532 = vmatpush1.bf16.msra.mxu0 %v152
  %533 = vmatprep.subr.bf16.mxu0 0
  %534 = vmatpush2.bf16.msra.mxu0 0
  %535 = vmatprep.subr.bf16.mxu0 0
  %536 = vmatpush2.bf16.msra.mxu0 0
  %537 = vmatprep.subr.bf16.mxu0 0
  %538 = vmatpush2.bf16.msra.mxu0 0
  %539 = vmatprep.subr.bf16.mxu0 0
  %540 = vmatpush2.bf16.msra.mxu0 0
  %541 = vmatprep.subr.bf16.mxu0 0
  %542 = vmatpush2.bf16.msra.mxu0 0
  %543 = vmatprep.subr.bf16.mxu0 0
  %544 = vmatpush2.bf16.msra.mxu0 0
  %545 = vmatprep.subr.bf16.mxu0 0
  %546 = vmatpush2.bf16.msra.mxu0 0
  %547 = vmatprep.subr.bf16.mxu0 0
  %548 = vmatpush2.bf16.msra.mxu0 0
  %549 = vmatprep.mubr.bf16.mxu0 0
  %550 = vmatmul.mubr.bf16.gmra.mxu0 %v194
  %v551 = vpop.f32.mrf.mxu0
  %v552 = vadd.f32 0.0, %v551
  %v553 = vpop.f32.mrf.mxu0
  %v554 = vpop.f32.mrf.mxu0
  %v555 = vadd.f32 0.0, %v554
  %v556 = vpop.f32.mrf.mxu0
  %557 = vmatprep.mubr.bf16.mxu0 0
  %558 = vmatmul.mubr.bf16.gmra.mxu0 %v197
  %v559 = vpop.f32.mrf.mxu0
  %v560 = vadd.f32 0.0, %v559
  %v561 = vpop.f32.mrf.mxu0
  %v562 = vpop.f32.mrf.mxu0
  %v563 = vadd.f32 0.0, %v562
  %v564 = vpop.f32.mrf.mxu0
  %565 = vdwg.mxu0
  %v566 = vld [vmem:[%s2] sm:$0xff]
  %v567 = vld [vmem:[%s2 + $0x8] sm:$0xff]
  %v568 = vld [vmem:[%s2 + $0x10] sm:$0xff]
  %v569 = vld [vmem:[%s2 + $0x18] sm:$0xff]
  %571 = vset.pattern.permute.xlu0 0
  %572 = vperm.xlu0 %571, %v566
  %v573 = vpop.permute.xlu0 %572
  %576 = vset.pattern.permute.xlu0 0
  %577 = vperm.xlu0 %576, %v567
  %v578 = vpop.permute.xlu0 %577
  %581 = vset.pattern.permute.xlu0 0
  %582 = vperm.xlu0 %581, %v568
  %v583 = vpop.permute.xlu0 %582
  %586 = vset.pattern.permute.xlu0 0
  %587 = vperm.xlu0 %586, %v569
  %v588 = vpop.permute.xlu0 %587
  %v590 = vmul.f32 %v234, %v573
  %v591 = vmul.f32 %v236, %v573
  %v592 = vmul.f32 %v287, %v573
  %v593 = vmul.f32 %v289, %v573
  %v594 = vmul.f32 %v340, %v573
  %v595 = vmul.f32 %v342, %v573
  %v596 = vmul.f32 %v393, %v573
  %v597 = vmul.f32 %v395, %v573
  %v598 = vmul.f32 %v446, %v573
  %v599 = vmul.f32 %v448, %v573
  %v600 = vmul.f32 %v499, %v573
  %v601 = vmul.f32 %v501, %v573
  %v602 = vmul.f32 %v552, %v573
  %v603 = vmul.f32 %v238, %v578
  %v604 = vmul.f32 %v240, %v578
  %v605 = vmul.f32 %v291, %v578
  %v606 = vmul.f32 %v293, %v578
  %v607 = vmul.f32 %v344, %v578
  %v608 = vmul.f32 %v346, %v578
  %v609 = vmul.f32 %v397, %v578
  %v610 = vmul.f32 %v399, %v578
  %v611 = vmul.f32 %v450, %v578
  %v612 = vmul.f32 %v452, %v578
  %v613 = vmul.f32 %v503, %v578
  %v614 = vmul.f32 %v505, %v578
  %v615 = vmul.f32 %v555, %v578
  %v616 = vmul.f32 %v244, %v583
  %v617 = vmul.f32 %v246, %v583
  %v618 = vmul.f32 %v297, %v583
  %v619 = vmul.f32 %v299, %v583
  %v620 = vmul.f32 %v350, %v583
  %v621 = vmul.f32 %v352, %v583
  %v622 = vmul.f32 %v403, %v583
  %v623 = vmul.f32 %v405, %v583
  %v624 = vmul.f32 %v456, %v583
  %v625 = vmul.f32 %v458, %v583
  %v626 = vmul.f32 %v509, %v583
  %v627 = vmul.f32 %v511, %v583
  %v628 = vmul.f32 %v560, %v583
  %v629 = vmul.f32 %v248, %v588
  %v630 = vmul.f32 %v250, %v588
  %v631 = vmul.f32 %v301, %v588
  %v632 = vmul.f32 %v303, %v588
  %v633 = vmul.f32 %v354, %v588
  %v634 = vmul.f32 %v356, %v588
  %v635 = vmul.f32 %v407, %v588
  %v636 = vmul.f32 %v409, %v588
  %v637 = vmul.f32 %v460, %v588
  %v638 = vmul.f32 %v462, %v588
  %v639 = vmul.f32 %v513, %v588
  %v640 = vmul.f32 %v515, %v588
  %v641 = vmul.f32 %v563, %v588
  %v642 = vld [vmem:[%s3] sm:$0xff]
  %v643 = vld [vmem:[%s3 + $0x8] sm:$0xff]
  %v644 = vld [vmem:[%s3 + $0x10] sm:$0xff]
  %v645 = vld [vmem:[%s3 + $0x18] sm:$0xff]
  %647 = vset.pattern.permute.xlu0 0
  %648 = vperm.xlu0 %647, %v642
  %v649 = vpop.permute.xlu0 %648
  %652 = vset.pattern.permute.xlu0 0
  %653 = vperm.xlu0 %652, %v643
  %v654 = vpop.permute.xlu0 %653
  %657 = vset.pattern.permute.xlu0 0
  %658 = vperm.xlu0 %657, %v644
  %v659 = vpop.permute.xlu0 %658
  %662 = vset.pattern.permute.xlu0 0
  %663 = vperm.xlu0 %662, %v645
  %v664 = vpop.permute.xlu0 %663
  %v666 = vadd.f32 %v590, %v649
  %v667 = vadd.f32 %v591, %v649
  %v668 = vadd.f32 %v592, %v649
  %v669 = vadd.f32 %v593, %v649
  %v670 = vadd.f32 %v594, %v649
  %v671 = vadd.f32 %v595, %v649
  %v672 = vadd.f32 %v596, %v649
  %v673 = vadd.f32 %v597, %v649
  %v674 = vadd.f32 %v598, %v649
  %v675 = vadd.f32 %v599, %v649
  %v676 = vadd.f32 %v600, %v649
  %v677 = vadd.f32 %v601, %v649
  %v678 = vadd.f32 %v602, %v649
  %v679 = vadd.f32 %v603, %v654
  %v680 = vadd.f32 %v604, %v654
  %v681 = vadd.f32 %v605, %v654
  %v682 = vadd.f32 %v606, %v654
  %v683 = vadd.f32 %v607, %v654
  %v684 = vadd.f32 %v608, %v654
  %v685 = vadd.f32 %v609, %v654
  %v686 = vadd.f32 %v610, %v654
  %v687 = vadd.f32 %v611, %v654
  %v688 = vadd.f32 %v612, %v654
  %v689 = vadd.f32 %v613, %v654
  %v690 = vadd.f32 %v614, %v654
  %v691 = vadd.f32 %v615, %v654
  %v692 = vadd.f32 %v616, %v659
  %v693 = vadd.f32 %v617, %v659
  %v694 = vadd.f32 %v618, %v659
  %v695 = vadd.f32 %v619, %v659
  %v696 = vadd.f32 %v620, %v659
  %v697 = vadd.f32 %v621, %v659
  %v698 = vadd.f32 %v622, %v659
  %v699 = vadd.f32 %v623, %v659
  %v700 = vadd.f32 %v624, %v659
  %v701 = vadd.f32 %v625, %v659
  %v702 = vadd.f32 %v626, %v659
  %v703 = vadd.f32 %v627, %v659
  %v704 = vadd.f32 %v628, %v659
  %v705 = vadd.f32 %v629, %v664
  %v706 = vadd.f32 %v630, %v664
  %v707 = vadd.f32 %v631, %v664
  %v708 = vadd.f32 %v632, %v664
  %v709 = vadd.f32 %v633, %v664
  %v710 = vadd.f32 %v634, %v664
  %v711 = vadd.f32 %v635, %v664
  %v712 = vadd.f32 %v636, %v664
  %v713 = vadd.f32 %v637, %v664
  %v714 = vadd.f32 %v638, %v664
  %v715 = vadd.f32 %v639, %v664
  %v716 = vadd.f32 %v640, %v664
  %v717 = vadd.f32 %v641, %v664
  %v718 = vmax.f32 %v666, 0.0
  %v719 = vmax.f32 %v667, 0.0
  %v720 = vmax.f32 %v668, 0.0
  %v721 = vmax.f32 %v669, 0.0
  %v722 = vmax.f32 %v670, 0.0
  %v723 = vmax.f32 %v671, 0.0
  %v724 = vmax.f32 %v672, 0.0
  %v725 = vmax.f32 %v673, 0.0
  %v726 = vmax.f32 %v674, 0.0
  %v727 = vmax.f32 %v675, 0.0
  %v728 = vmax.f32 %v676, 0.0
  %v729 = vmax.f32 %v677, 0.0
  %v730 = vmax.f32 %v678, 0.0
  %v731 = vmax.f32 %v679, 0.0
  %v732 = vmax.f32 %v680, 0.0
  %v733 = vmax.f32 %v681, 0.0
  %v734 = vmax.f32 %v682, 0.0
  %v735 = vmax.f32 %v683, 0.0
  %v736 = vmax.f32 %v684, 0.0
  %v737 = vmax.f32 %v685, 0.0
  %v738 = vmax.f32 %v686, 0.0
  %v739 = vmax.f32 %v687, 0.0
  %v740 = vmax.f32 %v688, 0.0
  %v741 = vmax.f32 %v689, 0.0
  %v742 = vmax.f32 %v690, 0.0
  %v743 = vmax.f32 %v691, 0.0
  %v744 = vmax.f32 %v692, 0.0
  %v745 = vmax.f32 %v693, 0.0
  %v746 = vmax.f32 %v694, 0.0
  %v747 = vmax.f32 %v695, 0.0
  %v748 = vmax.f32 %v696, 0.0
  %v749 = vmax.f32 %v697, 0.0
  %v750 = vmax.f32 %v698, 0.0
  %v751 = vmax.f32 %v699, 0.0
  %v752 = vmax.f32 %v700, 0.0
  %v753 = vmax.f32 %v701, 0.0
  %v754 = vmax.f32 %v702, 0.0
  %v755 = vmax.f32 %v703, 0.0
  %v756 = vmax.f32 %v704, 0.0
  %v757 = vmax.f32 %v705, 0.0
  %v758 = vmax.f32 %v706, 0.0
  %v759 = vmax.f32 %v707, 0.0
  %v760 = vmax.f32 %v708, 0.0
  %v761 = vmax.f32 %v709, 0.0
  %v762 = vmax.f32 %v710, 0.0
  %v763 = vmax.f32 %v711, 0.0
  %v764 = vmax.f32 %v712, 0.0
  %v765 = vmax.f32 %v713, 0.0
  %v766 = vmax.f32 %v714, 0.0
  %v767 = vmax.f32 %v715, 0.0
  %v768 = vmax.f32 %v716, 0.0
  %v769 = vmax.f32 %v717, 0.0
  %v770 = vpack.c.bf16 %v731, %v718
  %v771 = vpack.c.bf16 %v732, %v719
  %v772 = vpack.c.bf16 %v733, %v720
  %v773 = vpack.c.bf16 %v734, %v721
  %v774 = vpack.c.bf16 %v735, %v722
  %v775 = vpack.c.bf16 %v736, %v723
  %v776 = vpack.c.bf16 %v737, %v724
  %v777 = vpack.c.bf16 %v738, %v725
  %v778 = vpack.c.bf16 %v739, %v726
  %v779 = vpack.c.bf16 %v740, %v727
  %v780 = vpack.c.bf16 %v741, %v728
  %v781 = vpack.c.bf16 %v742, %v729
  %v782 = vpack.c.bf16 %v743, %v730
  %v783 = vpack.c.bf16 %v757, %v744
  %v784 = vpack.c.bf16 %v758, %v745
  %v785 = vpack.c.bf16 %v759, %v746
  %v786 = vpack.c.bf16 %v760, %v747
  %v787 = vpack.c.bf16 %v761, %v748
  %v788 = vpack.c.bf16 %v762, %v749
  %v789 = vpack.c.bf16 %v763, %v750
  %v790 = vpack.c.bf16 %v764, %v751
  %v791 = vpack.c.bf16 %v765, %v752
  %v792 = vpack.c.bf16 %v766, %v753
  %v793 = vpack.c.bf16 %v767, %v754
  %v794 = vpack.c.bf16 %v768, %v755
  %v795 = vpack.c.bf16 %v769, %v756
  %v822 = vunpack.c.l.b16 %v770
  %v823 = vunpack.c.l.b16 %v771
  %v824 = vunpack.c.l.b16 %v772
  %v825 = vunpack.c.l.b16 %v773
  %v826 = vunpack.c.l.b16 %v774
  %v827 = vunpack.c.l.b16 %v775
  %v828 = vunpack.c.l.b16 %v776
  %v829 = vunpack.c.l.b16 %v777
  %v830 = vunpack.c.l.b16 %v778
  %v831 = vunpack.c.l.b16 %v779
  %v832 = vunpack.c.l.b16 %v780
  %v833 = vunpack.c.l.b16 %v781
  %v834 = vunpack.c.l.b16 %v782
  %v835 = vunpack.c.h.b16 %v770
  %v836 = vunpack.c.h.b16 %v771
  %v837 = vunpack.c.h.b16 %v772
  %v838 = vunpack.c.h.b16 %v773
  %v839 = vunpack.c.h.b16 %v774
  %v840 = vunpack.c.h.b16 %v775
  %v841 = vunpack.c.h.b16 %v776
  %v842 = vunpack.c.h.b16 %v777
  %v843 = vunpack.c.h.b16 %v778
  %v844 = vunpack.c.h.b16 %v779
  %v845 = vunpack.c.h.b16 %v780
  %v846 = vunpack.c.h.b16 %v781
  %v847 = vunpack.c.h.b16 %v782
  %v848 = vunpack.c.l.b16 %v783
  %v849 = vunpack.c.l.b16 %v784
  %v850 = vunpack.c.l.b16 %v785
  %v851 = vunpack.c.l.b16 %v786
  %v852 = vunpack.c.l.b16 %v787
  %v853 = vunpack.c.l.b16 %v788
  %v854 = vunpack.c.l.b16 %v789
  %v855 = vunpack.c.l.b16 %v790
  %v856 = vunpack.c.l.b16 %v791
  %v857 = vunpack.c.l.b16 %v792
  %v858 = vunpack.c.l.b16 %v793
  %v859 = vunpack.c.l.b16 %v794
  %v860 = vunpack.c.l.b16 %v795
  %v861 = vunpack.c.h.b16 %v783
  %v862 = vunpack.c.h.b16 %v784
  %v863 = vunpack.c.h.b16 %v785
  %v864 = vunpack.c.h.b16 %v786
  %v865 = vunpack.c.h.b16 %v787
  %v866 = vunpack.c.h.b16 %v788
  %v867 = vunpack.c.h.b16 %v789
  %v868 = vunpack.c.h.b16 %v790
  %v869 = vunpack.c.h.b16 %v791
  %v870 = vunpack.c.h.b16 %v792
  %v871 = vunpack.c.h.b16 %v793
  %v872 = vunpack.c.h.b16 %v794
  %v873 = vunpack.c.h.b16 %v795
  %v874 = vpack.c.b16 %v823, %v822
  %v875 = vpack.c.b16 %v825, %v824
  %v876 = vpack.c.b16 %v827, %v826
  %v877 = vpack.c.b16 %v829, %v828
  %v878 = vpack.c.b16 %v831, %v830
  %v879 = vpack.c.b16 %v833, %v832
  %v880 = vpack.c.b16 %v834, %v834
  %v881 = vpack.c.b16 %v836, %v835
  %v882 = vpack.c.b16 %v838, %v837
  %v883 = vpack.c.b16 %v840, %v839
  %v884 = vpack.c.b16 %v842, %v841
  %v885 = vpack.c.b16 %v844, %v843
  %v886 = vpack.c.b16 %v846, %v845
  %v887 = vpack.c.b16 %v847, %v847
  %v888 = vpack.c.b16 %v849, %v848
  %v889 = vpack.c.b16 %v851, %v850
  %v890 = vpack.c.b16 %v853, %v852
  %v891 = vpack.c.b16 %v855, %v854
  %v892 = vpack.c.b16 %v857, %v856
  %v893 = vpack.c.b16 %v859, %v858
  %v894 = vpack.c.b16 %v860, %v860
  %v895 = vpack.c.b16 %v862, %v861
  %v896 = vpack.c.b16 %v864, %v863
  %v897 = vpack.c.b16 %v866, %v865
  %v898 = vpack.c.b16 %v868, %v867
  %v899 = vpack.c.b16 %v870, %v869
  %v900 = vpack.c.b16 %v872, %v871
  %v901 = vpack.c.b16 %v873, %v873
  %930 = vst [vmem:[%s4] sm:$0xff] %v874
  %931 = vst [vmem:[%s4 + $0x8] sm:$0xff] %v875
  %932 = vst [vmem:[%s4 + $0x10] sm:$0xff] %v876
  %933 = vst [vmem:[%s4 + $0x18] sm:$0xff] %v877
  %934 = vst [vmem:[%s4 + $0x20] sm:$0xff] %v878
  %935 = vst [vmem:[%s4 + $0x28] sm:$0xff] %v879
  %vm936 = vcmask 257024
  %937 = vst.msk [vmem:[%s4 + $0x30] sm:$0xf] %vm936, %v880
  %938 = vst [vmem:[%s4 + $0x34] sm:$0xff] %v881
  %939 = vst [vmem:[%s4 + $0x3c] sm:$0xff] %v882
  %940 = vst [vmem:[%s4 + $0x44] sm:$0xff] %v883
  %941 = vst [vmem:[%s4 + $0x4c] sm:$0xff] %v884
  %942 = vst [vmem:[%s4 + $0x54] sm:$0xff] %v885
  %943 = vst [vmem:[%s4 + $0x5c] sm:$0xff] %v886
  %944 = vst.msk [vmem:[%s4 + $0x64] sm:$0xf] %vm936, %v887
  %945 = vst [vmem:[%s4 + $0x68] sm:$0xff] %v888
  %946 = vst [vmem:[%s4 + $0x70] sm:$0xff] %v889
  %947 = vst [vmem:[%s4 + $0x78] sm:$0xff] %v890
  %948 = vst [vmem:[%s4 + $0x80] sm:$0xff] %v891
  %949 = vst [vmem:[%s4 + $0x88] sm:$0xff] %v892
  %950 = vst [vmem:[%s4 + $0x90] sm:$0xff] %v893
  %951 = vst.msk [vmem:[%s4 + $0x98] sm:$0xf] %vm936, %v894
  %952 = vst [vmem:[%s4 + $0x9c] sm:$0xff] %v895
  %953 = vst [vmem:[%s4 + $0xa4] sm:$0xff] %v896
  %954 = vst [vmem:[%s4 + $0xac] sm:$0xff] %v897
  %955 = vst [vmem:[%s4 + $0xb4] sm:$0xff] %v898
  %956 = vst [vmem:[%s4 + $0xbc] sm:$0xff] %v899
  %957 = vst [vmem:[%s4 + $0xc4] sm:$0xff] %v900
  %958 = vst.msk [vmem:[%s4 + $0xcc] sm:$0xf] %vm936, %v901
  // Predicated region
  $region18: #{auto_encoder_forward.6} parent=0 // pred_check
    _
  $region19: #{auto_encoder_forward.6} parent=0 // pred_check_branch
    %960 = sbr.rel (0) target = $region21
  $region20: #{auto_encoder_forward.6} parent=0 // pred_region
    _
  $region21: #{auto_encoder_forward.6} parent=0 // pred_fallthru
    _
  // Predicated region
  $region22: #{auto_encoder_forward.6} parent=0 // pred_check
    _
  $region23: #{auto_encoder_forward.6} parent=0 // pred_check_branch
    %962 = sbr.rel (0) target = $region25
  $region24: #{auto_encoder_forward.6} parent=0 // pred_region
    _
  $region25: #{auto_encoder_forward.6} parent=0 // pred_fallthru
    _

// kernel: auto_encoder_forward.7
$region0: #{auto_encoder_forward.7}
  #allocation0 [shape = 'u32[]', space=smem, size = 0x4, offset = 0x4, fixed_abs, tag = 'smem constant byte address 0x4 - core index']
  #allocation1 [shape = 'u32[144,128]{1,0:T(1,128)}', space=vmem, size = 0x12000, scoped, tag = 'internal scratch']
  %s0 = inlined_call_operand.vmem [shape: bf16[64,288], index: 0, kind: input, shape index: {}]
  %s1 = inlined_call_operand.vmem [shape: bf16[288,392], index: 1, kind: input, shape index: {}]
  %s2 = inlined_call_operand.vmem [shape: f32[64,1], index: 2, kind: input, shape index: {}]
  %s3 = inlined_call_operand.vmem [shape: f32[64,1], index: 3, kind: input, shape index: {}]
  %s4 = inlined_call_operand.vmem [shape: bf16[64,392], index: 4, kind: output, shape index: {}]
  %s5 = sld [smem:[#allocation0]]
  $region26: #{auto_encoder_forward.7} parent=0
    _
  %s7 = ssub.s32 1, %s5
  %s8 = scalar_select 0, %s7, %s5
  // Predicated region
  $region2: #{auto_encoder_forward.7} parent=0 // pred_check
    _
  $region3: #{auto_encoder_forward.7} parent=0 // pred_check_branch
    %10 = sbr.rel (0) target = $region5
  $region4: #{auto_encoder_forward.7} parent=0 // pred_region
    _
  $region5: #{auto_encoder_forward.7} parent=0 // pred_fallthru
    _
  // Predicated region
  $region6: #{auto_encoder_forward.7} parent=0 // pred_check
    _
  $region7: #{auto_encoder_forward.7} parent=0 // pred_check_branch
    %12 = sbr.rel (0) target = $region9
  $region8: #{auto_encoder_forward.7} parent=0 // pred_region
    _
  $region9: #{auto_encoder_forward.7} parent=0 // pred_fallthru
    _
  // Predicated region
  $region10: #{auto_encoder_forward.7} parent=0 // pred_check
    _
  $region11: #{auto_encoder_forward.7} parent=0 // pred_check_branch
    %14 = sbr.rel (0) target = $region13
  $region12: #{auto_encoder_forward.7} parent=0 // pred_region
    _
  $region13: #{auto_encoder_forward.7} parent=0 // pred_fallthru
    _
  // Predicated region
  $region14: #{auto_encoder_forward.7} parent=0 // pred_check
    _
  $region15: #{auto_encoder_forward.7} parent=0 // pred_check_branch
    %16 = sbr.rel (0) target = $region17
  $region16: #{auto_encoder_forward.7} parent=0 // pred_region
    _
  $region17: #{auto_encoder_forward.7} parent=0 // pred_fallthru
    _
  %v18 = vld [vmem:[%s0] sm:$0xff]
  %v19 = vld [vmem:[%s0 + $0x8] sm:$0xf]
  %v20 = vld [vmem:[%s0 + $0xc] sm:$0xff]
  %v21 = vld [vmem:[%s0 + $0x14] sm:$0xf]
  %v22 = vld [vmem:[%s0 + $0x18] sm:$0xff]
  %v23 = vld [vmem:[%s0 + $0x20] sm:$0xf]
  %v24 = vld [vmem:[%s0 + $0x24] sm:$0xff]
  %v25 = vld [vmem:[%s0 + $0x2c] sm:$0xf]
  %v26 = vld [vmem:[%s0 + $0x30] sm:$0xff]
  %v27 = vld [vmem:[%s0 + $0x38] sm:$0xf]
  %v28 = vld [vmem:[%s0 + $0x3c] sm:$0xff]
  %v29 = vld [vmem:[%s0 + $0x44] sm:$0xf]
  %v30 = vld [vmem:[%s0 + $0x48] sm:$0xff]
  %v31 = vld [vmem:[%s0 + $0x50] sm:$0xf]
  %v32 = vld [vmem:[%s0 + $0x54] sm:$0xff]
  %v33 = vld [vmem:[%s0 + $0x5c] sm:$0xf]
  %v34 = vld [vmem:[%s1] sm:$0xff]
  %v35 = vld [vmem:[%s1 + $0x8] sm:$0xff]
  %v36 = vld [vmem:[%s1 + $0x10] sm:$0xff]
  %v37 = vld [vmem:[%s1 + $0x18] sm:$0xff]
  %v38 = vld [vmem:[%s1 + $0x20] sm:$0xff]
  %v39 = vld [vmem:[%s1 + $0x28] sm:$0xff]
  %v40 = vld [vmem:[%s1 + $0x30] sm:$0xff]
  %v41 = vld [vmem:[%s1 + $0x38] sm:$0xff]
  %v42 = vld [vmem:[%s1 + $0x40] sm:$0xff]
  %v43 = vld [vmem:[%s1 + $0x48] sm:$0xff]
  %v44 = vld [vmem:[%s1 + $0x50] sm:$0xff]
  %v45 = vld [vmem:[%s1 + $0x58] sm:$0xff]
  %v46 = vld [vmem:[%s1 + $0x60] sm:$0xff]
  %v47 = vld [vmem:[%s1 + $0x68] sm:$0xff]
  %v48 = vld [vmem:[%s1 + $0x70] sm:$0xff]
  %v49 = vld [vmem:[%s1 + $0x78] sm:$0xff]
  %v50 = vld [vmem:[%s1 + $0x80] sm:$0xff]
  %v51 = vld [vmem:[%s1 + $0x88] sm:$0xff]
  %v52 = vld [vmem:[%s1 + $0x90] sm:$0xff]
  %v53 = vld [vmem:[%s1 + $0x98] sm:$0xff]
  %v54 = vld [vmem:[%s1 + $0xa0] sm:$0xff]
  %v55 = vld [vmem:[%s1 + $0xa8] sm:$0xff]
  %v56 = vld [vmem:[%s1 + $0xb0] sm:$0xff]
  %v57 = vld [vmem:[%s1 + $0xb8] sm:$0xff]
  %v58 = vld [vmem:[%s1 + $0xc0] sm:$0xff]
  %v59 = vld [vmem:[%s1 + $0xc8] sm:$0xff]
  %v60 = vld [vmem:[%s1 + $0xd0] sm:$0xff]
  %v61 = vld [vmem:[%s1 + $0xd8] sm:$0xff]
  %v62 = vld [vmem:[%s1 + $0xe0] sm:$0xff]
  %v63 = vld [vmem:[%s1 + $0xe8] sm:$0xff]
  %v64 = vld [vmem:[%s1 + $0xf0] sm:$0xff]
  %v65 = vld [vmem:[%s1 + $0xf8] sm:$0xff]
  %v66 = vld [vmem:[%s1 + $0x100] sm:$0xff]
  %v67 = vld [vmem:[%s1 + $0x108] sm:$0xff]
  %v68 = vld [vmem:[%s1 + $0x110] sm:$0xff]
  %v69 = vld [vmem:[%s1 + $0x118] sm:$0xff]
  %v70 = vld [vmem:[%s1 + $0x120] sm:$0xff]
  %v71 = vld [vmem:[%s1 + $0x128] sm:$0xff]
  %v72 = vld [vmem:[%s1 + $0x130] sm:$0xff]
  %v73 = vld [vmem:[%s1 + $0x138] sm:$0xff]
  %v74 = vld [vmem:[%s1 + $0x140] sm:$0xff]
  %v75 = vld [vmem:[%s1 + $0x148] sm:$0xff]
  %v76 = vld [vmem:[%s1 + $0x150] sm:$0xff]
  %v77 = vld [vmem:[%s1 + $0x158] sm:$0xff]
  %v78 = vld [vmem:[%s1 + $0x160] sm:$0xff]
  %v79 = vld [vmem:[%s1 + $0x168] sm:$0xff]
  %v80 = vld [vmem:[%s1 + $0x170] sm:$0xff]
  %v81 = vld [vmem:[%s1 + $0x178] sm:$0xff]
  %v82 = vld [vmem:[%s1 + $0x180] sm:$0xff]
  %v83 = vld [vmem:[%s1 + $0x188] sm:$0xff]
  %v84 = vld [vmem:[%s1 + $0x190] sm:$0xff]
  %v85 = vld [vmem:[%s1 + $0x198] sm:$0xff]
  %v86 = vld [vmem:[%s1 + $0x1a0] sm:$0xff]
  %v87 = vld [vmem:[%s1 + $0x1a8] sm:$0xff]
  %v88 = vld [vmem:[%s1 + $0x1b0] sm:$0xff]
  %v89 = vld [vmem:[%s1 + $0x1b8] sm:$0xff]
  %v90 = vld [vmem:[%s1 + $0x1c0] sm:$0xff]
  %v91 = vld [vmem:[%s1 + $0x1c8] sm:$0xff]
  %v92 = vld [vmem:[%s1 + $0x1d0] sm:$0xff]
  %v93 = vld [vmem:[%s1 + $0x1d8] sm:$0xff]
  %v94 = vld [vmem:[%s1 + $0x1e0] sm:$0xff]
  %v95 = vld [vmem:[%s1 + $0x1e8] sm:$0xff]
  %v96 = vld [vmem:[%s1 + $0x1f0] sm:$0xff]
  %v97 = vld [vmem:[%s1 + $0x1f8] sm:$0xff]
  %v98 = vld [vmem:[%s1 + $0x200] sm:$0xff]
  %v99 = vld [vmem:[%s1 + $0x208] sm:$0xff]
  %v100 = vld [vmem:[%s1 + $0x210] sm:$0xff]
  %v101 = vld [vmem:[%s1 + $0x218] sm:$0xff]
  %v102 = vld [vmem:[%s1 + $0x220] sm:$0xff]
  %v103 = vld [vmem:[%s1 + $0x228] sm:$0xff]
  %v104 = vld [vmem:[%s1 + $0x230] sm:$0xff]
  %v105 = vld [vmem:[%s1 + $0x238] sm:$0xff]
  %v122 = vunpack.c.l.b16 %v18
  %v123 = vunpack.c.h.b16 %v18
  %v124 = vunpack.c.l.b16 %v19
  %v125 = vunpack.c.l.b16 %v20
  %v126 = vunpack.c.h.b16 %v20
  %v127 = vunpack.c.l.b16 %v21
  %v128 = vunpack.c.l.b16 %v22
  %v129 = vunpack.c.h.b16 %v22
  %v130 = vunpack.c.l.b16 %v23
  %v131 = vunpack.c.l.b16 %v24
  %v132 = vunpack.c.h.b16 %v24
  %v133 = vunpack.c.l.b16 %v25
  %v134 = vunpack.c.l.b16 %v26
  %v135 = vunpack.c.h.b16 %v26
  %v136 = vunpack.c.l.b16 %v27
  %v137 = vunpack.c.l.b16 %v28
  %v138 = vunpack.c.h.b16 %v28
  %v139 = vunpack.c.l.b16 %v29
  %v140 = vunpack.c.l.b16 %v30
  %v141 = vunpack.c.h.b16 %v30
  %v142 = vunpack.c.l.b16 %v31
  %v143 = vunpack.c.l.b16 %v32
  %v144 = vunpack.c.h.b16 %v32
  %v145 = vunpack.c.l.b16 %v33
  %v146 = vpack.c.b16 %v125, %v122
  %v147 = vpack.c.b16 %v126, %v123
  %v148 = vpack.c.b16 %v127, %v124
  %v149 = vpack.c.b16 %v131, %v128
  %v150 = vpack.c.b16 %v132, %v129
  %v151 = vpack.c.b16 %v133, %v130
  %v152 = vpack.c.b16 %v137, %v134
  %v153 = vpack.c.b16 %v138, %v135
  %v154 = vpack.c.b16 %v139, %v136
  %v155 = vpack.c.b16 %v143, %v140
  %v156 = vpack.c.b16 %v144, %v141
  %v157 = vpack.c.b16 %v145, %v142
  %v238 = vunpack.c.l.b16 %v34
  %v239 = vunpack.c.h.b16 %v34
  %v240 = vunpack.c.l.b16 %v35
  %v241 = vunpack.c.h.b16 %v35
  %v242 = vunpack.c.l.b16 %v36
  %v243 = vunpack.c.h.b16 %v36
  %v244 = vunpack.c.l.b16 %v37
  %v245 = vunpack.c.h.b16 %v37
  %v246 = vunpack.c.l.b16 %v38
  %v247 = vunpack.c.h.b16 %v38
  %v248 = vunpack.c.l.b16 %v39
  %v249 = vunpack.c.h.b16 %v39
  %v250 = vunpack.c.l.b16 %v40
  %v251 = vunpack.c.h.b16 %v40
  %v252 = vunpack.c.l.b16 %v41
  %v253 = vunpack.c.h.b16 %v41
  %v254 = vunpack.c.l.b16 %v42
  %v255 = vunpack.c.h.b16 %v42
  %v256 = vunpack.c.l.b16 %v43
  %v257 = vunpack.c.h.b16 %v43
  %v258 = vunpack.c.l.b16 %v44
  %v259 = vunpack.c.h.b16 %v44
  %v260 = vunpack.c.l.b16 %v45
  %v261 = vunpack.c.h.b16 %v45
  %v262 = vunpack.c.l.b16 %v46
  %v263 = vunpack.c.h.b16 %v46
  %v264 = vunpack.c.l.b16 %v47
  %v265 = vunpack.c.h.b16 %v47
  %v266 = vunpack.c.l.b16 %v48
  %v267 = vunpack.c.h.b16 %v48
  %v268 = vunpack.c.l.b16 %v49
  %v269 = vunpack.c.h.b16 %v49
  %v270 = vunpack.c.l.b16 %v50
  %v271 = vunpack.c.h.b16 %v50
  %v272 = vunpack.c.l.b16 %v51
  %v273 = vunpack.c.h.b16 %v51
  %v274 = vunpack.c.l.b16 %v52
  %v275 = vunpack.c.h.b16 %v52
  %v276 = vunpack.c.l.b16 %v53
  %v277 = vunpack.c.h.b16 %v53
  %v278 = vunpack.c.l.b16 %v54
  %v279 = vunpack.c.h.b16 %v54
  %v280 = vunpack.c.l.b16 %v55
  %v281 = vunpack.c.h.b16 %v55
  %v282 = vunpack.c.l.b16 %v56
  %v283 = vunpack.c.h.b16 %v56
  %v284 = vunpack.c.l.b16 %v57
  %v285 = vunpack.c.h.b16 %v57
  %v286 = vunpack.c.l.b16 %v58
  %v287 = vunpack.c.h.b16 %v58
  %v288 = vunpack.c.l.b16 %v59
  %v289 = vunpack.c.h.b16 %v59
  %v290 = vunpack.c.l.b16 %v60
  %v291 = vunpack.c.h.b16 %v60
  %v292 = vunpack.c.l.b16 %v61
  %v293 = vunpack.c.h.b16 %v61
  %v294 = vunpack.c.l.b16 %v62
  %v295 = vunpack.c.h.b16 %v62
  %v296 = vunpack.c.l.b16 %v63
  %v297 = vunpack.c.h.b16 %v63
  %v298 = vunpack.c.l.b16 %v64
  %v299 = vunpack.c.h.b16 %v64
  %v300 = vunpack.c.l.b16 %v65
  %v301 = vunpack.c.h.b16 %v65
  %v302 = vunpack.c.l.b16 %v66
  %v303 = vunpack.c.h.b16 %v66
  %v304 = vunpack.c.l.b16 %v67
  %v305 = vunpack.c.h.b16 %v67
  %v306 = vunpack.c.l.b16 %v68
  %v307 = vunpack.c.h.b16 %v68
  %v308 = vunpack.c.l.b16 %v69
  %v309 = vunpack.c.h.b16 %v69
  %v310 = vunpack.c.l.b16 %v70
  %v311 = vunpack.c.h.b16 %v70
  %v312 = vunpack.c.l.b16 %v71
  %v313 = vunpack.c.h.b16 %v71
  %v314 = vunpack.c.l.b16 %v72
  %v315 = vunpack.c.h.b16 %v72
  %v316 = vunpack.c.l.b16 %v73
  %v317 = vunpack.c.h.b16 %v73
  %v318 = vunpack.c.l.b16 %v74
  %v319 = vunpack.c.h.b16 %v74
  %v320 = vunpack.c.l.b16 %v75
  %v321 = vunpack.c.h.b16 %v75
  %v322 = vunpack.c.l.b16 %v76
  %v323 = vunpack.c.h.b16 %v76
  %v324 = vunpack.c.l.b16 %v77
  %v325 = vunpack.c.h.b16 %v77
  %v326 = vunpack.c.l.b16 %v78
  %v327 = vunpack.c.h.b16 %v78
  %v328 = vunpack.c.l.b16 %v79
  %v329 = vunpack.c.h.b16 %v79
  %v330 = vunpack.c.l.b16 %v80
  %v331 = vunpack.c.h.b16 %v80
  %v332 = vunpack.c.l.b16 %v81
  %v333 = vunpack.c.h.b16 %v81
  %v334 = vunpack.c.l.b16 %v82
  %v335 = vunpack.c.h.b16 %v82
  %v336 = vunpack.c.l.b16 %v83
  %v337 = vunpack.c.h.b16 %v83
  %v338 = vunpack.c.l.b16 %v84
  %v339 = vunpack.c.h.b16 %v84
  %v340 = vunpack.c.l.b16 %v85
  %v341 = vunpack.c.h.b16 %v85
  %v342 = vunpack.c.l.b16 %v86
  %v343 = vunpack.c.h.b16 %v86
  %v344 = vunpack.c.l.b16 %v87
  %v345 = vunpack.c.h.b16 %v87
  %v346 = vunpack.c.l.b16 %v88
  %v347 = vunpack.c.h.b16 %v88
  %v348 = vunpack.c.l.b16 %v89
  %v349 = vunpack.c.h.b16 %v89
  %v350 = vunpack.c.l.b16 %v90
  %v351 = vunpack.c.h.b16 %v90
  %v352 = vunpack.c.l.b16 %v91
  %v353 = vunpack.c.h.b16 %v91
  %v354 = vunpack.c.l.b16 %v92
  %v355 = vunpack.c.h.b16 %v92
  %v356 = vunpack.c.l.b16 %v93
  %v357 = vunpack.c.h.b16 %v93
  %v358 = vunpack.c.l.b16 %v94
  %v359 = vunpack.c.h.b16 %v94
  %v360 = vunpack.c.l.b16 %v95
  %v361 = vunpack.c.h.b16 %v95
  %v362 = vunpack.c.l.b16 %v96
  %v363 = vunpack.c.h.b16 %v96
  %v364 = vunpack.c.l.b16 %v97
  %v365 = vunpack.c.h.b16 %v97
  %v366 = vunpack.c.l.b16 %v98
  %v367 = vunpack.c.h.b16 %v98
  %v368 = vunpack.c.l.b16 %v99
  %v369 = vunpack.c.h.b16 %v99
  %v370 = vunpack.c.l.b16 %v100
  %v371 = vunpack.c.h.b16 %v100
  %v372 = vunpack.c.l.b16 %v101
  %v373 = vunpack.c.h.b16 %v101
  %v374 = vunpack.c.l.b16 %v102
  %v375 = vunpack.c.h.b16 %v102
  %v376 = vunpack.c.l.b16 %v103
  %v377 = vunpack.c.h.b16 %v103
  %v378 = vunpack.c.l.b16 %v104
  %v379 = vunpack.c.h.b16 %v104
  %v380 = vunpack.c.l.b16 %v105
  %v381 = vunpack.c.h.b16 %v105
  %v382 = vpack.c.b16 %v242, %v238
  %v383 = vpack.c.b16 %v243, %v239
  %v384 = vpack.c.b16 %v244, %v240
  %v385 = vpack.c.b16 %v245, %v241
  %v386 = vpack.c.b16 %v250, %v246
  %v387 = vpack.c.b16 %v251, %v247
  %v388 = vpack.c.b16 %v252, %v248
  %v389 = vpack.c.b16 %v253, %v249
  %v390 = vpack.c.b16 %v258, %v254
  %v391 = vpack.c.b16 %v259, %v255
  %v392 = vpack.c.b16 %v260, %v256
  %v393 = vpack.c.b16 %v261, %v257
  %v394 = vpack.c.b16 %v266, %v262
  %v395 = vpack.c.b16 %v267, %v263
  %v396 = vpack.c.b16 %v268, %v264
  %v397 = vpack.c.b16 %v269, %v265
  %v398 = vpack.c.b16 %v274, %v270
  %v399 = vpack.c.b16 %v275, %v271
  %v400 = vpack.c.b16 %v276, %v272
  %v401 = vpack.c.b16 %v277, %v273
  %v402 = vpack.c.b16 %v282, %v278
  %v403 = vpack.c.b16 %v283, %v279
  %v404 = vpack.c.b16 %v284, %v280
  %v405 = vpack.c.b16 %v285, %v281
  %v406 = vpack.c.b16 %v290, %v286
  %v407 = vpack.c.b16 %v291, %v287
  %v408 = vpack.c.b16 %v292, %v288
  %v409 = vpack.c.b16 %v293, %v289
  %v410 = vpack.c.b16 %v298, %v294
  %v411 = vpack.c.b16 %v299, %v295
  %v412 = vpack.c.b16 %v300, %v296
  %v413 = vpack.c.b16 %v301, %v297
  %v414 = vpack.c.b16 %v306, %v302
  %v415 = vpack.c.b16 %v307, %v303
  %v416 = vpack.c.b16 %v308, %v304
  %v417 = vpack.c.b16 %v309, %v305
  %v418 = vpack.c.b16 %v314, %v310
  %v419 = vpack.c.b16 %v315, %v311
  %v420 = vpack.c.b16 %v316, %v312
  %v421 = vpack.c.b16 %v317, %v313
  %v422 = vpack.c.b16 %v322, %v318
  %v423 = vpack.c.b16 %v323, %v319
  %v424 = vpack.c.b16 %v324, %v320
  %v425 = vpack.c.b16 %v325, %v321
  %v426 = vpack.c.b16 %v330, %v326
  %v427 = vpack.c.b16 %v331, %v327
  %v428 = vpack.c.b16 %v332, %v328
  %v429 = vpack.c.b16 %v333, %v329
  %v430 = vpack.c.b16 %v338, %v334
  %v431 = vpack.c.b16 %v339, %v335
  %v432 = vpack.c.b16 %v340, %v336
  %v433 = vpack.c.b16 %v341, %v337
  %v434 = vpack.c.b16 %v346, %v342
  %v435 = vpack.c.b16 %v347, %v343
  %v436 = vpack.c.b16 %v348, %v344
  %v437 = vpack.c.b16 %v349, %v345
  %v438 = vpack.c.b16 %v354, %v350
  %v439 = vpack.c.b16 %v355, %v351
  %v440 = vpack.c.b16 %v356, %v352
  %v441 = vpack.c.b16 %v357, %v353
  %v442 = vpack.c.b16 %v362, %v358
  %v443 = vpack.c.b16 %v363, %v359
  %v444 = vpack.c.b16 %v364, %v360
  %v445 = vpack.c.b16 %v365, %v361
  %v446 = vpack.c.b16 %v370, %v366
  %v447 = vpack.c.b16 %v371, %v367
  %v448 = vpack.c.b16 %v372, %v368
  %v449 = vpack.c.b16 %v373, %v369
  %v450 = vpack.c.b16 %v378, %v374
  %v451 = vpack.c.b16 %v379, %v375
  %v452 = vpack.c.b16 %v380, %v376
  %v453 = vpack.c.b16 %v381, %v377
  %vm526 = vcmask 261120
  %v528 = vsel %vm526, %v148, 0
  %v531 = vsel %vm526, %v151, 0
  %v534 = vsel %vm526, %v154, 0
  %v537 = vsel %vm526, %v157, 0
  %539 = vmatprep.subr.bf16.mxu0 %v411
  %540 = vmatpush1.bf16.msra.mxu0 %v410
  %541 = vmatprep.subr.bf16.mxu0 %v407
  %542 = vmatpush1.bf16.msra.mxu0 %v406
  %543 = vmatprep.subr.bf16.mxu0 %v403
  %544 = vmatpush1.bf16.msra.mxu0 %v402
  %545 = vmatprep.subr.bf16.mxu0 %v399
  %546 = vmatpush1.bf16.msra.mxu0 %v398
  %547 = vmatprep.subr.bf16.mxu0 %v395
  %548 = vmatpush1.bf16.msra.mxu0 %v394
  %549 = vmatprep.subr.bf16.mxu0 %v391
  %550 = vmatpush1.bf16.msra.mxu0 %v390
  %551 = vmatprep.subr.bf16.mxu0 %v387
  %552 = vmatpush1.bf16.msra.mxu0 %v386
  %553 = vmatprep.subr.bf16.mxu0 %v383
  %554 = vmatpush1.bf16.msra.mxu0 %v382
  %555 = vmatprep.subr.bf16.mxu0 %v443
  %556 = vmatpush2.bf16.msra.mxu0 %v442
  %557 = vmatprep.subr.bf16.mxu0 %v439
  %558 = vmatpush2.bf16.msra.mxu0 %v438
  %559 = vmatprep.subr.bf16.mxu0 %v435
  %560 = vmatpush2.bf16.msra.mxu0 %v434
  %561 = vmatprep.subr.bf16.mxu0 %v431
  %562 = vmatpush2.bf16.msra.mxu0 %v430
  %563 = vmatprep.subr.bf16.mxu0 %v427
  %564 = vmatpush2.bf16.msra.mxu0 %v426
  %565 = vmatprep.subr.bf16.mxu0 %v423
  %566 = vmatpush2.bf16.msra.mxu0 %v422
  %567 = vmatprep.subr.bf16.mxu0 %v419
  %568 = vmatpush2.bf16.msra.mxu0 %v418
  %569 = vmatprep.subr.bf16.mxu0 %v415
  %570 = vmatpush2.bf16.msra.mxu0 %v414
  %571 = vmatprep.mubr.bf16.mxu0 %v147
  %572 = vmatmul.mubr.bf16.gmra.mxu0 %v146
  %v573 = vpop.f32.mrf.mxu0
  %v574 = vadd.f32 0.0, %v573
  %v575 = vpop.f32.mrf.mxu0
  %v576 = vadd.f32 0.0, %v575
  %v577 = vpop.f32.mrf.mxu0
  %v578 = vadd.f32 0.0, %v577
  %v579 = vpop.f32.mrf.mxu0
  %v580 = vadd.f32 0.0, %v579
  %581 = vmatprep.mubr.bf16.mxu0 %v150
  %582 = vmatmul.mubr.bf16.gmra.mxu0 %v149
  %v583 = vpop.f32.mrf.mxu0
  %v584 = vadd.f32 0.0, %v583
  %v585 = vpop.f32.mrf.mxu0
  %v586 = vadd.f32 0.0, %v585
  %v587 = vpop.f32.mrf.mxu0
  %v588 = vadd.f32 0.0, %v587
  %v589 = vpop.f32.mrf.mxu0
  %v590 = vadd.f32 0.0, %v589
  %591 = vmatprep.mubr.bf16.mxu0 %v153
  %592 = vmatmul.mubr.bf16.gmra.mxu0 %v152
  %v593 = vpop.f32.mrf.mxu0
  %v594 = vadd.f32 0.0, %v593
  %v595 = vpop.f32.mrf.mxu0
  %v596 = vadd.f32 0.0, %v595
  %v597 = vpop.f32.mrf.mxu0
  %v598 = vadd.f32 0.0, %v597
  %v599 = vpop.f32.mrf.mxu0
  %v600 = vadd.f32 0.0, %v599
  %601 = vmatprep.mubr.bf16.mxu0 %v156
  %602 = vmatmul.mubr.bf16.gmra.mxu0 %v155
  %v603 = vpop.f32.mrf.mxu0
  %v604 = vadd.f32 0.0, %v603
  %v605 = vpop.f32.mrf.mxu0
  %v606 = vadd.f32 0.0, %v605
  %v607 = vpop.f32.mrf.mxu0
  %v608 = vadd.f32 0.0, %v607
  %v609 = vpop.f32.mrf.mxu0
  %v610 = vadd.f32 0.0, %v609
  %611 = vdwg.mxu0
  %612 = vmatprep.subr.bf16.mxu0 0
  %613 = vmatpush1.bf16.msra.mxu0 0
  %614 = vmatprep.subr.bf16.mxu0 0
  %615 = vmatpush1.bf16.msra.mxu0 0
  %616 = vmatprep.subr.bf16.mxu0 0
  %617 = vmatpush1.bf16.msra.mxu0 0
  %618 = vmatprep.subr.bf16.mxu0 0
  %619 = vmatpush1.bf16.msra.mxu0 0
  %620 = vmatprep.subr.bf16.mxu0 0
  %621 = vmatpush1.bf16.msra.mxu0 0
  %622 = vmatprep.subr.bf16.mxu0 0
  %623 = vmatpush1.bf16.msra.mxu0 0
  %624 = vmatprep.subr.bf16.mxu0 %v451
  %625 = vmatpush1.bf16.msra.mxu0 %v450
  %626 = vmatprep.subr.bf16.mxu0 %v447
  %627 = vmatpush1.bf16.msra.mxu0 %v446
  %628 = vmatprep.subr.bf16.mxu0 0
  %629 = vmatpush2.bf16.msra.mxu0 0
  %630 = vmatprep.subr.bf16.mxu0 0
  %631 = vmatpush2.bf16.msra.mxu0 0
  %632 = vmatprep.subr.bf16.mxu0 0
  %633 = vmatpush2.bf16.msra.mxu0 0
  %634 = vmatprep.subr.bf16.mxu0 0
  %635 = vmatpush2.bf16.msra.mxu0 0
  %636 = vmatprep.subr.bf16.mxu0 0
  %637 = vmatpush2.bf16.msra.mxu0 0
  %638 = vmatprep.subr.bf16.mxu0 0
  %639 = vmatpush2.bf16.msra.mxu0 0
  %640 = vmatprep.subr.bf16.mxu0 0
  %641 = vmatpush2.bf16.msra.mxu0 0
  %642 = vmatprep.subr.bf16.mxu0 0
  %643 = vmatpush2.bf16.msra.mxu0 0
  %644 = vmatprep.mubr.bf16.mxu0 0
  %645 = vmatmul.mubr.bf16.gmra.mxu0 %v528
  %v646 = vpop.f32.mrf.mxu0
  %v647 = vadd.f32 %v574, %v646
  %v648 = vpop.f32.mrf.mxu0
  %v649 = vadd.f32 %v576, %v648
  %v650 = vpop.f32.mrf.mxu0
  %v651 = vadd.f32 %v578, %v650
  %v652 = vpop.f32.mrf.mxu0
  %v653 = vadd.f32 %v580, %v652
  %654 = vmatprep.mubr.bf16.mxu0 0
  %655 = vmatmul.mubr.bf16.gmra.mxu0 %v531
  %v656 = vpop.f32.mrf.mxu0
  %v657 = vadd.f32 %v584, %v656
  %v658 = vpop.f32.mrf.mxu0
  %v659 = vadd.f32 %v586, %v658
  %v660 = vpop.f32.mrf.mxu0
  %v661 = vadd.f32 %v588, %v660
  %v662 = vpop.f32.mrf.mxu0
  %v663 = vadd.f32 %v590, %v662
  %664 = vmatprep.mubr.bf16.mxu0 0
  %665 = vmatmul.mubr.bf16.gmra.mxu0 %v534
  %v666 = vpop.f32.mrf.mxu0
  %v667 = vadd.f32 %v594, %v666
  %v668 = vpop.f32.mrf.mxu0
  %v669 = vadd.f32 %v596, %v668
  %v670 = vpop.f32.mrf.mxu0
  %v671 = vadd.f32 %v598, %v670
  %v672 = vpop.f32.mrf.mxu0
  %v673 = vadd.f32 %v600, %v672
  %674 = vmatprep.mubr.bf16.mxu0 0
  %675 = vmatmul.mubr.bf16.gmra.mxu0 %v537
  %v676 = vpop.f32.mrf.mxu0
  %v677 = vadd.f32 %v604, %v676
  %v678 = vpop.f32.mrf.mxu0
  %v679 = vadd.f32 %v606, %v678
  %v680 = vpop.f32.mrf.mxu0
  %v681 = vadd.f32 %v608, %v680
  %v682 = vpop.f32.mrf.mxu0
  %v683 = vadd.f32 %v610, %v682
  %684 = vdwg.mxu0
  %685 = vmatprep.subr.bf16.mxu0 %v413
  %686 = vmatpush1.bf16.msra.mxu0 %v412
  %687 = vmatprep.subr.bf16.mxu0 %v409
  %688 = vmatpush1.bf16.msra.mxu0 %v408
  %689 = vmatprep.subr.bf16.mxu0 %v405
  %690 = vmatpush1.bf16.msra.mxu0 %v404
  %691 = vmatprep.subr.bf16.mxu0 %v401
  %692 = vmatpush1.bf16.msra.mxu0 %v400
  %693 = vmatprep.subr.bf16.mxu0 %v397
  %694 = vmatpush1.bf16.msra.mxu0 %v396
  %695 = vmatprep.subr.bf16.mxu0 %v393
  %696 = vmatpush1.bf16.msra.mxu0 %v392
  %697 = vmatprep.subr.bf16.mxu0 %v389
  %698 = vmatpush1.bf16.msra.mxu0 %v388
  %699 = vmatprep.subr.bf16.mxu0 %v385
  %700 = vmatpush1.bf16.msra.mxu0 %v384
  %701 = vmatprep.subr.bf16.mxu0 %v445
  %702 = vmatpush2.bf16.msra.mxu0 %v444
  %703 = vmatprep.subr.bf16.mxu0 %v441
  %704 = vmatpush2.bf16.msra.mxu0 %v440
  %705 = vmatprep.subr.bf16.mxu0 %v437
  %706 = vmatpush2.bf16.msra.mxu0 %v436
  %707 = vmatprep.subr.bf16.mxu0 %v433
  %708 = vmatpush2.bf16.msra.mxu0 %v432
  %709 = vmatprep.subr.bf16.mxu0 %v429
  %710 = vmatpush2.bf16.msra.mxu0 %v428
  %711 = vmatprep.subr.bf16.mxu0 %v425
  %712 = vmatpush2.bf16.msra.mxu0 %v424
  %713 = vmatprep.subr.bf16.mxu0 %v421
  %714 = vmatpush2.bf16.msra.mxu0 %v420
  %715 = vmatprep.subr.bf16.mxu0 %v417
  %716 = vmatpush2.bf16.msra.mxu0 %v416
  %717 = vmatprep.mubr.bf16.mxu0 %v147
  %718 = vmatmul.mubr.bf16.gmra.mxu0 %v146
  %v719 = vpop.f32.mrf.mxu0
  %v720 = vadd.f32 0.0, %v719
  %v721 = vpop.f32.mrf.mxu0
  %v722 = vadd.f32 0.0, %v721
  %v723 = vpop.f32.mrf.mxu0
  %v724 = vadd.f32 0.0, %v723
  %v725 = vpop.f32.mrf.mxu0
  %v726 = vadd.f32 0.0, %v725
  %727 = vmatprep.mubr.bf16.mxu0 %v150
  %728 = vmatmul.mubr.bf16.gmra.mxu0 %v149
  %v729 = vpop.f32.mrf.mxu0
  %v730 = vadd.f32 0.0, %v729
  %v731 = vpop.f32.mrf.mxu0
  %v732 = vadd.f32 0.0, %v731
  %v733 = vpop.f32.mrf.mxu0
  %v734 = vadd.f32 0.0, %v733
  %v735 = vpop.f32.mrf.mxu0
  %v736 = vadd.f32 0.0, %v735
  %737 = vmatprep.mubr.bf16.mxu0 %v153
  %738 = vmatmul.mubr.bf16.gmra.mxu0 %v152
  %v739 = vpop.f32.mrf.mxu0
  %v740 = vadd.f32 0.0, %v739
  %v741 = vpop.f32.mrf.mxu0
  %v742 = vadd.f32 0.0, %v741
  %v743 = vpop.f32.mrf.mxu0
  %v744 = vadd.f32 0.0, %v743
  %v745 = vpop.f32.mrf.mxu0
  %v746 = vadd.f32 0.0, %v745
  %747 = vmatprep.mubr.bf16.mxu0 %v156
  %748 = vmatmul.mubr.bf16.gmra.mxu0 %v155
  %v749 = vpop.f32.mrf.mxu0
  %v750 = vadd.f32 0.0, %v749
  %v751 = vpop.f32.mrf.mxu0
  %v752 = vadd.f32 0.0, %v751
  %v753 = vpop.f32.mrf.mxu0
  %v754 = vadd.f32 0.0, %v753
  %v755 = vpop.f32.mrf.mxu0
  %v756 = vadd.f32 0.0, %v755
  %757 = vdwg.mxu0
  %758 = vmatprep.subr.bf16.mxu0 0
  %759 = vmatpush1.bf16.msra.mxu0 0
  %760 = vmatprep.subr.bf16.mxu0 0
  %761 = vmatpush1.bf16.msra.mxu0 0
  %762 = vmatprep.subr.bf16.mxu0 0
  %763 = vmatpush1.bf16.msra.mxu0 0
  %764 = vmatprep.subr.bf16.mxu0 0
  %765 = vmatpush1.bf16.msra.mxu0 0
  %766 = vmatprep.subr.bf16.mxu0 0
  %767 = vmatpush1.bf16.msra.mxu0 0
  %768 = vmatprep.subr.bf16.mxu0 0
  %769 = vmatpush1.bf16.msra.mxu0 0
  %770 = vmatprep.subr.bf16.mxu0 %v453
  %771 = vmatpush1.bf16.msra.mxu0 %v452
  %772 = vmatprep.subr.bf16.mxu0 %v449
  %773 = vmatpush1.bf16.msra.mxu0 %v448
  %774 = vmatprep.subr.bf16.mxu0 0
  %775 = vmatpush2.bf16.msra.mxu0 0
  %776 = vmatprep.subr.bf16.mxu0 0
  %777 = vmatpush2.bf16.msra.mxu0 0
  %778 = vmatprep.subr.bf16.mxu0 0
  %779 = vmatpush2.bf16.msra.mxu0 0
  %780 = vmatprep.subr.bf16.mxu0 0
  %781 = vmatpush2.bf16.msra.mxu0 0
  %782 = vmatprep.subr.bf16.mxu0 0
  %783 = vmatpush2.bf16.msra.mxu0 0
  %784 = vmatprep.subr.bf16.mxu0 0
  %785 = vmatpush2.bf16.msra.mxu0 0
  %786 = vmatprep.subr.bf16.mxu0 0
  %787 = vmatpush2.bf16.msra.mxu0 0
  %788 = vmatprep.subr.bf16.mxu0 0
  %789 = vmatpush2.bf16.msra.mxu0 0
  %790 = vmatprep.mubr.bf16.mxu0 0
  %791 = vmatmul.mubr.bf16.gmra.mxu0 %v528
  %v792 = vpop.f32.mrf.mxu0
  %v793 = vadd.f32 %v720, %v792
  %v794 = vpop.f32.mrf.mxu0
  %v795 = vadd.f32 %v722, %v794
  %v796 = vpop.f32.mrf.mxu0
  %v797 = vadd.f32 %v724, %v796
  %v798 = vpop.f32.mrf.mxu0
  %v799 = vadd.f32 %v726, %v798
  %800 = vmatprep.mubr.bf16.mxu0 0
  %801 = vmatmul.mubr.bf16.gmra.mxu0 %v531
  %v802 = vpop.f32.mrf.mxu0
  %v803 = vadd.f32 %v730, %v802
  %v804 = vpop.f32.mrf.mxu0
  %v805 = vadd.f32 %v732, %v804
  %v806 = vpop.f32.mrf.mxu0
  %v807 = vadd.f32 %v734, %v806
  %v808 = vpop.f32.mrf.mxu0
  %v809 = vadd.f32 %v736, %v808
  %810 = vmatprep.mubr.bf16.mxu0 0
  %811 = vmatmul.mubr.bf16.gmra.mxu0 %v534
  %v812 = vpop.f32.mrf.mxu0
  %v813 = vadd.f32 %v740, %v812
  %v814 = vpop.f32.mrf.mxu0
  %v815 = vadd.f32 %v742, %v814
  %v816 = vpop.f32.mrf.mxu0
  %v817 = vadd.f32 %v744, %v816
  %v818 = vpop.f32.mrf.mxu0
  %v819 = vadd.f32 %v746, %v818
  %820 = vmatprep.mubr.bf16.mxu0 0
  %821 = vmatmul.mubr.bf16.gmra.mxu0 %v537
  %v822 = vpop.f32.mrf.mxu0
  %v823 = vadd.f32 %v750, %v822
  %v824 = vpop.f32.mrf.mxu0
  %v825 = vadd.f32 %v752, %v824
  %v826 = vpop.f32.mrf.mxu0
  %v827 = vadd.f32 %v754, %v826
  %v828 = vpop.f32.mrf.mxu0
  %v829 = vadd.f32 %v756, %v828
  %830 = vdwg.mxu0
  %v831 = vld [vmem:[%s2] sm:$0xff]
  %v832 = vld [vmem:[%s2 + $0x8] sm:$0xff]
  %v833 = vld [vmem:[%s2 + $0x10] sm:$0xff]
  %v834 = vld [vmem:[%s2 + $0x18] sm:$0xff]
  %v835 = vld [vmem:[%s2 + $0x20] sm:$0xff]
  %v836 = vld [vmem:[%s2 + $0x28] sm:$0xff]
  %v837 = vld [vmem:[%s2 + $0x30] sm:$0xff]
  %v838 = vld [vmem:[%s2 + $0x38] sm:$0xff]
  %840 = vset.pattern.permute.xlu0 0
  %841 = vperm.xlu0 %840, %v831
  %v842 = vpop.permute.xlu0 %841
  %845 = vset.pattern.permute.xlu0 0
  %846 = vperm.xlu0 %845, %v832
  %v847 = vpop.permute.xlu0 %846
  %850 = vset.pattern.permute.xlu0 0
  %851 = vperm.xlu0 %850, %v833
  %v852 = vpop.permute.xlu0 %851
  %855 = vset.pattern.permute.xlu0 0
  %856 = vperm.xlu0 %855, %v834
  %v857 = vpop.permute.xlu0 %856
  %860 = vset.pattern.permute.xlu0 0
  %861 = vperm.xlu0 %860, %v835
  %v862 = vpop.permute.xlu0 %861
  %865 = vset.pattern.permute.xlu0 0
  %866 = vperm.xlu0 %865, %v836
  %v867 = vpop.permute.xlu0 %866
  %870 = vset.pattern.permute.xlu0 0
  %871 = vperm.xlu0 %870, %v837
  %v872 = vpop.permute.xlu0 %871
  %875 = vset.pattern.permute.xlu0 0
  %876 = vperm.xlu0 %875, %v838
  %v877 = vpop.permute.xlu0 %876
  %v879 = vmul.f32 %v647, %v842
  %v880 = vmul.f32 %v649, %v842
  %v881 = vmul.f32 %v793, %v842
  %v882 = vmul.f32 %v795, %v842
  %v883 = vmul.f32 %v651, %v847
  %v884 = vmul.f32 %v653, %v847
  %v885 = vmul.f32 %v797, %v847
  %v886 = vmul.f32 %v799, %v847
  %v887 = vmul.f32 %v657, %v852
  %v888 = vmul.f32 %v659, %v852
  %v889 = vmul.f32 %v803, %v852
  %v890 = vmul.f32 %v805, %v852
  %v891 = vmul.f32 %v661, %v857
  %v892 = vmul.f32 %v663, %v857
  %v893 = vmul.f32 %v807, %v857
  %v894 = vmul.f32 %v809, %v857
  %v895 = vmul.f32 %v667, %v862
  %v896 = vmul.f32 %v669, %v862
  %v897 = vmul.f32 %v813, %v862
  %v898 = vmul.f32 %v815, %v862
  %v899 = vmul.f32 %v671, %v867
  %v900 = vmul.f32 %v673, %v867
  %v901 = vmul.f32 %v817, %v867
  %v902 = vmul.f32 %v819, %v867
  %v903 = vmul.f32 %v677, %v872
  %v904 = vmul.f32 %v679, %v872
  %v905 = vmul.f32 %v823, %v872
  %v906 = vmul.f32 %v825, %v872
  %v907 = vmul.f32 %v681, %v877
  %v908 = vmul.f32 %v683, %v877
  %v909 = vmul.f32 %v827, %v877
  %v910 = vmul.f32 %v829, %v877
  %v911 = vld [vmem:[%s3] sm:$0xff]
  %v912 = vld [vmem:[%s3 + $0x8] sm:$0xff]
  %v913 = vld [vmem:[%s3 + $0x10] sm:$0xff]
  %v914 = vld [vmem:[%s3 + $0x18] sm:$0xff]
  %v915 = vld [vmem:[%s3 + $0x20] sm:$0xff]
  %v916 = vld [vmem:[%s3 + $0x28] sm:$0xff]
  %v917 = vld [vmem:[%s3 + $0x30] sm:$0xff]
  %v918 = vld [vmem:[%s3 + $0x38] sm:$0xff]
  %920 = vset.pattern.permute.xlu0 0
  %921 = vperm.xlu0 %920, %v911
  %v922 = vpop.permute.xlu0 %921
  %925 = vset.pattern.permute.xlu0 0
  %926 = vperm.xlu0 %925, %v912
  %v927 = vpop.permute.xlu0 %926
  %930 = vset.pattern.permute.xlu0 0
  %931 = vperm.xlu0 %930, %v913
  %v932 = vpop.permute.xlu0 %931
  %935 = vset.pattern.permute.xlu0 0
  %936 = vperm.xlu0 %935, %v914
  %v937 = vpop.permute.xlu0 %936
  %940 = vset.pattern.permute.xlu0 0
  %941 = vperm.xlu0 %940, %v915
  %v942 = vpop.permute.xlu0 %941
  %945 = vset.pattern.permute.xlu0 0
  %946 = vperm.xlu0 %945, %v916
  %v947 = vpop.permute.xlu0 %946
  %950 = vset.pattern.permute.xlu0 0
  %951 = vperm.xlu0 %950, %v917
  %v952 = vpop.permute.xlu0 %951
  %955 = vset.pattern.permute.xlu0 0
  %956 = vperm.xlu0 %955, %v918
  %v957 = vpop.permute.xlu0 %956
  %v959 = vadd.f32 %v879, %v922
  %v960 = vadd.f32 %v880, %v922
  %v961 = vadd.f32 %v881, %v922
  %v962 = vadd.f32 %v882, %v922
  %v963 = vadd.f32 %v883, %v927
  %v964 = vadd.f32 %v884, %v927
  %v965 = vadd.f32 %v885, %v927
  %v966 = vadd.f32 %v886, %v927
  %v967 = vadd.f32 %v887, %v932
  %v968 = vadd.f32 %v888, %v932
  %v969 = vadd.f32 %v889, %v932
  %v970 = vadd.f32 %v890, %v932
  %v971 = vadd.f32 %v891, %v937
  %v972 = vadd.f32 %v892, %v937
  %v973 = vadd.f32 %v893, %v937
  %v974 = vadd.f32 %v894, %v937
  %v975 = vadd.f32 %v895, %v942
  %v976 = vadd.f32 %v896, %v942
  %v977 = vadd.f32 %v897, %v942
  %v978 = vadd.f32 %v898, %v942
  %v979 = vadd.f32 %v899, %v947
  %v980 = vadd.f32 %v900, %v947
  %v981 = vadd.f32 %v901, %v947
  %v982 = vadd.f32 %v902, %v947
  %v983 = vadd.f32 %v903, %v952
  %v984 = vadd.f32 %v904, %v952
  %v985 = vadd.f32 %v905, %v952
  %v986 = vadd.f32 %v906, %v952
  %v987 = vadd.f32 %v907, %v957
  %v988 = vadd.f32 %v908, %v957
  %v989 = vadd.f32 %v909, %v957
  %v990 = vadd.f32 %v910, %v957
  %v991 = vmax.f32 %v959, 0.0
  %v992 = vmax.f32 %v960, 0.0
  %v993 = vmax.f32 %v961, 0.0
  %v994 = vmax.f32 %v962, 0.0
  %v995 = vmax.f32 %v963, 0.0
  %v996 = vmax.f32 %v964, 0.0
  %v997 = vmax.f32 %v965, 0.0
  %v998 = vmax.f32 %v966, 0.0
  %v999 = vmax.f32 %v967, 0.0
  %v1000 = vmax.f32 %v968, 0.0
  %v1001 = vmax.f32 %v969, 0.0
  %v1002 = vmax.f32 %v970, 0.0
  %v1003 = vmax.f32 %v971, 0.0
  %v1004 = vmax.f32 %v972, 0.0
  %v1005 = vmax.f32 %v973, 0.0
  %v1006 = vmax.f32 %v974, 0.0
  %v1007 = vmax.f32 %v975, 0.0
  %v1008 = vmax.f32 %v976, 0.0
  %v1009 = vmax.f32 %v977, 0.0
  %v1010 = vmax.f32 %v978, 0.0
  %v1011 = vmax.f32 %v979, 0.0
  %v1012 = vmax.f32 %v980, 0.0
  %v1013 = vmax.f32 %v981, 0.0
  %v1014 = vmax.f32 %v982, 0.0
  %v1015 = vmax.f32 %v983, 0.0
  %v1016 = vmax.f32 %v984, 0.0
  %v1017 = vmax.f32 %v985, 0.0
  %v1018 = vmax.f32 %v986, 0.0
  %v1019 = vmax.f32 %v987, 0.0
  %v1020 = vmax.f32 %v988, 0.0
  %v1021 = vmax.f32 %v989, 0.0
  %v1022 = vmax.f32 %v990, 0.0
  %v1023 = vpack.c.bf16 %v995, %v991
  %v1024 = vpack.c.bf16 %v996, %v992
  %v1025 = vpack.c.bf16 %v997, %v993
  %v1026 = vpack.c.bf16 %v998, %v994
  %v1027 = vpack.c.bf16 %v1003, %v999
  %v1028 = vpack.c.bf16 %v1004, %v1000
  %v1029 = vpack.c.bf16 %v1005, %v1001
  %v1030 = vpack.c.bf16 %v1006, %v1002
  %v1031 = vpack.c.bf16 %v1011, %v1007
  %v1032 = vpack.c.bf16 %v1012, %v1008
  %v1033 = vpack.c.bf16 %v1013, %v1009
  %v1034 = vpack.c.bf16 %v1014, %v1010
  %v1035 = vpack.c.bf16 %v1019, %v1015
  %v1036 = vpack.c.bf16 %v1020, %v1016
  %v1037 = vpack.c.bf16 %v1021, %v1017
  %v1038 = vpack.c.bf16 %v1022, %v1018
  %v1055 = vunpack.c.l.b16 %v1023
  %v1056 = vunpack.c.l.b16 %v1024
  %v1057 = vunpack.c.l.b16 %v1025
  %v1058 = vunpack.c.l.b16 %v1026
  %v1059 = vunpack.c.h.b16 %v1023
  %v1060 = vunpack.c.h.b16 %v1024
  %v1061 = vunpack.c.h.b16 %v1025
  %v1062 = vunpack.c.h.b16 %v1026
  %v1063 = vunpack.c.l.b16 %v1027
  %v1064 = vunpack.c.l.b16 %v1028
  %v1065 = vunpack.c.l.b16 %v1029
  %v1066 = vunpack.c.l.b16 %v1030
  %v1067 = vunpack.c.h.b16 %v1027
  %v1068 = vunpack.c.h.b16 %v1028
  %v1069 = vunpack.c.h.b16 %v1029
  %v1070 = vunpack.c.h.b16 %v1030
  %v1071 = vunpack.c.l.b16 %v1031
  %v1072 = vunpack.c.l.b16 %v1032
  %v1073 = vunpack.c.l.b16 %v1033
  %v1074 = vunpack.c.l.b16 %v1034
  %v1075 = vunpack.c.h.b16 %v1031
  %v1076 = vunpack.c.h.b16 %v1032
  %v1077 = vunpack.c.h.b16 %v1033
  %v1078 = vunpack.c.h.b16 %v1034
  %v1079 = vunpack.c.l.b16 %v1035
  %v1080 = vunpack.c.l.b16 %v1036
  %v1081 = vunpack.c.l.b16 %v1037
  %v1082 = vunpack.c.l.b16 %v1038
  %v1083 = vunpack.c.h.b16 %v1035
  %v1084 = vunpack.c.h.b16 %v1036
  %v1085 = vunpack.c.h.b16 %v1037
  %v1086 = vunpack.c.h.b16 %v1038
  %v1087 = vpack.c.b16 %v1056, %v1055
  %v1088 = vpack.c.b16 %v1058, %v1057
  %v1089 = vpack.c.b16 %v1060, %v1059
  %v1090 = vpack.c.b16 %v1062, %v1061
  %v1091 = vpack.c.b16 %v1064, %v1063
  %v1092 = vpack.c.b16 %v1066, %v1065
  %v1093 = vpack.c.b16 %v1068, %v1067
  %v1094 = vpack.c.b16 %v1070, %v1069
  %v1095 = vpack.c.b16 %v1072, %v1071
  %v1096 = vpack.c.b16 %v1074, %v1073
  %v1097 = vpack.c.b16 %v1076, %v1075
  %v1098 = vpack.c.b16 %v1078, %v1077
  %v1099 = vpack.c.b16 %v1080, %v1079
  %v1100 = vpack.c.b16 %v1082, %v1081
  %v1101 = vpack.c.b16 %v1084, %v1083
  %v1102 = vpack.c.b16 %v1086, %v1085
  %1119 = vst [vmem:[%s4] sm:$0xff] %v1087
  %vm1120 = vcmask 1043456
  %vm1121 = vcmask 64516
  %vm1122 = vmor %vm1121, %vm1120
  %1123 = vst.msk [vmem:[%s4 + $0x8] sm:$0xff] %vm1122, %v1088
  %1124 = vst [vmem:[%s4 + $0x10] sm:$0xff] %v1089
  %1125 = vst.msk [vmem:[%s4 + $0x18] sm:$0xff] %vm1122, %v1090
  %1126 = vst [vmem:[%s4 + $0x20] sm:$0xff] %v1091
  %1127 = vst.msk [vmem:[%s4 + $0x28] sm:$0xff] %vm1122, %v1092
  %1128 = vst [vmem:[%s4 + $0x30] sm:$0xff] %v1093
  %1129 = vst.msk [vmem:[%s4 + $0x38] sm:$0xff] %vm1122, %v1094
  %1130 = vst [vmem:[%s4 + $0x40] sm:$0xff] %v1095
  %1131 = vst.msk [vmem:[%s4 + $0x48] sm:$0xff] %vm1122, %v1096
  %1132 = vst [vmem:[%s4 + $0x50] sm:$0xff] %v1097
  %1133 = vst.msk [vmem:[%s4 + $0x58] sm:$0xff] %vm1122, %v1098
  %1134 = vst [vmem:[%s4 + $0x60] sm:$0xff] %v1099
  %1135 = vst.msk [vmem:[%s4 + $0x68] sm:$0xff] %vm1122, %v1100
  %1136 = vst [vmem:[%s4 + $0x70] sm:$0xff] %v1101
  %1137 = vst.msk [vmem:[%s4 + $0x78] sm:$0xff] %vm1122, %v1102
  // Predicated region
  $region18: #{auto_encoder_forward.7} parent=0 // pred_check
    _
  $region19: #{auto_encoder_forward.7} parent=0 // pred_check_branch
    %1139 = sbr.rel (0) target = $region21
  $region20: #{auto_encoder_forward.7} parent=0 // pred_region
    _
  $region21: #{auto_encoder_forward.7} parent=0 // pred_fallthru
    _
  // Predicated region
  $region22: #{auto_encoder_forward.7} parent=0 // pred_check
    _
  $region23: #{auto_encoder_forward.7} parent=0 // pred_check_branch
    %1141 = sbr.rel (0) target = $region25
  $region24: #{auto_encoder_forward.7} parent=0 // pred_region
    _
  $region25: #{auto_encoder_forward.7} parent=0 // pred_fallthru
    _

// kernel: auto_encoder_forward.8
$region0: #{auto_encoder_forward.8}
  #allocation0 [shape = 'u32[]', space=smem, size = 0x4, offset = 0x4, fixed_abs, tag = 'smem constant byte address 0x4 - core index']
  #allocation1 [shape = 'u32[144,128]{1,0:T(1,128)}', space=vmem, size = 0x12000, scoped, tag = 'internal scratch']
  %s0 = inlined_call_operand.vmem [shape: bf16[98,576], index: 0, kind: input, shape index: {}]
  %s1 = inlined_call_operand.vmem [shape: bf16[576,128], index: 1, kind: input, shape index: {}]
  %s2 = inlined_call_operand.vmem [shape: f32[1,128], index: 2, kind: input, shape index: {}]
  %s3 = inlined_call_operand.vmem [shape: f32[1,128], index: 3, kind: input, shape index: {}]
  %s4 = inlined_call_operand.vmem [shape: bf16[98,128], index: 4, kind: output, shape index: {}]
  %s5 = sld [smem:[#allocation0]]
  $region26: #{auto_encoder_forward.8} parent=0
    _
  %s7 = ssub.s32 1, %s5
  %s8 = scalar_select 0, %s7, %s5
  // Predicated region
  $region2: #{auto_encoder_forward.8} parent=0 // pred_check
    _
  $region3: #{auto_encoder_forward.8} parent=0 // pred_check_branch
    %10 = sbr.rel (0) target = $region5
  $region4: #{auto_encoder_forward.8} parent=0 // pred_region
    _
  $region5: #{auto_encoder_forward.8} parent=0 // pred_fallthru
    _
  // Predicated region
  $region6: #{auto_encoder_forward.8} parent=0 // pred_check
    _
  $region7: #{auto_encoder_forward.8} parent=0 // pred_check_branch
    %12 = sbr.rel (0) target = $region9
  $region8: #{auto_encoder_forward.8} parent=0 // pred_region
    _
  $region9: #{auto_encoder_forward.8} parent=0 // pred_fallthru
    _
  // Predicated region
  $region10: #{auto_encoder_forward.8} parent=0 // pred_check
    _
  $region11: #{auto_encoder_forward.8} parent=0 // pred_check_branch
    %14 = sbr.rel (0) target = $region13
  $region12: #{auto_encoder_forward.8} parent=0 // pred_region
    _
  $region13: #{auto_encoder_forward.8} parent=0 // pred_fallthru
    _
  // Predicated region
  $region14: #{auto_encoder_forward.8} parent=0 // pred_check
    _
  $region15: #{auto_encoder_forward.8} parent=0 // pred_check_branch
    %16 = sbr.rel (0) target = $region17
  $region16: #{auto_encoder_forward.8} parent=0 // pred_region
    _
  $region17: #{auto_encoder_forward.8} parent=0 // pred_fallthru
    _
  %v18 = vld [vmem:[%s0] sm:$0xff]
  %v19 = vld [vmem:[%s0 + $0x8] sm:$0xff]
  %v20 = vld [vmem:[%s0 + $0x10] sm:$0xf]
  %v21 = vld [vmem:[%s0 + $0x14] sm:$0xff]
  %v22 = vld [vmem:[%s0 + $0x1c] sm:$0xff]
  %v23 = vld [vmem:[%s0 + $0x24] sm:$0xf]
  %v24 = vld [vmem:[%s0 + $0x28] sm:$0xff]
  %v25 = vld [vmem:[%s0 + $0x30] sm:$0xff]
  %v26 = vld [vmem:[%s0 + $0x38] sm:$0xf]
  %v27 = vld [vmem:[%s0 + $0x3c] sm:$0xff]
  %v28 = vld [vmem:[%s0 + $0x44] sm:$0xff]
  %v29 = vld [vmem:[%s0 + $0x4c] sm:$0xf]
  %v30 = vld [vmem:[%s0 + $0x50] sm:$0xff]
  %v31 = vld [vmem:[%s0 + $0x58] sm:$0xff]
  %v32 = vld [vmem:[%s0 + $0x60] sm:$0xf]
  %v33 = vld [vmem:[%s0 + $0x64] sm:$0xff]
  %v34 = vld [vmem:[%s0 + $0x6c] sm:$0xff]
  %v35 = vld [vmem:[%s0 + $0x74] sm:$0xf]
  %v36 = vld [vmem:[%s0 + $0x78] sm:$0xff]
  %v37 = vld [vmem:[%s0 + $0x80] sm:$0xff]
  %v38 = vld [vmem:[%s0 + $0x88] sm:$0xf]
  %v39 = vld [vmem:[%s0 + $0x8c] sm:$0xff]
  %v40 = vld [vmem:[%s0 + $0x94] sm:$0xff]
  %v41 = vld [vmem:[%s0 + $0x9c] sm:$0xf]
  %v42 = vld [vmem:[%s0 + $0xa0] sm:$0xff]
  %v43 = vld [vmem:[%s0 + $0xa8] sm:$0xff]
  %v44 = vld [vmem:[%s0 + $0xb0] sm:$0xf]
  %v45 = vld [vmem:[%s0 + $0xb4] sm:$0xff]
  %v46 = vld [vmem:[%s0 + $0xbc] sm:$0xff]
  %v47 = vld [vmem:[%s0 + $0xc4] sm:$0xf]
  %v48 = vld [vmem:[%s0 + $0xc8] sm:$0xff]
  %v49 = vld [vmem:[%s0 + $0xd0] sm:$0xff]
  %v50 = vld [vmem:[%s0 + $0xd8] sm:$0xf]
  %v51 = vld [vmem:[%s0 + $0xdc] sm:$0xff]
  %v52 = vld [vmem:[%s0 + $0xe4] sm:$0xff]
  %v53 = vld [vmem:[%s0 + $0xec] sm:$0xf]
  %v54 = vld [vmem:[%s0 + $0xf0] sm:$0x11]
  %v55 = vld [vmem:[%s0 + $0xf8] sm:$0x11]
  %v56 = vld [vmem:[%s0 + $0x100] sm:$0x1]
  %v57 = vld [vmem:[%s1] sm:$0xf]
  %v58 = vld [vmem:[%s1 + $0x4] sm:$0xf]
  %v59 = vld [vmem:[%s1 + $0x8] sm:$0xf]
  %v60 = vld [vmem:[%s1 + $0xc] sm:$0xf]
  %v61 = vld [vmem:[%s1 + $0x10] sm:$0xf]
  %v62 = vld [vmem:[%s1 + $0x14] sm:$0xf]
  %v63 = vld [vmem:[%s1 + $0x18] sm:$0xf]
  %v64 = vld [vmem:[%s1 + $0x1c] sm:$0xf]
  %v65 = vld [vmem:[%s1 + $0x20] sm:$0xf]
  %v66 = vld [vmem:[%s1 + $0x24] sm:$0xf]
  %v67 = vld [vmem:[%s1 + $0x28] sm:$0xf]
  %v68 = vld [vmem:[%s1 + $0x2c] sm:$0xf]
  %v69 = vld [vmem:[%s1 + $0x30] sm:$0xf]
  %v70 = vld [vmem:[%s1 + $0x34] sm:$0xf]
  %v71 = vld [vmem:[%s1 + $0x38] sm:$0xf]
  %v72 = vld [vmem:[%s1 + $0x3c] sm:$0xf]
  %v73 = vld [vmem:[%s1 + $0x40] sm:$0xf]
  %v74 = vld [vmem:[%s1 + $0x44] sm:$0xf]
  %v75 = vld [vmem:[%s1 + $0x48] sm:$0xf]
  %v76 = vld [vmem:[%s1 + $0x4c] sm:$0xf]
  %v77 = vld [vmem:[%s1 + $0x50] sm:$0xf]
  %v78 = vld [vmem:[%s1 + $0x54] sm:$0xf]
  %v79 = vld [vmem:[%s1 + $0x58] sm:$0xf]
  %v80 = vld [vmem:[%s1 + $0x5c] sm:$0xf]
  %v81 = vld [vmem:[%s1 + $0x60] sm:$0xf]
  %v82 = vld [vmem:[%s1 + $0x64] sm:$0xf]
  %v83 = vld [vmem:[%s1 + $0x68] sm:$0xf]
  %v84 = vld [vmem:[%s1 + $0x6c] sm:$0xf]
  %v85 = vld [vmem:[%s1 + $0x70] sm:$0xf]
  %v86 = vld [vmem:[%s1 + $0x74] sm:$0xf]
  %v87 = vld [vmem:[%s1 + $0x78] sm:$0xf]
  %v88 = vld [vmem:[%s1 + $0x7c] sm:$0xf]
  %v89 = vld [vmem:[%s1 + $0x80] sm:$0xf]
  %v90 = vld [vmem:[%s1 + $0x84] sm:$0xf]
  %v91 = vld [vmem:[%s1 + $0x88] sm:$0xf]
  %v92 = vld [vmem:[%s1 + $0x8c] sm:$0xf]
  %v93 = vld [vmem:[%s1 + $0x90] sm:$0xf]
  %v94 = vld [vmem:[%s1 + $0x94] sm:$0xf]
  %v95 = vld [vmem:[%s1 + $0x98] sm:$0xf]
  %v96 = vld [vmem:[%s1 + $0x9c] sm:$0xf]
  %v97 = vld [vmem:[%s1 + $0xa0] sm:$0xf]
  %v98 = vld [vmem:[%s1 + $0xa4] sm:$0xf]
  %v99 = vld [vmem:[%s1 + $0xa8] sm:$0xf]
  %v100 = vld [vmem:[%s1 + $0xac] sm:$0xf]
  %v101 = vld [vmem:[%s1 + $0xb0] sm:$0xf]
  %v102 = vld [vmem:[%s1 + $0xb4] sm:$0xf]
  %v103 = vld [vmem:[%s1 + $0xb8] sm:$0xf]
  %v104 = vld [vmem:[%s1 + $0xbc] sm:$0xf]
  %v105 = vld [vmem:[%s1 + $0xc0] sm:$0xf]
  %v106 = vld [vmem:[%s1 + $0xc4] sm:$0xf]
  %v107 = vld [vmem:[%s1 + $0xc8] sm:$0xf]
  %v108 = vld [vmem:[%s1 + $0xcc] sm:$0xf]
  %v109 = vld [vmem:[%s1 + $0xd0] sm:$0xf]
  %v110 = vld [vmem:[%s1 + $0xd4] sm:$0xf]
  %v111 = vld [vmem:[%s1 + $0xd8] sm:$0xf]
  %v112 = vld [vmem:[%s1 + $0xdc] sm:$0xf]
  %v113 = vld [vmem:[%s1 + $0xe0] sm:$0xf]
  %v114 = vld [vmem:[%s1 + $0xe4] sm:$0xf]
  %v115 = vld [vmem:[%s1 + $0xe8] sm:$0xf]
  %v116 = vld [vmem:[%s1 + $0xec] sm:$0xf]
  %v117 = vld [vmem:[%s1 + $0xf0] sm:$0xf]
  %v118 = vld [vmem:[%s1 + $0xf4] sm:$0xf]
  %v119 = vld [vmem:[%s1 + $0xf8] sm:$0xf]
  %v120 = vld [vmem:[%s1 + $0xfc] sm:$0xf]
  %v121 = vld [vmem:[%s1 + $0x100] sm:$0xf]
  %v122 = vld [vmem:[%s1 + $0x104] sm:$0xf]
  %v123 = vld [vmem:[%s1 + $0x108] sm:$0xf]
  %v124 = vld [vmem:[%s1 + $0x10c] sm:$0xf]
  %v125 = vld [vmem:[%s1 + $0x110] sm:$0xf]
  %v126 = vld [vmem:[%s1 + $0x114] sm:$0xf]
  %v127 = vld [vmem:[%s1 + $0x118] sm:$0xf]
  %v128 = vld [vmem:[%s1 + $0x11c] sm:$0xf]
  %v168 = vunpack.c.l.b16 %v18
  %v169 = vunpack.c.h.b16 %v18
  %v170 = vunpack.c.l.b16 %v19
  %v171 = vunpack.c.h.b16 %v19
  %v172 = vunpack.c.l.b16 %v20
  %v173 = vunpack.c.l.b16 %v21
  %v174 = vunpack.c.h.b16 %v21
  %v175 = vunpack.c.l.b16 %v22
  %v176 = vunpack.c.h.b16 %v22
  %v177 = vunpack.c.l.b16 %v23
  %v178 = vunpack.c.l.b16 %v24
  %v179 = vunpack.c.h.b16 %v24
  %v180 = vunpack.c.l.b16 %v25
  %v181 = vunpack.c.h.b16 %v25
  %v182 = vunpack.c.l.b16 %v26
  %v183 = vunpack.c.l.b16 %v27
  %v184 = vunpack.c.h.b16 %v27
  %v185 = vunpack.c.l.b16 %v28
  %v186 = vunpack.c.h.b16 %v28
  %v187 = vunpack.c.l.b16 %v29
  %v188 = vunpack.c.l.b16 %v30
  %v189 = vunpack.c.h.b16 %v30
  %v190 = vunpack.c.l.b16 %v31
  %v191 = vunpack.c.h.b16 %v31
  %v192 = vunpack.c.l.b16 %v32
  %v193 = vunpack.c.l.b16 %v33
  %v194 = vunpack.c.h.b16 %v33
  %v195 = vunpack.c.l.b16 %v34
  %v196 = vunpack.c.h.b16 %v34
  %v197 = vunpack.c.l.b16 %v35
  %v198 = vunpack.c.l.b16 %v36
  %v199 = vunpack.c.h.b16 %v36
  %v200 = vunpack.c.l.b16 %v37
  %v201 = vunpack.c.h.b16 %v37
  %v202 = vunpack.c.l.b16 %v38
  %v203 = vunpack.c.l.b16 %v39
  %v204 = vunpack.c.h.b16 %v39
  %v205 = vunpack.c.l.b16 %v40
  %v206 = vunpack.c.h.b16 %v40
  %v207 = vunpack.c.l.b16 %v41
  %v208 = vunpack.c.l.b16 %v42
  %v209 = vunpack.c.h.b16 %v42
  %v210 = vunpack.c.l.b16 %v43
  %v211 = vunpack.c.h.b16 %v43
  %v212 = vunpack.c.l.b16 %v44
  %v213 = vunpack.c.l.b16 %v45
  %v214 = vunpack.c.h.b16 %v45
  %v215 = vunpack.c.l.b16 %v46
  %v216 = vunpack.c.h.b16 %v46
  %v217 = vunpack.c.l.b16 %v47
  %v218 = vunpack.c.l.b16 %v48
  %v219 = vunpack.c.h.b16 %v48
  %v220 = vunpack.c.l.b16 %v49
  %v221 = vunpack.c.h.b16 %v49
  %v222 = vunpack.c.l.b16 %v50
  %v223 = vunpack.c.l.b16 %v51
  %v224 = vunpack.c.h.b16 %v51
  %v225 = vunpack.c.l.b16 %v52
  %v226 = vunpack.c.h.b16 %v52
  %v227 = vunpack.c.l.b16 %v53
  %v228 = vunpack.c.l.b16 %v54
  %v229 = vunpack.c.h.b16 %v54
  %v230 = vunpack.c.l.b16 %v55
  %v231 = vunpack.c.h.b16 %v55
  %v232 = vunpack.c.l.b16 %v56
  %v233 = vpack.c.b16 %v173, %v168
  %v234 = vpack.c.b16 %v174, %v169
  %v235 = vpack.c.b16 %v175, %v170
  %v236 = vpack.c.b16 %v176, %v171
  %v237 = vpack.c.b16 %v177, %v172
  %v238 = vpack.c.b16 %v183, %v178
  %v239 = vpack.c.b16 %v184, %v179
  %v240 = vpack.c.b16 %v185, %v180
  %v241 = vpack.c.b16 %v186, %v181
  %v242 = vpack.c.b16 %v187, %v182
  %v243 = vpack.c.b16 %v193, %v188
  %v244 = vpack.c.b16 %v194, %v189
  %v245 = vpack.c.b16 %v195, %v190
  %v246 = vpack.c.b16 %v196, %v191
  %v247 = vpack.c.b16 %v197, %v192
  %v248 = vpack.c.b16 %v203, %v198
  %v249 = vpack.c.b16 %v204, %v199
  %v250 = vpack.c.b16 %v205, %v200
  %v251 = vpack.c.b16 %v206, %v201
  %v252 = vpack.c.b16 %v207, %v202
  %v253 = vpack.c.b16 %v213, %v208
  %v254 = vpack.c.b16 %v214, %v209
  %v255 = vpack.c.b16 %v215, %v210
  %v256 = vpack.c.b16 %v216, %v211
  %v257 = vpack.c.b16 %v217, %v212
  %v258 = vpack.c.b16 %v223, %v218
  %v259 = vpack.c.b16 %v224, %v219
  %v260 = vpack.c.b16 %v225, %v220
  %v261 = vpack.c.b16 %v226, %v221
  %v262 = vpack.c.b16 %v227, %v222
  %v263 = vpack.c.b16 %v228, %v228
  %v264 = vpack.c.b16 %v229, %v229
  %v265 = vpack.c.b16 %v230, %v230
  %v266 = vpack.c.b16 %v231, %v231
  %v267 = vpack.c.b16 %v232, %v232
  %v368 = vunpack.c.l.b16 %v57
  %v369 = vunpack.c.l.b16 %v58
  %v370 = vunpack.c.l.b16 %v59
  %v371 = vunpack.c.l.b16 %v60
  %v372 = vunpack.c.l.b16 %v61
  %v373 = vunpack.c.l.b16 %v62
  %v374 = vunpack.c.l.b16 %v63
  %v375 = vunpack.c.l.b16 %v64
  %v376 = vunpack.c.l.b16 %v65
  %v377 = vunpack.c.l.b16 %v66
  %v378 = vunpack.c.l.b16 %v67
  %v379 = vunpack.c.l.b16 %v68
  %v380 = vunpack.c.l.b16 %v69
  %v381 = vunpack.c.l.b16 %v70
  %v382 = vunpack.c.l.b16 %v71
  %v383 = vunpack.c.l.b16 %v72
  %v384 = vunpack.c.l.b16 %v73
  %v385 = vunpack.c.l.b16 %v74
  %v386 = vunpack.c.l.b16 %v75
  %v387 = vunpack.c.l.b16 %v76
  %v388 = vunpack.c.l.b16 %v77
  %v389 = vunpack.c.l.b16 %v78
  %v390 = vunpack.c.l.b16 %v79
  %v391 = vunpack.c.l.b16 %v80
  %v392 = vunpack.c.l.b16 %v81
  %v393 = vunpack.c.l.b16 %v82
  %v394 = vunpack.c.l.b16 %v83
  %v395 = vunpack.c.l.b16 %v84
  %v396 = vunpack.c.l.b16 %v85
  %v397 = vunpack.c.l.b16 %v86
  %v398 = vunpack.c.l.b16 %v87
  %v399 = vunpack.c.l.b16 %v88
  %v400 = vunpack.c.l.b16 %v89
  %v401 = vunpack.c.l.b16 %v90
  %v402 = vunpack.c.l.b16 %v91
  %v403 = vunpack.c.l.b16 %v92
  %v404 = vunpack.c.l.b16 %v93
  %v405 = vunpack.c.l.b16 %v94
  %v406 = vunpack.c.l.b16 %v95
  %v407 = vunpack.c.l.b16 %v96
  %v408 = vunpack.c.l.b16 %v97
  %v409 = vunpack.c.l.b16 %v98
  %v410 = vunpack.c.l.b16 %v99
  %v411 = vunpack.c.l.b16 %v100
  %v412 = vunpack.c.l.b16 %v101
  %v413 = vunpack.c.l.b16 %v102
  %v414 = vunpack.c.l.b16 %v103
  %v415 = vunpack.c.l.b16 %v104
  %v416 = vunpack.c.l.b16 %v105
  %v417 = vunpack.c.l.b16 %v106
  %v418 = vunpack.c.l.b16 %v107
  %v419 = vunpack.c.l.b16 %v108
  %v420 = vunpack.c.l.b16 %v109
  %v421 = vunpack.c.l.b16 %v110
  %v422 = vunpack.c.l.b16 %v111
  %v423 = vunpack.c.l.b16 %v112
  %v424 = vunpack.c.l.b16 %v113
  %v425 = vunpack.c.l.b16 %v114
  %v426 = vunpack.c.l.b16 %v115
  %v427 = vunpack.c.l.b16 %v116
  %v428 = vunpack.c.l.b16 %v117
  %v429 = vunpack.c.l.b16 %v118
  %v430 = vunpack.c.l.b16 %v119
  %v431 = vunpack.c.l.b16 %v120
  %v432 = vunpack.c.l.b16 %v121
  %v433 = vunpack.c.l.b16 %v122
  %v434 = vunpack.c.l.b16 %v123
  %v435 = vunpack.c.l.b16 %v124
  %v436 = vunpack.c.l.b16 %v125
  %v437 = vunpack.c.l.b16 %v126
  %v438 = vunpack.c.l.b16 %v127
  %v439 = vunpack.c.l.b16 %v128
  %v440 = vpack.c.b16 %v369, %v368
  %v441 = vpack.c.b16 %v371, %v370
  %v442 = vpack.c.b16 %v373, %v372
  %v443 = vpack.c.b16 %v375, %v374
  %v444 = vpack.c.b16 %v377, %v376
  %v445 = vpack.c.b16 %v379, %v378
  %v446 = vpack.c.b16 %v381, %v380
  %v447 = vpack.c.b16 %v383, %v382
  %v448 = vpack.c.b16 %v385, %v384
  %v449 = vpack.c.b16 %v387, %v386
  %v450 = vpack.c.b16 %v389, %v388
  %v451 = vpack.c.b16 %v391, %v390
  %v452 = vpack.c.b16 %v393, %v392
  %v453 = vpack.c.b16 %v395, %v394
  %v454 = vpack.c.b16 %v397, %v396
  %v455 = vpack.c.b16 %v399, %v398
  %v456 = vpack.c.b16 %v401, %v400
  %v457 = vpack.c.b16 %v403, %v402
  %v458 = vpack.c.b16 %v405, %v404
  %v459 = vpack.c.b16 %v407, %v406
  %v460 = vpack.c.b16 %v409, %v408
  %v461 = vpack.c.b16 %v411, %v410
  %v462 = vpack.c.b16 %v413, %v412
  %v463 = vpack.c.b16 %v415, %v414
  %v464 = vpack.c.b16 %v417, %v416
  %v465 = vpack.c.b16 %v419, %v418
  %v466 = vpack.c.b16 %v421, %v420
  %v467 = vpack.c.b16 %v423, %v422
  %v468 = vpack.c.b16 %v425, %v424
  %v469 = vpack.c.b16 %v427, %v426
  %v470 = vpack.c.b16 %v429, %v428
  %v471 = vpack.c.b16 %v431, %v430
  %v472 = vpack.c.b16 %v433, %v432
  %v473 = vpack.c.b16 %v435, %v434
  %v474 = vpack.c.b16 %v437, %v436
  %v475 = vpack.c.b16 %v439, %v438
  %vm512 = vcmask 523264
  %v514 = vsel %vm512, %v237, 0
  %v517 = vsel %vm512, %v242, 0
  %v520 = vsel %vm512, %v247, 0
  %v523 = vsel %vm512, %v252, 0
  %v526 = vsel %vm512, %v257, 0
  %v529 = vsel %vm512, %v262, 0
  %v532 = vsel %vm512, %v267, 0
  %534 = vmatprep.subr.bf16.mxu0 0
  %535 = vmatpush1.bf16.msra.mxu0 %v447
  %536 = vmatprep.subr.bf16.mxu0 0
  %537 = vmatpush1.bf16.msra.mxu0 %v446
  %538 = vmatprep.subr.bf16.mxu0 0
  %539 = vmatpush1.bf16.msra.mxu0 %v445
  %540 = vmatprep.subr.bf16.mxu0 0
  %541 = vmatpush1.bf16.msra.mxu0 %v444
  %542 = vmatprep.subr.bf16.mxu0 0
  %543 = vmatpush1.bf16.msra.mxu0 %v443
  %544 = vmatprep.subr.bf16.mxu0 0
  %545 = vmatpush1.bf16.msra.mxu0 %v442
  %546 = vmatprep.subr.bf16.mxu0 0
  %547 = vmatpush1.bf16.msra.mxu0 %v441
  %548 = vmatprep.subr.bf16.mxu0 0
  %549 = vmatpush1.bf16.msra.mxu0 %v440
  %550 = vmatprep.subr.bf16.mxu0 0
  %551 = vmatpush2.bf16.msra.mxu0 %v455
  %552 = vmatprep.subr.bf16.mxu0 0
  %553 = vmatpush2.bf16.msra.mxu0 %v454
  %554 = vmatprep.subr.bf16.mxu0 0
  %555 = vmatpush2.bf16.msra.mxu0 %v453
  %556 = vmatprep.subr.bf16.mxu0 0
  %557 = vmatpush2.bf16.msra.mxu0 %v452
  %558 = vmatprep.subr.bf16.mxu0 0
  %559 = vmatpush2.bf16.msra.mxu0 %v451
  %560 = vmatprep.subr.bf16.mxu0 0
  %561 = vmatpush2.bf16.msra.mxu0 %v450
  %562 = vmatprep.subr.bf16.mxu0 0
  %563 = vmatpush2.bf16.msra.mxu0 %v449
  %564 = vmatprep.subr.bf16.mxu0 0
  %565 = vmatpush2.bf16.msra.mxu0 %v448
  %566 = vmatprep.mubr.bf16.mxu0 %v234
  %567 = vmatmul.mubr.bf16.gmra.mxu0 %v233
  %v568 = vpop.f32.mrf.mxu0
  %v569 = vadd.f32 0.0, %v568
  %v570 = vpop.f32.mrf.mxu0
  %v571 = vpop.f32.mrf.mxu0
  %v572 = vadd.f32 0.0, %v571
  %v573 = vpop.f32.mrf.mxu0
  %574 = vmatprep.mubr.bf16.mxu0 %v239
  %575 = vmatmul.mubr.bf16.gmra.mxu0 %v238
  %v576 = vpop.f32.mrf.mxu0
  %v577 = vadd.f32 0.0, %v576
  %v578 = vpop.f32.mrf.mxu0
  %v579 = vpop.f32.mrf.mxu0
  %v580 = vadd.f32 0.0, %v579
  %v581 = vpop.f32.mrf.mxu0
  %582 = vmatprep.mubr.bf16.mxu0 %v244
  %583 = vmatmul.mubr.bf16.gmra.mxu0 %v243
  %v584 = vpop.f32.mrf.mxu0
  %v585 = vadd.f32 0.0, %v584
  %v586 = vpop.f32.mrf.mxu0
  %v587 = vpop.f32.mrf.mxu0
  %v588 = vadd.f32 0.0, %v587
  %v589 = vpop.f32.mrf.mxu0
  %590 = vmatprep.mubr.bf16.mxu0 %v249
  %591 = vmatmul.mubr.bf16.gmra.mxu0 %v248
  %v592 = vpop.f32.mrf.mxu0
  %v593 = vadd.f32 0.0, %v592
  %v594 = vpop.f32.mrf.mxu0
  %v595 = vpop.f32.mrf.mxu0
  %v596 = vadd.f32 0.0, %v595
  %v597 = vpop.f32.mrf.mxu0
  %598 = vmatprep.mubr.bf16.mxu0 %v254
  %599 = vmatmul.mubr.bf16.gmra.mxu0 %v253
  %v600 = vpop.f32.mrf.mxu0
  %v601 = vadd.f32 0.0, %v600
  %v602 = vpop.f32.mrf.mxu0
  %v603 = vpop.f32.mrf.mxu0
  %v604 = vadd.f32 0.0, %v603
  %v605 = vpop.f32.mrf.mxu0
  %606 = vmatprep.mubr.bf16.mxu0 %v259
  %607 = vmatmul.mubr.bf16.gmra.mxu0 %v258
  %v608 = vpop.f32.mrf.mxu0
  %v609 = vadd.f32 0.0, %v608
  %v610 = vpop.f32.mrf.mxu0
  %v611 = vpop.f32.mrf.mxu0
  %v612 = vadd.f32 0.0, %v611
  %v613 = vpop.f32.mrf.mxu0
  %614 = vmatprep.mubr.bf16.mxu0 %v264
  %615 = vmatmul.mubr.bf16.gmra.mxu0 %v263
  %v616 = vpop.f32.mrf.mxu0
  %v617 = vadd.f32 0.0, %v616
  %v618 = vpop.f32.mrf.mxu0
  %v619 = vpop.f32.mrf.mxu0
  %v620 = vpop.f32.mrf.mxu0
  %621 = vdwg.mxu0
  %622 = vmatprep.subr.bf16.mxu0 0
  %623 = vmatpush1.bf16.msra.mxu0 %v463
  %624 = vmatprep.subr.bf16.mxu0 0
  %625 = vmatpush1.bf16.msra.mxu0 %v462
  %626 = vmatprep.subr.bf16.mxu0 0
  %627 = vmatpush1.bf16.msra.mxu0 %v461
  %628 = vmatprep.subr.bf16.mxu0 0
  %629 = vmatpush1.bf16.msra.mxu0 %v460
  %630 = vmatprep.subr.bf16.mxu0 0
  %631 = vmatpush1.bf16.msra.mxu0 %v459
  %632 = vmatprep.subr.bf16.mxu0 0
  %633 = vmatpush1.bf16.msra.mxu0 %v458
  %634 = vmatprep.subr.bf16.mxu0 0
  %635 = vmatpush1.bf16.msra.mxu0 %v457
  %636 = vmatprep.subr.bf16.mxu0 0
  %637 = vmatpush1.bf16.msra.mxu0 %v456
  %638 = vmatprep.subr.bf16.mxu0 0
  %639 = vmatpush2.bf16.msra.mxu0 %v471
  %640 = vmatprep.subr.bf16.mxu0 0
  %641 = vmatpush2.bf16.msra.mxu0 %v470
  %642 = vmatprep.subr.bf16.mxu0 0
  %643 = vmatpush2.bf16.msra.mxu0 %v469
  %644 = vmatprep.subr.bf16.mxu0 0
  %645 = vmatpush2.bf16.msra.mxu0 %v468
  %646 = vmatprep.subr.bf16.mxu0 0
  %647 = vmatpush2.bf16.msra.mxu0 %v467
  %648 = vmatprep.subr.bf16.mxu0 0
  %649 = vmatpush2.bf16.msra.mxu0 %v466
  %650 = vmatprep.subr.bf16.mxu0 0
  %651 = vmatpush2.bf16.msra.mxu0 %v465
  %652 = vmatprep.subr.bf16.mxu0 0
  %653 = vmatpush2.bf16.msra.mxu0 %v464
  %654 = vmatprep.mubr.bf16.mxu0 %v236
  %655 = vmatmul.mubr.bf16.gmra.mxu0 %v235
  %v656 = vpop.f32.mrf.mxu0
  %v657 = vadd.f32 %v569, %v656
  %v658 = vpop.f32.mrf.mxu0
  %v659 = vpop.f32.mrf.mxu0
  %v660 = vadd.f32 %v572, %v659
  %v661 = vpop.f32.mrf.mxu0
  %662 = vmatprep.mubr.bf16.mxu0 %v241
  %663 = vmatmul.mubr.bf16.gmra.mxu0 %v240
  %v664 = vpop.f32.mrf.mxu0
  %v665 = vadd.f32 %v577, %v664
  %v666 = vpop.f32.mrf.mxu0
  %v667 = vpop.f32.mrf.mxu0
  %v668 = vadd.f32 %v580, %v667
  %v669 = vpop.f32.mrf.mxu0
  %670 = vmatprep.mubr.bf16.mxu0 %v246
  %671 = vmatmul.mubr.bf16.gmra.mxu0 %v245
  %v672 = vpop.f32.mrf.mxu0
  %v673 = vadd.f32 %v585, %v672
  %v674 = vpop.f32.mrf.mxu0
  %v675 = vpop.f32.mrf.mxu0
  %v676 = vadd.f32 %v588, %v675
  %v677 = vpop.f32.mrf.mxu0
  %678 = vmatprep.mubr.bf16.mxu0 %v251
  %679 = vmatmul.mubr.bf16.gmra.mxu0 %v250
  %v680 = vpop.f32.mrf.mxu0
  %v681 = vadd.f32 %v593, %v680
  %v682 = vpop.f32.mrf.mxu0
  %v683 = vpop.f32.mrf.mxu0
  %v684 = vadd.f32 %v596, %v683
  %v685 = vpop.f32.mrf.mxu0
  %686 = vmatprep.mubr.bf16.mxu0 %v256
  %687 = vmatmul.mubr.bf16.gmra.mxu0 %v255
  %v688 = vpop.f32.mrf.mxu0
  %v689 = vadd.f32 %v601, %v688
  %v690 = vpop.f32.mrf.mxu0
  %v691 = vpop.f32.mrf.mxu0
  %v692 = vadd.f32 %v604, %v691
  %v693 = vpop.f32.mrf.mxu0
  %694 = vmatprep.mubr.bf16.mxu0 %v261
  %695 = vmatmul.mubr.bf16.gmra.mxu0 %v260
  %v696 = vpop.f32.mrf.mxu0
  %v697 = vadd.f32 %v609, %v696
  %v698 = vpop.f32.mrf.mxu0
  %v699 = vpop.f32.mrf.mxu0
  %v700 = vadd.f32 %v612, %v699
  %v701 = vpop.f32.mrf.mxu0
  %702 = vmatprep.mubr.bf16.mxu0 %v266
  %703 = vmatmul.mubr.bf16.gmra.mxu0 %v265
  %v704 = vpop.f32.mrf.mxu0
  %v705 = vadd.f32 %v617, %v704
  %v706 = vpop.f32.mrf.mxu0
  %v707 = vpop.f32.mrf.mxu0
  %v708 = vpop.f32.mrf.mxu0
  %709 = vdwg.mxu0
  %710 = vmatprep.subr.bf16.mxu0 0
  %711 = vmatpush1.bf16.msra.mxu0 0
  %712 = vmatprep.subr.bf16.mxu0 0
  %713 = vmatpush1.bf16.msra.mxu0 0
  %714 = vmatprep.subr.bf16.mxu0 0
  %715 = vmatpush1.bf16.msra.mxu0 0
  %716 = vmatprep.subr.bf16.mxu0 0
  %717 = vmatpush1.bf16.msra.mxu0 0
  %718 = vmatprep.subr.bf16.mxu0 0
  %719 = vmatpush1.bf16.msra.mxu0 %v475
  %720 = vmatprep.subr.bf16.mxu0 0
  %721 = vmatpush1.bf16.msra.mxu0 %v474
  %722 = vmatprep.subr.bf16.mxu0 0
  %723 = vmatpush1.bf16.msra.mxu0 %v473
  %724 = vmatprep.subr.bf16.mxu0 0
  %725 = vmatpush1.bf16.msra.mxu0 %v472
  %726 = vmatprep.subr.bf16.mxu0 0
  %727 = vmatpush2.bf16.msra.mxu0 0
  %728 = vmatprep.subr.bf16.mxu0 0
  %729 = vmatpush2.bf16.msra.mxu0 0
  %730 = vmatprep.subr.bf16.mxu0 0
  %731 = vmatpush2.bf16.msra.mxu0 0
  %732 = vmatprep.subr.bf16.mxu0 0
  %733 = vmatpush2.bf16.msra.mxu0 0
  %734 = vmatprep.subr.bf16.mxu0 0
  %735 = vmatpush2.bf16.msra.mxu0 0
  %736 = vmatprep.subr.bf16.mxu0 0
  %737 = vmatpush2.bf16.msra.mxu0 0
  %738 = vmatprep.subr.bf16.mxu0 0
  %739 = vmatpush2.bf16.msra.mxu0 0
  %740 = vmatprep.subr.bf16.mxu0 0
  %741 = vmatpush2.bf16.msra.mxu0 0
  %742 = vmatprep.mubr.bf16.mxu0 0
  %743 = vmatmul.mubr.bf16.gmra.mxu0 %v514
  %v744 = vpop.f32.mrf.mxu0
  %v745 = vadd.f32 %v657, %v744
  %v746 = vpop.f32.mrf.mxu0
  %v747 = vpop.f32.mrf.mxu0
  %v748 = vadd.f32 %v660, %v747
  %v749 = vpop.f32.mrf.mxu0
  %750 = vmatprep.mubr.bf16.mxu0 0
  %751 = vmatmul.mubr.bf16.gmra.mxu0 %v517
  %v752 = vpop.f32.mrf.mxu0
  %v753 = vadd.f32 %v665, %v752
  %v754 = vpop.f32.mrf.mxu0
  %v755 = vpop.f32.mrf.mxu0
  %v756 = vadd.f32 %v668, %v755
  %v757 = vpop.f32.mrf.mxu0
  %758 = vmatprep.mubr.bf16.mxu0 0
  %759 = vmatmul.mubr.bf16.gmra.mxu0 %v520
  %v760 = vpop.f32.mrf.mxu0
  %v761 = vadd.f32 %v673, %v760
  %v762 = vpop.f32.mrf.mxu0
  %v763 = vpop.f32.mrf.mxu0
  %v764 = vadd.f32 %v676, %v763
  %v765 = vpop.f32.mrf.mxu0
  %766 = vmatprep.mubr.bf16.mxu0 0
  %767 = vmatmul.mubr.bf16.gmra.mxu0 %v523
  %v768 = vpop.f32.mrf.mxu0
  %v769 = vadd.f32 %v681, %v768
  %v770 = vpop.f32.mrf.mxu0
  %v771 = vpop.f32.mrf.mxu0
  %v772 = vadd.f32 %v684, %v771
  %v773 = vpop.f32.mrf.mxu0
  %774 = vmatprep.mubr.bf16.mxu0 0
  %775 = vmatmul.mubr.bf16.gmra.mxu0 %v526
  %v776 = vpop.f32.mrf.mxu0
  %v777 = vadd.f32 %v689, %v776
  %v778 = vpop.f32.mrf.mxu0
  %v779 = vpop.f32.mrf.mxu0
  %v780 = vadd.f32 %v692, %v779
  %v781 = vpop.f32.mrf.mxu0
  %782 = vmatprep.mubr.bf16.mxu0 0
  %783 = vmatmul.mubr.bf16.gmra.mxu0 %v529
  %v784 = vpop.f32.mrf.mxu0
  %v785 = vadd.f32 %v697, %v784
  %v786 = vpop.f32.mrf.mxu0
  %v787 = vpop.f32.mrf.mxu0
  %v788 = vadd.f32 %v700, %v787
  %v789 = vpop.f32.mrf.mxu0
  %790 = vmatprep.mubr.bf16.mxu0 0
  %791 = vmatmul.mubr.bf16.gmra.mxu0 %v532
  %v792 = vpop.f32.mrf.mxu0
  %v793 = vadd.f32 %v705, %v792
  %v794 = vpop.f32.mrf.mxu0
  %v795 = vpop.f32.mrf.mxu0
  %v796 = vpop.f32.mrf.mxu0
  %797 = vdwg.mxu0
  %v798 = vld [vmem:[%s2] sm:$0x1]
  %v800 = vlaneseq
  %v801 = vshrl.u32 %v800, 7
  %v802 = vsub.s32 0, %v801
  %v803 = vrot.slane %v798, %v802
  %v805 = vmul.f32 %v745, %v803
  %v806 = vmul.f32 %v748, %v803
  %v807 = vmul.f32 %v753, %v803
  %v808 = vmul.f32 %v756, %v803
  %v809 = vmul.f32 %v761, %v803
  %v810 = vmul.f32 %v764, %v803
  %v811 = vmul.f32 %v769, %v803
  %v812 = vmul.f32 %v772, %v803
  %v813 = vmul.f32 %v777, %v803
  %v814 = vmul.f32 %v780, %v803
  %v815 = vmul.f32 %v785, %v803
  %v816 = vmul.f32 %v788, %v803
  %v817 = vmul.f32 %v793, %v803
  %v818 = vld [vmem:[%s3] sm:$0x1]
  %v820 = vlaneseq
  %v821 = vshrl.u32 %v820, 7
  %v822 = vsub.s32 0, %v821
  %v823 = vrot.slane %v818, %v822
  %v825 = vadd.f32 %v805, %v823
  %v826 = vadd.f32 %v806, %v823
  %v827 = vadd.f32 %v807, %v823
  %v828 = vadd.f32 %v808, %v823
  %v829 = vadd.f32 %v809, %v823
  %v830 = vadd.f32 %v810, %v823
  %v831 = vadd.f32 %v811, %v823
  %v832 = vadd.f32 %v812, %v823
  %v833 = vadd.f32 %v813, %v823
  %v834 = vadd.f32 %v814, %v823
  %v835 = vadd.f32 %v815, %v823
  %v836 = vadd.f32 %v816, %v823
  %v837 = vadd.f32 %v817, %v823
  %v838 = vmax.f32 %v825, 0.0
  %v839 = vmax.f32 %v826, 0.0
  %v840 = vmax.f32 %v827, 0.0
  %v841 = vmax.f32 %v828, 0.0
  %v842 = vmax.f32 %v829, 0.0
  %v843 = vmax.f32 %v830, 0.0
  %v844 = vmax.f32 %v831, 0.0
  %v845 = vmax.f32 %v832, 0.0
  %v846 = vmax.f32 %v833, 0.0
  %v847 = vmax.f32 %v834, 0.0
  %v848 = vmax.f32 %v835, 0.0
  %v849 = vmax.f32 %v836, 0.0
  %v850 = vmax.f32 %v837, 0.0
  %v851 = vpack.c.bf16 %v839, %v838
  %v852 = vpack.c.bf16 %v841, %v840
  %v853 = vpack.c.bf16 %v843, %v842
  %v854 = vpack.c.bf16 %v845, %v844
  %v855 = vpack.c.bf16 %v847, %v846
  %v856 = vpack.c.bf16 %v849, %v848
  %v857 = vpack.c.bf16 %v850, %v850
  %v865 = vunpack.c.l.b16 %v851
  %v866 = vunpack.c.h.b16 %v851
  %v867 = vunpack.c.l.b16 %v852
  %v868 = vunpack.c.h.b16 %v852
  %v869 = vunpack.c.l.b16 %v853
  %v870 = vunpack.c.h.b16 %v853
  %v871 = vunpack.c.l.b16 %v854
  %v872 = vunpack.c.h.b16 %v854
  %v873 = vunpack.c.l.b16 %v855
  %v874 = vunpack.c.h.b16 %v855
  %v875 = vunpack.c.l.b16 %v856
  %v876 = vunpack.c.h.b16 %v856
  %v877 = vunpack.c.l.b16 %v857
  %v878 = vpack.c.b16 %v865, %v865
  %v879 = vpack.c.b16 %v866, %v866
  %v880 = vpack.c.b16 %v867, %v867
  %v881 = vpack.c.b16 %v868, %v868
  %v882 = vpack.c.b16 %v869, %v869
  %v883 = vpack.c.b16 %v870, %v870
  %v884 = vpack.c.b16 %v871, %v871
  %v885 = vpack.c.b16 %v872, %v872
  %v886 = vpack.c.b16 %v873, %v873
  %v887 = vpack.c.b16 %v874, %v874
  %v888 = vpack.c.b16 %v875, %v875
  %v889 = vpack.c.b16 %v876, %v876
  %v890 = vpack.c.b16 %v877, %v877
  %904 = vst [vmem:[%s4] sm:$0xf] %v878
  %905 = vst [vmem:[%s4 + $0x4] sm:$0xf] %v879
  %906 = vst [vmem:[%s4 + $0x8] sm:$0xf] %v880
  %907 = vst [vmem:[%s4 + $0xc] sm:$0xf] %v881
  %908 = vst [vmem:[%s4 + $0x10] sm:$0xf] %v882
  %909 = vst [vmem:[%s4 + $0x14] sm:$0xf] %v883
  %910 = vst [vmem:[%s4 + $0x18] sm:$0xf] %v884
  %911 = vst [vmem:[%s4 + $0x1c] sm:$0xf] %v885
  %912 = vst [vmem:[%s4 + $0x20] sm:$0xf] %v886
  %913 = vst [vmem:[%s4 + $0x24] sm:$0xf] %v887
  %914 = vst [vmem:[%s4 + $0x28] sm:$0xf] %v888
  %915 = vst [vmem:[%s4 + $0x2c] sm:$0xf] %v889
  %916 = vst [vmem:[%s4 + $0x30] sm:$0x1] %v890
  // Predicated region
  $region18: #{auto_encoder_forward.8} parent=0 // pred_check
    _
  $region19: #{auto_encoder_forward.8} parent=0 // pred_check_branch
    %918 = sbr.rel (0) target = $region21
  $region20: #{auto_encoder_forward.8} parent=0 // pred_region
    _
  $region21: #{auto_encoder_forward.8} parent=0 // pred_fallthru
    _
  // Predicated region
  $region22: #{auto_encoder_forward.8} parent=0 // pred_check
    _
  $region23: #{auto_encoder_forward.8} parent=0 // pred_check_branch
    %920 = sbr.rel (0) target = $region25
  $region24: #{auto_encoder_forward.8} parent=0 // pred_region
    _
  $region25: #{auto_encoder_forward.8} parent=0 // pred_fallthru
    _

// kernel: auto_encoder_forward.10
$region0: #{auto_encoder_forward.10}
  #allocation0 [shape = 'u32[]', space=smem, size = 0x4, offset = 0x4, fixed_abs, tag = 'smem constant byte address 0x4 - core index']
  #allocation1 [shape = 'u32[144,128]{1,0:T(1,128)}', space=vmem, size = 0x12000, scoped, tag = 'internal scratch']
  %s0 = inlined_call_operand.vmem [shape: bf16[98,512], index: 0, kind: input, shape index: {}]
  %s1 = inlined_call_operand.vmem [shape: bf16[512,256], index: 1, kind: input, shape index: {}]
  %s2 = inlined_call_operand.vmem [shape: f32[1,256], index: 2, kind: input, shape index: {}]
  %s3 = inlined_call_operand.vmem [shape: f32[1,256], index: 3, kind: input, shape index: {}]
  %s4 = inlined_call_operand.vmem [shape: bf16[98,256], index: 4, kind: output, shape index: {}]
  %s5 = sld [smem:[#allocation0]]
  $region26: #{auto_encoder_forward.10} parent=0
    _
  %s7 = ssub.s32 1, %s5
  %s8 = scalar_select 0, %s7, %s5
  // Predicated region
  $region2: #{auto_encoder_forward.10} parent=0 // pred_check
    _
  $region3: #{auto_encoder_forward.10} parent=0 // pred_check_branch
    %10 = sbr.rel (0) target = $region5
  $region4: #{auto_encoder_forward.10} parent=0 // pred_region
    _
  $region5: #{auto_encoder_forward.10} parent=0 // pred_fallthru
    _
  // Predicated region
  $region6: #{auto_encoder_forward.10} parent=0 // pred_check
    _
  $region7: #{auto_encoder_forward.10} parent=0 // pred_check_branch
    %12 = sbr.rel (0) target = $region9
  $region8: #{auto_encoder_forward.10} parent=0 // pred_region
    _
  $region9: #{auto_encoder_forward.10} parent=0 // pred_fallthru
    _
  // Predicated region
  $region10: #{auto_encoder_forward.10} parent=0 // pred_check
    _
  $region11: #{auto_encoder_forward.10} parent=0 // pred_check_branch
    %14 = sbr.rel (0) target = $region13
  $region12: #{auto_encoder_forward.10} parent=0 // pred_region
    _
  $region13: #{auto_encoder_forward.10} parent=0 // pred_fallthru
    _
  // Predicated region
  $region14: #{auto_encoder_forward.10} parent=0 // pred_check
    _
  $region15: #{auto_encoder_forward.10} parent=0 // pred_check_branch
    %16 = sbr.rel (0) target = $region17
  $region16: #{auto_encoder_forward.10} parent=0 // pred_region
    _
  $region17: #{auto_encoder_forward.10} parent=0 // pred_fallthru
    _
  %v17 = vld [vmem:[%s0] sm:$0xff]
  %v18 = vld [vmem:[%s0 + $0x8] sm:$0xff]
  %v19 = vld [vmem:[%s0 + $0x10] sm:$0xff]
  %v20 = vld [vmem:[%s0 + $0x18] sm:$0xff]
  %v21 = vld [vmem:[%s0 + $0x20] sm:$0xff]
  %v22 = vld [vmem:[%s0 + $0x28] sm:$0xff]
  %v23 = vld [vmem:[%s0 + $0x30] sm:$0xff]
  %v24 = vld [vmem:[%s0 + $0x38] sm:$0xff]
  %v25 = vld [vmem:[%s0 + $0x40] sm:$0xff]
  %v26 = vld [vmem:[%s0 + $0x48] sm:$0xff]
  %v27 = vld [vmem:[%s0 + $0x50] sm:$0xff]
  %v28 = vld [vmem:[%s0 + $0x58] sm:$0xff]
  %v29 = vld [vmem:[%s0 + $0x60] sm:$0xff]
  %v30 = vld [vmem:[%s0 + $0x68] sm:$0xff]
  %v31 = vld [vmem:[%s0 + $0x70] sm:$0xff]
  %v32 = vld [vmem:[%s0 + $0x78] sm:$0xff]
  %v33 = vld [vmem:[%s0 + $0x80] sm:$0xff]
  %v34 = vld [vmem:[%s0 + $0x88] sm:$0xff]
  %v35 = vld [vmem:[%s0 + $0x90] sm:$0xff]
  %v36 = vld [vmem:[%s0 + $0x98] sm:$0xff]
  %v37 = vld [vmem:[%s0 + $0xa0] sm:$0xff]
  %v38 = vld [vmem:[%s0 + $0xa8] sm:$0xff]
  %v39 = vld [vmem:[%s0 + $0xb0] sm:$0xff]
  %v40 = vld [vmem:[%s0 + $0xb8] sm:$0xff]
  %v41 = vld [vmem:[%s0 + $0xc0] sm:$0x11]
  %v42 = vld [vmem:[%s0 + $0xc8] sm:$0x11]
  %v43 = vld [vmem:[%s1] sm:$0xff]
  %v44 = vld [vmem:[%s1 + $0x8] sm:$0xff]
  %v45 = vld [vmem:[%s1 + $0x10] sm:$0xff]
  %v46 = vld [vmem:[%s1 + $0x18] sm:$0xff]
  %v47 = vld [vmem:[%s1 + $0x20] sm:$0xff]
  %v48 = vld [vmem:[%s1 + $0x28] sm:$0xff]
  %v49 = vld [vmem:[%s1 + $0x30] sm:$0xff]
  %v50 = vld [vmem:[%s1 + $0x38] sm:$0xff]
  %v51 = vld [vmem:[%s1 + $0x40] sm:$0xff]
  %v52 = vld [vmem:[%s1 + $0x48] sm:$0xff]
  %v53 = vld [vmem:[%s1 + $0x50] sm:$0xff]
  %v54 = vld [vmem:[%s1 + $0x58] sm:$0xff]
  %v55 = vld [vmem:[%s1 + $0x60] sm:$0xff]
  %v56 = vld [vmem:[%s1 + $0x68] sm:$0xff]
  %v57 = vld [vmem:[%s1 + $0x70] sm:$0xff]
  %v58 = vld [vmem:[%s1 + $0x78] sm:$0xff]
  %v59 = vld [vmem:[%s1 + $0x80] sm:$0xff]
  %v60 = vld [vmem:[%s1 + $0x88] sm:$0xff]
  %v61 = vld [vmem:[%s1 + $0x90] sm:$0xff]
  %v62 = vld [vmem:[%s1 + $0x98] sm:$0xff]
  %v63 = vld [vmem:[%s1 + $0xa0] sm:$0xff]
  %v64 = vld [vmem:[%s1 + $0xa8] sm:$0xff]
  %v65 = vld [vmem:[%s1 + $0xb0] sm:$0xff]
  %v66 = vld [vmem:[%s1 + $0xb8] sm:$0xff]
  %v67 = vld [vmem:[%s1 + $0xc0] sm:$0xff]
  %v68 = vld [vmem:[%s1 + $0xc8] sm:$0xff]
  %v69 = vld [vmem:[%s1 + $0xd0] sm:$0xff]
  %v70 = vld [vmem:[%s1 + $0xd8] sm:$0xff]
  %v71 = vld [vmem:[%s1 + $0xe0] sm:$0xff]
  %v72 = vld [vmem:[%s1 + $0xe8] sm:$0xff]
  %v73 = vld [vmem:[%s1 + $0xf0] sm:$0xff]
  %v74 = vld [vmem:[%s1 + $0xf8] sm:$0xff]
  %v75 = vld [vmem:[%s1 + $0x100] sm:$0xff]
  %v76 = vld [vmem:[%s1 + $0x108] sm:$0xff]
  %v77 = vld [vmem:[%s1 + $0x110] sm:$0xff]
  %v78 = vld [vmem:[%s1 + $0x118] sm:$0xff]
  %v79 = vld [vmem:[%s1 + $0x120] sm:$0xff]
  %v80 = vld [vmem:[%s1 + $0x128] sm:$0xff]
  %v81 = vld [vmem:[%s1 + $0x130] sm:$0xff]
  %v82 = vld [vmem:[%s1 + $0x138] sm:$0xff]
  %v83 = vld [vmem:[%s1 + $0x140] sm:$0xff]
  %v84 = vld [vmem:[%s1 + $0x148] sm:$0xff]
  %v85 = vld [vmem:[%s1 + $0x150] sm:$0xff]
  %v86 = vld [vmem:[%s1 + $0x158] sm:$0xff]
  %v87 = vld [vmem:[%s1 + $0x160] sm:$0xff]
  %v88 = vld [vmem:[%s1 + $0x168] sm:$0xff]
  %v89 = vld [vmem:[%s1 + $0x170] sm:$0xff]
  %v90 = vld [vmem:[%s1 + $0x178] sm:$0xff]
  %v91 = vld [vmem:[%s1 + $0x180] sm:$0xff]
  %v92 = vld [vmem:[%s1 + $0x188] sm:$0xff]
  %v93 = vld [vmem:[%s1 + $0x190] sm:$0xff]
  %v94 = vld [vmem:[%s1 + $0x198] sm:$0xff]
  %v95 = vld [vmem:[%s1 + $0x1a0] sm:$0xff]
  %v96 = vld [vmem:[%s1 + $0x1a8] sm:$0xff]
  %v97 = vld [vmem:[%s1 + $0x1b0] sm:$0xff]
  %v98 = vld [vmem:[%s1 + $0x1b8] sm:$0xff]
  %v99 = vld [vmem:[%s1 + $0x1c0] sm:$0xff]
  %v100 = vld [vmem:[%s1 + $0x1c8] sm:$0xff]
  %v101 = vld [vmem:[%s1 + $0x1d0] sm:$0xff]
  %v102 = vld [vmem:[%s1 + $0x1d8] sm:$0xff]
  %v103 = vld [vmem:[%s1 + $0x1e0] sm:$0xff]
  %v104 = vld [vmem:[%s1 + $0x1e8] sm:$0xff]
  %v105 = vld [vmem:[%s1 + $0x1f0] sm:$0xff]
  %v106 = vld [vmem:[%s1 + $0x1f8] sm:$0xff]
  %v133 = vunpack.c.l.b16 %v17
  %v134 = vunpack.c.h.b16 %v17
  %v135 = vunpack.c.l.b16 %v18
  %v136 = vunpack.c.h.b16 %v18
  %v137 = vunpack.c.l.b16 %v19
  %v138 = vunpack.c.h.b16 %v19
  %v139 = vunpack.c.l.b16 %v20
  %v140 = vunpack.c.h.b16 %v20
  %v141 = vunpack.c.l.b16 %v21
  %v142 = vunpack.c.h.b16 %v21
  %v143 = vunpack.c.l.b16 %v22
  %v144 = vunpack.c.h.b16 %v22
  %v145 = vunpack.c.l.b16 %v23
  %v146 = vunpack.c.h.b16 %v23
  %v147 = vunpack.c.l.b16 %v24
  %v148 = vunpack.c.h.b16 %v24
  %v149 = vunpack.c.l.b16 %v25
  %v150 = vunpack.c.h.b16 %v25
  %v151 = vunpack.c.l.b16 %v26
  %v152 = vunpack.c.h.b16 %v26
  %v153 = vunpack.c.l.b16 %v27
  %v154 = vunpack.c.h.b16 %v27
  %v155 = vunpack.c.l.b16 %v28
  %v156 = vunpack.c.h.b16 %v28
  %v157 = vunpack.c.l.b16 %v29
  %v158 = vunpack.c.h.b16 %v29
  %v159 = vunpack.c.l.b16 %v30
  %v160 = vunpack.c.h.b16 %v30
  %v161 = vunpack.c.l.b16 %v31
  %v162 = vunpack.c.h.b16 %v31
  %v163 = vunpack.c.l.b16 %v32
  %v164 = vunpack.c.h.b16 %v32
  %v165 = vunpack.c.l.b16 %v33
  %v166 = vunpack.c.h.b16 %v33
  %v167 = vunpack.c.l.b16 %v34
  %v168 = vunpack.c.h.b16 %v34
  %v169 = vunpack.c.l.b16 %v35
  %v170 = vunpack.c.h.b16 %v35
  %v171 = vunpack.c.l.b16 %v36
  %v172 = vunpack.c.h.b16 %v36
  %v173 = vunpack.c.l.b16 %v37
  %v174 = vunpack.c.h.b16 %v37
  %v175 = vunpack.c.l.b16 %v38
  %v176 = vunpack.c.h.b16 %v38
  %v177 = vunpack.c.l.b16 %v39
  %v178 = vunpack.c.h.b16 %v39
  %v179 = vunpack.c.l.b16 %v40
  %v180 = vunpack.c.h.b16 %v40
  %v181 = vunpack.c.l.b16 %v41
  %v182 = vunpack.c.h.b16 %v41
  %v183 = vunpack.c.l.b16 %v42
  %v184 = vunpack.c.h.b16 %v42
  %v185 = vpack.c.b16 %v137, %v133
  %v186 = vpack.c.b16 %v138, %v134
  %v187 = vpack.c.b16 %v139, %v135
  %v188 = vpack.c.b16 %v140, %v136
  %v189 = vpack.c.b16 %v145, %v141
  %v190 = vpack.c.b16 %v146, %v142
  %v191 = vpack.c.b16 %v147, %v143
  %v192 = vpack.c.b16 %v148, %v144
  %v193 = vpack.c.b16 %v153, %v149
  %v194 = vpack.c.b16 %v154, %v150
  %v195 = vpack.c.b16 %v155, %v151
  %v196 = vpack.c.b16 %v156, %v152
  %v197 = vpack.c.b16 %v161, %v157
  %v198 = vpack.c.b16 %v162, %v158
  %v199 = vpack.c.b16 %v163, %v159
  %v200 = vpack.c.b16 %v164, %v160
  %v201 = vpack.c.b16 %v169, %v165
  %v202 = vpack.c.b16 %v170, %v166
  %v203 = vpack.c.b16 %v171, %v167
  %v204 = vpack.c.b16 %v172, %v168
  %v205 = vpack.c.b16 %v177, %v173
  %v206 = vpack.c.b16 %v178, %v174
  %v207 = vpack.c.b16 %v179, %v175
  %v208 = vpack.c.b16 %v180, %v176
  %v209 = vpack.c.b16 %v181, %v181
  %v210 = vpack.c.b16 %v182, %v182
  %v211 = vpack.c.b16 %v183, %v183
  %v212 = vpack.c.b16 %v184, %v184
  %v305 = vunpack.c.l.b16 %v43
  %v306 = vunpack.c.h.b16 %v43
  %v307 = vunpack.c.l.b16 %v44
  %v308 = vunpack.c.h.b16 %v44
  %v309 = vunpack.c.l.b16 %v45
  %v310 = vunpack.c.h.b16 %v45
  %v311 = vunpack.c.l.b16 %v46
  %v312 = vunpack.c.h.b16 %v46
  %v313 = vunpack.c.l.b16 %v47
  %v314 = vunpack.c.h.b16 %v47
  %v315 = vunpack.c.l.b16 %v48
  %v316 = vunpack.c.h.b16 %v48
  %v317 = vunpack.c.l.b16 %v49
  %v318 = vunpack.c.h.b16 %v49
  %v319 = vunpack.c.l.b16 %v50
  %v320 = vunpack.c.h.b16 %v50
  %v321 = vunpack.c.l.b16 %v51
  %v322 = vunpack.c.h.b16 %v51
  %v323 = vunpack.c.l.b16 %v52
  %v324 = vunpack.c.h.b16 %v52
  %v325 = vunpack.c.l.b16 %v53
  %v326 = vunpack.c.h.b16 %v53
  %v327 = vunpack.c.l.b16 %v54
  %v328 = vunpack.c.h.b16 %v54
  %v329 = vunpack.c.l.b16 %v55
  %v330 = vunpack.c.h.b16 %v55
  %v331 = vunpack.c.l.b16 %v56
  %v332 = vunpack.c.h.b16 %v56
  %v333 = vunpack.c.l.b16 %v57
  %v334 = vunpack.c.h.b16 %v57
  %v335 = vunpack.c.l.b16 %v58
  %v336 = vunpack.c.h.b16 %v58
  %v337 = vunpack.c.l.b16 %v59
  %v338 = vunpack.c.h.b16 %v59
  %v339 = vunpack.c.l.b16 %v60
  %v340 = vunpack.c.h.b16 %v60
  %v341 = vunpack.c.l.b16 %v61
  %v342 = vunpack.c.h.b16 %v61
  %v343 = vunpack.c.l.b16 %v62
  %v344 = vunpack.c.h.b16 %v62
  %v345 = vunpack.c.l.b16 %v63
  %v346 = vunpack.c.h.b16 %v63
  %v347 = vunpack.c.l.b16 %v64
  %v348 = vunpack.c.h.b16 %v64
  %v349 = vunpack.c.l.b16 %v65
  %v350 = vunpack.c.h.b16 %v65
  %v351 = vunpack.c.l.b16 %v66
  %v352 = vunpack.c.h.b16 %v66
  %v353 = vunpack.c.l.b16 %v67
  %v354 = vunpack.c.h.b16 %v67
  %v355 = vunpack.c.l.b16 %v68
  %v356 = vunpack.c.h.b16 %v68
  %v357 = vunpack.c.l.b16 %v69
  %v358 = vunpack.c.h.b16 %v69
  %v359 = vunpack.c.l.b16 %v70
  %v360 = vunpack.c.h.b16 %v70
  %v361 = vunpack.c.l.b16 %v71
  %v362 = vunpack.c.h.b16 %v71
  %v363 = vunpack.c.l.b16 %v72
  %v364 = vunpack.c.h.b16 %v72
  %v365 = vunpack.c.l.b16 %v73
  %v366 = vunpack.c.h.b16 %v73
  %v367 = vunpack.c.l.b16 %v74
  %v368 = vunpack.c.h.b16 %v74
  %v369 = vunpack.c.l.b16 %v75
  %v370 = vunpack.c.h.b16 %v75
  %v371 = vunpack.c.l.b16 %v76
  %v372 = vunpack.c.h.b16 %v76
  %v373 = vunpack.c.l.b16 %v77
  %v374 = vunpack.c.h.b16 %v77
  %v375 = vunpack.c.l.b16 %v78
  %v376 = vunpack.c.h.b16 %v78
  %v377 = vunpack.c.l.b16 %v79
  %v378 = vunpack.c.h.b16 %v79
  %v379 = vunpack.c.l.b16 %v80
  %v380 = vunpack.c.h.b16 %v80
  %v381 = vunpack.c.l.b16 %v81
  %v382 = vunpack.c.h.b16 %v81
  %v383 = vunpack.c.l.b16 %v82
  %v384 = vunpack.c.h.b16 %v82
  %v385 = vunpack.c.l.b16 %v83
  %v386 = vunpack.c.h.b16 %v83
  %v387 = vunpack.c.l.b16 %v84
  %v388 = vunpack.c.h.b16 %v84
  %v389 = vunpack.c.l.b16 %v85
  %v390 = vunpack.c.h.b16 %v85
  %v391 = vunpack.c.l.b16 %v86
  %v392 = vunpack.c.h.b16 %v86
  %v393 = vunpack.c.l.b16 %v87
  %v394 = vunpack.c.h.b16 %v87
  %v395 = vunpack.c.l.b16 %v88
  %v396 = vunpack.c.h.b16 %v88
  %v397 = vunpack.c.l.b16 %v89
  %v398 = vunpack.c.h.b16 %v89
  %v399 = vunpack.c.l.b16 %v90
  %v400 = vunpack.c.h.b16 %v90
  %v401 = vunpack.c.l.b16 %v91
  %v402 = vunpack.c.h.b16 %v91
  %v403 = vunpack.c.l.b16 %v92
  %v404 = vunpack.c.h.b16 %v92
  %v405 = vunpack.c.l.b16 %v93
  %v406 = vunpack.c.h.b16 %v93
  %v407 = vunpack.c.l.b16 %v94
  %v408 = vunpack.c.h.b16 %v94
  %v409 = vunpack.c.l.b16 %v95
  %v410 = vunpack.c.h.b16 %v95
  %v411 = vunpack.c.l.b16 %v96
  %v412 = vunpack.c.h.b16 %v96
  %v413 = vunpack.c.l.b16 %v97
  %v414 = vunpack.c.h.b16 %v97
  %v415 = vunpack.c.l.b16 %v98
  %v416 = vunpack.c.h.b16 %v98
  %v417 = vunpack.c.l.b16 %v99
  %v418 = vunpack.c.h.b16 %v99
  %v419 = vunpack.c.l.b16 %v100
  %v420 = vunpack.c.h.b16 %v100
  %v421 = vunpack.c.l.b16 %v101
  %v422 = vunpack.c.h.b16 %v101
  %v423 = vunpack.c.l.b16 %v102
  %v424 = vunpack.c.h.b16 %v102
  %v425 = vunpack.c.l.b16 %v103
  %v426 = vunpack.c.h.b16 %v103
  %v427 = vunpack.c.l.b16 %v104
  %v428 = vunpack.c.h.b16 %v104
  %v429 = vunpack.c.l.b16 %v105
  %v430 = vunpack.c.h.b16 %v105
  %v431 = vunpack.c.l.b16 %v106
  %v432 = vunpack.c.h.b16 %v106
  %v433 = vpack.c.b16 %v307, %v305
  %v434 = vpack.c.b16 %v308, %v306
  %v435 = vpack.c.b16 %v311, %v309
  %v436 = vpack.c.b16 %v312, %v310
  %v437 = vpack.c.b16 %v315, %v313
  %v438 = vpack.c.b16 %v316, %v314
  %v439 = vpack.c.b16 %v319, %v317
  %v440 = vpack.c.b16 %v320, %v318
  %v441 = vpack.c.b16 %v323, %v321
  %v442 = vpack.c.b16 %v324, %v322
  %v443 = vpack.c.b16 %v327, %v325
  %v444 = vpack.c.b16 %v328, %v326
  %v445 = vpack.c.b16 %v331, %v329
  %v446 = vpack.c.b16 %v332, %v330
  %v447 = vpack.c.b16 %v335, %v333
  %v448 = vpack.c.b16 %v336, %v334
  %v449 = vpack.c.b16 %v339, %v337
  %v450 = vpack.c.b16 %v340, %v338
  %v451 = vpack.c.b16 %v343, %v341
  %v452 = vpack.c.b16 %v344, %v342
  %v453 = vpack.c.b16 %v347, %v345
  %v454 = vpack.c.b16 %v348, %v346
  %v455 = vpack.c.b16 %v351, %v349
  %v456 = vpack.c.b16 %v352, %v350
  %v457 = vpack.c.b16 %v355, %v353
  %v458 = vpack.c.b16 %v356, %v354
  %v459 = vpack.c.b16 %v359, %v357
  %v460 = vpack.c.b16 %v360, %v358
  %v461 = vpack.c.b16 %v363, %v361
  %v462 = vpack.c.b16 %v364, %v362
  %v463 = vpack.c.b16 %v367, %v365
  %v464 = vpack.c.b16 %v368, %v366
  %v465 = vpack.c.b16 %v371, %v369
  %v466 = vpack.c.b16 %v372, %v370
  %v467 = vpack.c.b16 %v375, %v373
  %v468 = vpack.c.b16 %v376, %v374
  %v469 = vpack.c.b16 %v379, %v377
  %v470 = vpack.c.b16 %v380, %v378
  %v471 = vpack.c.b16 %v383, %v381
  %v472 = vpack.c.b16 %v384, %v382
  %v473 = vpack.c.b16 %v387, %v385
  %v474 = vpack.c.b16 %v388, %v386
  %v475 = vpack.c.b16 %v391, %v389
  %v476 = vpack.c.b16 %v392, %v390
  %v477 = vpack.c.b16 %v395, %v393
  %v478 = vpack.c.b16 %v396, %v394
  %v479 = vpack.c.b16 %v399, %v397
  %v480 = vpack.c.b16 %v400, %v398
  %v481 = vpack.c.b16 %v403, %v401
  %v482 = vpack.c.b16 %v404, %v402
  %v483 = vpack.c.b16 %v407, %v405
  %v484 = vpack.c.b16 %v408, %v406
  %v485 = vpack.c.b16 %v411, %v409
  %v486 = vpack.c.b16 %v412, %v410
  %v487 = vpack.c.b16 %v415, %v413
  %v488 = vpack.c.b16 %v416, %v414
  %v489 = vpack.c.b16 %v419, %v417
  %v490 = vpack.c.b16 %v420, %v418
  %v491 = vpack.c.b16 %v423, %v421
  %v492 = vpack.c.b16 %v424, %v422
  %v493 = vpack.c.b16 %v427, %v425
  %v494 = vpack.c.b16 %v428, %v426
  %v495 = vpack.c.b16 %v431, %v429
  %v496 = vpack.c.b16 %v432, %v430
  %561 = vmatprep.subr.bf16.mxu0 %v448
  %562 = vmatpush1.bf16.msra.mxu0 %v447
  %563 = vmatprep.subr.bf16.mxu0 %v446
  %564 = vmatpush1.bf16.msra.mxu0 %v445
  %565 = vmatprep.subr.bf16.mxu0 %v444
  %566 = vmatpush1.bf16.msra.mxu0 %v443
  %567 = vmatprep.subr.bf16.mxu0 %v442
  %568 = vmatpush1.bf16.msra.mxu0 %v441
  %569 = vmatprep.subr.bf16.mxu0 %v440
  %570 = vmatpush1.bf16.msra.mxu0 %v439
  %571 = vmatprep.subr.bf16.mxu0 %v438
  %572 = vmatpush1.bf16.msra.mxu0 %v437
  %573 = vmatprep.subr.bf16.mxu0 %v436
  %574 = vmatpush1.bf16.msra.mxu0 %v435
  %575 = vmatprep.subr.bf16.mxu0 %v434
  %576 = vmatpush1.bf16.msra.mxu0 %v433
  %577 = vmatprep.subr.bf16.mxu0 %v464
  %578 = vmatpush2.bf16.msra.mxu0 %v463
  %579 = vmatprep.subr.bf16.mxu0 %v462
  %580 = vmatpush2.bf16.msra.mxu0 %v461
  %581 = vmatprep.subr.bf16.mxu0 %v460
  %582 = vmatpush2.bf16.msra.mxu0 %v459
  %583 = vmatprep.subr.bf16.mxu0 %v458
  %584 = vmatpush2.bf16.msra.mxu0 %v457
  %585 = vmatprep.subr.bf16.mxu0 %v456
  %586 = vmatpush2.bf16.msra.mxu0 %v455
  %587 = vmatprep.subr.bf16.mxu0 %v454
  %588 = vmatpush2.bf16.msra.mxu0 %v453
  %589 = vmatprep.subr.bf16.mxu0 %v452
  %590 = vmatpush2.bf16.msra.mxu0 %v451
  %591 = vmatprep.subr.bf16.mxu0 %v450
  %592 = vmatpush2.bf16.msra.mxu0 %v449
  %593 = vmatprep.mubr.bf16.mxu0 %v186
  %594 = vmatmul.mubr.bf16.gmra.mxu0 %v185
  %v595 = vpop.f32.mrf.mxu0
  %v596 = vadd.f32 0.0, %v595
  %v597 = vpop.f32.mrf.mxu0
  %v598 = vadd.f32 0.0, %v597
  %v599 = vpop.f32.mrf.mxu0
  %v600 = vadd.f32 0.0, %v599
  %v601 = vpop.f32.mrf.mxu0
  %v602 = vadd.f32 0.0, %v601
  %603 = vmatprep.mubr.bf16.mxu0 %v190
  %604 = vmatmul.mubr.bf16.gmra.mxu0 %v189
  %v605 = vpop.f32.mrf.mxu0
  %v606 = vadd.f32 0.0, %v605
  %v607 = vpop.f32.mrf.mxu0
  %v608 = vadd.f32 0.0, %v607
  %v609 = vpop.f32.mrf.mxu0
  %v610 = vadd.f32 0.0, %v609
  %v611 = vpop.f32.mrf.mxu0
  %v612 = vadd.f32 0.0, %v611
  %613 = vmatprep.mubr.bf16.mxu0 %v194
  %614 = vmatmul.mubr.bf16.gmra.mxu0 %v193
  %v615 = vpop.f32.mrf.mxu0
  %v616 = vadd.f32 0.0, %v615
  %v617 = vpop.f32.mrf.mxu0
  %v618 = vadd.f32 0.0, %v617
  %v619 = vpop.f32.mrf.mxu0
  %v620 = vadd.f32 0.0, %v619
  %v621 = vpop.f32.mrf.mxu0
  %v622 = vadd.f32 0.0, %v621
  %623 = vmatprep.mubr.bf16.mxu0 %v198
  %624 = vmatmul.mubr.bf16.gmra.mxu0 %v197
  %v625 = vpop.f32.mrf.mxu0
  %v626 = vadd.f32 0.0, %v625
  %v627 = vpop.f32.mrf.mxu0
  %v628 = vadd.f32 0.0, %v627
  %v629 = vpop.f32.mrf.mxu0
  %v630 = vadd.f32 0.0, %v629
  %v631 = vpop.f32.mrf.mxu0
  %v632 = vadd.f32 0.0, %v631
  %633 = vmatprep.mubr.bf16.mxu0 %v202
  %634 = vmatmul.mubr.bf16.gmra.mxu0 %v201
  %v635 = vpop.f32.mrf.mxu0
  %v636 = vadd.f32 0.0, %v635
  %v637 = vpop.f32.mrf.mxu0
  %v638 = vadd.f32 0.0, %v637
  %v639 = vpop.f32.mrf.mxu0
  %v640 = vadd.f32 0.0, %v639
  %v641 = vpop.f32.mrf.mxu0
  %v642 = vadd.f32 0.0, %v641
  %643 = vmatprep.mubr.bf16.mxu0 %v206
  %644 = vmatmul.mubr.bf16.gmra.mxu0 %v205
  %v645 = vpop.f32.mrf.mxu0
  %v646 = vadd.f32 0.0, %v645
  %v647 = vpop.f32.mrf.mxu0
  %v648 = vadd.f32 0.0, %v647
  %v649 = vpop.f32.mrf.mxu0
  %v650 = vadd.f32 0.0, %v649
  %v651 = vpop.f32.mrf.mxu0
  %v652 = vadd.f32 0.0, %v651
  %653 = vmatprep.mubr.bf16.mxu0 %v210
  %654 = vmatmul.mubr.bf16.gmra.mxu0 %v209
  %v655 = vpop.f32.mrf.mxu0
  %v656 = vadd.f32 0.0, %v655
  %v657 = vpop.f32.mrf.mxu0
  %v658 = vadd.f32 0.0, %v657
  %v659 = vpop.f32.mrf.mxu0
  %v660 = vpop.f32.mrf.mxu0
  %661 = vdwg.mxu0
  %662 = vmatprep.subr.bf16.mxu0 %v480
  %663 = vmatpush1.bf16.msra.mxu0 %v479
  %664 = vmatprep.subr.bf16.mxu0 %v478
  %665 = vmatpush1.bf16.msra.mxu0 %v477
  %666 = vmatprep.subr.bf16.mxu0 %v476
  %667 = vmatpush1.bf16.msra.mxu0 %v475
  %668 = vmatprep.subr.bf16.mxu0 %v474
  %669 = vmatpush1.bf16.msra.mxu0 %v473
  %670 = vmatprep.subr.bf16.mxu0 %v472
  %671 = vmatpush1.bf16.msra.mxu0 %v471
  %672 = vmatprep.subr.bf16.mxu0 %v470
  %673 = vmatpush1.bf16.msra.mxu0 %v469
  %674 = vmatprep.subr.bf16.mxu0 %v468
  %675 = vmatpush1.bf16.msra.mxu0 %v467
  %676 = vmatprep.subr.bf16.mxu0 %v466
  %677 = vmatpush1.bf16.msra.mxu0 %v465
  %678 = vmatprep.subr.bf16.mxu0 %v496
  %679 = vmatpush2.bf16.msra.mxu0 %v495
  %680 = vmatprep.subr.bf16.mxu0 %v494
  %681 = vmatpush2.bf16.msra.mxu0 %v493
  %682 = vmatprep.subr.bf16.mxu0 %v492
  %683 = vmatpush2.bf16.msra.mxu0 %v491
  %684 = vmatprep.subr.bf16.mxu0 %v490
  %685 = vmatpush2.bf16.msra.mxu0 %v489
  %686 = vmatprep.subr.bf16.mxu0 %v488
  %687 = vmatpush2.bf16.msra.mxu0 %v487
  %688 = vmatprep.subr.bf16.mxu0 %v486
  %689 = vmatpush2.bf16.msra.mxu0 %v485
  %690 = vmatprep.subr.bf16.mxu0 %v484
  %691 = vmatpush2.bf16.msra.mxu0 %v483
  %692 = vmatprep.subr.bf16.mxu0 %v482
  %693 = vmatpush2.bf16.msra.mxu0 %v481
  %694 = vmatprep.mubr.bf16.mxu0 %v188
  %695 = vmatmul.mubr.bf16.gmra.mxu0 %v187
  %v696 = vpop.f32.mrf.mxu0
  %v697 = vadd.f32 %v596, %v696
  %v698 = vpop.f32.mrf.mxu0
  %v699 = vadd.f32 %v598, %v698
  %v700 = vpop.f32.mrf.mxu0
  %v701 = vadd.f32 %v600, %v700
  %v702 = vpop.f32.mrf.mxu0
  %v703 = vadd.f32 %v602, %v702
  %704 = vmatprep.mubr.bf16.mxu0 %v192
  %705 = vmatmul.mubr.bf16.gmra.mxu0 %v191
  %v706 = vpop.f32.mrf.mxu0
  %v707 = vadd.f32 %v606, %v706
  %v708 = vpop.f32.mrf.mxu0
  %v709 = vadd.f32 %v608, %v708
  %v710 = vpop.f32.mrf.mxu0
  %v711 = vadd.f32 %v610, %v710
  %v712 = vpop.f32.mrf.mxu0
  %v713 = vadd.f32 %v612, %v712
  %714 = vmatprep.mubr.bf16.mxu0 %v196
  %715 = vmatmul.mubr.bf16.gmra.mxu0 %v195
  %v716 = vpop.f32.mrf.mxu0
  %v717 = vadd.f32 %v616, %v716
  %v718 = vpop.f32.mrf.mxu0
  %v719 = vadd.f32 %v618, %v718
  %v720 = vpop.f32.mrf.mxu0
  %v721 = vadd.f32 %v620, %v720
  %v722 = vpop.f32.mrf.mxu0
  %v723 = vadd.f32 %v622, %v722
  %724 = vmatprep.mubr.bf16.mxu0 %v200
  %725 = vmatmul.mubr.bf16.gmra.mxu0 %v199
  %v726 = vpop.f32.mrf.mxu0
  %v727 = vadd.f32 %v626, %v726
  %v728 = vpop.f32.mrf.mxu0
  %v729 = vadd.f32 %v628, %v728
  %v730 = vpop.f32.mrf.mxu0
  %v731 = vadd.f32 %v630, %v730
  %v732 = vpop.f32.mrf.mxu0
  %v733 = vadd.f32 %v632, %v732
  %734 = vmatprep.mubr.bf16.mxu0 %v204
  %735 = vmatmul.mubr.bf16.gmra.mxu0 %v203
  %v736 = vpop.f32.mrf.mxu0
  %v737 = vadd.f32 %v636, %v736
  %v738 = vpop.f32.mrf.mxu0
  %v739 = vadd.f32 %v638, %v738
  %v740 = vpop.f32.mrf.mxu0
  %v741 = vadd.f32 %v640, %v740
  %v742 = vpop.f32.mrf.mxu0
  %v743 = vadd.f32 %v642, %v742
  %744 = vmatprep.mubr.bf16.mxu0 %v208
  %745 = vmatmul.mubr.bf16.gmra.mxu0 %v207
  %v746 = vpop.f32.mrf.mxu0
  %v747 = vadd.f32 %v646, %v746
  %v748 = vpop.f32.mrf.mxu0
  %v749 = vadd.f32 %v648, %v748
  %v750 = vpop.f32.mrf.mxu0
  %v751 = vadd.f32 %v650, %v750
  %v752 = vpop.f32.mrf.mxu0
  %v753 = vadd.f32 %v652, %v752
  %754 = vmatprep.mubr.bf16.mxu0 %v212
  %755 = vmatmul.mubr.bf16.gmra.mxu0 %v211
  %v756 = vpop.f32.mrf.mxu0
  %v757 = vadd.f32 %v656, %v756
  %v758 = vpop.f32.mrf.mxu0
  %v759 = vadd.f32 %v658, %v758
  %v760 = vpop.f32.mrf.mxu0
  %v761 = vpop.f32.mrf.mxu0
  %762 = vdwg.mxu0
  %v763 = vld [vmem:[%s2] sm:$0x3]
  %v765 = vlaneseq
  %v766 = vshrl.u32 %v765, 7
  %v767 = vsub.s32 0, %v766
  %v768 = vrot.slane %v763, %v767
  %v769 = vlaneseq
  %v770 = vshrl.u32 %v769, 7
  %v771 = vsub.s32 1, %v770
  %v772 = vrot.slane %v763, %v771
  %v775 = vmul.f32 %v697, %v768
  %v776 = vmul.f32 %v699, %v772
  %v777 = vmul.f32 %v701, %v768
  %v778 = vmul.f32 %v703, %v772
  %v779 = vmul.f32 %v707, %v768
  %v780 = vmul.f32 %v709, %v772
  %v781 = vmul.f32 %v711, %v768
  %v782 = vmul.f32 %v713, %v772
  %v783 = vmul.f32 %v717, %v768
  %v784 = vmul.f32 %v719, %v772
  %v785 = vmul.f32 %v721, %v768
  %v786 = vmul.f32 %v723, %v772
  %v787 = vmul.f32 %v727, %v768
  %v788 = vmul.f32 %v729, %v772
  %v789 = vmul.f32 %v731, %v768
  %v790 = vmul.f32 %v733, %v772
  %v791 = vmul.f32 %v737, %v768
  %v792 = vmul.f32 %v739, %v772
  %v793 = vmul.f32 %v741, %v768
  %v794 = vmul.f32 %v743, %v772
  %v795 = vmul.f32 %v747, %v768
  %v796 = vmul.f32 %v749, %v772
  %v797 = vmul.f32 %v751, %v768
  %v798 = vmul.f32 %v753, %v772
  %v799 = vmul.f32 %v757, %v768
  %v800 = vmul.f32 %v759, %v772
  %v801 = vld [vmem:[%s3] sm:$0x3]
  %v803 = vlaneseq
  %v804 = vshrl.u32 %v803, 7
  %v805 = vsub.s32 0, %v804
  %v806 = vrot.slane %v801, %v805
  %v807 = vlaneseq
  %v808 = vshrl.u32 %v807, 7
  %v809 = vsub.s32 1, %v808
  %v810 = vrot.slane %v801, %v809
  %v813 = vadd.f32 %v775, %v806
  %v814 = vadd.f32 %v776, %v810
  %v815 = vadd.f32 %v777, %v806
  %v816 = vadd.f32 %v778, %v810
  %v817 = vadd.f32 %v779, %v806
  %v818 = vadd.f32 %v780, %v810
  %v819 = vadd.f32 %v781, %v806
  %v820 = vadd.f32 %v782, %v810
  %v821 = vadd.f32 %v783, %v806
  %v822 = vadd.f32 %v784, %v810
  %v823 = vadd.f32 %v785, %v806
  %v824 = vadd.f32 %v786, %v810
  %v825 = vadd.f32 %v787, %v806
  %v826 = vadd.f32 %v788, %v810
  %v827 = vadd.f32 %v789, %v806
  %v828 = vadd.f32 %v790, %v810
  %v829 = vadd.f32 %v791, %v806
  %v830 = vadd.f32 %v792, %v810
  %v831 = vadd.f32 %v793, %v806
  %v832 = vadd.f32 %v794, %v810
  %v833 = vadd.f32 %v795, %v806
  %v834 = vadd.f32 %v796, %v810
  %v835 = vadd.f32 %v797, %v806
  %v836 = vadd.f32 %v798, %v810
  %v837 = vadd.f32 %v799, %v806
  %v838 = vadd.f32 %v800, %v810
  %v839 = vmax.f32 %v813, 0.0
  %v840 = vmax.f32 %v814, 0.0
  %v841 = vmax.f32 %v815, 0.0
  %v842 = vmax.f32 %v816, 0.0
  %v843 = vmax.f32 %v817, 0.0
  %v844 = vmax.f32 %v818, 0.0
  %v845 = vmax.f32 %v819, 0.0
  %v846 = vmax.f32 %v820, 0.0
  %v847 = vmax.f32 %v821, 0.0
  %v848 = vmax.f32 %v822, 0.0
  %v849 = vmax.f32 %v823, 0.0
  %v850 = vmax.f32 %v824, 0.0
  %v851 = vmax.f32 %v825, 0.0
  %v852 = vmax.f32 %v826, 0.0
  %v853 = vmax.f32 %v827, 0.0
  %v854 = vmax.f32 %v828, 0.0
  %v855 = vmax.f32 %v829, 0.0
  %v856 = vmax.f32 %v830, 0.0
  %v857 = vmax.f32 %v831, 0.0
  %v858 = vmax.f32 %v832, 0.0
  %v859 = vmax.f32 %v833, 0.0
  %v860 = vmax.f32 %v834, 0.0
  %v861 = vmax.f32 %v835, 0.0
  %v862 = vmax.f32 %v836, 0.0
  %v863 = vmax.f32 %v837, 0.0
  %v864 = vmax.f32 %v838, 0.0
  %v865 = vpack.c.bf16 %v841, %v839
  %v866 = vpack.c.bf16 %v842, %v840
  %v867 = vpack.c.bf16 %v845, %v843
  %v868 = vpack.c.bf16 %v846, %v844
  %v869 = vpack.c.bf16 %v849, %v847
  %v870 = vpack.c.bf16 %v850, %v848
  %v871 = vpack.c.bf16 %v853, %v851
  %v872 = vpack.c.bf16 %v854, %v852
  %v873 = vpack.c.bf16 %v857, %v855
  %v874 = vpack.c.bf16 %v858, %v856
  %v875 = vpack.c.bf16 %v861, %v859
  %v876 = vpack.c.bf16 %v862, %v860
  %v877 = vpack.c.bf16 %v863, %v863
  %v878 = vpack.c.bf16 %v864, %v864
  %v893 = vunpack.c.l.b16 %v865
  %v894 = vunpack.c.l.b16 %v866
  %v895 = vunpack.c.h.b16 %v865
  %v896 = vunpack.c.h.b16 %v866
  %v897 = vunpack.c.l.b16 %v867
  %v898 = vunpack.c.l.b16 %v868
  %v899 = vunpack.c.h.b16 %v867
  %v900 = vunpack.c.h.b16 %v868
  %v901 = vunpack.c.l.b16 %v869
  %v902 = vunpack.c.l.b16 %v870
  %v903 = vunpack.c.h.b16 %v869
  %v904 = vunpack.c.h.b16 %v870
  %v905 = vunpack.c.l.b16 %v871
  %v906 = vunpack.c.l.b16 %v872
  %v907 = vunpack.c.h.b16 %v871
  %v908 = vunpack.c.h.b16 %v872
  %v909 = vunpack.c.l.b16 %v873
  %v910 = vunpack.c.l.b16 %v874
  %v911 = vunpack.c.h.b16 %v873
  %v912 = vunpack.c.h.b16 %v874
  %v913 = vunpack.c.l.b16 %v875
  %v914 = vunpack.c.l.b16 %v876
  %v915 = vunpack.c.h.b16 %v875
  %v916 = vunpack.c.h.b16 %v876
  %v917 = vunpack.c.l.b16 %v877
  %v918 = vunpack.c.l.b16 %v878
  %v919 = vpack.c.b16 %v894, %v893
  %v920 = vpack.c.b16 %v896, %v895
  %v921 = vpack.c.b16 %v898, %v897
  %v922 = vpack.c.b16 %v900, %v899
  %v923 = vpack.c.b16 %v902, %v901
  %v924 = vpack.c.b16 %v904, %v903
  %v925 = vpack.c.b16 %v906, %v905
  %v926 = vpack.c.b16 %v908, %v907
  %v927 = vpack.c.b16 %v910, %v909
  %v928 = vpack.c.b16 %v912, %v911
  %v929 = vpack.c.b16 %v914, %v913
  %v930 = vpack.c.b16 %v916, %v915
  %v931 = vpack.c.b16 %v918, %v917
  %945 = vst [vmem:[%s4] sm:$0xff] %v919
  %946 = vst [vmem:[%s4 + $0x8] sm:$0xff] %v920
  %947 = vst [vmem:[%s4 + $0x10] sm:$0xff] %v921
  %948 = vst [vmem:[%s4 + $0x18] sm:$0xff] %v922
  %949 = vst [vmem:[%s4 + $0x20] sm:$0xff] %v923
  %950 = vst [vmem:[%s4 + $0x28] sm:$0xff] %v924
  %951 = vst [vmem:[%s4 + $0x30] sm:$0xff] %v925
  %952 = vst [vmem:[%s4 + $0x38] sm:$0xff] %v926
  %953 = vst [vmem:[%s4 + $0x40] sm:$0xff] %v927
  %954 = vst [vmem:[%s4 + $0x48] sm:$0xff] %v928
  %955 = vst [vmem:[%s4 + $0x50] sm:$0xff] %v929
  %956 = vst [vmem:[%s4 + $0x58] sm:$0xff] %v930
  %957 = vst [vmem:[%s4 + $0x60] sm:$0x11] %v931
  // Predicated region
  $region18: #{auto_encoder_forward.10} parent=0 // pred_check
    _
  $region19: #{auto_encoder_forward.10} parent=0 // pred_check_branch
    %959 = sbr.rel (0) target = $region21
  $region20: #{auto_encoder_forward.10} parent=0 // pred_region
    _
  $region21: #{auto_encoder_forward.10} parent=0 // pred_fallthru
    _
  // Predicated region
  $region22: #{auto_encoder_forward.10} parent=0 // pred_check
    _
  $region23: #{auto_encoder_forward.10} parent=0 // pred_check_branch
    %961 = sbr.rel (0) target = $region25
  $region24: #{auto_encoder_forward.10} parent=0 // pred_region
    _
  $region25: #{auto_encoder_forward.10} parent=0 // pred_fallthru
    _

// kernel: auto_encoder_forward.9
$region0: #{auto_encoder_forward.9}
  #allocation0 [shape = 'u32[]', space=smem, size = 0x4, offset = 0x4, fixed_abs, tag = 'smem constant byte address 0x4 - core index']
  #allocation1 [shape = 'u32[144,128]{1,0:T(1,128)}', space=vmem, size = 0x12000, scoped, tag = 'internal scratch']
  %s0 = inlined_call_operand.vmem [shape: bf16[32,1152], index: 0, kind: input, shape index: {}]
  %s1 = inlined_call_operand.vmem [shape: bf16[1152,256], index: 1, kind: input, shape index: {}]
  %s2 = inlined_call_operand.vmem [shape: f32[1,256], index: 2, kind: input, shape index: {}]
  %s3 = inlined_call_operand.vmem [shape: f32[1,256], index: 3, kind: input, shape index: {}]
  %s4 = inlined_call_operand.vmem [shape: bf16[4,32,32], index: 4, kind: input, shape index: {}]
  %s5 = inlined_call_operand.vmem [shape: bf16[4,256,512], index: 5, kind: input, shape index: {}]
  %s6 = inlined_call_operand.vmem [shape: f32[1,512], index: 6, kind: input, shape index: {}]
  %s7 = inlined_call_operand.vmem [shape: f32[1,512], index: 7, kind: input, shape index: {}]
  %s8 = inlined_call_operand.vmem [shape: bf16[32,512], index: 8, kind: output, shape index: {}]
  %s9 = sld [smem:[#allocation0]]
  $region42: #{auto_encoder_forward.9} parent=0
    _
  %s11 = ssub.s32 1, %s9
  %s12 = scalar_select 0, %s11, %s9
  // Predicated region
  $region2: #{auto_encoder_forward.9} parent=0 // pred_check
    _
  $region3: #{auto_encoder_forward.9} parent=0 // pred_check_branch
    %14 = sbr.rel (0) target = $region5
  $region4: #{auto_encoder_forward.9} parent=0 // pred_region
    _
  $region5: #{auto_encoder_forward.9} parent=0 // pred_fallthru
    _
  // Predicated region
  $region6: #{auto_encoder_forward.9} parent=0 // pred_check
    _
  $region7: #{auto_encoder_forward.9} parent=0 // pred_check_branch
    %16 = sbr.rel (0) target = $region9
  $region8: #{auto_encoder_forward.9} parent=0 // pred_region
    _
  $region9: #{auto_encoder_forward.9} parent=0 // pred_fallthru
    _
  // Predicated region
  $region10: #{auto_encoder_forward.9} parent=0 // pred_check
    _
  $region11: #{auto_encoder_forward.9} parent=0 // pred_check_branch
    %18 = sbr.rel (0) target = $region13
  $region12: #{auto_encoder_forward.9} parent=0 // pred_region
    _
  $region13: #{auto_encoder_forward.9} parent=0 // pred_fallthru
    _
  // Predicated region
  $region14: #{auto_encoder_forward.9} parent=0 // pred_check
    _
  $region15: #{auto_encoder_forward.9} parent=0 // pred_check_branch
    %20 = sbr.rel (0) target = $region17
  $region16: #{auto_encoder_forward.9} parent=0 // pred_region
    _
  $region17: #{auto_encoder_forward.9} parent=0 // pred_fallthru
    _
  // Predicated region
  $region18: #{auto_encoder_forward.9} parent=0 // pred_check
    _
  $region19: #{auto_encoder_forward.9} parent=0 // pred_check_branch
    %22 = sbr.rel (0) target = $region21
  $region20: #{auto_encoder_forward.9} parent=0 // pred_region
    _
  $region21: #{auto_encoder_forward.9} parent=0 // pred_fallthru
    _
  // Predicated region
  $region22: #{auto_encoder_forward.9} parent=0 // pred_check
    _
  $region23: #{auto_encoder_forward.9} parent=0 // pred_check_branch
    %24 = sbr.rel (0) target = $region25
  $region24: #{auto_encoder_forward.9} parent=0 // pred_region
    _
  $region25: #{auto_encoder_forward.9} parent=0 // pred_fallthru
    _
  // Predicated region
  $region26: #{auto_encoder_forward.9} parent=0 // pred_check
    _
  $region27: #{auto_encoder_forward.9} parent=0 // pred_check_branch
    %26 = sbr.rel (0) target = $region29
  $region28: #{auto_encoder_forward.9} parent=0 // pred_region
    _
  $region29: #{auto_encoder_forward.9} parent=0 // pred_fallthru
    _
  // Predicated region
  $region30: #{auto_encoder_forward.9} parent=0 // pred_check
    _
  $region31: #{auto_encoder_forward.9} parent=0 // pred_check_branch
    %28 = sbr.rel (0) target = $region33
  $region32: #{auto_encoder_forward.9} parent=0 // pred_region
    _
  $region33: #{auto_encoder_forward.9} parent=0 // pred_fallthru
    _
  %v30 = vld [vmem:[%s0] sm:$0xff]
  %v31 = vld [vmem:[%s0 + $0x8] sm:$0xff]
  %v32 = vld [vmem:[%s0 + $0x10] sm:$0xff]
  %v33 = vld [vmem:[%s0 + $0x18] sm:$0xff]
  %v34 = vld [vmem:[%s0 + $0x20] sm:$0xf]
  %v35 = vld [vmem:[%s0 + $0x24] sm:$0xff]
  %v36 = vld [vmem:[%s0 + $0x2c] sm:$0xff]
  %v37 = vld [vmem:[%s0 + $0x34] sm:$0xff]
  %v38 = vld [vmem:[%s0 + $0x3c] sm:$0xff]
  %v39 = vld [vmem:[%s0 + $0x44] sm:$0xf]
  %v40 = vld [vmem:[%s0 + $0x48] sm:$0xff]
  %v41 = vld [vmem:[%s0 + $0x50] sm:$0xff]
  %v42 = vld [vmem:[%s0 + $0x58] sm:$0xff]
  %v43 = vld [vmem:[%s0 + $0x60] sm:$0xff]
  %v44 = vld [vmem:[%s0 + $0x68] sm:$0xf]
  %v45 = vld [vmem:[%s0 + $0x6c] sm:$0xff]
  %v46 = vld [vmem:[%s0 + $0x74] sm:$0xff]
  %v47 = vld [vmem:[%s0 + $0x7c] sm:$0xff]
  %v48 = vld [vmem:[%s0 + $0x84] sm:$0xff]
  %v49 = vld [vmem:[%s0 + $0x8c] sm:$0xf]
  %v50 = vld [vmem:[%s1] sm:$0xff]
  %v51 = vld [vmem:[%s1 + $0x8] sm:$0xff]
  %v52 = vld [vmem:[%s1 + $0x10] sm:$0xff]
  %v53 = vld [vmem:[%s1 + $0x18] sm:$0xff]
  %v54 = vld [vmem:[%s1 + $0x20] sm:$0xff]
  %v55 = vld [vmem:[%s1 + $0x28] sm:$0xff]
  %v56 = vld [vmem:[%s1 + $0x30] sm:$0xff]
  %v57 = vld [vmem:[%s1 + $0x38] sm:$0xff]
  %v58 = vld [vmem:[%s1 + $0x40] sm:$0xff]
  %v59 = vld [vmem:[%s1 + $0x48] sm:$0xff]
  %v60 = vld [vmem:[%s1 + $0x50] sm:$0xff]
  %v61 = vld [vmem:[%s1 + $0x58] sm:$0xff]
  %v62 = vld [vmem:[%s1 + $0x60] sm:$0xff]
  %v63 = vld [vmem:[%s1 + $0x68] sm:$0xff]
  %v64 = vld [vmem:[%s1 + $0x70] sm:$0xff]
  %v65 = vld [vmem:[%s1 + $0x78] sm:$0xff]
  %v66 = vld [vmem:[%s1 + $0x80] sm:$0xff]
  %v67 = vld [vmem:[%s1 + $0x88] sm:$0xff]
  %v68 = vld [vmem:[%s1 + $0x90] sm:$0xff]
  %v69 = vld [vmem:[%s1 + $0x98] sm:$0xff]
  %v70 = vld [vmem:[%s1 + $0xa0] sm:$0xff]
  %v71 = vld [vmem:[%s1 + $0xa8] sm:$0xff]
  %v72 = vld [vmem:[%s1 + $0xb0] sm:$0xff]
  %v73 = vld [vmem:[%s1 + $0xb8] sm:$0xff]
  %v74 = vld [vmem:[%s1 + $0xc0] sm:$0xff]
  %v75 = vld [vmem:[%s1 + $0xc8] sm:$0xff]
  %v76 = vld [vmem:[%s1 + $0xd0] sm:$0xff]
  %v77 = vld [vmem:[%s1 + $0xd8] sm:$0xff]
  %v78 = vld [vmem:[%s1 + $0xe0] sm:$0xff]
  %v79 = vld [vmem:[%s1 + $0xe8] sm:$0xff]
  %v80 = vld [vmem:[%s1 + $0xf0] sm:$0xff]
  %v81 = vld [vmem:[%s1 + $0xf8] sm:$0xff]
  %v82 = vld [vmem:[%s1 + $0x100] sm:$0xff]
  %v83 = vld [vmem:[%s1 + $0x108] sm:$0xff]
  %v84 = vld [vmem:[%s1 + $0x110] sm:$0xff]
  %v85 = vld [vmem:[%s1 + $0x118] sm:$0xff]
  %v86 = vld [vmem:[%s1 + $0x120] sm:$0xff]
  %v87 = vld [vmem:[%s1 + $0x128] sm:$0xff]
  %v88 = vld [vmem:[%s1 + $0x130] sm:$0xff]
  %v89 = vld [vmem:[%s1 + $0x138] sm:$0xff]
  %v90 = vld [vmem:[%s1 + $0x140] sm:$0xff]
  %v91 = vld [vmem:[%s1 + $0x148] sm:$0xff]
  %v92 = vld [vmem:[%s1 + $0x150] sm:$0xff]
  %v93 = vld [vmem:[%s1 + $0x158] sm:$0xff]
  %v94 = vld [vmem:[%s1 + $0x160] sm:$0xff]
  %v95 = vld [vmem:[%s1 + $0x168] sm:$0xff]
  %v96 = vld [vmem:[%s1 + $0x170] sm:$0xff]
  %v97 = vld [vmem:[%s1 + $0x178] sm:$0xff]
  %v98 = vld [vmem:[%s1 + $0x180] sm:$0xff]
  %v99 = vld [vmem:[%s1 + $0x188] sm:$0xff]
  %v100 = vld [vmem:[%s1 + $0x190] sm:$0xff]
  %v101 = vld [vmem:[%s1 + $0x198] sm:$0xff]
  %v102 = vld [vmem:[%s1 + $0x1a0] sm:$0xff]
  %v103 = vld [vmem:[%s1 + $0x1a8] sm:$0xff]
  %v104 = vld [vmem:[%s1 + $0x1b0] sm:$0xff]
  %v105 = vld [vmem:[%s1 + $0x1b8] sm:$0xff]
  %v106 = vld [vmem:[%s1 + $0x1c0] sm:$0xff]
  %v107 = vld [vmem:[%s1 + $0x1c8] sm:$0xff]
  %v108 = vld [vmem:[%s1 + $0x1d0] sm:$0xff]
  %v109 = vld [vmem:[%s1 + $0x1d8] sm:$0xff]
  %v110 = vld [vmem:[%s1 + $0x1e0] sm:$0xff]
  %v111 = vld [vmem:[%s1 + $0x1e8] sm:$0xff]
  %v112 = vld [vmem:[%s1 + $0x1f0] sm:$0xff]
  %v113 = vld [vmem:[%s1 + $0x1f8] sm:$0xff]
  %v114 = vld [vmem:[%s1 + $0x200] sm:$0xff]
  %v115 = vld [vmem:[%s1 + $0x208] sm:$0xff]
  %v116 = vld [vmem:[%s1 + $0x210] sm:$0xff]
  %v117 = vld [vmem:[%s1 + $0x218] sm:$0xff]
  %v118 = vld [vmem:[%s1 + $0x220] sm:$0xff]
  %v119 = vld [vmem:[%s1 + $0x228] sm:$0xff]
  %v120 = vld [vmem:[%s1 + $0x230] sm:$0xff]
  %v121 = vld [vmem:[%s1 + $0x238] sm:$0xff]
  %v122 = vld [vmem:[%s1 + $0x240] sm:$0xff]
  %v123 = vld [vmem:[%s1 + $0x248] sm:$0xff]
  %v124 = vld [vmem:[%s1 + $0x250] sm:$0xff]
  %v125 = vld [vmem:[%s1 + $0x258] sm:$0xff]
  %v126 = vld [vmem:[%s1 + $0x260] sm:$0xff]
  %v127 = vld [vmem:[%s1 + $0x268] sm:$0xff]
  %v128 = vld [vmem:[%s1 + $0x270] sm:$0xff]
  %v129 = vld [vmem:[%s1 + $0x278] sm:$0xff]
  %v130 = vld [vmem:[%s1 + $0x280] sm:$0xff]
  %v131 = vld [vmem:[%s1 + $0x288] sm:$0xff]
  %v132 = vld [vmem:[%s1 + $0x290] sm:$0xff]
  %v133 = vld [vmem:[%s1 + $0x298] sm:$0xff]
  %v134 = vld [vmem:[%s1 + $0x2a0] sm:$0xff]
  %v135 = vld [vmem:[%s1 + $0x2a8] sm:$0xff]
  %v136 = vld [vmem:[%s1 + $0x2b0] sm:$0xff]
  %v137 = vld [vmem:[%s1 + $0x2b8] sm:$0xff]
  %v138 = vld [vmem:[%s1 + $0x2c0] sm:$0xff]
  %v139 = vld [vmem:[%s1 + $0x2c8] sm:$0xff]
  %v140 = vld [vmem:[%s1 + $0x2d0] sm:$0xff]
  %v141 = vld [vmem:[%s1 + $0x2d8] sm:$0xff]
  %v142 = vld [vmem:[%s1 + $0x2e0] sm:$0xff]
  %v143 = vld [vmem:[%s1 + $0x2e8] sm:$0xff]
  %v144 = vld [vmem:[%s1 + $0x2f0] sm:$0xff]
  %v145 = vld [vmem:[%s1 + $0x2f8] sm:$0xff]
  %v146 = vld [vmem:[%s1 + $0x300] sm:$0xff]
  %v147 = vld [vmem:[%s1 + $0x308] sm:$0xff]
  %v148 = vld [vmem:[%s1 + $0x310] sm:$0xff]
  %v149 = vld [vmem:[%s1 + $0x318] sm:$0xff]
  %v150 = vld [vmem:[%s1 + $0x320] sm:$0xff]
  %v151 = vld [vmem:[%s1 + $0x328] sm:$0xff]
  %v152 = vld [vmem:[%s1 + $0x330] sm:$0xff]
  %v153 = vld [vmem:[%s1 + $0x338] sm:$0xff]
  %v154 = vld [vmem:[%s1 + $0x340] sm:$0xff]
  %v155 = vld [vmem:[%s1 + $0x348] sm:$0xff]
  %v156 = vld [vmem:[%s1 + $0x350] sm:$0xff]
  %v157 = vld [vmem:[%s1 + $0x358] sm:$0xff]
  %v158 = vld [vmem:[%s1 + $0x360] sm:$0xff]
  %v159 = vld [vmem:[%s1 + $0x368] sm:$0xff]
  %v160 = vld [vmem:[%s1 + $0x370] sm:$0xff]
  %v161 = vld [vmem:[%s1 + $0x378] sm:$0xff]
  %v162 = vld [vmem:[%s1 + $0x380] sm:$0xff]
  %v163 = vld [vmem:[%s1 + $0x388] sm:$0xff]
  %v164 = vld [vmem:[%s1 + $0x390] sm:$0xff]
  %v165 = vld [vmem:[%s1 + $0x398] sm:$0xff]
  %v166 = vld [vmem:[%s1 + $0x3a0] sm:$0xff]
  %v167 = vld [vmem:[%s1 + $0x3a8] sm:$0xff]
  %v168 = vld [vmem:[%s1 + $0x3b0] sm:$0xff]
  %v169 = vld [vmem:[%s1 + $0x3b8] sm:$0xff]
  %v170 = vld [vmem:[%s1 + $0x3c0] sm:$0xff]
  %v171 = vld [vmem:[%s1 + $0x3c8] sm:$0xff]
  %v172 = vld [vmem:[%s1 + $0x3d0] sm:$0xff]
  %v173 = vld [vmem:[%s1 + $0x3d8] sm:$0xff]
  %v174 = vld [vmem:[%s1 + $0x3e0] sm:$0xff]
  %v175 = vld [vmem:[%s1 + $0x3e8] sm:$0xff]
  %v176 = vld [vmem:[%s1 + $0x3f0] sm:$0xff]
  %v177 = vld [vmem:[%s1 + $0x3f8] sm:$0xff]
  %v178 = vld [vmem:[%s1 + $0x400] sm:$0xff]
  %v179 = vld [vmem:[%s1 + $0x408] sm:$0xff]
  %v180 = vld [vmem:[%s1 + $0x410] sm:$0xff]
  %v181 = vld [vmem:[%s1 + $0x418] sm:$0xff]
  %v182 = vld [vmem:[%s1 + $0x420] sm:$0xff]
  %v183 = vld [vmem:[%s1 + $0x428] sm:$0xff]
  %v184 = vld [vmem:[%s1 + $0x430] sm:$0xff]
  %v185 = vld [vmem:[%s1 + $0x438] sm:$0xff]
  %v186 = vld [vmem:[%s1 + $0x440] sm:$0xff]
  %v187 = vld [vmem:[%s1 + $0x448] sm:$0xff]
  %v188 = vld [vmem:[%s1 + $0x450] sm:$0xff]
  %v189 = vld [vmem:[%s1 + $0x458] sm:$0xff]
  %v190 = vld [vmem:[%s1 + $0x460] sm:$0xff]
  %v191 = vld [vmem:[%s1 + $0x468] sm:$0xff]
  %v192 = vld [vmem:[%s1 + $0x470] sm:$0xff]
  %v193 = vld [vmem:[%s1 + $0x478] sm:$0xff]
  %v214 = vunpack.c.l.b16 %v30
  %v215 = vunpack.c.h.b16 %v30
  %v216 = vunpack.c.l.b16 %v31
  %v217 = vunpack.c.h.b16 %v31
  %v218 = vunpack.c.l.b16 %v32
  %v219 = vunpack.c.h.b16 %v32
  %v220 = vunpack.c.l.b16 %v33
  %v221 = vunpack.c.h.b16 %v33
  %v222 = vunpack.c.l.b16 %v34
  %v223 = vunpack.c.l.b16 %v35
  %v224 = vunpack.c.h.b16 %v35
  %v225 = vunpack.c.l.b16 %v36
  %v226 = vunpack.c.h.b16 %v36
  %v227 = vunpack.c.l.b16 %v37
  %v228 = vunpack.c.h.b16 %v37
  %v229 = vunpack.c.l.b16 %v38
  %v230 = vunpack.c.h.b16 %v38
  %v231 = vunpack.c.l.b16 %v39
  %v232 = vunpack.c.l.b16 %v40
  %v233 = vunpack.c.h.b16 %v40
  %v234 = vunpack.c.l.b16 %v41
  %v235 = vunpack.c.h.b16 %v41
  %v236 = vunpack.c.l.b16 %v42
  %v237 = vunpack.c.h.b16 %v42
  %v238 = vunpack.c.l.b16 %v43
  %v239 = vunpack.c.h.b16 %v43
  %v240 = vunpack.c.l.b16 %v44
  %v241 = vunpack.c.l.b16 %v45
  %v242 = vunpack.c.h.b16 %v45
  %v243 = vunpack.c.l.b16 %v46
  %v244 = vunpack.c.h.b16 %v46
  %v245 = vunpack.c.l.b16 %v47
  %v246 = vunpack.c.h.b16 %v47
  %v247 = vunpack.c.l.b16 %v48
  %v248 = vunpack.c.h.b16 %v48
  %v249 = vunpack.c.l.b16 %v49
  %v250 = vpack.c.b16 %v223, %v214
  %v251 = vpack.c.b16 %v224, %v215
  %v252 = vpack.c.b16 %v225, %v216
  %v253 = vpack.c.b16 %v226, %v217
  %v254 = vpack.c.b16 %v227, %v218
  %v255 = vpack.c.b16 %v228, %v219
  %v256 = vpack.c.b16 %v229, %v220
  %v257 = vpack.c.b16 %v230, %v221
  %v258 = vpack.c.b16 %v231, %v222
  %v259 = vpack.c.b16 %v241, %v232
  %v260 = vpack.c.b16 %v242, %v233
  %v261 = vpack.c.b16 %v243, %v234
  %v262 = vpack.c.b16 %v244, %v235
  %v263 = vpack.c.b16 %v245, %v236
  %v264 = vpack.c.b16 %v246, %v237
  %v265 = vpack.c.b16 %v247, %v238
  %v266 = vpack.c.b16 %v248, %v239
  %v267 = vpack.c.b16 %v249, %v240
  %v430 = vunpack.c.l.b16 %v50
  %v431 = vunpack.c.h.b16 %v50
  %v432 = vunpack.c.l.b16 %v51
  %v433 = vunpack.c.h.b16 %v51
  %v434 = vunpack.c.l.b16 %v52
  %v435 = vunpack.c.h.b16 %v52
  %v436 = vunpack.c.l.b16 %v53
  %v437 = vunpack.c.h.b16 %v53
  %v438 = vunpack.c.l.b16 %v54
  %v439 = vunpack.c.h.b16 %v54
  %v440 = vunpack.c.l.b16 %v55
  %v441 = vunpack.c.h.b16 %v55
  %v442 = vunpack.c.l.b16 %v56
  %v443 = vunpack.c.h.b16 %v56
  %v444 = vunpack.c.l.b16 %v57
  %v445 = vunpack.c.h.b16 %v57
  %v446 = vunpack.c.l.b16 %v58
  %v447 = vunpack.c.h.b16 %v58
  %v448 = vunpack.c.l.b16 %v59
  %v449 = vunpack.c.h.b16 %v59
  %v450 = vunpack.c.l.b16 %v60
  %v451 = vunpack.c.h.b16 %v60
  %v452 = vunpack.c.l.b16 %v61
  %v453 = vunpack.c.h.b16 %v61
  %v454 = vunpack.c.l.b16 %v62
  %v455 = vunpack.c.h.b16 %v62
  %v456 = vunpack.c.l.b16 %v63
  %v457 = vunpack.c.h.b16 %v63
  %v458 = vunpack.c.l.b16 %v64
  %v459 = vunpack.c.h.b16 %v64
  %v460 = vunpack.c.l.b16 %v65
  %v461 = vunpack.c.h.b16 %v65
  %v462 = vunpack.c.l.b16 %v66
  %v463 = vunpack.c.h.b16 %v66
  %v464 = vunpack.c.l.b16 %v67
  %v465 = vunpack.c.h.b16 %v67
  %v466 = vunpack.c.l.b16 %v68
  %v467 = vunpack.c.h.b16 %v68
  %v468 = vunpack.c.l.b16 %v69
  %v469 = vunpack.c.h.b16 %v69
  %v470 = vunpack.c.l.b16 %v70
  %v471 = vunpack.c.h.b16 %v70
  %v472 = vunpack.c.l.b16 %v71
  %v473 = vunpack.c.h.b16 %v71
  %v474 = vunpack.c.l.b16 %v72
  %v475 = vunpack.c.h.b16 %v72
  %v476 = vunpack.c.l.b16 %v73
  %v477 = vunpack.c.h.b16 %v73
  %v478 = vunpack.c.l.b16 %v74
  %v479 = vunpack.c.h.b16 %v74
  %v480 = vunpack.c.l.b16 %v75
  %v481 = vunpack.c.h.b16 %v75
  %v482 = vunpack.c.l.b16 %v76
  %v483 = vunpack.c.h.b16 %v76
  %v484 = vunpack.c.l.b16 %v77
  %v485 = vunpack.c.h.b16 %v77
  %v486 = vunpack.c.l.b16 %v78
  %v487 = vunpack.c.h.b16 %v78
  %v488 = vunpack.c.l.b16 %v79
  %v489 = vunpack.c.h.b16 %v79
  %v490 = vunpack.c.l.b16 %v80
  %v491 = vunpack.c.h.b16 %v80
  %v492 = vunpack.c.l.b16 %v81
  %v493 = vunpack.c.h.b16 %v81
  %v494 = vunpack.c.l.b16 %v82
  %v495 = vunpack.c.h.b16 %v82
  %v496 = vunpack.c.l.b16 %v83
  %v497 = vunpack.c.h.b16 %v83
  %v498 = vunpack.c.l.b16 %v84
  %v499 = vunpack.c.h.b16 %v84
  %v500 = vunpack.c.l.b16 %v85
  %v501 = vunpack.c.h.b16 %v85
  %v502 = vunpack.c.l.b16 %v86
  %v503 = vunpack.c.h.b16 %v86
  %v504 = vunpack.c.l.b16 %v87
  %v505 = vunpack.c.h.b16 %v87
  %v506 = vunpack.c.l.b16 %v88
  %v507 = vunpack.c.h.b16 %v88
  %v508 = vunpack.c.l.b16 %v89
  %v509 = vunpack.c.h.b16 %v89
  %v510 = vunpack.c.l.b16 %v90
  %v511 = vunpack.c.h.b16 %v90
  %v512 = vunpack.c.l.b16 %v91
  %v513 = vunpack.c.h.b16 %v91
  %v514 = vunpack.c.l.b16 %v92
  %v515 = vunpack.c.h.b16 %v92
  %v516 = vunpack.c.l.b16 %v93
  %v517 = vunpack.c.h.b16 %v93
  %v518 = vunpack.c.l.b16 %v94
  %v519 = vunpack.c.h.b16 %v94
  %v520 = vunpack.c.l.b16 %v95
  %v521 = vunpack.c.h.b16 %v95
  %v522 = vunpack.c.l.b16 %v96
  %v523 = vunpack.c.h.b16 %v96
  %v524 = vunpack.c.l.b16 %v97
  %v525 = vunpack.c.h.b16 %v97
  %v526 = vunpack.c.l.b16 %v98
  %v527 = vunpack.c.h.b16 %v98
  %v528 = vunpack.c.l.b16 %v99
  %v529 = vunpack.c.h.b16 %v99
  %v530 = vunpack.c.l.b16 %v100
  %v531 = vunpack.c.h.b16 %v100
  %v532 = vunpack.c.l.b16 %v101
  %v533 = vunpack.c.h.b16 %v101
  %v534 = vunpack.c.l.b16 %v102
  %v535 = vunpack.c.h.b16 %v102
  %v536 = vunpack.c.l.b16 %v103
  %v537 = vunpack.c.h.b16 %v103
  %v538 = vunpack.c.l.b16 %v104
  %v539 = vunpack.c.h.b16 %v104
  %v540 = vunpack.c.l.b16 %v105
  %v541 = vunpack.c.h.b16 %v105
  %v542 = vunpack.c.l.b16 %v106
  %v543 = vunpack.c.h.b16 %v106
  %v544 = vunpack.c.l.b16 %v107
  %v545 = vunpack.c.h.b16 %v107
  %v546 = vunpack.c.l.b16 %v108
  %v547 = vunpack.c.h.b16 %v108
  %v548 = vunpack.c.l.b16 %v109
  %v549 = vunpack.c.h.b16 %v109
  %v550 = vunpack.c.l.b16 %v110
  %v551 = vunpack.c.h.b16 %v110
  %v552 = vunpack.c.l.b16 %v111
  %v553 = vunpack.c.h.b16 %v111
  %v554 = vunpack.c.l.b16 %v112
  %v555 = vunpack.c.h.b16 %v112
  %v556 = vunpack.c.l.b16 %v113
  %v557 = vunpack.c.h.b16 %v113
  %v558 = vunpack.c.l.b16 %v114
  %v559 = vunpack.c.h.b16 %v114
  %v560 = vunpack.c.l.b16 %v115
  %v561 = vunpack.c.h.b16 %v115
  %v562 = vunpack.c.l.b16 %v116
  %v563 = vunpack.c.h.b16 %v116
  %v564 = vunpack.c.l.b16 %v117
  %v565 = vunpack.c.h.b16 %v117
  %v566 = vunpack.c.l.b16 %v118
  %v567 = vunpack.c.h.b16 %v118
  %v568 = vunpack.c.l.b16 %v119
  %v569 = vunpack.c.h.b16 %v119
  %v570 = vunpack.c.l.b16 %v120
  %v571 = vunpack.c.h.b16 %v120
  %v572 = vunpack.c.l.b16 %v121
  %v573 = vunpack.c.h.b16 %v121
  %v574 = vunpack.c.l.b16 %v122
  %v575 = vunpack.c.h.b16 %v122
  %v576 = vunpack.c.l.b16 %v123
  %v577 = vunpack.c.h.b16 %v123
  %v578 = vunpack.c.l.b16 %v124
  %v579 = vunpack.c.h.b16 %v124
  %v580 = vunpack.c.l.b16 %v125
  %v581 = vunpack.c.h.b16 %v125
  %v582 = vunpack.c.l.b16 %v126
  %v583 = vunpack.c.h.b16 %v126
  %v584 = vunpack.c.l.b16 %v127
  %v585 = vunpack.c.h.b16 %v127
  %v586 = vunpack.c.l.b16 %v128
  %v587 = vunpack.c.h.b16 %v128
  %v588 = vunpack.c.l.b16 %v129
  %v589 = vunpack.c.h.b16 %v129
  %v590 = vunpack.c.l.b16 %v130
  %v591 = vunpack.c.h.b16 %v130
  %v592 = vunpack.c.l.b16 %v131
  %v593 = vunpack.c.h.b16 %v131
  %v594 = vunpack.c.l.b16 %v132
  %v595 = vunpack.c.h.b16 %v132
  %v596 = vunpack.c.l.b16 %v133
  %v597 = vunpack.c.h.b16 %v133
  %v598 = vunpack.c.l.b16 %v134
  %v599 = vunpack.c.h.b16 %v134
  %v600 = vunpack.c.l.b16 %v135
  %v601 = vunpack.c.h.b16 %v135
  %v602 = vunpack.c.l.b16 %v136
  %v603 = vunpack.c.h.b16 %v136
  %v604 = vunpack.c.l.b16 %v137
  %v605 = vunpack.c.h.b16 %v137
  %v606 = vunpack.c.l.b16 %v138
  %v607 = vunpack.c.h.b16 %v138
  %v608 = vunpack.c.l.b16 %v139
  %v609 = vunpack.c.h.b16 %v139
  %v610 = vunpack.c.l.b16 %v140
  %v611 = vunpack.c.h.b16 %v140
  %v612 = vunpack.c.l.b16 %v141
  %v613 = vunpack.c.h.b16 %v141
  %v614 = vunpack.c.l.b16 %v142
  %v615 = vunpack.c.h.b16 %v142
  %v616 = vunpack.c.l.b16 %v143
  %v617 = vunpack.c.h.b16 %v143
  %v618 = vunpack.c.l.b16 %v144
  %v619 = vunpack.c.h.b16 %v144
  %v620 = vunpack.c.l.b16 %v145
  %v621 = vunpack.c.h.b16 %v145
  %v622 = vunpack.c.l.b16 %v146
  %v623 = vunpack.c.h.b16 %v146
  %v624 = vunpack.c.l.b16 %v147
  %v625 = vunpack.c.h.b16 %v147
  %v626 = vunpack.c.l.b16 %v148
  %v627 = vunpack.c.h.b16 %v148
  %v628 = vunpack.c.l.b16 %v149
  %v629 = vunpack.c.h.b16 %v149
  %v630 = vunpack.c.l.b16 %v150
  %v631 = vunpack.c.h.b16 %v150
  %v632 = vunpack.c.l.b16 %v151
  %v633 = vunpack.c.h.b16 %v151
  %v634 = vunpack.c.l.b16 %v152
  %v635 = vunpack.c.h.b16 %v152
  %v636 = vunpack.c.l.b16 %v153
  %v637 = vunpack.c.h.b16 %v153
  %v638 = vunpack.c.l.b16 %v154
  %v639 = vunpack.c.h.b16 %v154
  %v640 = vunpack.c.l.b16 %v155
  %v641 = vunpack.c.h.b16 %v155
  %v642 = vunpack.c.l.b16 %v156
  %v643 = vunpack.c.h.b16 %v156
  %v644 = vunpack.c.l.b16 %v157
  %v645 = vunpack.c.h.b16 %v157
  %v646 = vunpack.c.l.b16 %v158
  %v647 = vunpack.c.h.b16 %v158
  %v648 = vunpack.c.l.b16 %v159
  %v649 = vunpack.c.h.b16 %v159
  %v650 = vunpack.c.l.b16 %v160
  %v651 = vunpack.c.h.b16 %v160
  %v652 = vunpack.c.l.b16 %v161
  %v653 = vunpack.c.h.b16 %v161
  %v654 = vunpack.c.l.b16 %v162
  %v655 = vunpack.c.h.b16 %v162
  %v656 = vunpack.c.l.b16 %v163
  %v657 = vunpack.c.h.b16 %v163
  %v658 = vunpack.c.l.b16 %v164
  %v659 = vunpack.c.h.b16 %v164
  %v660 = vunpack.c.l.b16 %v165
  %v661 = vunpack.c.h.b16 %v165
  %v662 = vunpack.c.l.b16 %v166
  %v663 = vunpack.c.h.b16 %v166
  %v664 = vunpack.c.l.b16 %v167
  %v665 = vunpack.c.h.b16 %v167
  %v666 = vunpack.c.l.b16 %v168
  %v667 = vunpack.c.h.b16 %v168
  %v668 = vunpack.c.l.b16 %v169
  %v669 = vunpack.c.h.b16 %v169
  %v670 = vunpack.c.l.b16 %v170
  %v671 = vunpack.c.h.b16 %v170
  %v672 = vunpack.c.l.b16 %v171
  %v673 = vunpack.c.h.b16 %v171
  %v674 = vunpack.c.l.b16 %v172
  %v675 = vunpack.c.h.b16 %v172
  %v676 = vunpack.c.l.b16 %v173
  %v677 = vunpack.c.h.b16 %v173
  %v678 = vunpack.c.l.b16 %v174
  %v679 = vunpack.c.h.b16 %v174
  %v680 = vunpack.c.l.b16 %v175
  %v681 = vunpack.c.h.b16 %v175
  %v682 = vunpack.c.l.b16 %v176
  %v683 = vunpack.c.h.b16 %v176
  %v684 = vunpack.c.l.b16 %v177
  %v685 = vunpack.c.h.b16 %v177
  %v686 = vunpack.c.l.b16 %v178
  %v687 = vunpack.c.h.b16 %v178
  %v688 = vunpack.c.l.b16 %v179
  %v689 = vunpack.c.h.b16 %v179
  %v690 = vunpack.c.l.b16 %v180
  %v691 = vunpack.c.h.b16 %v180
  %v692 = vunpack.c.l.b16 %v181
  %v693 = vunpack.c.h.b16 %v181
  %v694 = vunpack.c.l.b16 %v182
  %v695 = vunpack.c.h.b16 %v182
  %v696 = vunpack.c.l.b16 %v183
  %v697 = vunpack.c.h.b16 %v183
  %v698 = vunpack.c.l.b16 %v184
  %v699 = vunpack.c.h.b16 %v184
  %v700 = vunpack.c.l.b16 %v185
  %v701 = vunpack.c.h.b16 %v185
  %v702 = vunpack.c.l.b16 %v186
  %v703 = vunpack.c.h.b16 %v186
  %v704 = vunpack.c.l.b16 %v187
  %v705 = vunpack.c.h.b16 %v187
  %v706 = vunpack.c.l.b16 %v188
  %v707 = vunpack.c.h.b16 %v188
  %v708 = vunpack.c.l.b16 %v189
  %v709 = vunpack.c.h.b16 %v189
  %v710 = vunpack.c.l.b16 %v190
  %v711 = vunpack.c.h.b16 %v190
  %v712 = vunpack.c.l.b16 %v191
  %v713 = vunpack.c.h.b16 %v191
  %v714 = vunpack.c.l.b16 %v192
  %v715 = vunpack.c.h.b16 %v192
  %v716 = vunpack.c.l.b16 %v193
  %v717 = vunpack.c.h.b16 %v193
  %v718 = vpack.c.b16 %v432, %v430
  %v719 = vpack.c.b16 %v433, %v431
  %v720 = vpack.c.b16 %v436, %v434
  %v721 = vpack.c.b16 %v437, %v435
  %v722 = vpack.c.b16 %v440, %v438
  %v723 = vpack.c.b16 %v441, %v439
  %v724 = vpack.c.b16 %v444, %v442
  %v725 = vpack.c.b16 %v445, %v443
  %v726 = vpack.c.b16 %v448, %v446
  %v727 = vpack.c.b16 %v449, %v447
  %v728 = vpack.c.b16 %v452, %v450
  %v729 = vpack.c.b16 %v453, %v451
  %v730 = vpack.c.b16 %v456, %v454
  %v731 = vpack.c.b16 %v457, %v455
  %v732 = vpack.c.b16 %v460, %v458
  %v733 = vpack.c.b16 %v461, %v459
  %v734 = vpack.c.b16 %v464, %v462
  %v735 = vpack.c.b16 %v465, %v463
  %v736 = vpack.c.b16 %v468, %v466
  %v737 = vpack.c.b16 %v469, %v467
  %v738 = vpack.c.b16 %v472, %v470
  %v739 = vpack.c.b16 %v473, %v471
  %v740 = vpack.c.b16 %v476, %v474
  %v741 = vpack.c.b16 %v477, %v475
  %v742 = vpack.c.b16 %v480, %v478
  %v743 = vpack.c.b16 %v481, %v479
  %v744 = vpack.c.b16 %v484, %v482
  %v745 = vpack.c.b16 %v485, %v483
  %v746 = vpack.c.b16 %v488, %v486
  %v747 = vpack.c.b16 %v489, %v487
  %v748 = vpack.c.b16 %v492, %v490
  %v749 = vpack.c.b16 %v493, %v491
  %v750 = vpack.c.b16 %v496, %v494
  %v751 = vpack.c.b16 %v497, %v495
  %v752 = vpack.c.b16 %v500, %v498
  %v753 = vpack.c.b16 %v501, %v499
  %v754 = vpack.c.b16 %v504, %v502
  %v755 = vpack.c.b16 %v505, %v503
  %v756 = vpack.c.b16 %v508, %v506
  %v757 = vpack.c.b16 %v509, %v507
  %v758 = vpack.c.b16 %v512, %v510
  %v759 = vpack.c.b16 %v513, %v511
  %v760 = vpack.c.b16 %v516, %v514
  %v761 = vpack.c.b16 %v517, %v515
  %v762 = vpack.c.b16 %v520, %v518
  %v763 = vpack.c.b16 %v521, %v519
  %v764 = vpack.c.b16 %v524, %v522
  %v765 = vpack.c.b16 %v525, %v523
  %v766 = vpack.c.b16 %v528, %v526
  %v767 = vpack.c.b16 %v529, %v527
  %v768 = vpack.c.b16 %v532, %v530
  %v769 = vpack.c.b16 %v533, %v531
  %v770 = vpack.c.b16 %v536, %v534
  %v771 = vpack.c.b16 %v537, %v535
  %v772 = vpack.c.b16 %v540, %v538
  %v773 = vpack.c.b16 %v541, %v539
  %v774 = vpack.c.b16 %v544, %v542
  %v775 = vpack.c.b16 %v545, %v543
  %v776 = vpack.c.b16 %v548, %v546
  %v777 = vpack.c.b16 %v549, %v547
  %v778 = vpack.c.b16 %v552, %v550
  %v779 = vpack.c.b16 %v553, %v551
  %v780 = vpack.c.b16 %v556, %v554
  %v781 = vpack.c.b16 %v557, %v555
  %v782 = vpack.c.b16 %v560, %v558
  %v783 = vpack.c.b16 %v561, %v559
  %v784 = vpack.c.b16 %v564, %v562
  %v785 = vpack.c.b16 %v565, %v563
  %v786 = vpack.c.b16 %v568, %v566
  %v787 = vpack.c.b16 %v569, %v567
  %v788 = vpack.c.b16 %v572, %v570
  %v789 = vpack.c.b16 %v573, %v571
  %v790 = vpack.c.b16 %v576, %v574
  %v791 = vpack.c.b16 %v577, %v575
  %v792 = vpack.c.b16 %v580, %v578
  %v793 = vpack.c.b16 %v581, %v579
  %v794 = vpack.c.b16 %v584, %v582
  %v795 = vpack.c.b16 %v585, %v583
  %v796 = vpack.c.b16 %v588, %v586
  %v797 = vpack.c.b16 %v589, %v587
  %v798 = vpack.c.b16 %v592, %v590
  %v799 = vpack.c.b16 %v593, %v591
  %v800 = vpack.c.b16 %v596, %v594
  %v801 = vpack.c.b16 %v597, %v595
  %v802 = vpack.c.b16 %v600, %v598
  %v803 = vpack.c.b16 %v601, %v599
  %v804 = vpack.c.b16 %v604, %v602
  %v805 = vpack.c.b16 %v605, %v603
  %v806 = vpack.c.b16 %v608, %v606
  %v807 = vpack.c.b16 %v609, %v607
  %v808 = vpack.c.b16 %v612, %v610
  %v809 = vpack.c.b16 %v613, %v611
  %v810 = vpack.c.b16 %v616, %v614
  %v811 = vpack.c.b16 %v617, %v615
  %v812 = vpack.c.b16 %v620, %v618
  %v813 = vpack.c.b16 %v621, %v619
  %v814 = vpack.c.b16 %v624, %v622
  %v815 = vpack.c.b16 %v625, %v623
  %v816 = vpack.c.b16 %v628, %v626
  %v817 = vpack.c.b16 %v629, %v627
  %v818 = vpack.c.b16 %v632, %v630
  %v819 = vpack.c.b16 %v633, %v631
  %v820 = vpack.c.b16 %v636, %v634
  %v821 = vpack.c.b16 %v637, %v635
  %v822 = vpack.c.b16 %v640, %v638
  %v823 = vpack.c.b16 %v641, %v639
  %v824 = vpack.c.b16 %v644, %v642
  %v825 = vpack.c.b16 %v645, %v643
  %v826 = vpack.c.b16 %v648, %v646
  %v827 = vpack.c.b16 %v649, %v647
  %v828 = vpack.c.b16 %v652, %v650
  %v829 = vpack.c.b16 %v653, %v651
  %v830 = vpack.c.b16 %v656, %v654
  %v831 = vpack.c.b16 %v657, %v655
  %v832 = vpack.c.b16 %v660, %v658
  %v833 = vpack.c.b16 %v661, %v659
  %v834 = vpack.c.b16 %v664, %v662
  %v835 = vpack.c.b16 %v665, %v663
  %v836 = vpack.c.b16 %v668, %v666
  %v837 = vpack.c.b16 %v669, %v667
  %v838 = vpack.c.b16 %v672, %v670
  %v839 = vpack.c.b16 %v673, %v671
  %v840 = vpack.c.b16 %v676, %v674
  %v841 = vpack.c.b16 %v677, %v675
  %v842 = vpack.c.b16 %v680, %v678
  %v843 = vpack.c.b16 %v681, %v679
  %v844 = vpack.c.b16 %v684, %v682
  %v845 = vpack.c.b16 %v685, %v683
  %v846 = vpack.c.b16 %v688, %v686
  %v847 = vpack.c.b16 %v689, %v687
  %v848 = vpack.c.b16 %v692, %v690
  %v849 = vpack.c.b16 %v693, %v691
  %v850 = vpack.c.b16 %v696, %v694
  %v851 = vpack.c.b16 %v697, %v695
  %v852 = vpack.c.b16 %v700, %v698
  %v853 = vpack.c.b16 %v701, %v699
  %v854 = vpack.c.b16 %v704, %v702
  %v855 = vpack.c.b16 %v705, %v703
  %v856 = vpack.c.b16 %v708, %v706
  %v857 = vpack.c.b16 %v709, %v707
  %v858 = vpack.c.b16 %v712, %v710
  %v859 = vpack.c.b16 %v713, %v711
  %v860 = vpack.c.b16 %v716, %v714
  %v861 = vpack.c.b16 %v717, %v715
  %1006 = vmatprep.subr.bf16.mxu0 %v733
  %1007 = vmatpush1.bf16.msra.mxu0 %v732
  %1008 = vmatprep.subr.bf16.mxu0 %v731
  %1009 = vmatpush1.bf16.msra.mxu0 %v730
  %1010 = vmatprep.subr.bf16.mxu0 %v729
  %1011 = vmatpush1.bf16.msra.mxu0 %v728
  %1012 = vmatprep.subr.bf16.mxu0 %v727
  %1013 = vmatpush1.bf16.msra.mxu0 %v726
  %1014 = vmatprep.subr.bf16.mxu0 %v725
  %1015 = vmatpush1.bf16.msra.mxu0 %v724
  %1016 = vmatprep.subr.bf16.mxu0 %v723
  %1017 = vmatpush1.bf16.msra.mxu0 %v722
  %1018 = vmatprep.subr.bf16.mxu0 %v721
  %1019 = vmatpush1.bf16.msra.mxu0 %v720
  %1020 = vmatprep.subr.bf16.mxu0 %v719
  %1021 = vmatpush1.bf16.msra.mxu0 %v718
  %1022 = vmatprep.subr.bf16.mxu0 %v749
  %1023 = vmatpush2.bf16.msra.mxu0 %v748
  %1024 = vmatprep.subr.bf16.mxu0 %v747
  %1025 = vmatpush2.bf16.msra.mxu0 %v746
  %1026 = vmatprep.subr.bf16.mxu0 %v745
  %1027 = vmatpush2.bf16.msra.mxu0 %v744
  %1028 = vmatprep.subr.bf16.mxu0 %v743
  %1029 = vmatpush2.bf16.msra.mxu0 %v742
  %1030 = vmatprep.subr.bf16.mxu0 %v741
  %1031 = vmatpush2.bf16.msra.mxu0 %v740
  %1032 = vmatprep.subr.bf16.mxu0 %v739
  %1033 = vmatpush2.bf16.msra.mxu0 %v738
  %1034 = vmatprep.subr.bf16.mxu0 %v737
  %1035 = vmatpush2.bf16.msra.mxu0 %v736
  %1036 = vmatprep.subr.bf16.mxu0 %v735
  %1037 = vmatpush2.bf16.msra.mxu0 %v734
  %1038 = vmatprep.mubr.bf16.mxu0 %v251
  %1039 = vmatmul.mubr.bf16.gmra.mxu0 %v250
  %v1040 = vpop.f32.mrf.mxu0
  %v1041 = vadd.f32 0.0, %v1040
  %v1042 = vpop.f32.mrf.mxu0
  %v1043 = vadd.f32 0.0, %v1042
  %v1044 = vpop.f32.mrf.mxu0
  %v1045 = vadd.f32 0.0, %v1044
  %v1046 = vpop.f32.mrf.mxu0
  %v1047 = vadd.f32 0.0, %v1046
  %1048 = vmatprep.mubr.bf16.mxu0 %v260
  %1049 = vmatmul.mubr.bf16.gmra.mxu0 %v259
  %v1050 = vpop.f32.mrf.mxu0
  %v1051 = vadd.f32 0.0, %v1050
  %v1052 = vpop.f32.mrf.mxu0
  %v1053 = vadd.f32 0.0, %v1052
  %v1054 = vpop.f32.mrf.mxu0
  %v1055 = vadd.f32 0.0, %v1054
  %v1056 = vpop.f32.mrf.mxu0
  %v1057 = vadd.f32 0.0, %v1056
  %1058 = vdwg.mxu0
  %1059 = vmatprep.subr.bf16.mxu0 %v765
  %1060 = vmatpush1.bf16.msra.mxu0 %v764
  %1061 = vmatprep.subr.bf16.mxu0 %v763
  %1062 = vmatpush1.bf16.msra.mxu0 %v762
  %1063 = vmatprep.subr.bf16.mxu0 %v761
  %1064 = vmatpush1.bf16.msra.mxu0 %v760
  %1065 = vmatprep.subr.bf16.mxu0 %v759
  %1066 = vmatpush1.bf16.msra.mxu0 %v758
  %1067 = vmatprep.subr.bf16.mxu0 %v757
  %1068 = vmatpush1.bf16.msra.mxu0 %v756
  %1069 = vmatprep.subr.bf16.mxu0 %v755
  %1070 = vmatpush1.bf16.msra.mxu0 %v754
  %1071 = vmatprep.subr.bf16.mxu0 %v753
  %1072 = vmatpush1.bf16.msra.mxu0 %v752
  %1073 = vmatprep.subr.bf16.mxu0 %v751
  %1074 = vmatpush1.bf16.msra.mxu0 %v750
  %1075 = vmatprep.subr.bf16.mxu0 %v781
  %1076 = vmatpush2.bf16.msra.mxu0 %v780
  %1077 = vmatprep.subr.bf16.mxu0 %v779
  %1078 = vmatpush2.bf16.msra.mxu0 %v778
  %1079 = vmatprep.subr.bf16.mxu0 %v777
  %1080 = vmatpush2.bf16.msra.mxu0 %v776
  %1081 = vmatprep.subr.bf16.mxu0 %v775
  %1082 = vmatpush2.bf16.msra.mxu0 %v774
  %1083 = vmatprep.subr.bf16.mxu0 %v773
  %1084 = vmatpush2.bf16.msra.mxu0 %v772
  %1085 = vmatprep.subr.bf16.mxu0 %v771
  %1086 = vmatpush2.bf16.msra.mxu0 %v770
  %1087 = vmatprep.subr.bf16.mxu0 %v769
  %1088 = vmatpush2.bf16.msra.mxu0 %v768
  %1089 = vmatprep.subr.bf16.mxu0 %v767
  %1090 = vmatpush2.bf16.msra.mxu0 %v766
  %1091 = vmatprep.mubr.bf16.mxu0 %v253
  %1092 = vmatmul.mubr.bf16.gmra.mxu0 %v252
  %v1093 = vpop.f32.mrf.mxu0
  %v1094 = vadd.f32 %v1041, %v1093
  %v1095 = vpop.f32.mrf.mxu0
  %v1096 = vadd.f32 %v1043, %v1095
  %v1097 = vpop.f32.mrf.mxu0
  %v1098 = vadd.f32 %v1045, %v1097
  %v1099 = vpop.f32.mrf.mxu0
  %v1100 = vadd.f32 %v1047, %v1099
  %1101 = vmatprep.mubr.bf16.mxu0 %v262
  %1102 = vmatmul.mubr.bf16.gmra.mxu0 %v261
  %v1103 = vpop.f32.mrf.mxu0
  %v1104 = vadd.f32 %v1051, %v1103
  %v1105 = vpop.f32.mrf.mxu0
  %v1106 = vadd.f32 %v1053, %v1105
  %v1107 = vpop.f32.mrf.mxu0
  %v1108 = vadd.f32 %v1055, %v1107
  %v1109 = vpop.f32.mrf.mxu0
  %v1110 = vadd.f32 %v1057, %v1109
  %1111 = vdwg.mxu0
  %1112 = vmatprep.subr.bf16.mxu0 %v797
  %1113 = vmatpush1.bf16.msra.mxu0 %v796
  %1114 = vmatprep.subr.bf16.mxu0 %v795
  %1115 = vmatpush1.bf16.msra.mxu0 %v794
  %1116 = vmatprep.subr.bf16.mxu0 %v793
  %1117 = vmatpush1.bf16.msra.mxu0 %v792
  %1118 = vmatprep.subr.bf16.mxu0 %v791
  %1119 = vmatpush1.bf16.msra.mxu0 %v790
  %1120 = vmatprep.subr.bf16.mxu0 %v789
  %1121 = vmatpush1.bf16.msra.mxu0 %v788
  %1122 = vmatprep.subr.bf16.mxu0 %v787
  %1123 = vmatpush1.bf16.msra.mxu0 %v786
  %1124 = vmatprep.subr.bf16.mxu0 %v785
  %1125 = vmatpush1.bf16.msra.mxu0 %v784
  %1126 = vmatprep.subr.bf16.mxu0 %v783
  %1127 = vmatpush1.bf16.msra.mxu0 %v782
  %1128 = vmatprep.subr.bf16.mxu0 %v813
  %1129 = vmatpush2.bf16.msra.mxu0 %v812
  %1130 = vmatprep.subr.bf16.mxu0 %v811
  %1131 = vmatpush2.bf16.msra.mxu0 %v810
  %1132 = vmatprep.subr.bf16.mxu0 %v809
  %1133 = vmatpush2.bf16.msra.mxu0 %v808
  %1134 = vmatprep.subr.bf16.mxu0 %v807
  %1135 = vmatpush2.bf16.msra.mxu0 %v806
  %1136 = vmatprep.subr.bf16.mxu0 %v805
  %1137 = vmatpush2.bf16.msra.mxu0 %v804
  %1138 = vmatprep.subr.bf16.mxu0 %v803
  %1139 = vmatpush2.bf16.msra.mxu0 %v802
  %1140 = vmatprep.subr.bf16.mxu0 %v801
  %1141 = vmatpush2.bf16.msra.mxu0 %v800
  %1142 = vmatprep.subr.bf16.mxu0 %v799
  %1143 = vmatpush2.bf16.msra.mxu0 %v798
  %1144 = vmatprep.mubr.bf16.mxu0 %v255
  %1145 = vmatmul.mubr.bf16.gmra.mxu0 %v254
  %v1146 = vpop.f32.mrf.mxu0
  %v1147 = vadd.f32 %v1094, %v1146
  %v1148 = vpop.f32.mrf.mxu0
  %v1149 = vadd.f32 %v1096, %v1148
  %v1150 = vpop.f32.mrf.mxu0
  %v1151 = vadd.f32 %v1098, %v1150
  %v1152 = vpop.f32.mrf.mxu0
  %v1153 = vadd.f32 %v1100, %v1152
  %1154 = vmatprep.mubr.bf16.mxu0 %v264
  %1155 = vmatmul.mubr.bf16.gmra.mxu0 %v263
  %v1156 = vpop.f32.mrf.mxu0
  %v1157 = vadd.f32 %v1104, %v1156
  %v1158 = vpop.f32.mrf.mxu0
  %v1159 = vadd.f32 %v1106, %v1158
  %v1160 = vpop.f32.mrf.mxu0
  %v1161 = vadd.f32 %v1108, %v1160
  %v1162 = vpop.f32.mrf.mxu0
  %v1163 = vadd.f32 %v1110, %v1162
  %1164 = vdwg.mxu0
  %1165 = vmatprep.subr.bf16.mxu0 %v829
  %1166 = vmatpush1.bf16.msra.mxu0 %v828
  %1167 = vmatprep.subr.bf16.mxu0 %v827
  %1168 = vmatpush1.bf16.msra.mxu0 %v826
  %1169 = vmatprep.subr.bf16.mxu0 %v825
  %1170 = vmatpush1.bf16.msra.mxu0 %v824
  %1171 = vmatprep.subr.bf16.mxu0 %v823
  %1172 = vmatpush1.bf16.msra.mxu0 %v822
  %1173 = vmatprep.subr.bf16.mxu0 %v821
  %1174 = vmatpush1.bf16.msra.mxu0 %v820
  %1175 = vmatprep.subr.bf16.mxu0 %v819
  %1176 = vmatpush1.bf16.msra.mxu0 %v818
  %1177 = vmatprep.subr.bf16.mxu0 %v817
  %1178 = vmatpush1.bf16.msra.mxu0 %v816
  %1179 = vmatprep.subr.bf16.mxu0 %v815
  %1180 = vmatpush1.bf16.msra.mxu0 %v814
  %1181 = vmatprep.subr.bf16.mxu0 %v845
  %1182 = vmatpush2.bf16.msra.mxu0 %v844
  %1183 = vmatprep.subr.bf16.mxu0 %v843
  %1184 = vmatpush2.bf16.msra.mxu0 %v842
  %1185 = vmatprep.subr.bf16.mxu0 %v841
  %1186 = vmatpush2.bf16.msra.mxu0 %v840
  %1187 = vmatprep.subr.bf16.mxu0 %v839
  %1188 = vmatpush2.bf16.msra.mxu0 %v838
  %1189 = vmatprep.subr.bf16.mxu0 %v837
  %1190 = vmatpush2.bf16.msra.mxu0 %v836
  %1191 = vmatprep.subr.bf16.mxu0 %v835
  %1192 = vmatpush2.bf16.msra.mxu0 %v834
  %1193 = vmatprep.subr.bf16.mxu0 %v833
  %1194 = vmatpush2.bf16.msra.mxu0 %v832
  %1195 = vmatprep.subr.bf16.mxu0 %v831
  %1196 = vmatpush2.bf16.msra.mxu0 %v830
  %1197 = vmatprep.mubr.bf16.mxu0 %v257
  %1198 = vmatmul.mubr.bf16.gmra.mxu0 %v256
  %v1199 = vpop.f32.mrf.mxu0
  %v1200 = vadd.f32 %v1147, %v1199
  %v1201 = vpop.f32.mrf.mxu0
  %v1202 = vadd.f32 %v1149, %v1201
  %v1203 = vpop.f32.mrf.mxu0
  %v1204 = vadd.f32 %v1151, %v1203
  %v1205 = vpop.f32.mrf.mxu0
  %v1206 = vadd.f32 %v1153, %v1205
  %1207 = vmatprep.mubr.bf16.mxu0 %v266
  %1208 = vmatmul.mubr.bf16.gmra.mxu0 %v265
  %v1209 = vpop.f32.mrf.mxu0
  %v1210 = vadd.f32 %v1157, %v1209
  %v1211 = vpop.f32.mrf.mxu0
  %v1212 = vadd.f32 %v1159, %v1211
  %v1213 = vpop.f32.mrf.mxu0
  %v1214 = vadd.f32 %v1161, %v1213
  %v1215 = vpop.f32.mrf.mxu0
  %v1216 = vadd.f32 %v1163, %v1215
  %1217 = vdwg.mxu0
  %1218 = vmatprep.subr.bf16.mxu0 %v861
  %1219 = vmatpush1.bf16.msra.mxu0 %v860
  %1220 = vmatprep.subr.bf16.mxu0 %v859
  %1221 = vmatpush1.bf16.msra.mxu0 %v858
  %1222 = vmatprep.subr.bf16.mxu0 %v857
  %1223 = vmatpush1.bf16.msra.mxu0 %v856
  %1224 = vmatprep.subr.bf16.mxu0 %v855
  %1225 = vmatpush1.bf16.msra.mxu0 %v854
  %1226 = vmatprep.subr.bf16.mxu0 %v853
  %1227 = vmatpush1.bf16.msra.mxu0 %v852
  %1228 = vmatprep.subr.bf16.mxu0 %v851
  %1229 = vmatpush1.bf16.msra.mxu0 %v850
  %1230 = vmatprep.subr.bf16.mxu0 %v849
  %1231 = vmatpush1.bf16.msra.mxu0 %v848
  %1232 = vmatprep.subr.bf16.mxu0 %v847
  %1233 = vmatpush1.bf16.msra.mxu0 %v846
  %1234 = vmatprep.subr.bf16.mxu0 0
  %1235 = vmatpush2.bf16.msra.mxu0 0
  %1236 = vmatprep.subr.bf16.mxu0 0
  %1237 = vmatpush2.bf16.msra.mxu0 0
  %1238 = vmatprep.subr.bf16.mxu0 0
  %1239 = vmatpush2.bf16.msra.mxu0 0
  %1240 = vmatprep.subr.bf16.mxu0 0
  %1241 = vmatpush2.bf16.msra.mxu0 0
  %1242 = vmatprep.subr.bf16.mxu0 0
  %1243 = vmatpush2.bf16.msra.mxu0 0
  %1244 = vmatprep.subr.bf16.mxu0 0
  %1245 = vmatpush2.bf16.msra.mxu0 0
  %1246 = vmatprep.subr.bf16.mxu0 0
  %1247 = vmatpush2.bf16.msra.mxu0 0
  %1248 = vmatprep.subr.bf16.mxu0 0
  %1249 = vmatpush2.bf16.msra.mxu0 0
  %1250 = vmatprep.mubr.bf16.mxu0 0
  %1251 = vmatmul.mubr.bf16.gmra.mxu0 %v258
  %v1252 = vpop.f32.mrf.mxu0
  %v1253 = vadd.f32 %v1200, %v1252
  %v1254 = vpop.f32.mrf.mxu0
  %v1255 = vadd.f32 %v1202, %v1254
  %v1256 = vpop.f32.mrf.mxu0
  %v1257 = vadd.f32 %v1204, %v1256
  %v1258 = vpop.f32.mrf.mxu0
  %v1259 = vadd.f32 %v1206, %v1258
  %1260 = vmatprep.mubr.bf16.mxu0 0
  %1261 = vmatmul.mubr.bf16.gmra.mxu0 %v267
  %v1262 = vpop.f32.mrf.mxu0
  %v1263 = vadd.f32 %v1210, %v1262
  %v1264 = vpop.f32.mrf.mxu0
  %v1265 = vadd.f32 %v1212, %v1264
  %v1266 = vpop.f32.mrf.mxu0
  %v1267 = vadd.f32 %v1214, %v1266
  %v1268 = vpop.f32.mrf.mxu0
  %v1269 = vadd.f32 %v1216, %v1268
  %1270 = vdwg.mxu0
  %v1271 = vld [vmem:[%s2] sm:$0x3]
  %v1273 = vlaneseq
  %v1274 = vshrl.u32 %v1273, 7
  %v1275 = vsub.s32 0, %v1274
  %v1276 = vrot.slane %v1271, %v1275
  %v1277 = vlaneseq
  %v1278 = vshrl.u32 %v1277, 7
  %v1279 = vsub.s32 1, %v1278
  %v1280 = vrot.slane %v1271, %v1279
  %v1283 = vmul.f32 %v1253, %v1276
  %v1284 = vmul.f32 %v1255, %v1280
  %v1285 = vmul.f32 %v1257, %v1276
  %v1286 = vmul.f32 %v1259, %v1280
  %v1287 = vmul.f32 %v1263, %v1276
  %v1288 = vmul.f32 %v1265, %v1280
  %v1289 = vmul.f32 %v1267, %v1276
  %v1290 = vmul.f32 %v1269, %v1280
  %v1291 = vld [vmem:[%s3] sm:$0x3]
  %v1293 = vlaneseq
  %v1294 = vshrl.u32 %v1293, 7
  %v1295 = vsub.s32 0, %v1294
  %v1296 = vrot.slane %v1291, %v1295
  %v1297 = vlaneseq
  %v1298 = vshrl.u32 %v1297, 7
  %v1299 = vsub.s32 1, %v1298
  %v1300 = vrot.slane %v1291, %v1299
  %v1303 = vadd.f32 %v1283, %v1296
  %v1304 = vadd.f32 %v1284, %v1300
  %v1305 = vadd.f32 %v1285, %v1296
  %v1306 = vadd.f32 %v1286, %v1300
  %v1307 = vadd.f32 %v1287, %v1296
  %v1308 = vadd.f32 %v1288, %v1300
  %v1309 = vadd.f32 %v1289, %v1296
  %v1310 = vadd.f32 %v1290, %v1300
  %v1311 = vmax.f32 %v1303, 0.0
  %v1312 = vmax.f32 %v1304, 0.0
  %v1313 = vmax.f32 %v1305, 0.0
  %v1314 = vmax.f32 %v1306, 0.0
  %v1315 = vmax.f32 %v1307, 0.0
  %v1316 = vmax.f32 %v1308, 0.0
  %v1317 = vmax.f32 %v1309, 0.0
  %v1318 = vmax.f32 %v1310, 0.0
  %v1319 = vpack.c.bf16 %v1313, %v1311
  %v1320 = vpack.c.bf16 %v1314, %v1312
  %v1321 = vpack.c.bf16 %v1317, %v1315
  %v1322 = vpack.c.bf16 %v1318, %v1316
  %v1323 = vld [vmem:[%s4] sm:$0xf]
  %v1324 = vld [vmem:[%s4 + $0x4] sm:$0xf]
  %v1325 = vld [vmem:[%s4 + $0x8] sm:$0xf]
  %v1326 = vld [vmem:[%s4 + $0xc] sm:$0xf]
  %v1331 = vunpack.c.l.b16 %v1323
  %v1332 = vunpack.c.l.b16 %v1324
  %v1333 = vunpack.c.l.b16 %v1325
  %v1334 = vunpack.c.l.b16 %v1326
  %v1335 = vpack.c.b16 %v1332, %v1331
  %v1336 = vpack.c.b16 %v1334, %v1333
  %vm1337 = vcmask 261120
  %v1339 = vsel %vm1337, %v1335, 0
  %v1342 = vsel %vm1337, %v1336, 0
  %1344 = vmatprep.subr.bf16.mxu0 0
  %1345 = vmatpush1.bf16.msra.mxu0 0
  %1346 = vmatprep.subr.bf16.mxu0 0
  %1347 = vmatpush1.bf16.msra.mxu0 0
  %1348 = vmatprep.subr.bf16.mxu0 0
  %1349 = vmatpush1.bf16.msra.mxu0 0
  %1350 = vmatprep.subr.bf16.mxu0 0
  %1351 = vmatpush1.bf16.msra.mxu0 0
  %1352 = vmatprep.subr.bf16.mxu0 0
  %1353 = vmatpush1.bf16.msra.mxu0 0
  %1354 = vmatprep.subr.bf16.mxu0 0
  %1355 = vmatpush1.bf16.msra.mxu0 0
  %1356 = vmatprep.subr.bf16.mxu0 %v1322
  %1357 = vmatpush1.bf16.msra.mxu0 %v1321
  %1358 = vmatprep.subr.bf16.mxu0 %v1320
  %1359 = vmatpush1.bf16.msra.mxu0 %v1319
  %1360 = vmatprep.subr.bf16.mxu0 0
  %1361 = vmatpush2.bf16.msra.mxu0 0
  %1362 = vmatprep.subr.bf16.mxu0 0
  %1363 = vmatpush2.bf16.msra.mxu0 0
  %1364 = vmatprep.subr.bf16.mxu0 0
  %1365 = vmatpush2.bf16.msra.mxu0 0
  %1366 = vmatprep.subr.bf16.mxu0 0
  %1367 = vmatpush2.bf16.msra.mxu0 0
  %1368 = vmatprep.subr.bf16.mxu0 0
  %1369 = vmatpush2.bf16.msra.mxu0 0
  %1370 = vmatprep.subr.bf16.mxu0 0
  %1371 = vmatpush2.bf16.msra.mxu0 0
  %1372 = vmatprep.subr.bf16.mxu0 0
  %1373 = vmatpush2.bf16.msra.mxu0 0
  %1374 = vmatprep.subr.bf16.mxu0 0
  %1375 = vmatpush2.bf16.msra.mxu0 0
  %1376 = vmatprep.mubr.bf16.mxu0 0
  %1377 = vmatmul.mubr.bf16.gmra.mxu0 %v1339
  %v1378 = vpop.f32.mrf.mxu0
  %v1379 = vadd.f32 0.0, %v1378
  %v1380 = vpop.f32.mrf.mxu0
  %v1381 = vadd.f32 0.0, %v1380
  %v1382 = vpop.f32.mrf.mxu0
  %v1383 = vadd.f32 0.0, %v1382
  %v1384 = vpop.f32.mrf.mxu0
  %v1385 = vadd.f32 0.0, %v1384
  %1386 = vmatprep.mubr.bf16.mxu0 0
  %1387 = vmatmul.mubr.bf16.gmra.mxu0 %v1342
  %v1388 = vpop.f32.mrf.mxu0
  %v1389 = vadd.f32 0.0, %v1388
  %v1390 = vpop.f32.mrf.mxu0
  %v1391 = vadd.f32 0.0, %v1390
  %v1392 = vpop.f32.mrf.mxu0
  %v1393 = vadd.f32 0.0, %v1392
  %v1394 = vpop.f32.mrf.mxu0
  %v1395 = vadd.f32 0.0, %v1394
  %1396 = vdwg.mxu0
  %v1397 = vpack.c.bf16 %v1383, %v1379
  %v1398 = vpack.c.bf16 %v1385, %v1381
  %v1399 = vpack.c.bf16 %v1393, %v1389
  %v1400 = vpack.c.bf16 %v1395, %v1391
  %v1401 = vld [vmem:[%s5] sm:$0xff]
  %v1402 = vld [vmem:[%s5 + $0x8] sm:$0xff]
  %v1403 = vld [vmem:[%s5 + $0x10] sm:$0xff]
  %v1404 = vld [vmem:[%s5 + $0x18] sm:$0xff]
  %v1405 = vld [vmem:[%s5 + $0x20] sm:$0xff]
  %v1406 = vld [vmem:[%s5 + $0x28] sm:$0xff]
  %v1407 = vld [vmem:[%s5 + $0x30] sm:$0xff]
  %v1408 = vld [vmem:[%s5 + $0x38] sm:$0xff]
  %v1409 = vld [vmem:[%s5 + $0x40] sm:$0xff]
  %v1410 = vld [vmem:[%s5 + $0x48] sm:$0xff]
  %v1411 = vld [vmem:[%s5 + $0x50] sm:$0xff]
  %v1412 = vld [vmem:[%s5 + $0x58] sm:$0xff]
  %v1413 = vld [vmem:[%s5 + $0x60] sm:$0xff]
  %v1414 = vld [vmem:[%s5 + $0x68] sm:$0xff]
  %v1415 = vld [vmem:[%s5 + $0x70] sm:$0xff]
  %v1416 = vld [vmem:[%s5 + $0x78] sm:$0xff]
  %v1417 = vld [vmem:[%s5 + $0x80] sm:$0xff]
  %v1418 = vld [vmem:[%s5 + $0x88] sm:$0xff]
  %v1419 = vld [vmem:[%s5 + $0x90] sm:$0xff]
  %v1420 = vld [vmem:[%s5 + $0x98] sm:$0xff]
  %v1421 = vld [vmem:[%s5 + $0xa0] sm:$0xff]
  %v1422 = vld [vmem:[%s5 + $0xa8] sm:$0xff]
  %v1423 = vld [vmem:[%s5 + $0xb0] sm:$0xff]
  %v1424 = vld [vmem:[%s5 + $0xb8] sm:$0xff]
  %v1425 = vld [vmem:[%s5 + $0xc0] sm:$0xff]
  %v1426 = vld [vmem:[%s5 + $0xc8] sm:$0xff]
  %v1427 = vld [vmem:[%s5 + $0xd0] sm:$0xff]
  %v1428 = vld [vmem:[%s5 + $0xd8] sm:$0xff]
  %v1429 = vld [vmem:[%s5 + $0xe0] sm:$0xff]
  %v1430 = vld [vmem:[%s5 + $0xe8] sm:$0xff]
  %v1431 = vld [vmem:[%s5 + $0xf0] sm:$0xff]
  %v1432 = vld [vmem:[%s5 + $0xf8] sm:$0xff]
  %v1433 = vld [vmem:[%s5 + $0x100] sm:$0xff]
  %v1434 = vld [vmem:[%s5 + $0x108] sm:$0xff]
  %v1435 = vld [vmem:[%s5 + $0x110] sm:$0xff]
  %v1436 = vld [vmem:[%s5 + $0x118] sm:$0xff]
  %v1437 = vld [vmem:[%s5 + $0x120] sm:$0xff]
  %v1438 = vld [vmem:[%s5 + $0x128] sm:$0xff]
  %v1439 = vld [vmem:[%s5 + $0x130] sm:$0xff]
  %v1440 = vld [vmem:[%s5 + $0x138] sm:$0xff]
  %v1441 = vld [vmem:[%s5 + $0x140] sm:$0xff]
  %v1442 = vld [vmem:[%s5 + $0x148] sm:$0xff]
  %v1443 = vld [vmem:[%s5 + $0x150] sm:$0xff]
  %v1444 = vld [vmem:[%s5 + $0x158] sm:$0xff]
  %v1445 = vld [vmem:[%s5 + $0x160] sm:$0xff]
  %v1446 = vld [vmem:[%s5 + $0x168] sm:$0xff]
  %v1447 = vld [vmem:[%s5 + $0x170] sm:$0xff]
  %v1448 = vld [vmem:[%s5 + $0x178] sm:$0xff]
  %v1449 = vld [vmem:[%s5 + $0x180] sm:$0xff]
  %v1450 = vld [vmem:[%s5 + $0x188] sm:$0xff]
  %v1451 = vld [vmem:[%s5 + $0x190] sm:$0xff]
  %v1452 = vld [vmem:[%s5 + $0x198] sm:$0xff]
  %v1453 = vld [vmem:[%s5 + $0x1a0] sm:$0xff]
  %v1454 = vld [vmem:[%s5 + $0x1a8] sm:$0xff]
  %v1455 = vld [vmem:[%s5 + $0x1b0] sm:$0xff]
  %v1456 = vld [vmem:[%s5 + $0x1b8] sm:$0xff]
  %v1457 = vld [vmem:[%s5 + $0x1c0] sm:$0xff]
  %v1458 = vld [vmem:[%s5 + $0x1c8] sm:$0xff]
  %v1459 = vld [vmem:[%s5 + $0x1d0] sm:$0xff]
  %v1460 = vld [vmem:[%s5 + $0x1d8] sm:$0xff]
  %v1461 = vld [vmem:[%s5 + $0x1e0] sm:$0xff]
  %v1462 = vld [vmem:[%s5 + $0x1e8] sm:$0xff]
  %v1463 = vld [vmem:[%s5 + $0x1f0] sm:$0xff]
  %v1464 = vld [vmem:[%s5 + $0x1f8] sm:$0xff]
  %s1465 = scalar_lea.vmem %s4, 16
  %v1466 = vld [vmem:[%s1465] sm:$0xf]
  %v1467 = vld [vmem:[%s1465 + $0x4] sm:$0xf]
  %v1468 = vld [vmem:[%s1465 + $0x8] sm:$0xf]
  %v1469 = vld [vmem:[%s1465 + $0xc] sm:$0xf]
  %v1474 = vunpack.c.l.b16 %v1466
  %v1475 = vunpack.c.l.b16 %v1467
  %v1476 = vunpack.c.l.b16 %v1468
  %v1477 = vunpack.c.l.b16 %v1469
  %v1478 = vpack.c.b16 %v1475, %v1474
  %v1479 = vpack.c.b16 %v1477, %v1476
  %v1481 = vsel %vm1337, %v1478, 0
  %v1484 = vsel %vm1337, %v1479, 0
  %1486 = vmatprep.subr.bf16.mxu0 0
  %1487 = vmatpush1.bf16.msra.mxu0 0
  %1488 = vmatprep.subr.bf16.mxu0 0
  %1489 = vmatpush1.bf16.msra.mxu0 0
  %1490 = vmatprep.subr.bf16.mxu0 0
  %1491 = vmatpush1.bf16.msra.mxu0 0
  %1492 = vmatprep.subr.bf16.mxu0 0
  %1493 = vmatpush1.bf16.msra.mxu0 0
  %1494 = vmatprep.subr.bf16.mxu0 0
  %1495 = vmatpush1.bf16.msra.mxu0 0
  %1496 = vmatprep.subr.bf16.mxu0 0
  %1497 = vmatpush1.bf16.msra.mxu0 0
  %1498 = vmatprep.subr.bf16.mxu0 %v1322
  %1499 = vmatpush1.bf16.msra.mxu0 %v1321
  %1500 = vmatprep.subr.bf16.mxu0 %v1320
  %1501 = vmatpush1.bf16.msra.mxu0 %v1319
  %1502 = vmatprep.subr.bf16.mxu0 0
  %1503 = vmatpush2.bf16.msra.mxu0 0
  %1504 = vmatprep.subr.bf16.mxu0 0
  %1505 = vmatpush2.bf16.msra.mxu0 0
  %1506 = vmatprep.subr.bf16.mxu0 0
  %1507 = vmatpush2.bf16.msra.mxu0 0
  %1508 = vmatprep.subr.bf16.mxu0 0
  %1509 = vmatpush2.bf16.msra.mxu0 0
  %1510 = vmatprep.subr.bf16.mxu0 0
  %1511 = vmatpush2.bf16.msra.mxu0 0
  %1512 = vmatprep.subr.bf16.mxu0 0
  %1513 = vmatpush2.bf16.msra.mxu0 0
  %1514 = vmatprep.subr.bf16.mxu0 0
  %1515 = vmatpush2.bf16.msra.mxu0 0
  %1516 = vmatprep.subr.bf16.mxu0 0
  %1517 = vmatpush2.bf16.msra.mxu0 0
  %1518 = vmatprep.mubr.bf16.mxu0 0
  %1519 = vmatmul.mubr.bf16.gmra.mxu0 %v1481
  %v1520 = vpop.f32.mrf.mxu0
  %v1521 = vadd.f32 0.0, %v1520
  %v1522 = vpop.f32.mrf.mxu0
  %v1523 = vadd.f32 0.0, %v1522
  %v1524 = vpop.f32.mrf.mxu0
  %v1525 = vadd.f32 0.0, %v1524
  %v1526 = vpop.f32.mrf.mxu0
  %v1527 = vadd.f32 0.0, %v1526
  %1528 = vmatprep.mubr.bf16.mxu0 0
  %1529 = vmatmul.mubr.bf16.gmra.mxu0 %v1484
  %v1530 = vpop.f32.mrf.mxu0
  %v1531 = vadd.f32 0.0, %v1530
  %v1532 = vpop.f32.mrf.mxu0
  %v1533 = vadd.f32 0.0, %v1532
  %v1534 = vpop.f32.mrf.mxu0
  %v1535 = vadd.f32 0.0, %v1534
  %v1536 = vpop.f32.mrf.mxu0
  %v1537 = vadd.f32 0.0, %v1536
  %1538 = vdwg.mxu0
  %v1539 = vpack.c.bf16 %v1525, %v1521
  %v1540 = vpack.c.bf16 %v1527, %v1523
  %v1541 = vpack.c.bf16 %v1535, %v1531
  %v1542 = vpack.c.bf16 %v1537, %v1533
  %s1543 = scalar_lea.vmem %s5, 512
  %v1544 = vld [vmem:[%s1543] sm:$0xff]
  %v1545 = vld [vmem:[%s1543 + $0x8] sm:$0xff]
  %v1546 = vld [vmem:[%s1543 + $0x10] sm:$0xff]
  %v1547 = vld [vmem:[%s1543 + $0x18] sm:$0xff]
  %v1548 = vld [vmem:[%s1543 + $0x20] sm:$0xff]
  %v1549 = vld [vmem:[%s1543 + $0x28] sm:$0xff]
  %v1550 = vld [vmem:[%s1543 + $0x30] sm:$0xff]
  %v1551 = vld [vmem:[%s1543 + $0x38] sm:$0xff]
  %v1552 = vld [vmem:[%s1543 + $0x40] sm:$0xff]
  %v1553 = vld [vmem:[%s1543 + $0x48] sm:$0xff]
  %v1554 = vld [vmem:[%s1543 + $0x50] sm:$0xff]
  %v1555 = vld [vmem:[%s1543 + $0x58] sm:$0xff]
  %v1556 = vld [vmem:[%s1543 + $0x60] sm:$0xff]
  %v1557 = vld [vmem:[%s1543 + $0x68] sm:$0xff]
  %v1558 = vld [vmem:[%s1543 + $0x70] sm:$0xff]
  %v1559 = vld [vmem:[%s1543 + $0x78] sm:$0xff]
  %v1560 = vld [vmem:[%s1543 + $0x80] sm:$0xff]
  %v1561 = vld [vmem:[%s1543 + $0x88] sm:$0xff]
  %v1562 = vld [vmem:[%s1543 + $0x90] sm:$0xff]
  %v1563 = vld [vmem:[%s1543 + $0x98] sm:$0xff]
  %v1564 = vld [vmem:[%s1543 + $0xa0] sm:$0xff]
  %v1565 = vld [vmem:[%s1543 + $0xa8] sm:$0xff]
  %v1566 = vld [vmem:[%s1543 + $0xb0] sm:$0xff]
  %v1567 = vld [vmem:[%s1543 + $0xb8] sm:$0xff]
  %v1568 = vld [vmem:[%s1543 + $0xc0] sm:$0xff]
  %v1569 = vld [vmem:[%s1543 + $0xc8] sm:$0xff]
  %v1570 = vld [vmem:[%s1543 + $0xd0] sm:$0xff]
  %v1571 = vld [vmem:[%s1543 + $0xd8] sm:$0xff]
  %v1572 = vld [vmem:[%s1543 + $0xe0] sm:$0xff]
  %v1573 = vld [vmem:[%s1543 + $0xe8] sm:$0xff]
  %v1574 = vld [vmem:[%s1543 + $0xf0] sm:$0xff]
  %v1575 = vld [vmem:[%s1543 + $0xf8] sm:$0xff]
  %v1576 = vld [vmem:[%s1543 + $0x100] sm:$0xff]
  %v1577 = vld [vmem:[%s1543 + $0x108] sm:$0xff]
  %v1578 = vld [vmem:[%s1543 + $0x110] sm:$0xff]
  %v1579 = vld [vmem:[%s1543 + $0x118] sm:$0xff]
  %v1580 = vld [vmem:[%s1543 + $0x120] sm:$0xff]
  %v1581 = vld [vmem:[%s1543 + $0x128] sm:$0xff]
  %v1582 = vld [vmem:[%s1543 + $0x130] sm:$0xff]
  %v1583 = vld [vmem:[%s1543 + $0x138] sm:$0xff]
  %v1584 = vld [vmem:[%s1543 + $0x140] sm:$0xff]
  %v1585 = vld [vmem:[%s1543 + $0x148] sm:$0xff]
  %v1586 = vld [vmem:[%s1543 + $0x150] sm:$0xff]
  %v1587 = vld [vmem:[%s1543 + $0x158] sm:$0xff]
  %v1588 = vld [vmem:[%s1543 + $0x160] sm:$0xff]
  %v1589 = vld [vmem:[%s1543 + $0x168] sm:$0xff]
  %v1590 = vld [vmem:[%s1543 + $0x170] sm:$0xff]
  %v1591 = vld [vmem:[%s1543 + $0x178] sm:$0xff]
  %v1592 = vld [vmem:[%s1543 + $0x180] sm:$0xff]
  %v1593 = vld [vmem:[%s1543 + $0x188] sm:$0xff]
  %v1594 = vld [vmem:[%s1543 + $0x190] sm:$0xff]
  %v1595 = vld [vmem:[%s1543 + $0x198] sm:$0xff]
  %v1596 = vld [vmem:[%s1543 + $0x1a0] sm:$0xff]
  %v1597 = vld [vmem:[%s1543 + $0x1a8] sm:$0xff]
  %v1598 = vld [vmem:[%s1543 + $0x1b0] sm:$0xff]
  %v1599 = vld [vmem:[%s1543 + $0x1b8] sm:$0xff]
  %v1600 = vld [vmem:[%s1543 + $0x1c0] sm:$0xff]
  %v1601 = vld [vmem:[%s1543 + $0x1c8] sm:$0xff]
  %v1602 = vld [vmem:[%s1543 + $0x1d0] sm:$0xff]
  %v1603 = vld [vmem:[%s1543 + $0x1d8] sm:$0xff]
  %v1604 = vld [vmem:[%s1543 + $0x1e0] sm:$0xff]
  %v1605 = vld [vmem:[%s1543 + $0x1e8] sm:$0xff]
  %v1606 = vld [vmem:[%s1543 + $0x1f0] sm:$0xff]
  %v1607 = vld [vmem:[%s1543 + $0x1f8] sm:$0xff]
  %v1672 = vunpack.c.l.b16 %v1544
  %v1673 = vunpack.c.h.b16 %v1544
  %v1674 = vunpack.c.l.b16 %v1545
  %v1675 = vunpack.c.h.b16 %v1545
  %v1676 = vunpack.c.l.b16 %v1546
  %v1677 = vunpack.c.h.b16 %v1546
  %v1678 = vunpack.c.l.b16 %v1547
  %v1679 = vunpack.c.h.b16 %v1547
  %v1680 = vunpack.c.l.b16 %v1548
  %v1681 = vunpack.c.h.b16 %v1548
  %v1682 = vunpack.c.l.b16 %v1549
  %v1683 = vunpack.c.h.b16 %v1549
  %v1684 = vunpack.c.l.b16 %v1550
  %v1685 = vunpack.c.h.b16 %v1550
  %v1686 = vunpack.c.l.b16 %v1551
  %v1687 = vunpack.c.h.b16 %v1551
  %v1688 = vunpack.c.l.b16 %v1552
  %v1689 = vunpack.c.h.b16 %v1552
  %v1690 = vunpack.c.l.b16 %v1553
  %v1691 = vunpack.c.h.b16 %v1553
  %v1692 = vunpack.c.l.b16 %v1554
  %v1693 = vunpack.c.h.b16 %v1554
  %v1694 = vunpack.c.l.b16 %v1555
  %v1695 = vunpack.c.h.b16 %v1555
  %v1696 = vunpack.c.l.b16 %v1556
  %v1697 = vunpack.c.h.b16 %v1556
  %v1698 = vunpack.c.l.b16 %v1557
  %v1699 = vunpack.c.h.b16 %v1557
  %v1700 = vunpack.c.l.b16 %v1558
  %v1701 = vunpack.c.h.b16 %v1558
  %v1702 = vunpack.c.l.b16 %v1559
  %v1703 = vunpack.c.h.b16 %v1559
  %v1704 = vunpack.c.l.b16 %v1560
  %v1705 = vunpack.c.h.b16 %v1560
  %v1706 = vunpack.c.l.b16 %v1561
  %v1707 = vunpack.c.h.b16 %v1561
  %v1708 = vunpack.c.l.b16 %v1562
  %v1709 = vunpack.c.h.b16 %v1562
  %v1710 = vunpack.c.l.b16 %v1563
  %v1711 = vunpack.c.h.b16 %v1563
  %v1712 = vunpack.c.l.b16 %v1564
  %v1713 = vunpack.c.h.b16 %v1564
  %v1714 = vunpack.c.l.b16 %v1565
  %v1715 = vunpack.c.h.b16 %v1565
  %v1716 = vunpack.c.l.b16 %v1566
  %v1717 = vunpack.c.h.b16 %v1566
  %v1718 = vunpack.c.l.b16 %v1567
  %v1719 = vunpack.c.h.b16 %v1567
  %v1720 = vunpack.c.l.b16 %v1568
  %v1721 = vunpack.c.h.b16 %v1568
  %v1722 = vunpack.c.l.b16 %v1569
  %v1723 = vunpack.c.h.b16 %v1569
  %v1724 = vunpack.c.l.b16 %v1570
  %v1725 = vunpack.c.h.b16 %v1570
  %v1726 = vunpack.c.l.b16 %v1571
  %v1727 = vunpack.c.h.b16 %v1571
  %v1728 = vunpack.c.l.b16 %v1572
  %v1729 = vunpack.c.h.b16 %v1572
  %v1730 = vunpack.c.l.b16 %v1573
  %v1731 = vunpack.c.h.b16 %v1573
  %v1732 = vunpack.c.l.b16 %v1574
  %v1733 = vunpack.c.h.b16 %v1574
  %v1734 = vunpack.c.l.b16 %v1575
  %v1735 = vunpack.c.h.b16 %v1575
  %v1736 = vunpack.c.l.b16 %v1576
  %v1737 = vunpack.c.h.b16 %v1576
  %v1738 = vunpack.c.l.b16 %v1577
  %v1739 = vunpack.c.h.b16 %v1577
  %v1740 = vunpack.c.l.b16 %v1578
  %v1741 = vunpack.c.h.b16 %v1578
  %v1742 = vunpack.c.l.b16 %v1579
  %v1743 = vunpack.c.h.b16 %v1579
  %v1744 = vunpack.c.l.b16 %v1580
  %v1745 = vunpack.c.h.b16 %v1580
  %v1746 = vunpack.c.l.b16 %v1581
  %v1747 = vunpack.c.h.b16 %v1581
  %v1748 = vunpack.c.l.b16 %v1582
  %v1749 = vunpack.c.h.b16 %v1582
  %v1750 = vunpack.c.l.b16 %v1583
  %v1751 = vunpack.c.h.b16 %v1583
  %v1752 = vunpack.c.l.b16 %v1584
  %v1753 = vunpack.c.h.b16 %v1584
  %v1754 = vunpack.c.l.b16 %v1585
  %v1755 = vunpack.c.h.b16 %v1585
  %v1756 = vunpack.c.l.b16 %v1586
  %v1757 = vunpack.c.h.b16 %v1586
  %v1758 = vunpack.c.l.b16 %v1587
  %v1759 = vunpack.c.h.b16 %v1587
  %v1760 = vunpack.c.l.b16 %v1588
  %v1761 = vunpack.c.h.b16 %v1588
  %v1762 = vunpack.c.l.b16 %v1589
  %v1763 = vunpack.c.h.b16 %v1589
  %v1764 = vunpack.c.l.b16 %v1590
  %v1765 = vunpack.c.h.b16 %v1590
  %v1766 = vunpack.c.l.b16 %v1591
  %v1767 = vunpack.c.h.b16 %v1591
  %v1768 = vunpack.c.l.b16 %v1592
  %v1769 = vunpack.c.h.b16 %v1592
  %v1770 = vunpack.c.l.b16 %v1593
  %v1771 = vunpack.c.h.b16 %v1593
  %v1772 = vunpack.c.l.b16 %v1594
  %v1773 = vunpack.c.h.b16 %v1594
  %v1774 = vunpack.c.l.b16 %v1595
  %v1775 = vunpack.c.h.b16 %v1595
  %v1776 = vunpack.c.l.b16 %v1596
  %v1777 = vunpack.c.h.b16 %v1596
  %v1778 = vunpack.c.l.b16 %v1597
  %v1779 = vunpack.c.h.b16 %v1597
  %v1780 = vunpack.c.l.b16 %v1598
  %v1781 = vunpack.c.h.b16 %v1598
  %v1782 = vunpack.c.l.b16 %v1599
  %v1783 = vunpack.c.h.b16 %v1599
  %v1784 = vunpack.c.l.b16 %v1600
  %v1785 = vunpack.c.h.b16 %v1600
  %v1786 = vunpack.c.l.b16 %v1601
  %v1787 = vunpack.c.h.b16 %v1601
  %v1788 = vunpack.c.l.b16 %v1602
  %v1789 = vunpack.c.h.b16 %v1602
  %v1790 = vunpack.c.l.b16 %v1603
  %v1791 = vunpack.c.h.b16 %v1603
  %v1792 = vunpack.c.l.b16 %v1604
  %v1793 = vunpack.c.h.b16 %v1604
  %v1794 = vunpack.c.l.b16 %v1605
  %v1795 = vunpack.c.h.b16 %v1605
  %v1796 = vunpack.c.l.b16 %v1606
  %v1797 = vunpack.c.h.b16 %v1606
  %v1798 = vunpack.c.l.b16 %v1607
  %v1799 = vunpack.c.h.b16 %v1607
  %v1800 = vpack.c.b16 %v1676, %v1672
  %v1801 = vpack.c.b16 %v1677, %v1673
  %v1802 = vpack.c.b16 %v1678, %v1674
  %v1803 = vpack.c.b16 %v1679, %v1675
  %v1804 = vpack.c.b16 %v1684, %v1680
  %v1805 = vpack.c.b16 %v1685, %v1681
  %v1806 = vpack.c.b16 %v1686, %v1682
  %v1807 = vpack.c.b16 %v1687, %v1683
  %v1808 = vpack.c.b16 %v1692, %v1688
  %v1809 = vpack.c.b16 %v1693, %v1689
  %v1810 = vpack.c.b16 %v1694, %v1690
  %v1811 = vpack.c.b16 %v1695, %v1691
  %v1812 = vpack.c.b16 %v1700, %v1696
  %v1813 = vpack.c.b16 %v1701, %v1697
  %v1814 = vpack.c.b16 %v1702, %v1698
  %v1815 = vpack.c.b16 %v1703, %v1699
  %v1816 = vpack.c.b16 %v1708, %v1704
  %v1817 = vpack.c.b16 %v1709, %v1705
  %v1818 = vpack.c.b16 %v1710, %v1706
  %v1819 = vpack.c.b16 %v1711, %v1707
  %v1820 = vpack.c.b16 %v1716, %v1712
  %v1821 = vpack.c.b16 %v1717, %v1713
  %v1822 = vpack.c.b16 %v1718, %v1714
  %v1823 = vpack.c.b16 %v1719, %v1715
  %v1824 = vpack.c.b16 %v1724, %v1720
  %v1825 = vpack.c.b16 %v1725, %v1721
  %v1826 = vpack.c.b16 %v1726, %v1722
  %v1827 = vpack.c.b16 %v1727, %v1723
  %v1828 = vpack.c.b16 %v1732, %v1728
  %v1829 = vpack.c.b16 %v1733, %v1729
  %v1830 = vpack.c.b16 %v1734, %v1730
  %v1831 = vpack.c.b16 %v1735, %v1731
  %v1832 = vpack.c.b16 %v1740, %v1736
  %v1833 = vpack.c.b16 %v1741, %v1737
  %v1834 = vpack.c.b16 %v1742, %v1738
  %v1835 = vpack.c.b16 %v1743, %v1739
  %v1836 = vpack.c.b16 %v1748, %v1744
  %v1837 = vpack.c.b16 %v1749, %v1745
  %v1838 = vpack.c.b16 %v1750, %v1746
  %v1839 = vpack.c.b16 %v1751, %v1747
  %v1840 = vpack.c.b16 %v1756, %v1752
  %v1841 = vpack.c.b16 %v1757, %v1753
  %v1842 = vpack.c.b16 %v1758, %v1754
  %v1843 = vpack.c.b16 %v1759, %v1755
  %v1844 = vpack.c.b16 %v1764, %v1760
  %v1845 = vpack.c.b16 %v1765, %v1761
  %v1846 = vpack.c.b16 %v1766, %v1762
  %v1847 = vpack.c.b16 %v1767, %v1763
  %v1848 = vpack.c.b16 %v1772, %v1768
  %v1849 = vpack.c.b16 %v1773, %v1769
  %v1850 = vpack.c.b16 %v1774, %v1770
  %v1851 = vpack.c.b16 %v1775, %v1771
  %v1852 = vpack.c.b16 %v1780, %v1776
  %v1853 = vpack.c.b16 %v1781, %v1777
  %v1854 = vpack.c.b16 %v1782, %v1778
  %v1855 = vpack.c.b16 %v1783, %v1779
  %v1856 = vpack.c.b16 %v1788, %v1784
  %v1857 = vpack.c.b16 %v1789, %v1785
  %v1858 = vpack.c.b16 %v1790, %v1786
  %v1859 = vpack.c.b16 %v1791, %v1787
  %v1860 = vpack.c.b16 %v1796, %v1792
  %v1861 = vpack.c.b16 %v1797, %v1793
  %v1862 = vpack.c.b16 %v1798, %v1794
  %v1863 = vpack.c.b16 %v1799, %v1795
  %1928 = vmatprep.subr.bf16.mxu0 %v1829
  %1929 = vmatpush1.bf16.msra.mxu0 %v1828
  %1930 = vmatprep.subr.bf16.mxu0 %v1825
  %1931 = vmatpush1.bf16.msra.mxu0 %v1824
  %1932 = vmatprep.subr.bf16.mxu0 %v1821
  %1933 = vmatpush1.bf16.msra.mxu0 %v1820
  %1934 = vmatprep.subr.bf16.mxu0 %v1817
  %1935 = vmatpush1.bf16.msra.mxu0 %v1816
  %1936 = vmatprep.subr.bf16.mxu0 %v1813
  %1937 = vmatpush1.bf16.msra.mxu0 %v1812
  %1938 = vmatprep.subr.bf16.mxu0 %v1809
  %1939 = vmatpush1.bf16.msra.mxu0 %v1808
  %1940 = vmatprep.subr.bf16.mxu0 %v1805
  %1941 = vmatpush1.bf16.msra.mxu0 %v1804
  %1942 = vmatprep.subr.bf16.mxu0 %v1801
  %1943 = vmatpush1.bf16.msra.mxu0 %v1800
  %1944 = vmatprep.subr.bf16.mxu0 %v1861
  %1945 = vmatpush2.bf16.msra.mxu0 %v1860
  %1946 = vmatprep.subr.bf16.mxu0 %v1857
  %1947 = vmatpush2.bf16.msra.mxu0 %v1856
  %1948 = vmatprep.subr.bf16.mxu0 %v1853
  %1949 = vmatpush2.bf16.msra.mxu0 %v1852
  %1950 = vmatprep.subr.bf16.mxu0 %v1849
  %1951 = vmatpush2.bf16.msra.mxu0 %v1848
  %1952 = vmatprep.subr.bf16.mxu0 %v1845
  %1953 = vmatpush2.bf16.msra.mxu0 %v1844
  %1954 = vmatprep.subr.bf16.mxu0 %v1841
  %1955 = vmatpush2.bf16.msra.mxu0 %v1840
  %1956 = vmatprep.subr.bf16.mxu0 %v1837
  %1957 = vmatpush2.bf16.msra.mxu0 %v1836
  %1958 = vmatprep.subr.bf16.mxu0 %v1833
  %1959 = vmatpush2.bf16.msra.mxu0 %v1832
  %1960 = vmatprep.mubr.bf16.mxu0 %v1540
  %1961 = vmatmul.mubr.bf16.gmra.mxu0 %v1539
  %v1962 = vpop.f32.mrf.mxu0
  %v1963 = vadd.f32 0.0, %v1962
  %v1964 = vpop.f32.mrf.mxu0
  %v1965 = vadd.f32 0.0, %v1964
  %v1966 = vpop.f32.mrf.mxu0
  %v1967 = vadd.f32 0.0, %v1966
  %v1968 = vpop.f32.mrf.mxu0
  %v1969 = vadd.f32 0.0, %v1968
  %1970 = vmatprep.mubr.bf16.mxu0 %v1542
  %1971 = vmatmul.mubr.bf16.gmra.mxu0 %v1541
  %v1972 = vpop.f32.mrf.mxu0
  %v1973 = vadd.f32 0.0, %v1972
  %v1974 = vpop.f32.mrf.mxu0
  %v1975 = vadd.f32 0.0, %v1974
  %v1976 = vpop.f32.mrf.mxu0
  %v1977 = vadd.f32 0.0, %v1976
  %v1978 = vpop.f32.mrf.mxu0
  %v1979 = vadd.f32 0.0, %v1978
  %1980 = vdwg.mxu0
  %1981 = vmatprep.subr.bf16.mxu0 %v1831
  %1982 = vmatpush1.bf16.msra.mxu0 %v1830
  %1983 = vmatprep.subr.bf16.mxu0 %v1827
  %1984 = vmatpush1.bf16.msra.mxu0 %v1826
  %1985 = vmatprep.subr.bf16.mxu0 %v1823
  %1986 = vmatpush1.bf16.msra.mxu0 %v1822
  %1987 = vmatprep.subr.bf16.mxu0 %v1819
  %1988 = vmatpush1.bf16.msra.mxu0 %v1818
  %1989 = vmatprep.subr.bf16.mxu0 %v1815
  %1990 = vmatpush1.bf16.msra.mxu0 %v1814
  %1991 = vmatprep.subr.bf16.mxu0 %v1811
  %1992 = vmatpush1.bf16.msra.mxu0 %v1810
  %1993 = vmatprep.subr.bf16.mxu0 %v1807
  %1994 = vmatpush1.bf16.msra.mxu0 %v1806
  %1995 = vmatprep.subr.bf16.mxu0 %v1803
  %1996 = vmatpush1.bf16.msra.mxu0 %v1802
  %1997 = vmatprep.subr.bf16.mxu0 %v1863
  %1998 = vmatpush2.bf16.msra.mxu0 %v1862
  %1999 = vmatprep.subr.bf16.mxu0 %v1859
  %2000 = vmatpush2.bf16.msra.mxu0 %v1858
  %2001 = vmatprep.subr.bf16.mxu0 %v1855
  %2002 = vmatpush2.bf16.msra.mxu0 %v1854
  %2003 = vmatprep.subr.bf16.mxu0 %v1851
  %2004 = vmatpush2.bf16.msra.mxu0 %v1850
  %2005 = vmatprep.subr.bf16.mxu0 %v1847
  %2006 = vmatpush2.bf16.msra.mxu0 %v1846
  %2007 = vmatprep.subr.bf16.mxu0 %v1843
  %2008 = vmatpush2.bf16.msra.mxu0 %v1842
  %2009 = vmatprep.subr.bf16.mxu0 %v1839
  %2010 = vmatpush2.bf16.msra.mxu0 %v1838
  %2011 = vmatprep.subr.bf16.mxu0 %v1835
  %2012 = vmatpush2.bf16.msra.mxu0 %v1834
  %2013 = vmatprep.mubr.bf16.mxu0 %v1540
  %2014 = vmatmul.mubr.bf16.gmra.mxu0 %v1539
  %v2015 = vpop.f32.mrf.mxu0
  %v2016 = vadd.f32 0.0, %v2015
  %v2017 = vpop.f32.mrf.mxu0
  %v2018 = vadd.f32 0.0, %v2017
  %v2019 = vpop.f32.mrf.mxu0
  %v2020 = vadd.f32 0.0, %v2019
  %v2021 = vpop.f32.mrf.mxu0
  %v2022 = vadd.f32 0.0, %v2021
  %2023 = vmatprep.mubr.bf16.mxu0 %v1542
  %2024 = vmatmul.mubr.bf16.gmra.mxu0 %v1541
  %v2025 = vpop.f32.mrf.mxu0
  %v2026 = vadd.f32 0.0, %v2025
  %v2027 = vpop.f32.mrf.mxu0
  %v2028 = vadd.f32 0.0, %v2027
  %v2029 = vpop.f32.mrf.mxu0
  %v2030 = vadd.f32 0.0, %v2029
  %v2031 = vpop.f32.mrf.mxu0
  %v2032 = vadd.f32 0.0, %v2031
  %2033 = vdwg.mxu0
  %v2098 = vunpack.c.l.b16 %v1401
  %v2099 = vunpack.c.h.b16 %v1401
  %v2100 = vunpack.c.l.b16 %v1402
  %v2101 = vunpack.c.h.b16 %v1402
  %v2102 = vunpack.c.l.b16 %v1403
  %v2103 = vunpack.c.h.b16 %v1403
  %v2104 = vunpack.c.l.b16 %v1404
  %v2105 = vunpack.c.h.b16 %v1404
  %v2106 = vunpack.c.l.b16 %v1405
  %v2107 = vunpack.c.h.b16 %v1405
  %v2108 = vunpack.c.l.b16 %v1406
  %v2109 = vunpack.c.h.b16 %v1406
  %v2110 = vunpack.c.l.b16 %v1407
  %v2111 = vunpack.c.h.b16 %v1407
  %v2112 = vunpack.c.l.b16 %v1408
  %v2113 = vunpack.c.h.b16 %v1408
  %v2114 = vunpack.c.l.b16 %v1409
  %v2115 = vunpack.c.h.b16 %v1409
  %v2116 = vunpack.c.l.b16 %v1410
  %v2117 = vunpack.c.h.b16 %v1410
  %v2118 = vunpack.c.l.b16 %v1411
  %v2119 = vunpack.c.h.b16 %v1411
  %v2120 = vunpack.c.l.b16 %v1412
  %v2121 = vunpack.c.h.b16 %v1412
  %v2122 = vunpack.c.l.b16 %v1413
  %v2123 = vunpack.c.h.b16 %v1413
  %v2124 = vunpack.c.l.b16 %v1414
  %v2125 = vunpack.c.h.b16 %v1414
  %v2126 = vunpack.c.l.b16 %v1415
  %v2127 = vunpack.c.h.b16 %v1415
  %v2128 = vunpack.c.l.b16 %v1416
  %v2129 = vunpack.c.h.b16 %v1416
  %v2130 = vunpack.c.l.b16 %v1417
  %v2131 = vunpack.c.h.b16 %v1417
  %v2132 = vunpack.c.l.b16 %v1418
  %v2133 = vunpack.c.h.b16 %v1418
  %v2134 = vunpack.c.l.b16 %v1419
  %v2135 = vunpack.c.h.b16 %v1419
  %v2136 = vunpack.c.l.b16 %v1420
  %v2137 = vunpack.c.h.b16 %v1420
  %v2138 = vunpack.c.l.b16 %v1421
  %v2139 = vunpack.c.h.b16 %v1421
  %v2140 = vunpack.c.l.b16 %v1422
  %v2141 = vunpack.c.h.b16 %v1422
  %v2142 = vunpack.c.l.b16 %v1423
  %v2143 = vunpack.c.h.b16 %v1423
  %v2144 = vunpack.c.l.b16 %v1424
  %v2145 = vunpack.c.h.b16 %v1424
  %v2146 = vunpack.c.l.b16 %v1425
  %v2147 = vunpack.c.h.b16 %v1425
  %v2148 = vunpack.c.l.b16 %v1426
  %v2149 = vunpack.c.h.b16 %v1426
  %v2150 = vunpack.c.l.b16 %v1427
  %v2151 = vunpack.c.h.b16 %v1427
  %v2152 = vunpack.c.l.b16 %v1428
  %v2153 = vunpack.c.h.b16 %v1428
  %v2154 = vunpack.c.l.b16 %v1429
  %v2155 = vunpack.c.h.b16 %v1429
  %v2156 = vunpack.c.l.b16 %v1430
  %v2157 = vunpack.c.h.b16 %v1430
  %v2158 = vunpack.c.l.b16 %v1431
  %v2159 = vunpack.c.h.b16 %v1431
  %v2160 = vunpack.c.l.b16 %v1432
  %v2161 = vunpack.c.h.b16 %v1432
  %v2162 = vunpack.c.l.b16 %v1433
  %v2163 = vunpack.c.h.b16 %v1433
  %v2164 = vunpack.c.l.b16 %v1434
  %v2165 = vunpack.c.h.b16 %v1434
  %v2166 = vunpack.c.l.b16 %v1435
  %v2167 = vunpack.c.h.b16 %v1435
  %v2168 = vunpack.c.l.b16 %v1436
  %v2169 = vunpack.c.h.b16 %v1436
  %v2170 = vunpack.c.l.b16 %v1437
  %v2171 = vunpack.c.h.b16 %v1437
  %v2172 = vunpack.c.l.b16 %v1438
  %v2173 = vunpack.c.h.b16 %v1438
  %v2174 = vunpack.c.l.b16 %v1439
  %v2175 = vunpack.c.h.b16 %v1439
  %v2176 = vunpack.c.l.b16 %v1440
  %v2177 = vunpack.c.h.b16 %v1440
  %v2178 = vunpack.c.l.b16 %v1441
  %v2179 = vunpack.c.h.b16 %v1441
  %v2180 = vunpack.c.l.b16 %v1442
  %v2181 = vunpack.c.h.b16 %v1442
  %v2182 = vunpack.c.l.b16 %v1443
  %v2183 = vunpack.c.h.b16 %v1443
  %v2184 = vunpack.c.l.b16 %v1444
  %v2185 = vunpack.c.h.b16 %v1444
  %v2186 = vunpack.c.l.b16 %v1445
  %v2187 = vunpack.c.h.b16 %v1445
  %v2188 = vunpack.c.l.b16 %v1446
  %v2189 = vunpack.c.h.b16 %v1446
  %v2190 = vunpack.c.l.b16 %v1447
  %v2191 = vunpack.c.h.b16 %v1447
  %v2192 = vunpack.c.l.b16 %v1448
  %v2193 = vunpack.c.h.b16 %v1448
  %v2194 = vunpack.c.l.b16 %v1449
  %v2195 = vunpack.c.h.b16 %v1449
  %v2196 = vunpack.c.l.b16 %v1450
  %v2197 = vunpack.c.h.b16 %v1450
  %v2198 = vunpack.c.l.b16 %v1451
  %v2199 = vunpack.c.h.b16 %v1451
  %v2200 = vunpack.c.l.b16 %v1452
  %v2201 = vunpack.c.h.b16 %v1452
  %v2202 = vunpack.c.l.b16 %v1453
  %v2203 = vunpack.c.h.b16 %v1453
  %v2204 = vunpack.c.l.b16 %v1454
  %v2205 = vunpack.c.h.b16 %v1454
  %v2206 = vunpack.c.l.b16 %v1455
  %v2207 = vunpack.c.h.b16 %v1455
  %v2208 = vunpack.c.l.b16 %v1456
  %v2209 = vunpack.c.h.b16 %v1456
  %v2210 = vunpack.c.l.b16 %v1457
  %v2211 = vunpack.c.h.b16 %v1457
  %v2212 = vunpack.c.l.b16 %v1458
  %v2213 = vunpack.c.h.b16 %v1458
  %v2214 = vunpack.c.l.b16 %v1459
  %v2215 = vunpack.c.h.b16 %v1459
  %v2216 = vunpack.c.l.b16 %v1460
  %v2217 = vunpack.c.h.b16 %v1460
  %v2218 = vunpack.c.l.b16 %v1461
  %v2219 = vunpack.c.h.b16 %v1461
  %v2220 = vunpack.c.l.b16 %v1462
  %v2221 = vunpack.c.h.b16 %v1462
  %v2222 = vunpack.c.l.b16 %v1463
  %v2223 = vunpack.c.h.b16 %v1463
  %v2224 = vunpack.c.l.b16 %v1464
  %v2225 = vunpack.c.h.b16 %v1464
  %v2226 = vpack.c.b16 %v2102, %v2098
  %v2227 = vpack.c.b16 %v2103, %v2099
  %v2228 = vpack.c.b16 %v2104, %v2100
  %v2229 = vpack.c.b16 %v2105, %v2101
  %v2230 = vpack.c.b16 %v2110, %v2106
  %v2231 = vpack.c.b16 %v2111, %v2107
  %v2232 = vpack.c.b16 %v2112, %v2108
  %v2233 = vpack.c.b16 %v2113, %v2109
  %v2234 = vpack.c.b16 %v2118, %v2114
  %v2235 = vpack.c.b16 %v2119, %v2115
  %v2236 = vpack.c.b16 %v2120, %v2116
  %v2237 = vpack.c.b16 %v2121, %v2117
  %v2238 = vpack.c.b16 %v2126, %v2122
  %v2239 = vpack.c.b16 %v2127, %v2123
  %v2240 = vpack.c.b16 %v2128, %v2124
  %v2241 = vpack.c.b16 %v2129, %v2125
  %v2242 = vpack.c.b16 %v2134, %v2130
  %v2243 = vpack.c.b16 %v2135, %v2131
  %v2244 = vpack.c.b16 %v2136, %v2132
  %v2245 = vpack.c.b16 %v2137, %v2133
  %v2246 = vpack.c.b16 %v2142, %v2138
  %v2247 = vpack.c.b16 %v2143, %v2139
  %v2248 = vpack.c.b16 %v2144, %v2140
  %v2249 = vpack.c.b16 %v2145, %v2141
  %v2250 = vpack.c.b16 %v2150, %v2146
  %v2251 = vpack.c.b16 %v2151, %v2147
  %v2252 = vpack.c.b16 %v2152, %v2148
  %v2253 = vpack.c.b16 %v2153, %v2149
  %v2254 = vpack.c.b16 %v2158, %v2154
  %v2255 = vpack.c.b16 %v2159, %v2155
  %v2256 = vpack.c.b16 %v2160, %v2156
  %v2257 = vpack.c.b16 %v2161, %v2157
  %v2258 = vpack.c.b16 %v2166, %v2162
  %v2259 = vpack.c.b16 %v2167, %v2163
  %v2260 = vpack.c.b16 %v2168, %v2164
  %v2261 = vpack.c.b16 %v2169, %v2165
  %v2262 = vpack.c.b16 %v2174, %v2170
  %v2263 = vpack.c.b16 %v2175, %v2171
  %v2264 = vpack.c.b16 %v2176, %v2172
  %v2265 = vpack.c.b16 %v2177, %v2173
  %v2266 = vpack.c.b16 %v2182, %v2178
  %v2267 = vpack.c.b16 %v2183, %v2179
  %v2268 = vpack.c.b16 %v2184, %v2180
  %v2269 = vpack.c.b16 %v2185, %v2181
  %v2270 = vpack.c.b16 %v2190, %v2186
  %v2271 = vpack.c.b16 %v2191, %v2187
  %v2272 = vpack.c.b16 %v2192, %v2188
  %v2273 = vpack.c.b16 %v2193, %v2189
  %v2274 = vpack.c.b16 %v2198, %v2194
  %v2275 = vpack.c.b16 %v2199, %v2195
  %v2276 = vpack.c.b16 %v2200, %v2196
  %v2277 = vpack.c.b16 %v2201, %v2197
  %v2278 = vpack.c.b16 %v2206, %v2202
  %v2279 = vpack.c.b16 %v2207, %v2203
  %v2280 = vpack.c.b16 %v2208, %v2204
  %v2281 = vpack.c.b16 %v2209, %v2205
  %v2282 = vpack.c.b16 %v2214, %v2210
  %v2283 = vpack.c.b16 %v2215, %v2211
  %v2284 = vpack.c.b16 %v2216, %v2212
  %v2285 = vpack.c.b16 %v2217, %v2213
  %v2286 = vpack.c.b16 %v2222, %v2218
  %v2287 = vpack.c.b16 %v2223, %v2219
  %v2288 = vpack.c.b16 %v2224, %v2220
  %v2289 = vpack.c.b16 %v2225, %v2221
  %2354 = vmatprep.subr.bf16.mxu0 %v2255
  %2355 = vmatpush1.bf16.msra.mxu0 %v2254
  %2356 = vmatprep.subr.bf16.mxu0 %v2251
  %2357 = vmatpush1.bf16.msra.mxu0 %v2250
  %2358 = vmatprep.subr.bf16.mxu0 %v2247
  %2359 = vmatpush1.bf16.msra.mxu0 %v2246
  %2360 = vmatprep.subr.bf16.mxu0 %v2243
  %2361 = vmatpush1.bf16.msra.mxu0 %v2242
  %2362 = vmatprep.subr.bf16.mxu0 %v2239
  %2363 = vmatpush1.bf16.msra.mxu0 %v2238
  %2364 = vmatprep.subr.bf16.mxu0 %v2235
  %2365 = vmatpush1.bf16.msra.mxu0 %v2234
  %2366 = vmatprep.subr.bf16.mxu0 %v2231
  %2367 = vmatpush1.bf16.msra.mxu0 %v2230
  %2368 = vmatprep.subr.bf16.mxu0 %v2227
  %2369 = vmatpush1.bf16.msra.mxu0 %v2226
  %2370 = vmatprep.subr.bf16.mxu0 %v2287
  %2371 = vmatpush2.bf16.msra.mxu0 %v2286
  %2372 = vmatprep.subr.bf16.mxu0 %v2283
  %2373 = vmatpush2.bf16.msra.mxu0 %v2282
  %2374 = vmatprep.subr.bf16.mxu0 %v2279
  %2375 = vmatpush2.bf16.msra.mxu0 %v2278
  %2376 = vmatprep.subr.bf16.mxu0 %v2275
  %2377 = vmatpush2.bf16.msra.mxu0 %v2274
  %2378 = vmatprep.subr.bf16.mxu0 %v2271
  %2379 = vmatpush2.bf16.msra.mxu0 %v2270
  %2380 = vmatprep.subr.bf16.mxu0 %v2267
  %2381 = vmatpush2.bf16.msra.mxu0 %v2266
  %2382 = vmatprep.subr.bf16.mxu0 %v2263
  %2383 = vmatpush2.bf16.msra.mxu0 %v2262
  %2384 = vmatprep.subr.bf16.mxu0 %v2259
  %2385 = vmatpush2.bf16.msra.mxu0 %v2258
  %2386 = vmatprep.mubr.bf16.mxu0 %v1398
  %2387 = vmatmul.mubr.bf16.gmra.mxu0 %v1397
  %v2388 = vpop.f32.mrf.mxu0
  %v2389 = vadd.f32 %v1963, %v2388
  %v2390 = vpop.f32.mrf.mxu0
  %v2391 = vadd.f32 %v1965, %v2390
  %v2392 = vpop.f32.mrf.mxu0
  %v2393 = vadd.f32 %v1967, %v2392
  %v2394 = vpop.f32.mrf.mxu0
  %v2395 = vadd.f32 %v1969, %v2394
  %2396 = vmatprep.mubr.bf16.mxu0 %v1400
  %2397 = vmatmul.mubr.bf16.gmra.mxu0 %v1399
  %v2398 = vpop.f32.mrf.mxu0
  %v2399 = vadd.f32 %v1973, %v2398
  %v2400 = vpop.f32.mrf.mxu0
  %v2401 = vadd.f32 %v1975, %v2400
  %v2402 = vpop.f32.mrf.mxu0
  %v2403 = vadd.f32 %v1977, %v2402
  %v2404 = vpop.f32.mrf.mxu0
  %v2405 = vadd.f32 %v1979, %v2404
  %2406 = vdwg.mxu0
  %2407 = vmatprep.subr.bf16.mxu0 %v2257
  %2408 = vmatpush1.bf16.msra.mxu0 %v2256
  %2409 = vmatprep.subr.bf16.mxu0 %v2253
  %2410 = vmatpush1.bf16.msra.mxu0 %v2252
  %2411 = vmatprep.subr.bf16.mxu0 %v2249
  %2412 = vmatpush1.bf16.msra.mxu0 %v2248
  %2413 = vmatprep.subr.bf16.mxu0 %v2245
  %2414 = vmatpush1.bf16.msra.mxu0 %v2244
  %2415 = vmatprep.subr.bf16.mxu0 %v2241
  %2416 = vmatpush1.bf16.msra.mxu0 %v2240
  %2417 = vmatprep.subr.bf16.mxu0 %v2237
  %2418 = vmatpush1.bf16.msra.mxu0 %v2236
  %2419 = vmatprep.subr.bf16.mxu0 %v2233
  %2420 = vmatpush1.bf16.msra.mxu0 %v2232
  %2421 = vmatprep.subr.bf16.mxu0 %v2229
  %2422 = vmatpush1.bf16.msra.mxu0 %v2228
  %2423 = vmatprep.subr.bf16.mxu0 %v2289
  %2424 = vmatpush2.bf16.msra.mxu0 %v2288
  %2425 = vmatprep.subr.bf16.mxu0 %v2285
  %2426 = vmatpush2.bf16.msra.mxu0 %v2284
  %2427 = vmatprep.subr.bf16.mxu0 %v2281
  %2428 = vmatpush2.bf16.msra.mxu0 %v2280
  %2429 = vmatprep.subr.bf16.mxu0 %v2277
  %2430 = vmatpush2.bf16.msra.mxu0 %v2276
  %2431 = vmatprep.subr.bf16.mxu0 %v2273
  %2432 = vmatpush2.bf16.msra.mxu0 %v2272
  %2433 = vmatprep.subr.bf16.mxu0 %v2269
  %2434 = vmatpush2.bf16.msra.mxu0 %v2268
  %2435 = vmatprep.subr.bf16.mxu0 %v2265
  %2436 = vmatpush2.bf16.msra.mxu0 %v2264
  %2437 = vmatprep.subr.bf16.mxu0 %v2261
  %2438 = vmatpush2.bf16.msra.mxu0 %v2260
  %2439 = vmatprep.mubr.bf16.mxu0 %v1398
  %2440 = vmatmul.mubr.bf16.gmra.mxu0 %v1397
  %v2441 = vpop.f32.mrf.mxu0
  %v2442 = vadd.f32 %v2016, %v2441
  %v2443 = vpop.f32.mrf.mxu0
  %v2444 = vadd.f32 %v2018, %v2443
  %v2445 = vpop.f32.mrf.mxu0
  %v2446 = vadd.f32 %v2020, %v2445
  %v2447 = vpop.f32.mrf.mxu0
  %v2448 = vadd.f32 %v2022, %v2447
  %2449 = vmatprep.mubr.bf16.mxu0 %v1400
  %2450 = vmatmul.mubr.bf16.gmra.mxu0 %v1399
  %v2451 = vpop.f32.mrf.mxu0
  %v2452 = vadd.f32 %v2026, %v2451
  %v2453 = vpop.f32.mrf.mxu0
  %v2454 = vadd.f32 %v2028, %v2453
  %v2455 = vpop.f32.mrf.mxu0
  %v2456 = vadd.f32 %v2030, %v2455
  %v2457 = vpop.f32.mrf.mxu0
  %v2458 = vadd.f32 %v2032, %v2457
  %2459 = vdwg.mxu0
  %s2460 = scalar_lea.vmem %s4, 32
  %v2461 = vld [vmem:[%s2460] sm:$0xf]
  %v2462 = vld [vmem:[%s2460 + $0x4] sm:$0xf]
  %v2463 = vld [vmem:[%s2460 + $0x8] sm:$0xf]
  %v2464 = vld [vmem:[%s2460 + $0xc] sm:$0xf]
  %v2469 = vunpack.c.l.b16 %v2461
  %v2470 = vunpack.c.l.b16 %v2462
  %v2471 = vunpack.c.l.b16 %v2463
  %v2472 = vunpack.c.l.b16 %v2464
  %v2473 = vpack.c.b16 %v2470, %v2469
  %v2474 = vpack.c.b16 %v2472, %v2471
  %v2476 = vsel %vm1337, %v2473, 0
  %v2479 = vsel %vm1337, %v2474, 0
  %2481 = vmatprep.subr.bf16.mxu0 0
  %2482 = vmatpush1.bf16.msra.mxu0 0
  %2483 = vmatprep.subr.bf16.mxu0 0
  %2484 = vmatpush1.bf16.msra.mxu0 0
  %2485 = vmatprep.subr.bf16.mxu0 0
  %2486 = vmatpush1.bf16.msra.mxu0 0
  %2487 = vmatprep.subr.bf16.mxu0 0
  %2488 = vmatpush1.bf16.msra.mxu0 0
  %2489 = vmatprep.subr.bf16.mxu0 0
  %2490 = vmatpush1.bf16.msra.mxu0 0
  %2491 = vmatprep.subr.bf16.mxu0 0
  %2492 = vmatpush1.bf16.msra.mxu0 0
  %2493 = vmatprep.subr.bf16.mxu0 %v1322
  %2494 = vmatpush1.bf16.msra.mxu0 %v1321
  %2495 = vmatprep.subr.bf16.mxu0 %v1320
  %2496 = vmatpush1.bf16.msra.mxu0 %v1319
  %2497 = vmatprep.subr.bf16.mxu0 0
  %2498 = vmatpush2.bf16.msra.mxu0 0
  %2499 = vmatprep.subr.bf16.mxu0 0
  %2500 = vmatpush2.bf16.msra.mxu0 0
  %2501 = vmatprep.subr.bf16.mxu0 0
  %2502 = vmatpush2.bf16.msra.mxu0 0
  %2503 = vmatprep.subr.bf16.mxu0 0
  %2504 = vmatpush2.bf16.msra.mxu0 0
  %2505 = vmatprep.subr.bf16.mxu0 0
  %2506 = vmatpush2.bf16.msra.mxu0 0
  %2507 = vmatprep.subr.bf16.mxu0 0
  %2508 = vmatpush2.bf16.msra.mxu0 0
  %2509 = vmatprep.subr.bf16.mxu0 0
  %2510 = vmatpush2.bf16.msra.mxu0 0
  %2511 = vmatprep.subr.bf16.mxu0 0
  %2512 = vmatpush2.bf16.msra.mxu0 0
  %2513 = vmatprep.mubr.bf16.mxu0 0
  %2514 = vmatmul.mubr.bf16.gmra.mxu0 %v2476
  %v2515 = vpop.f32.mrf.mxu0
  %v2516 = vadd.f32 0.0, %v2515
  %v2517 = vpop.f32.mrf.mxu0
  %v2518 = vadd.f32 0.0, %v2517
  %v2519 = vpop.f32.mrf.mxu0
  %v2520 = vadd.f32 0.0, %v2519
  %v2521 = vpop.f32.mrf.mxu0
  %v2522 = vadd.f32 0.0, %v2521
  %2523 = vmatprep.mubr.bf16.mxu0 0
  %2524 = vmatmul.mubr.bf16.gmra.mxu0 %v2479
  %v2525 = vpop.f32.mrf.mxu0
  %v2526 = vadd.f32 0.0, %v2525
  %v2527 = vpop.f32.mrf.mxu0
  %v2528 = vadd.f32 0.0, %v2527
  %v2529 = vpop.f32.mrf.mxu0
  %v2530 = vadd.f32 0.0, %v2529
  %v2531 = vpop.f32.mrf.mxu0
  %v2532 = vadd.f32 0.0, %v2531
  %2533 = vdwg.mxu0
  %v2534 = vpack.c.bf16 %v2520, %v2516
  %v2535 = vpack.c.bf16 %v2522, %v2518
  %v2536 = vpack.c.bf16 %v2530, %v2526
  %v2537 = vpack.c.bf16 %v2532, %v2528
  %s2538 = scalar_lea.vmem %s5, 1024
  %v2539 = vld [vmem:[%s2538] sm:$0xff]
  %v2540 = vld [vmem:[%s2538 + $0x8] sm:$0xff]
  %v2541 = vld [vmem:[%s2538 + $0x10] sm:$0xff]
  %v2542 = vld [vmem:[%s2538 + $0x18] sm:$0xff]
  %v2543 = vld [vmem:[%s2538 + $0x20] sm:$0xff]
  %v2544 = vld [vmem:[%s2538 + $0x28] sm:$0xff]
  %v2545 = vld [vmem:[%s2538 + $0x30] sm:$0xff]
  %v2546 = vld [vmem:[%s2538 + $0x38] sm:$0xff]
  %v2547 = vld [vmem:[%s2538 + $0x40] sm:$0xff]
  %v2548 = vld [vmem:[%s2538 + $0x48] sm:$0xff]
  %v2549 = vld [vmem:[%s2538 + $0x50] sm:$0xff]
  %v2550 = vld [vmem:[%s2538 + $0x58] sm:$0xff]
  %v2551 = vld [vmem:[%s2538 + $0x60] sm:$0xff]
  %v2552 = vld [vmem:[%s2538 + $0x68] sm:$0xff]
  %v2553 = vld [vmem:[%s2538 + $0x70] sm:$0xff]
  %v2554 = vld [vmem:[%s2538 + $0x78] sm:$0xff]
  %v2555 = vld [vmem:[%s2538 + $0x80] sm:$0xff]
  %v2556 = vld [vmem:[%s2538 + $0x88] sm:$0xff]
  %v2557 = vld [vmem:[%s2538 + $0x90] sm:$0xff]
  %v2558 = vld [vmem:[%s2538 + $0x98] sm:$0xff]
  %v2559 = vld [vmem:[%s2538 + $0xa0] sm:$0xff]
  %v2560 = vld [vmem:[%s2538 + $0xa8] sm:$0xff]
  %v2561 = vld [vmem:[%s2538 + $0xb0] sm:$0xff]
  %v2562 = vld [vmem:[%s2538 + $0xb8] sm:$0xff]
  %v2563 = vld [vmem:[%s2538 + $0xc0] sm:$0xff]
  %v2564 = vld [vmem:[%s2538 + $0xc8] sm:$0xff]
  %v2565 = vld [vmem:[%s2538 + $0xd0] sm:$0xff]
  %v2566 = vld [vmem:[%s2538 + $0xd8] sm:$0xff]
  %v2567 = vld [vmem:[%s2538 + $0xe0] sm:$0xff]
  %v2568 = vld [vmem:[%s2538 + $0xe8] sm:$0xff]
  %v2569 = vld [vmem:[%s2538 + $0xf0] sm:$0xff]
  %v2570 = vld [vmem:[%s2538 + $0xf8] sm:$0xff]
  %v2571 = vld [vmem:[%s2538 + $0x100] sm:$0xff]
  %v2572 = vld [vmem:[%s2538 + $0x108] sm:$0xff]
  %v2573 = vld [vmem:[%s2538 + $0x110] sm:$0xff]
  %v2574 = vld [vmem:[%s2538 + $0x118] sm:$0xff]
  %v2575 = vld [vmem:[%s2538 + $0x120] sm:$0xff]
  %v2576 = vld [vmem:[%s2538 + $0x128] sm:$0xff]
  %v2577 = vld [vmem:[%s2538 + $0x130] sm:$0xff]
  %v2578 = vld [vmem:[%s2538 + $0x138] sm:$0xff]
  %v2579 = vld [vmem:[%s2538 + $0x140] sm:$0xff]
  %v2580 = vld [vmem:[%s2538 + $0x148] sm:$0xff]
  %v2581 = vld [vmem:[%s2538 + $0x150] sm:$0xff]
  %v2582 = vld [vmem:[%s2538 + $0x158] sm:$0xff]
  %v2583 = vld [vmem:[%s2538 + $0x160] sm:$0xff]
  %v2584 = vld [vmem:[%s2538 + $0x168] sm:$0xff]
  %v2585 = vld [vmem:[%s2538 + $0x170] sm:$0xff]
  %v2586 = vld [vmem:[%s2538 + $0x178] sm:$0xff]
  %v2587 = vld [vmem:[%s2538 + $0x180] sm:$0xff]
  %v2588 = vld [vmem:[%s2538 + $0x188] sm:$0xff]
  %v2589 = vld [vmem:[%s2538 + $0x190] sm:$0xff]
  %v2590 = vld [vmem:[%s2538 + $0x198] sm:$0xff]
  %v2591 = vld [vmem:[%s2538 + $0x1a0] sm:$0xff]
  %v2592 = vld [vmem:[%s2538 + $0x1a8] sm:$0xff]
  %v2593 = vld [vmem:[%s2538 + $0x1b0] sm:$0xff]
  %v2594 = vld [vmem:[%s2538 + $0x1b8] sm:$0xff]
  %v2595 = vld [vmem:[%s2538 + $0x1c0] sm:$0xff]
  %v2596 = vld [vmem:[%s2538 + $0x1c8] sm:$0xff]
  %v2597 = vld [vmem:[%s2538 + $0x1d0] sm:$0xff]
  %v2598 = vld [vmem:[%s2538 + $0x1d8] sm:$0xff]
  %v2599 = vld [vmem:[%s2538 + $0x1e0] sm:$0xff]
  %v2600 = vld [vmem:[%s2538 + $0x1e8] sm:$0xff]
  %v2601 = vld [vmem:[%s2538 + $0x1f0] sm:$0xff]
  %v2602 = vld [vmem:[%s2538 + $0x1f8] sm:$0xff]
  %v2667 = vunpack.c.l.b16 %v2539
  %v2668 = vunpack.c.h.b16 %v2539
  %v2669 = vunpack.c.l.b16 %v2540
  %v2670 = vunpack.c.h.b16 %v2540
  %v2671 = vunpack.c.l.b16 %v2541
  %v2672 = vunpack.c.h.b16 %v2541
  %v2673 = vunpack.c.l.b16 %v2542
  %v2674 = vunpack.c.h.b16 %v2542
  %v2675 = vunpack.c.l.b16 %v2543
  %v2676 = vunpack.c.h.b16 %v2543
  %v2677 = vunpack.c.l.b16 %v2544
  %v2678 = vunpack.c.h.b16 %v2544
  %v2679 = vunpack.c.l.b16 %v2545
  %v2680 = vunpack.c.h.b16 %v2545
  %v2681 = vunpack.c.l.b16 %v2546
  %v2682 = vunpack.c.h.b16 %v2546
  %v2683 = vunpack.c.l.b16 %v2547
  %v2684 = vunpack.c.h.b16 %v2547
  %v2685 = vunpack.c.l.b16 %v2548
  %v2686 = vunpack.c.h.b16 %v2548
  %v2687 = vunpack.c.l.b16 %v2549
  %v2688 = vunpack.c.h.b16 %v2549
  %v2689 = vunpack.c.l.b16 %v2550
  %v2690 = vunpack.c.h.b16 %v2550
  %v2691 = vunpack.c.l.b16 %v2551
  %v2692 = vunpack.c.h.b16 %v2551
  %v2693 = vunpack.c.l.b16 %v2552
  %v2694 = vunpack.c.h.b16 %v2552
  %v2695 = vunpack.c.l.b16 %v2553
  %v2696 = vunpack.c.h.b16 %v2553
  %v2697 = vunpack.c.l.b16 %v2554
  %v2698 = vunpack.c.h.b16 %v2554
  %v2699 = vunpack.c.l.b16 %v2555
  %v2700 = vunpack.c.h.b16 %v2555
  %v2701 = vunpack.c.l.b16 %v2556
  %v2702 = vunpack.c.h.b16 %v2556
  %v2703 = vunpack.c.l.b16 %v2557
  %v2704 = vunpack.c.h.b16 %v2557
  %v2705 = vunpack.c.l.b16 %v2558
  %v2706 = vunpack.c.h.b16 %v2558
  %v2707 = vunpack.c.l.b16 %v2559
  %v2708 = vunpack.c.h.b16 %v2559
  %v2709 = vunpack.c.l.b16 %v2560
  %v2710 = vunpack.c.h.b16 %v2560
  %v2711 = vunpack.c.l.b16 %v2561
  %v2712 = vunpack.c.h.b16 %v2561
  %v2713 = vunpack.c.l.b16 %v2562
  %v2714 = vunpack.c.h.b16 %v2562
  %v2715 = vunpack.c.l.b16 %v2563
  %v2716 = vunpack.c.h.b16 %v2563
  %v2717 = vunpack.c.l.b16 %v2564
  %v2718 = vunpack.c.h.b16 %v2564
  %v2719 = vunpack.c.l.b16 %v2565
  %v2720 = vunpack.c.h.b16 %v2565
  %v2721 = vunpack.c.l.b16 %v2566
  %v2722 = vunpack.c.h.b16 %v2566
  %v2723 = vunpack.c.l.b16 %v2567
  %v2724 = vunpack.c.h.b16 %v2567
  %v2725 = vunpack.c.l.b16 %v2568
  %v2726 = vunpack.c.h.b16 %v2568
  %v2727 = vunpack.c.l.b16 %v2569
  %v2728 = vunpack.c.h.b16 %v2569
  %v2729 = vunpack.c.l.b16 %v2570
  %v2730 = vunpack.c.h.b16 %v2570
  %v2731 = vunpack.c.l.b16 %v2571
  %v2732 = vunpack.c.h.b16 %v2571
  %v2733 = vunpack.c.l.b16 %v2572
  %v2734 = vunpack.c.h.b16 %v2572
  %v2735 = vunpack.c.l.b16 %v2573
  %v2736 = vunpack.c.h.b16 %v2573
  %v2737 = vunpack.c.l.b16 %v2574
  %v2738 = vunpack.c.h.b16 %v2574
  %v2739 = vunpack.c.l.b16 %v2575
  %v2740 = vunpack.c.h.b16 %v2575
  %v2741 = vunpack.c.l.b16 %v2576
  %v2742 = vunpack.c.h.b16 %v2576
  %v2743 = vunpack.c.l.b16 %v2577
  %v2744 = vunpack.c.h.b16 %v2577
  %v2745 = vunpack.c.l.b16 %v2578
  %v2746 = vunpack.c.h.b16 %v2578
  %v2747 = vunpack.c.l.b16 %v2579
  %v2748 = vunpack.c.h.b16 %v2579
  %v2749 = vunpack.c.l.b16 %v2580
  %v2750 = vunpack.c.h.b16 %v2580
  %v2751 = vunpack.c.l.b16 %v2581
  %v2752 = vunpack.c.h.b16 %v2581
  %v2753 = vunpack.c.l.b16 %v2582
  %v2754 = vunpack.c.h.b16 %v2582
  %v2755 = vunpack.c.l.b16 %v2583
  %v2756 = vunpack.c.h.b16 %v2583
  %v2757 = vunpack.c.l.b16 %v2584
  %v2758 = vunpack.c.h.b16 %v2584
  %v2759 = vunpack.c.l.b16 %v2585
  %v2760 = vunpack.c.h.b16 %v2585
  %v2761 = vunpack.c.l.b16 %v2586
  %v2762 = vunpack.c.h.b16 %v2586
  %v2763 = vunpack.c.l.b16 %v2587
  %v2764 = vunpack.c.h.b16 %v2587
  %v2765 = vunpack.c.l.b16 %v2588
  %v2766 = vunpack.c.h.b16 %v2588
  %v2767 = vunpack.c.l.b16 %v2589
  %v2768 = vunpack.c.h.b16 %v2589
  %v2769 = vunpack.c.l.b16 %v2590
  %v2770 = vunpack.c.h.b16 %v2590
  %v2771 = vunpack.c.l.b16 %v2591
  %v2772 = vunpack.c.h.b16 %v2591
  %v2773 = vunpack.c.l.b16 %v2592
  %v2774 = vunpack.c.h.b16 %v2592
  %v2775 = vunpack.c.l.b16 %v2593
  %v2776 = vunpack.c.h.b16 %v2593
  %v2777 = vunpack.c.l.b16 %v2594
  %v2778 = vunpack.c.h.b16 %v2594
  %v2779 = vunpack.c.l.b16 %v2595
  %v2780 = vunpack.c.h.b16 %v2595
  %v2781 = vunpack.c.l.b16 %v2596
  %v2782 = vunpack.c.h.b16 %v2596
  %v2783 = vunpack.c.l.b16 %v2597
  %v2784 = vunpack.c.h.b16 %v2597
  %v2785 = vunpack.c.l.b16 %v2598
  %v2786 = vunpack.c.h.b16 %v2598
  %v2787 = vunpack.c.l.b16 %v2599
  %v2788 = vunpack.c.h.b16 %v2599
  %v2789 = vunpack.c.l.b16 %v2600
  %v2790 = vunpack.c.h.b16 %v2600
  %v2791 = vunpack.c.l.b16 %v2601
  %v2792 = vunpack.c.h.b16 %v2601
  %v2793 = vunpack.c.l.b16 %v2602
  %v2794 = vunpack.c.h.b16 %v2602
  %v2795 = vpack.c.b16 %v2671, %v2667
  %v2796 = vpack.c.b16 %v2672, %v2668
  %v2797 = vpack.c.b16 %v2673, %v2669
  %v2798 = vpack.c.b16 %v2674, %v2670
  %v2799 = vpack.c.b16 %v2679, %v2675
  %v2800 = vpack.c.b16 %v2680, %v2676
  %v2801 = vpack.c.b16 %v2681, %v2677
  %v2802 = vpack.c.b16 %v2682, %v2678
  %v2803 = vpack.c.b16 %v2687, %v2683
  %v2804 = vpack.c.b16 %v2688, %v2684
  %v2805 = vpack.c.b16 %v2689, %v2685
  %v2806 = vpack.c.b16 %v2690, %v2686
  %v2807 = vpack.c.b16 %v2695, %v2691
  %v2808 = vpack.c.b16 %v2696, %v2692
  %v2809 = vpack.c.b16 %v2697, %v2693
  %v2810 = vpack.c.b16 %v2698, %v2694
  %v2811 = vpack.c.b16 %v2703, %v2699
  %v2812 = vpack.c.b16 %v2704, %v2700
  %v2813 = vpack.c.b16 %v2705, %v2701
  %v2814 = vpack.c.b16 %v2706, %v2702
  %v2815 = vpack.c.b16 %v2711, %v2707
  %v2816 = vpack.c.b16 %v2712, %v2708
  %v2817 = vpack.c.b16 %v2713, %v2709
  %v2818 = vpack.c.b16 %v2714, %v2710
  %v2819 = vpack.c.b16 %v2719, %v2715
  %v2820 = vpack.c.b16 %v2720, %v2716
  %v2821 = vpack.c.b16 %v2721, %v2717
  %v2822 = vpack.c.b16 %v2722, %v2718
  %v2823 = vpack.c.b16 %v2727, %v2723
  %v2824 = vpack.c.b16 %v2728, %v2724
  %v2825 = vpack.c.b16 %v2729, %v2725
  %v2826 = vpack.c.b16 %v2730, %v2726
  %v2827 = vpack.c.b16 %v2735, %v2731
  %v2828 = vpack.c.b16 %v2736, %v2732
  %v2829 = vpack.c.b16 %v2737, %v2733
  %v2830 = vpack.c.b16 %v2738, %v2734
  %v2831 = vpack.c.b16 %v2743, %v2739
  %v2832 = vpack.c.b16 %v2744, %v2740
  %v2833 = vpack.c.b16 %v2745, %v2741
  %v2834 = vpack.c.b16 %v2746, %v2742
  %v2835 = vpack.c.b16 %v2751, %v2747
  %v2836 = vpack.c.b16 %v2752, %v2748
  %v2837 = vpack.c.b16 %v2753, %v2749
  %v2838 = vpack.c.b16 %v2754, %v2750
  %v2839 = vpack.c.b16 %v2759, %v2755
  %v2840 = vpack.c.b16 %v2760, %v2756
  %v2841 = vpack.c.b16 %v2761, %v2757
  %v2842 = vpack.c.b16 %v2762, %v2758
  %v2843 = vpack.c.b16 %v2767, %v2763
  %v2844 = vpack.c.b16 %v2768, %v2764
  %v2845 = vpack.c.b16 %v2769, %v2765
  %v2846 = vpack.c.b16 %v2770, %v2766
  %v2847 = vpack.c.b16 %v2775, %v2771
  %v2848 = vpack.c.b16 %v2776, %v2772
  %v2849 = vpack.c.b16 %v2777, %v2773
  %v2850 = vpack.c.b16 %v2778, %v2774
  %v2851 = vpack.c.b16 %v2783, %v2779
  %v2852 = vpack.c.b16 %v2784, %v2780
  %v2853 = vpack.c.b16 %v2785, %v2781
  %v2854 = vpack.c.b16 %v2786, %v2782
  %v2855 = vpack.c.b16 %v2791, %v2787
  %v2856 = vpack.c.b16 %v2792, %v2788
  %v2857 = vpack.c.b16 %v2793, %v2789
  %v2858 = vpack.c.b16 %v2794, %v2790
  %2923 = vmatprep.subr.bf16.mxu0 %v2824
  %2924 = vmatpush1.bf16.msra.mxu0 %v2823
  %2925 = vmatprep.subr.bf16.mxu0 %v2820
  %2926 = vmatpush1.bf16.msra.mxu0 %v2819
  %2927 = vmatprep.subr.bf16.mxu0 %v2816
  %2928 = vmatpush1.bf16.msra.mxu0 %v2815
  %2929 = vmatprep.subr.bf16.mxu0 %v2812
  %2930 = vmatpush1.bf16.msra.mxu0 %v2811
  %2931 = vmatprep.subr.bf16.mxu0 %v2808
  %2932 = vmatpush1.bf16.msra.mxu0 %v2807
  %2933 = vmatprep.subr.bf16.mxu0 %v2804
  %2934 = vmatpush1.bf16.msra.mxu0 %v2803
  %2935 = vmatprep.subr.bf16.mxu0 %v2800
  %2936 = vmatpush1.bf16.msra.mxu0 %v2799
  %2937 = vmatprep.subr.bf16.mxu0 %v2796
  %2938 = vmatpush1.bf16.msra.mxu0 %v2795
  %2939 = vmatprep.subr.bf16.mxu0 %v2856
  %2940 = vmatpush2.bf16.msra.mxu0 %v2855
  %2941 = vmatprep.subr.bf16.mxu0 %v2852
  %2942 = vmatpush2.bf16.msra.mxu0 %v2851
  %2943 = vmatprep.subr.bf16.mxu0 %v2848
  %2944 = vmatpush2.bf16.msra.mxu0 %v2847
  %2945 = vmatprep.subr.bf16.mxu0 %v2844
  %2946 = vmatpush2.bf16.msra.mxu0 %v2843
  %2947 = vmatprep.subr.bf16.mxu0 %v2840
  %2948 = vmatpush2.bf16.msra.mxu0 %v2839
  %2949 = vmatprep.subr.bf16.mxu0 %v2836
  %2950 = vmatpush2.bf16.msra.mxu0 %v2835
  %2951 = vmatprep.subr.bf16.mxu0 %v2832
  %2952 = vmatpush2.bf16.msra.mxu0 %v2831
  %2953 = vmatprep.subr.bf16.mxu0 %v2828
  %2954 = vmatpush2.bf16.msra.mxu0 %v2827
  %2955 = vmatprep.mubr.bf16.mxu0 %v2535
  %2956 = vmatmul.mubr.bf16.gmra.mxu0 %v2534
  %v2957 = vpop.f32.mrf.mxu0
  %v2958 = vadd.f32 0.0, %v2957
  %v2959 = vpop.f32.mrf.mxu0
  %v2960 = vadd.f32 0.0, %v2959
  %v2961 = vpop.f32.mrf.mxu0
  %v2962 = vadd.f32 0.0, %v2961
  %v2963 = vpop.f32.mrf.mxu0
  %v2964 = vadd.f32 0.0, %v2963
  %2965 = vmatprep.mubr.bf16.mxu0 %v2537
  %2966 = vmatmul.mubr.bf16.gmra.mxu0 %v2536
  %v2967 = vpop.f32.mrf.mxu0
  %v2968 = vadd.f32 0.0, %v2967
  %v2969 = vpop.f32.mrf.mxu0
  %v2970 = vadd.f32 0.0, %v2969
  %v2971 = vpop.f32.mrf.mxu0
  %v2972 = vadd.f32 0.0, %v2971
  %v2973 = vpop.f32.mrf.mxu0
  %v2974 = vadd.f32 0.0, %v2973
  %2975 = vdwg.mxu0
  %2976 = vmatprep.subr.bf16.mxu0 %v2826
  %2977 = vmatpush1.bf16.msra.mxu0 %v2825
  %2978 = vmatprep.subr.bf16.mxu0 %v2822
  %2979 = vmatpush1.bf16.msra.mxu0 %v2821
  %2980 = vmatprep.subr.bf16.mxu0 %v2818
  %2981 = vmatpush1.bf16.msra.mxu0 %v2817
  %2982 = vmatprep.subr.bf16.mxu0 %v2814
  %2983 = vmatpush1.bf16.msra.mxu0 %v2813
  %2984 = vmatprep.subr.bf16.mxu0 %v2810
  %2985 = vmatpush1.bf16.msra.mxu0 %v2809
  %2986 = vmatprep.subr.bf16.mxu0 %v2806
  %2987 = vmatpush1.bf16.msra.mxu0 %v2805
  %2988 = vmatprep.subr.bf16.mxu0 %v2802
  %2989 = vmatpush1.bf16.msra.mxu0 %v2801
  %2990 = vmatprep.subr.bf16.mxu0 %v2798
  %2991 = vmatpush1.bf16.msra.mxu0 %v2797
  %2992 = vmatprep.subr.bf16.mxu0 %v2858
  %2993 = vmatpush2.bf16.msra.mxu0 %v2857
  %2994 = vmatprep.subr.bf16.mxu0 %v2854
  %2995 = vmatpush2.bf16.msra.mxu0 %v2853
  %2996 = vmatprep.subr.bf16.mxu0 %v2850
  %2997 = vmatpush2.bf16.msra.mxu0 %v2849
  %2998 = vmatprep.subr.bf16.mxu0 %v2846
  %2999 = vmatpush2.bf16.msra.mxu0 %v2845
  %3000 = vmatprep.subr.bf16.mxu0 %v2842
  %3001 = vmatpush2.bf16.msra.mxu0 %v2841
  %3002 = vmatprep.subr.bf16.mxu0 %v2838
  %3003 = vmatpush2.bf16.msra.mxu0 %v2837
  %3004 = vmatprep.subr.bf16.mxu0 %v2834
  %3005 = vmatpush2.bf16.msra.mxu0 %v2833
  %3006 = vmatprep.subr.bf16.mxu0 %v2830
  %3007 = vmatpush2.bf16.msra.mxu0 %v2829
  %3008 = vmatprep.mubr.bf16.mxu0 %v2535
  %3009 = vmatmul.mubr.bf16.gmra.mxu0 %v2534
  %v3010 = vpop.f32.mrf.mxu0
  %v3011 = vadd.f32 0.0, %v3010
  %v3012 = vpop.f32.mrf.mxu0
  %v3013 = vadd.f32 0.0, %v3012
  %v3014 = vpop.f32.mrf.mxu0
  %v3015 = vadd.f32 0.0, %v3014
  %v3016 = vpop.f32.mrf.mxu0
  %v3017 = vadd.f32 0.0, %v3016
  %3018 = vmatprep.mubr.bf16.mxu0 %v2537
  %3019 = vmatmul.mubr.bf16.gmra.mxu0 %v2536
  %v3020 = vpop.f32.mrf.mxu0
  %v3021 = vadd.f32 0.0, %v3020
  %v3022 = vpop.f32.mrf.mxu0
  %v3023 = vadd.f32 0.0, %v3022
  %v3024 = vpop.f32.mrf.mxu0
  %v3025 = vadd.f32 0.0, %v3024
  %v3026 = vpop.f32.mrf.mxu0
  %v3027 = vadd.f32 0.0, %v3026
  %3028 = vdwg.mxu0
  %v3029 = vadd.f32 %v2389, %v2958
  %v3030 = vadd.f32 %v2391, %v2960
  %v3031 = vadd.f32 %v2442, %v3011
  %v3032 = vadd.f32 %v2444, %v3013
  %v3033 = vadd.f32 %v2393, %v2962
  %v3034 = vadd.f32 %v2395, %v2964
  %v3035 = vadd.f32 %v2446, %v3015
  %v3036 = vadd.f32 %v2448, %v3017
  %v3037 = vadd.f32 %v2399, %v2968
  %v3038 = vadd.f32 %v2401, %v2970
  %v3039 = vadd.f32 %v2452, %v3021
  %v3040 = vadd.f32 %v2454, %v3023
  %v3041 = vadd.f32 %v2403, %v2972
  %v3042 = vadd.f32 %v2405, %v2974
  %v3043 = vadd.f32 %v2456, %v3025
  %v3044 = vadd.f32 %v2458, %v3027
  %s3045 = scalar_lea.vmem %s4, 48
  %v3046 = vld [vmem:[%s3045] sm:$0xf]
  %v3047 = vld [vmem:[%s3045 + $0x4] sm:$0xf]
  %v3048 = vld [vmem:[%s3045 + $0x8] sm:$0xf]
  %v3049 = vld [vmem:[%s3045 + $0xc] sm:$0xf]
  %v3054 = vunpack.c.l.b16 %v3046
  %v3055 = vunpack.c.l.b16 %v3047
  %v3056 = vunpack.c.l.b16 %v3048
  %v3057 = vunpack.c.l.b16 %v3049
  %v3058 = vpack.c.b16 %v3055, %v3054
  %v3059 = vpack.c.b16 %v3057, %v3056
  %v3061 = vsel %vm1337, %v3058, 0
  %v3064 = vsel %vm1337, %v3059, 0
  %3066 = vmatprep.subr.bf16.mxu0 0
  %3067 = vmatpush1.bf16.msra.mxu0 0
  %3068 = vmatprep.subr.bf16.mxu0 0
  %3069 = vmatpush1.bf16.msra.mxu0 0
  %3070 = vmatprep.subr.bf16.mxu0 0
  %3071 = vmatpush1.bf16.msra.mxu0 0
  %3072 = vmatprep.subr.bf16.mxu0 0
  %3073 = vmatpush1.bf16.msra.mxu0 0
  %3074 = vmatprep.subr.bf16.mxu0 0
  %3075 = vmatpush1.bf16.msra.mxu0 0
  %3076 = vmatprep.subr.bf16.mxu0 0
  %3077 = vmatpush1.bf16.msra.mxu0 0
  %3078 = vmatprep.subr.bf16.mxu0 %v1322
  %3079 = vmatpush1.bf16.msra.mxu0 %v1321
  %3080 = vmatprep.subr.bf16.mxu0 %v1320
  %3081 = vmatpush1.bf16.msra.mxu0 %v1319
  %3082 = vmatprep.subr.bf16.mxu0 0
  %3083 = vmatpush2.bf16.msra.mxu0 0
  %3084 = vmatprep.subr.bf16.mxu0 0
  %3085 = vmatpush2.bf16.msra.mxu0 0
  %3086 = vmatprep.subr.bf16.mxu0 0
  %3087 = vmatpush2.bf16.msra.mxu0 0
  %3088 = vmatprep.subr.bf16.mxu0 0
  %3089 = vmatpush2.bf16.msra.mxu0 0
  %3090 = vmatprep.subr.bf16.mxu0 0
  %3091 = vmatpush2.bf16.msra.mxu0 0
  %3092 = vmatprep.subr.bf16.mxu0 0
  %3093 = vmatpush2.bf16.msra.mxu0 0
  %3094 = vmatprep.subr.bf16.mxu0 0
  %3095 = vmatpush2.bf16.msra.mxu0 0
  %3096 = vmatprep.subr.bf16.mxu0 0
  %3097 = vmatpush2.bf16.msra.mxu0 0
  %3098 = vmatprep.mubr.bf16.mxu0 0
  %3099 = vmatmul.mubr.bf16.gmra.mxu0 %v3061
  %v3100 = vpop.f32.mrf.mxu0
  %v3101 = vadd.f32 0.0, %v3100
  %v3102 = vpop.f32.mrf.mxu0
  %v3103 = vadd.f32 0.0, %v3102
  %v3104 = vpop.f32.mrf.mxu0
  %v3105 = vadd.f32 0.0, %v3104
  %v3106 = vpop.f32.mrf.mxu0
  %v3107 = vadd.f32 0.0, %v3106
  %3108 = vmatprep.mubr.bf16.mxu0 0
  %3109 = vmatmul.mubr.bf16.gmra.mxu0 %v3064
  %v3110 = vpop.f32.mrf.mxu0
  %v3111 = vadd.f32 0.0, %v3110
  %v3112 = vpop.f32.mrf.mxu0
  %v3113 = vadd.f32 0.0, %v3112
  %v3114 = vpop.f32.mrf.mxu0
  %v3115 = vadd.f32 0.0, %v3114
  %v3116 = vpop.f32.mrf.mxu0
  %v3117 = vadd.f32 0.0, %v3116
  %3118 = vdwg.mxu0
  %v3119 = vpack.c.bf16 %v3105, %v3101
  %v3120 = vpack.c.bf16 %v3107, %v3103
  %v3121 = vpack.c.bf16 %v3115, %v3111
  %v3122 = vpack.c.bf16 %v3117, %v3113
  %s3123 = scalar_lea.vmem %s5, 1536
  %v3124 = vld [vmem:[%s3123] sm:$0xff]
  %v3125 = vld [vmem:[%s3123 + $0x8] sm:$0xff]
  %v3126 = vld [vmem:[%s3123 + $0x10] sm:$0xff]
  %v3127 = vld [vmem:[%s3123 + $0x18] sm:$0xff]
  %v3128 = vld [vmem:[%s3123 + $0x20] sm:$0xff]
  %v3129 = vld [vmem:[%s3123 + $0x28] sm:$0xff]
  %v3130 = vld [vmem:[%s3123 + $0x30] sm:$0xff]
  %v3131 = vld [vmem:[%s3123 + $0x38] sm:$0xff]
  %v3132 = vld [vmem:[%s3123 + $0x40] sm:$0xff]
  %v3133 = vld [vmem:[%s3123 + $0x48] sm:$0xff]
  %v3134 = vld [vmem:[%s3123 + $0x50] sm:$0xff]
  %v3135 = vld [vmem:[%s3123 + $0x58] sm:$0xff]
  %v3136 = vld [vmem:[%s3123 + $0x60] sm:$0xff]
  %v3137 = vld [vmem:[%s3123 + $0x68] sm:$0xff]
  %v3138 = vld [vmem:[%s3123 + $0x70] sm:$0xff]
  %v3139 = vld [vmem:[%s3123 + $0x78] sm:$0xff]
  %v3140 = vld [vmem:[%s3123 + $0x80] sm:$0xff]
  %v3141 = vld [vmem:[%s3123 + $0x88] sm:$0xff]
  %v3142 = vld [vmem:[%s3123 + $0x90] sm:$0xff]
  %v3143 = vld [vmem:[%s3123 + $0x98] sm:$0xff]
  %v3144 = vld [vmem:[%s3123 + $0xa0] sm:$0xff]
  %v3145 = vld [vmem:[%s3123 + $0xa8] sm:$0xff]
  %v3146 = vld [vmem:[%s3123 + $0xb0] sm:$0xff]
  %v3147 = vld [vmem:[%s3123 + $0xb8] sm:$0xff]
  %v3148 = vld [vmem:[%s3123 + $0xc0] sm:$0xff]
  %v3149 = vld [vmem:[%s3123 + $0xc8] sm:$0xff]
  %v3150 = vld [vmem:[%s3123 + $0xd0] sm:$0xff]
  %v3151 = vld [vmem:[%s3123 + $0xd8] sm:$0xff]
  %v3152 = vld [vmem:[%s3123 + $0xe0] sm:$0xff]
  %v3153 = vld [vmem:[%s3123 + $0xe8] sm:$0xff]
  %v3154 = vld [vmem:[%s3123 + $0xf0] sm:$0xff]
  %v3155 = vld [vmem:[%s3123 + $0xf8] sm:$0xff]
  %v3156 = vld [vmem:[%s3123 + $0x100] sm:$0xff]
  %v3157 = vld [vmem:[%s3123 + $0x108] sm:$0xff]
  %v3158 = vld [vmem:[%s3123 + $0x110] sm:$0xff]
  %v3159 = vld [vmem:[%s3123 + $0x118] sm:$0xff]
  %v3160 = vld [vmem:[%s3123 + $0x120] sm:$0xff]
  %v3161 = vld [vmem:[%s3123 + $0x128] sm:$0xff]
  %v3162 = vld [vmem:[%s3123 + $0x130] sm:$0xff]
  %v3163 = vld [vmem:[%s3123 + $0x138] sm:$0xff]
  %v3164 = vld [vmem:[%s3123 + $0x140] sm:$0xff]
  %v3165 = vld [vmem:[%s3123 + $0x148] sm:$0xff]
  %v3166 = vld [vmem:[%s3123 + $0x150] sm:$0xff]
  %v3167 = vld [vmem:[%s3123 + $0x158] sm:$0xff]
  %v3168 = vld [vmem:[%s3123 + $0x160] sm:$0xff]
  %v3169 = vld [vmem:[%s3123 + $0x168] sm:$0xff]
  %v3170 = vld [vmem:[%s3123 + $0x170] sm:$0xff]
  %v3171 = vld [vmem:[%s3123 + $0x178] sm:$0xff]
  %v3172 = vld [vmem:[%s3123 + $0x180] sm:$0xff]
  %v3173 = vld [vmem:[%s3123 + $0x188] sm:$0xff]
  %v3174 = vld [vmem:[%s3123 + $0x190] sm:$0xff]
  %v3175 = vld [vmem:[%s3123 + $0x198] sm:$0xff]
  %v3176 = vld [vmem:[%s3123 + $0x1a0] sm:$0xff]
  %v3177 = vld [vmem:[%s3123 + $0x1a8] sm:$0xff]
  %v3178 = vld [vmem:[%s3123 + $0x1b0] sm:$0xff]
  %v3179 = vld [vmem:[%s3123 + $0x1b8] sm:$0xff]
  %v3180 = vld [vmem:[%s3123 + $0x1c0] sm:$0xff]
  %v3181 = vld [vmem:[%s3123 + $0x1c8] sm:$0xff]
  %v3182 = vld [vmem:[%s3123 + $0x1d0] sm:$0xff]
  %v3183 = vld [vmem:[%s3123 + $0x1d8] sm:$0xff]
  %v3184 = vld [vmem:[%s3123 + $0x1e0] sm:$0xff]
  %v3185 = vld [vmem:[%s3123 + $0x1e8] sm:$0xff]
  %v3186 = vld [vmem:[%s3123 + $0x1f0] sm:$0xff]
  %v3187 = vld [vmem:[%s3123 + $0x1f8] sm:$0xff]
  %v3252 = vunpack.c.l.b16 %v3124
  %v3253 = vunpack.c.h.b16 %v3124
  %v3254 = vunpack.c.l.b16 %v3125
  %v3255 = vunpack.c.h.b16 %v3125
  %v3256 = vunpack.c.l.b16 %v3126
  %v3257 = vunpack.c.h.b16 %v3126
  %v3258 = vunpack.c.l.b16 %v3127
  %v3259 = vunpack.c.h.b16 %v3127
  %v3260 = vunpack.c.l.b16 %v3128
  %v3261 = vunpack.c.h.b16 %v3128
  %v3262 = vunpack.c.l.b16 %v3129
  %v3263 = vunpack.c.h.b16 %v3129
  %v3264 = vunpack.c.l.b16 %v3130
  %v3265 = vunpack.c.h.b16 %v3130
  %v3266 = vunpack.c.l.b16 %v3131
  %v3267 = vunpack.c.h.b16 %v3131
  %v3268 = vunpack.c.l.b16 %v3132
  %v3269 = vunpack.c.h.b16 %v3132
  %v3270 = vunpack.c.l.b16 %v3133
  %v3271 = vunpack.c.h.b16 %v3133
  %v3272 = vunpack.c.l.b16 %v3134
  %v3273 = vunpack.c.h.b16 %v3134
  %v3274 = vunpack.c.l.b16 %v3135
  %v3275 = vunpack.c.h.b16 %v3135
  %v3276 = vunpack.c.l.b16 %v3136
  %v3277 = vunpack.c.h.b16 %v3136
  %v3278 = vunpack.c.l.b16 %v3137
  %v3279 = vunpack.c.h.b16 %v3137
  %v3280 = vunpack.c.l.b16 %v3138
  %v3281 = vunpack.c.h.b16 %v3138
  %v3282 = vunpack.c.l.b16 %v3139
  %v3283 = vunpack.c.h.b16 %v3139
  %v3284 = vunpack.c.l.b16 %v3140
  %v3285 = vunpack.c.h.b16 %v3140
  %v3286 = vunpack.c.l.b16 %v3141
  %v3287 = vunpack.c.h.b16 %v3141
  %v3288 = vunpack.c.l.b16 %v3142
  %v3289 = vunpack.c.h.b16 %v3142
  %v3290 = vunpack.c.l.b16 %v3143
  %v3291 = vunpack.c.h.b16 %v3143
  %v3292 = vunpack.c.l.b16 %v3144
  %v3293 = vunpack.c.h.b16 %v3144
  %v3294 = vunpack.c.l.b16 %v3145
  %v3295 = vunpack.c.h.b16 %v3145
  %v3296 = vunpack.c.l.b16 %v3146
  %v3297 = vunpack.c.h.b16 %v3146
  %v3298 = vunpack.c.l.b16 %v3147
  %v3299 = vunpack.c.h.b16 %v3147
  %v3300 = vunpack.c.l.b16 %v3148
  %v3301 = vunpack.c.h.b16 %v3148
  %v3302 = vunpack.c.l.b16 %v3149
  %v3303 = vunpack.c.h.b16 %v3149
  %v3304 = vunpack.c.l.b16 %v3150
  %v3305 = vunpack.c.h.b16 %v3150
  %v3306 = vunpack.c.l.b16 %v3151
  %v3307 = vunpack.c.h.b16 %v3151
  %v3308 = vunpack.c.l.b16 %v3152
  %v3309 = vunpack.c.h.b16 %v3152
  %v3310 = vunpack.c.l.b16 %v3153
  %v3311 = vunpack.c.h.b16 %v3153
  %v3312 = vunpack.c.l.b16 %v3154
  %v3313 = vunpack.c.h.b16 %v3154
  %v3314 = vunpack.c.l.b16 %v3155
  %v3315 = vunpack.c.h.b16 %v3155
  %v3316 = vunpack.c.l.b16 %v3156
  %v3317 = vunpack.c.h.b16 %v3156
  %v3318 = vunpack.c.l.b16 %v3157
  %v3319 = vunpack.c.h.b16 %v3157
  %v3320 = vunpack.c.l.b16 %v3158
  %v3321 = vunpack.c.h.b16 %v3158
  %v3322 = vunpack.c.l.b16 %v3159
  %v3323 = vunpack.c.h.b16 %v3159
  %v3324 = vunpack.c.l.b16 %v3160
  %v3325 = vunpack.c.h.b16 %v3160
  %v3326 = vunpack.c.l.b16 %v3161
  %v3327 = vunpack.c.h.b16 %v3161
  %v3328 = vunpack.c.l.b16 %v3162
  %v3329 = vunpack.c.h.b16 %v3162
  %v3330 = vunpack.c.l.b16 %v3163
  %v3331 = vunpack.c.h.b16 %v3163
  %v3332 = vunpack.c.l.b16 %v3164
  %v3333 = vunpack.c.h.b16 %v3164
  %v3334 = vunpack.c.l.b16 %v3165
  %v3335 = vunpack.c.h.b16 %v3165
  %v3336 = vunpack.c.l.b16 %v3166
  %v3337 = vunpack.c.h.b16 %v3166
  %v3338 = vunpack.c.l.b16 %v3167
  %v3339 = vunpack.c.h.b16 %v3167
  %v3340 = vunpack.c.l.b16 %v3168
  %v3341 = vunpack.c.h.b16 %v3168
  %v3342 = vunpack.c.l.b16 %v3169
  %v3343 = vunpack.c.h.b16 %v3169
  %v3344 = vunpack.c.l.b16 %v3170
  %v3345 = vunpack.c.h.b16 %v3170
  %v3346 = vunpack.c.l.b16 %v3171
  %v3347 = vunpack.c.h.b16 %v3171
  %v3348 = vunpack.c.l.b16 %v3172
  %v3349 = vunpack.c.h.b16 %v3172
  %v3350 = vunpack.c.l.b16 %v3173
  %v3351 = vunpack.c.h.b16 %v3173
  %v3352 = vunpack.c.l.b16 %v3174
  %v3353 = vunpack.c.h.b16 %v3174
  %v3354 = vunpack.c.l.b16 %v3175
  %v3355 = vunpack.c.h.b16 %v3175
  %v3356 = vunpack.c.l.b16 %v3176
  %v3357 = vunpack.c.h.b16 %v3176
  %v3358 = vunpack.c.l.b16 %v3177
  %v3359 = vunpack.c.h.b16 %v3177
  %v3360 = vunpack.c.l.b16 %v3178
  %v3361 = vunpack.c.h.b16 %v3178
  %v3362 = vunpack.c.l.b16 %v3179
  %v3363 = vunpack.c.h.b16 %v3179
  %v3364 = vunpack.c.l.b16 %v3180
  %v3365 = vunpack.c.h.b16 %v3180
  %v3366 = vunpack.c.l.b16 %v3181
  %v3367 = vunpack.c.h.b16 %v3181
  %v3368 = vunpack.c.l.b16 %v3182
  %v3369 = vunpack.c.h.b16 %v3182
  %v3370 = vunpack.c.l.b16 %v3183
  %v3371 = vunpack.c.h.b16 %v3183
  %v3372 = vunpack.c.l.b16 %v3184
  %v3373 = vunpack.c.h.b16 %v3184
  %v3374 = vunpack.c.l.b16 %v3185
  %v3375 = vunpack.c.h.b16 %v3185
  %v3376 = vunpack.c.l.b16 %v3186
  %v3377 = vunpack.c.h.b16 %v3186
  %v3378 = vunpack.c.l.b16 %v3187
  %v3379 = vunpack.c.h.b16 %v3187
  %v3380 = vpack.c.b16 %v3256, %v3252
  %v3381 = vpack.c.b16 %v3257, %v3253
  %v3382 = vpack.c.b16 %v3258, %v3254
  %v3383 = vpack.c.b16 %v3259, %v3255
  %v3384 = vpack.c.b16 %v3264, %v3260
  %v3385 = vpack.c.b16 %v3265, %v3261
  %v3386 = vpack.c.b16 %v3266, %v3262
  %v3387 = vpack.c.b16 %v3267, %v3263
  %v3388 = vpack.c.b16 %v3272, %v3268
  %v3389 = vpack.c.b16 %v3273, %v3269
  %v3390 = vpack.c.b16 %v3274, %v3270
  %v3391 = vpack.c.b16 %v3275, %v3271
  %v3392 = vpack.c.b16 %v3280, %v3276
  %v3393 = vpack.c.b16 %v3281, %v3277
  %v3394 = vpack.c.b16 %v3282, %v3278
  %v3395 = vpack.c.b16 %v3283, %v3279
  %v3396 = vpack.c.b16 %v3288, %v3284
  %v3397 = vpack.c.b16 %v3289, %v3285
  %v3398 = vpack.c.b16 %v3290, %v3286
  %v3399 = vpack.c.b16 %v3291, %v3287
  %v3400 = vpack.c.b16 %v3296, %v3292
  %v3401 = vpack.c.b16 %v3297, %v3293
  %v3402 = vpack.c.b16 %v3298, %v3294
  %v3403 = vpack.c.b16 %v3299, %v3295
  %v3404 = vpack.c.b16 %v3304, %v3300
  %v3405 = vpack.c.b16 %v3305, %v3301
  %v3406 = vpack.c.b16 %v3306, %v3302
  %v3407 = vpack.c.b16 %v3307, %v3303
  %v3408 = vpack.c.b16 %v3312, %v3308
  %v3409 = vpack.c.b16 %v3313, %v3309
  %v3410 = vpack.c.b16 %v3314, %v3310
  %v3411 = vpack.c.b16 %v3315, %v3311
  %v3412 = vpack.c.b16 %v3320, %v3316
  %v3413 = vpack.c.b16 %v3321, %v3317
  %v3414 = vpack.c.b16 %v3322, %v3318
  %v3415 = vpack.c.b16 %v3323, %v3319
  %v3416 = vpack.c.b16 %v3328, %v3324
  %v3417 = vpack.c.b16 %v3329, %v3325
  %v3418 = vpack.c.b16 %v3330, %v3326
  %v3419 = vpack.c.b16 %v3331, %v3327
  %v3420 = vpack.c.b16 %v3336, %v3332
  %v3421 = vpack.c.b16 %v3337, %v3333
  %v3422 = vpack.c.b16 %v3338, %v3334
  %v3423 = vpack.c.b16 %v3339, %v3335
  %v3424 = vpack.c.b16 %v3344, %v3340
  %v3425 = vpack.c.b16 %v3345, %v3341
  %v3426 = vpack.c.b16 %v3346, %v3342
  %v3427 = vpack.c.b16 %v3347, %v3343
  %v3428 = vpack.c.b16 %v3352, %v3348
  %v3429 = vpack.c.b16 %v3353, %v3349
  %v3430 = vpack.c.b16 %v3354, %v3350
  %v3431 = vpack.c.b16 %v3355, %v3351
  %v3432 = vpack.c.b16 %v3360, %v3356
  %v3433 = vpack.c.b16 %v3361, %v3357
  %v3434 = vpack.c.b16 %v3362, %v3358
  %v3435 = vpack.c.b16 %v3363, %v3359
  %v3436 = vpack.c.b16 %v3368, %v3364
  %v3437 = vpack.c.b16 %v3369, %v3365
  %v3438 = vpack.c.b16 %v3370, %v3366
  %v3439 = vpack.c.b16 %v3371, %v3367
  %v3440 = vpack.c.b16 %v3376, %v3372
  %v3441 = vpack.c.b16 %v3377, %v3373
  %v3442 = vpack.c.b16 %v3378, %v3374
  %v3443 = vpack.c.b16 %v3379, %v3375
  %3508 = vmatprep.subr.bf16.mxu0 %v3409
  %3509 = vmatpush1.bf16.msra.mxu0 %v3408
  %3510 = vmatprep.subr.bf16.mxu0 %v3405
  %3511 = vmatpush1.bf16.msra.mxu0 %v3404
  %3512 = vmatprep.subr.bf16.mxu0 %v3401
  %3513 = vmatpush1.bf16.msra.mxu0 %v3400
  %3514 = vmatprep.subr.bf16.mxu0 %v3397
  %3515 = vmatpush1.bf16.msra.mxu0 %v3396
  %3516 = vmatprep.subr.bf16.mxu0 %v3393
  %3517 = vmatpush1.bf16.msra.mxu0 %v3392
  %3518 = vmatprep.subr.bf16.mxu0 %v3389
  %3519 = vmatpush1.bf16.msra.mxu0 %v3388
  %3520 = vmatprep.subr.bf16.mxu0 %v3385
  %3521 = vmatpush1.bf16.msra.mxu0 %v3384
  %3522 = vmatprep.subr.bf16.mxu0 %v3381
  %3523 = vmatpush1.bf16.msra.mxu0 %v3380
  %3524 = vmatprep.subr.bf16.mxu0 %v3441
  %3525 = vmatpush2.bf16.msra.mxu0 %v3440
  %3526 = vmatprep.subr.bf16.mxu0 %v3437
  %3527 = vmatpush2.bf16.msra.mxu0 %v3436
  %3528 = vmatprep.subr.bf16.mxu0 %v3433
  %3529 = vmatpush2.bf16.msra.mxu0 %v3432
  %3530 = vmatprep.subr.bf16.mxu0 %v3429
  %3531 = vmatpush2.bf16.msra.mxu0 %v3428
  %3532 = vmatprep.subr.bf16.mxu0 %v3425
  %3533 = vmatpush2.bf16.msra.mxu0 %v3424
  %3534 = vmatprep.subr.bf16.mxu0 %v3421
  %3535 = vmatpush2.bf16.msra.mxu0 %v3420
  %3536 = vmatprep.subr.bf16.mxu0 %v3417
  %3537 = vmatpush2.bf16.msra.mxu0 %v3416
  %3538 = vmatprep.subr.bf16.mxu0 %v3413
  %3539 = vmatpush2.bf16.msra.mxu0 %v3412
  %3540 = vmatprep.mubr.bf16.mxu0 %v3120
  %3541 = vmatmul.mubr.bf16.gmra.mxu0 %v3119
  %v3542 = vpop.f32.mrf.mxu0
  %v3543 = vadd.f32 0.0, %v3542
  %v3544 = vpop.f32.mrf.mxu0
  %v3545 = vadd.f32 0.0, %v3544
  %v3546 = vpop.f32.mrf.mxu0
  %v3547 = vadd.f32 0.0, %v3546
  %v3548 = vpop.f32.mrf.mxu0
  %v3549 = vadd.f32 0.0, %v3548
  %3550 = vmatprep.mubr.bf16.mxu0 %v3122
  %3551 = vmatmul.mubr.bf16.gmra.mxu0 %v3121
  %v3552 = vpop.f32.mrf.mxu0
  %v3553 = vadd.f32 0.0, %v3552
  %v3554 = vpop.f32.mrf.mxu0
  %v3555 = vadd.f32 0.0, %v3554
  %v3556 = vpop.f32.mrf.mxu0
  %v3557 = vadd.f32 0.0, %v3556
  %v3558 = vpop.f32.mrf.mxu0
  %v3559 = vadd.f32 0.0, %v3558
  %3560 = vdwg.mxu0
  %3561 = vmatprep.subr.bf16.mxu0 %v3411
  %3562 = vmatpush1.bf16.msra.mxu0 %v3410
  %3563 = vmatprep.subr.bf16.mxu0 %v3407
  %3564 = vmatpush1.bf16.msra.mxu0 %v3406
  %3565 = vmatprep.subr.bf16.mxu0 %v3403
  %3566 = vmatpush1.bf16.msra.mxu0 %v3402
  %3567 = vmatprep.subr.bf16.mxu0 %v3399
  %3568 = vmatpush1.bf16.msra.mxu0 %v3398
  %3569 = vmatprep.subr.bf16.mxu0 %v3395
  %3570 = vmatpush1.bf16.msra.mxu0 %v3394
  %3571 = vmatprep.subr.bf16.mxu0 %v3391
  %3572 = vmatpush1.bf16.msra.mxu0 %v3390
  %3573 = vmatprep.subr.bf16.mxu0 %v3387
  %3574 = vmatpush1.bf16.msra.mxu0 %v3386
  %3575 = vmatprep.subr.bf16.mxu0 %v3383
  %3576 = vmatpush1.bf16.msra.mxu0 %v3382
  %3577 = vmatprep.subr.bf16.mxu0 %v3443
  %3578 = vmatpush2.bf16.msra.mxu0 %v3442
  %3579 = vmatprep.subr.bf16.mxu0 %v3439
  %3580 = vmatpush2.bf16.msra.mxu0 %v3438
  %3581 = vmatprep.subr.bf16.mxu0 %v3435
  %3582 = vmatpush2.bf16.msra.mxu0 %v3434
  %3583 = vmatprep.subr.bf16.mxu0 %v3431
  %3584 = vmatpush2.bf16.msra.mxu0 %v3430
  %3585 = vmatprep.subr.bf16.mxu0 %v3427
  %3586 = vmatpush2.bf16.msra.mxu0 %v3426
  %3587 = vmatprep.subr.bf16.mxu0 %v3423
  %3588 = vmatpush2.bf16.msra.mxu0 %v3422
  %3589 = vmatprep.subr.bf16.mxu0 %v3419
  %3590 = vmatpush2.bf16.msra.mxu0 %v3418
  %3591 = vmatprep.subr.bf16.mxu0 %v3415
  %3592 = vmatpush2.bf16.msra.mxu0 %v3414
  %3593 = vmatprep.mubr.bf16.mxu0 %v3120
  %3594 = vmatmul.mubr.bf16.gmra.mxu0 %v3119
  %v3595 = vpop.f32.mrf.mxu0
  %v3596 = vadd.f32 0.0, %v3595
  %v3597 = vpop.f32.mrf.mxu0
  %v3598 = vadd.f32 0.0, %v3597
  %v3599 = vpop.f32.mrf.mxu0
  %v3600 = vadd.f32 0.0, %v3599
  %v3601 = vpop.f32.mrf.mxu0
  %v3602 = vadd.f32 0.0, %v3601
  %3603 = vmatprep.mubr.bf16.mxu0 %v3122
  %3604 = vmatmul.mubr.bf16.gmra.mxu0 %v3121
  %v3605 = vpop.f32.mrf.mxu0
  %v3606 = vadd.f32 0.0, %v3605
  %v3607 = vpop.f32.mrf.mxu0
  %v3608 = vadd.f32 0.0, %v3607
  %v3609 = vpop.f32.mrf.mxu0
  %v3610 = vadd.f32 0.0, %v3609
  %v3611 = vpop.f32.mrf.mxu0
  %v3612 = vadd.f32 0.0, %v3611
  %3613 = vdwg.mxu0
  %v3614 = vadd.f32 %v3029, %v3543
  %v3615 = vadd.f32 %v3030, %v3545
  %v3616 = vadd.f32 %v3031, %v3596
  %v3617 = vadd.f32 %v3032, %v3598
  %v3618 = vadd.f32 %v3033, %v3547
  %v3619 = vadd.f32 %v3034, %v3549
  %v3620 = vadd.f32 %v3035, %v3600
  %v3621 = vadd.f32 %v3036, %v3602
  %v3622 = vadd.f32 %v3037, %v3553
  %v3623 = vadd.f32 %v3038, %v3555
  %v3624 = vadd.f32 %v3039, %v3606
  %v3625 = vadd.f32 %v3040, %v3608
  %v3626 = vadd.f32 %v3041, %v3557
  %v3627 = vadd.f32 %v3042, %v3559
  %v3628 = vadd.f32 %v3043, %v3610
  %v3629 = vadd.f32 %v3044, %v3612
  %v3630 = vld [vmem:[%s6] sm:$0xf]
  %v3632 = vlaneseq
  %v3633 = vshrl.u32 %v3632, 7
  %v3634 = vsub.s32 0, %v3633
  %v3635 = vrot.slane %v3630, %v3634
  %v3636 = vlaneseq
  %v3637 = vshrl.u32 %v3636, 7
  %v3638 = vsub.s32 1, %v3637
  %v3639 = vrot.slane %v3630, %v3638
  %v3640 = vlaneseq
  %v3641 = vshrl.u32 %v3640, 7
  %v3642 = vsub.s32 2, %v3641
  %v3643 = vrot.slane %v3630, %v3642
  %v3644 = vlaneseq
  %v3645 = vshrl.u32 %v3644, 7
  %v3646 = vsub.s32 3, %v3645
  %v3647 = vrot.slane %v3630, %v3646
  %v3652 = vmul.f32 %v3614, %v3635
  %v3653 = vmul.f32 %v3615, %v3639
  %v3654 = vmul.f32 %v3616, %v3643
  %v3655 = vmul.f32 %v3617, %v3647
  %v3656 = vmul.f32 %v3618, %v3635
  %v3657 = vmul.f32 %v3619, %v3639
  %v3658 = vmul.f32 %v3620, %v3643
  %v3659 = vmul.f32 %v3621, %v3647
  %v3660 = vmul.f32 %v3622, %v3635
  %v3661 = vmul.f32 %v3623, %v3639
  %v3662 = vmul.f32 %v3624, %v3643
  %v3663 = vmul.f32 %v3625, %v3647
  %v3664 = vmul.f32 %v3626, %v3635
  %v3665 = vmul.f32 %v3627, %v3639
  %v3666 = vmul.f32 %v3628, %v3643
  %v3667 = vmul.f32 %v3629, %v3647
  %v3668 = vld [vmem:[%s7] sm:$0xf]
  %v3670 = vlaneseq
  %v3671 = vshrl.u32 %v3670, 7
  %v3672 = vsub.s32 0, %v3671
  %v3673 = vrot.slane %v3668, %v3672
  %v3674 = vlaneseq
  %v3675 = vshrl.u32 %v3674, 7
  %v3676 = vsub.s32 1, %v3675
  %v3677 = vrot.slane %v3668, %v3676
  %v3678 = vlaneseq
  %v3679 = vshrl.u32 %v3678, 7
  %v3680 = vsub.s32 2, %v3679
  %v3681 = vrot.slane %v3668, %v3680
  %v3682 = vlaneseq
  %v3683 = vshrl.u32 %v3682, 7
  %v3684 = vsub.s32 3, %v3683
  %v3685 = vrot.slane %v3668, %v3684
  %v3690 = vadd.f32 %v3652, %v3673
  %v3691 = vadd.f32 %v3653, %v3677
  %v3692 = vadd.f32 %v3654, %v3681
  %v3693 = vadd.f32 %v3655, %v3685
  %v3694 = vadd.f32 %v3656, %v3673
  %v3695 = vadd.f32 %v3657, %v3677
  %v3696 = vadd.f32 %v3658, %v3681
  %v3697 = vadd.f32 %v3659, %v3685
  %v3698 = vadd.f32 %v3660, %v3673
  %v3699 = vadd.f32 %v3661, %v3677
  %v3700 = vadd.f32 %v3662, %v3681
  %v3701 = vadd.f32 %v3663, %v3685
  %v3702 = vadd.f32 %v3664, %v3673
  %v3703 = vadd.f32 %v3665, %v3677
  %v3704 = vadd.f32 %v3666, %v3681
  %v3705 = vadd.f32 %v3667, %v3685
  %v3706 = vmax.f32 %v3690, 0.0
  %v3707 = vmax.f32 %v3691, 0.0
  %v3708 = vmax.f32 %v3692, 0.0
  %v3709 = vmax.f32 %v3693, 0.0
  %v3710 = vmax.f32 %v3694, 0.0
  %v3711 = vmax.f32 %v3695, 0.0
  %v3712 = vmax.f32 %v3696, 0.0
  %v3713 = vmax.f32 %v3697, 0.0
  %v3714 = vmax.f32 %v3698, 0.0
  %v3715 = vmax.f32 %v3699, 0.0
  %v3716 = vmax.f32 %v3700, 0.0
  %v3717 = vmax.f32 %v3701, 0.0
  %v3718 = vmax.f32 %v3702, 0.0
  %v3719 = vmax.f32 %v3703, 0.0
  %v3720 = vmax.f32 %v3704, 0.0
  %v3721 = vmax.f32 %v3705, 0.0
  %v3722 = vpack.c.bf16 %v3710, %v3706
  %v3723 = vpack.c.bf16 %v3711, %v3707
  %v3724 = vpack.c.bf16 %v3712, %v3708
  %v3725 = vpack.c.bf16 %v3713, %v3709
  %v3726 = vpack.c.bf16 %v3718, %v3714
  %v3727 = vpack.c.bf16 %v3719, %v3715
  %v3728 = vpack.c.bf16 %v3720, %v3716
  %v3729 = vpack.c.bf16 %v3721, %v3717
  %v3738 = vunpack.c.l.b16 %v3722
  %v3739 = vunpack.c.l.b16 %v3723
  %v3740 = vunpack.c.l.b16 %v3724
  %v3741 = vunpack.c.l.b16 %v3725
  %v3742 = vunpack.c.h.b16 %v3722
  %v3743 = vunpack.c.h.b16 %v3723
  %v3744 = vunpack.c.h.b16 %v3724
  %v3745 = vunpack.c.h.b16 %v3725
  %v3746 = vunpack.c.l.b16 %v3726
  %v3747 = vunpack.c.l.b16 %v3727
  %v3748 = vunpack.c.l.b16 %v3728
  %v3749 = vunpack.c.l.b16 %v3729
  %v3750 = vunpack.c.h.b16 %v3726
  %v3751 = vunpack.c.h.b16 %v3727
  %v3752 = vunpack.c.h.b16 %v3728
  %v3753 = vunpack.c.h.b16 %v3729
  %v3754 = vpack.c.b16 %v3739, %v3738
  %v3755 = vpack.c.b16 %v3741, %v3740
  %v3756 = vpack.c.b16 %v3743, %v3742
  %v3757 = vpack.c.b16 %v3745, %v3744
  %v3758 = vpack.c.b16 %v3747, %v3746
  %v3759 = vpack.c.b16 %v3749, %v3748
  %v3760 = vpack.c.b16 %v3751, %v3750
  %v3761 = vpack.c.b16 %v3753, %v3752
  %3770 = vst [vmem:[%s8] sm:$0xff] %v3754
  %3771 = vst [vmem:[%s8 + $0x8] sm:$0xff] %v3755
  %3772 = vst [vmem:[%s8 + $0x10] sm:$0xff] %v3756
  %3773 = vst [vmem:[%s8 + $0x18] sm:$0xff] %v3757
  %3774 = vst [vmem:[%s8 + $0x20] sm:$0xff] %v3758
  %3775 = vst [vmem:[%s8 + $0x28] sm:$0xff] %v3759
  %3776 = vst [vmem:[%s8 + $0x30] sm:$0xff] %v3760
  %3777 = vst [vmem:[%s8 + $0x38] sm:$0xff] %v3761
  // Predicated region
  $region34: #{auto_encoder_forward.9} parent=0 // pred_check
    _
  $region35: #{auto_encoder_forward.9} parent=0 // pred_check_branch
    %3779 = sbr.rel (0) target = $region37
  $region36: #{auto_encoder_forward.9} parent=0 // pred_region
    _
  $region37: #{auto_encoder_forward.9} parent=0 // pred_fallthru
    _
  // Predicated region
  $region38: #{auto_encoder_forward.9} parent=0 // pred_check
    _
  $region39: #{auto_encoder_forward.9} parent=0 // pred_check_branch
    %3781 = sbr.rel (0) target = $region41
  $region40: #{auto_encoder_forward.9} parent=0 // pred_region
    _
  $region41: #{auto_encoder_forward.9} parent=0 // pred_fallthru
    _

// kernel: auto_encoder_forward.11
$region0: #{auto_encoder_forward.11}
  #allocation0 [shape = 'u32[]', space=smem, size = 0x4, offset = 0x4, fixed_abs, tag = 'smem constant byte address 0x4 - core index']
  #allocation1 [shape = 'u32[144,128]{1,0:T(1,128)}', space=vmem, size = 0x12000, scoped, tag = 'internal scratch']
  %s0 = inlined_call_operand.vmem [shape: bf16[4,256], index: 0, kind: input, shape index: {}]
  %s1 = inlined_call_operand.vmem [shape: bf16[256,392], index: 1, kind: input, shape index: {}]
  %s2 = inlined_call_operand.vmem [shape: f32[4,1], index: 2, kind: input, shape index: {}]
  %s3 = inlined_call_operand.vmem [shape: f32[4,1], index: 3, kind: input, shape index: {}]
  %s4 = inlined_call_operand.vmem [shape: f32[4,392], index: 4, kind: output, shape index: {}]
  %s5 = sld [smem:[#allocation0]]
  $region26: #{auto_encoder_forward.11} parent=0
    _
  %s7 = ssub.s32 1, %s5
  %s8 = scalar_select 0, %s7, %s5
  // Predicated region
  $region2: #{auto_encoder_forward.11} parent=0 // pred_check
    _
  $region3: #{auto_encoder_forward.11} parent=0 // pred_check_branch
    %10 = sbr.rel (0) target = $region5
  $region4: #{auto_encoder_forward.11} parent=0 // pred_region
    _
  $region5: #{auto_encoder_forward.11} parent=0 // pred_fallthru
    _
  // Predicated region
  $region6: #{auto_encoder_forward.11} parent=0 // pred_check
    _
  $region7: #{auto_encoder_forward.11} parent=0 // pred_check_branch
    %12 = sbr.rel (0) target = $region9
  $region8: #{auto_encoder_forward.11} parent=0 // pred_region
    _
  $region9: #{auto_encoder_forward.11} parent=0 // pred_fallthru
    _
  // Predicated region
  $region10: #{auto_encoder_forward.11} parent=0 // pred_check
    _
  $region11: #{auto_encoder_forward.11} parent=0 // pred_check_branch
    %14 = sbr.rel (0) target = $region13
  $region12: #{auto_encoder_forward.11} parent=0 // pred_region
    _
  $region13: #{auto_encoder_forward.11} parent=0 // pred_fallthru
    _
  // Predicated region
  $region14: #{auto_encoder_forward.11} parent=0 // pred_check
    _
  $region15: #{auto_encoder_forward.11} parent=0 // pred_check_branch
    %16 = sbr.rel (0) target = $region17
  $region16: #{auto_encoder_forward.11} parent=0 // pred_region
    _
  $region17: #{auto_encoder_forward.11} parent=0 // pred_fallthru
    _
  %v17 = vld [vmem:[%s0] sm:$0xf]
  %v18 = vld [vmem:[%s1] sm:$0xff]
  %v19 = vld [vmem:[%s1 + $0x8] sm:$0xff]
  %v20 = vld [vmem:[%s1 + $0x10] sm:$0xff]
  %v21 = vld [vmem:[%s1 + $0x18] sm:$0xff]
  %v22 = vld [vmem:[%s1 + $0x20] sm:$0xff]
  %v23 = vld [vmem:[%s1 + $0x28] sm:$0xff]
  %v24 = vld [vmem:[%s1 + $0x30] sm:$0xff]
  %v25 = vld [vmem:[%s1 + $0x38] sm:$0xff]
  %v26 = vld [vmem:[%s1 + $0x40] sm:$0xff]
  %v27 = vld [vmem:[%s1 + $0x48] sm:$0xff]
  %v28 = vld [vmem:[%s1 + $0x50] sm:$0xff]
  %v29 = vld [vmem:[%s1 + $0x58] sm:$0xff]
  %v30 = vld [vmem:[%s1 + $0x60] sm:$0xff]
  %v31 = vld [vmem:[%s1 + $0x68] sm:$0xff]
  %v32 = vld [vmem:[%s1 + $0x70] sm:$0xff]
  %v33 = vld [vmem:[%s1 + $0x78] sm:$0xff]
  %v34 = vld [vmem:[%s1 + $0x80] sm:$0xff]
  %v35 = vld [vmem:[%s1 + $0x88] sm:$0xff]
  %v36 = vld [vmem:[%s1 + $0x90] sm:$0xff]
  %v37 = vld [vmem:[%s1 + $0x98] sm:$0xff]
  %v38 = vld [vmem:[%s1 + $0xa0] sm:$0xff]
  %v39 = vld [vmem:[%s1 + $0xa8] sm:$0xff]
  %v40 = vld [vmem:[%s1 + $0xb0] sm:$0xff]
  %v41 = vld [vmem:[%s1 + $0xb8] sm:$0xff]
  %v42 = vld [vmem:[%s1 + $0xc0] sm:$0xff]
  %v43 = vld [vmem:[%s1 + $0xc8] sm:$0xff]
  %v44 = vld [vmem:[%s1 + $0xd0] sm:$0xff]
  %v45 = vld [vmem:[%s1 + $0xd8] sm:$0xff]
  %v46 = vld [vmem:[%s1 + $0xe0] sm:$0xff]
  %v47 = vld [vmem:[%s1 + $0xe8] sm:$0xff]
  %v48 = vld [vmem:[%s1 + $0xf0] sm:$0xff]
  %v49 = vld [vmem:[%s1 + $0xf8] sm:$0xff]
  %v50 = vld [vmem:[%s1 + $0x100] sm:$0xff]
  %v51 = vld [vmem:[%s1 + $0x108] sm:$0xff]
  %v52 = vld [vmem:[%s1 + $0x110] sm:$0xff]
  %v53 = vld [vmem:[%s1 + $0x118] sm:$0xff]
  %v54 = vld [vmem:[%s1 + $0x120] sm:$0xff]
  %v55 = vld [vmem:[%s1 + $0x128] sm:$0xff]
  %v56 = vld [vmem:[%s1 + $0x130] sm:$0xff]
  %v57 = vld [vmem:[%s1 + $0x138] sm:$0xff]
  %v58 = vld [vmem:[%s1 + $0x140] sm:$0xff]
  %v59 = vld [vmem:[%s1 + $0x148] sm:$0xff]
  %v60 = vld [vmem:[%s1 + $0x150] sm:$0xff]
  %v61 = vld [vmem:[%s1 + $0x158] sm:$0xff]
  %v62 = vld [vmem:[%s1 + $0x160] sm:$0xff]
  %v63 = vld [vmem:[%s1 + $0x168] sm:$0xff]
  %v64 = vld [vmem:[%s1 + $0x170] sm:$0xff]
  %v65 = vld [vmem:[%s1 + $0x178] sm:$0xff]
  %v66 = vld [vmem:[%s1 + $0x180] sm:$0xff]
  %v67 = vld [vmem:[%s1 + $0x188] sm:$0xff]
  %v68 = vld [vmem:[%s1 + $0x190] sm:$0xff]
  %v69 = vld [vmem:[%s1 + $0x198] sm:$0xff]
  %v70 = vld [vmem:[%s1 + $0x1a0] sm:$0xff]
  %v71 = vld [vmem:[%s1 + $0x1a8] sm:$0xff]
  %v72 = vld [vmem:[%s1 + $0x1b0] sm:$0xff]
  %v73 = vld [vmem:[%s1 + $0x1b8] sm:$0xff]
  %v74 = vld [vmem:[%s1 + $0x1c0] sm:$0xff]
  %v75 = vld [vmem:[%s1 + $0x1c8] sm:$0xff]
  %v76 = vld [vmem:[%s1 + $0x1d0] sm:$0xff]
  %v77 = vld [vmem:[%s1 + $0x1d8] sm:$0xff]
  %v78 = vld [vmem:[%s1 + $0x1e0] sm:$0xff]
  %v79 = vld [vmem:[%s1 + $0x1e8] sm:$0xff]
  %v80 = vld [vmem:[%s1 + $0x1f0] sm:$0xff]
  %v81 = vld [vmem:[%s1 + $0x1f8] sm:$0xff]
  %v84 = vunpack.c.l.s4 1983009808
  %v85 = vunpack.c.0.s8 %v84
  %v86 = vlaneseq
  %v87 = vshrl.u32 %v86, 7
  %v88 = vsub.s32 %v85, %v87
  %v89 = vrot.slane %v17, %v88
  %v90 = vcombine.high %v89, %v89
  %v157 = vunpack.c.l.b16 %v18
  %v158 = vunpack.c.h.b16 %v18
  %v159 = vunpack.c.l.b16 %v19
  %v160 = vunpack.c.h.b16 %v19
  %v161 = vunpack.c.l.b16 %v20
  %v162 = vunpack.c.h.b16 %v20
  %v163 = vunpack.c.l.b16 %v21
  %v164 = vunpack.c.h.b16 %v21
  %v165 = vunpack.c.l.b16 %v22
  %v166 = vunpack.c.h.b16 %v22
  %v167 = vunpack.c.l.b16 %v23
  %v168 = vunpack.c.h.b16 %v23
  %v169 = vunpack.c.l.b16 %v24
  %v170 = vunpack.c.h.b16 %v24
  %v171 = vunpack.c.l.b16 %v25
  %v172 = vunpack.c.h.b16 %v25
  %v173 = vunpack.c.l.b16 %v26
  %v174 = vunpack.c.h.b16 %v26
  %v175 = vunpack.c.l.b16 %v27
  %v176 = vunpack.c.h.b16 %v27
  %v177 = vunpack.c.l.b16 %v28
  %v178 = vunpack.c.h.b16 %v28
  %v179 = vunpack.c.l.b16 %v29
  %v180 = vunpack.c.h.b16 %v29
  %v181 = vunpack.c.l.b16 %v30
  %v182 = vunpack.c.h.b16 %v30
  %v183 = vunpack.c.l.b16 %v31
  %v184 = vunpack.c.h.b16 %v31
  %v185 = vunpack.c.l.b16 %v32
  %v186 = vunpack.c.h.b16 %v32
  %v187 = vunpack.c.l.b16 %v33
  %v188 = vunpack.c.h.b16 %v33
  %v189 = vunpack.c.l.b16 %v34
  %v190 = vunpack.c.h.b16 %v34
  %v191 = vunpack.c.l.b16 %v35
  %v192 = vunpack.c.h.b16 %v35
  %v193 = vunpack.c.l.b16 %v36
  %v194 = vunpack.c.h.b16 %v36
  %v195 = vunpack.c.l.b16 %v37
  %v196 = vunpack.c.h.b16 %v37
  %v197 = vunpack.c.l.b16 %v38
  %v198 = vunpack.c.h.b16 %v38
  %v199 = vunpack.c.l.b16 %v39
  %v200 = vunpack.c.h.b16 %v39
  %v201 = vunpack.c.l.b16 %v40
  %v202 = vunpack.c.h.b16 %v40
  %v203 = vunpack.c.l.b16 %v41
  %v204 = vunpack.c.h.b16 %v41
  %v205 = vunpack.c.l.b16 %v42
  %v206 = vunpack.c.h.b16 %v42
  %v207 = vunpack.c.l.b16 %v43
  %v208 = vunpack.c.h.b16 %v43
  %v209 = vunpack.c.l.b16 %v44
  %v210 = vunpack.c.h.b16 %v44
  %v211 = vunpack.c.l.b16 %v45
  %v212 = vunpack.c.h.b16 %v45
  %v213 = vunpack.c.l.b16 %v46
  %v214 = vunpack.c.h.b16 %v46
  %v215 = vunpack.c.l.b16 %v47
  %v216 = vunpack.c.h.b16 %v47
  %v217 = vunpack.c.l.b16 %v48
  %v218 = vunpack.c.h.b16 %v48
  %v219 = vunpack.c.l.b16 %v49
  %v220 = vunpack.c.h.b16 %v49
  %v221 = vunpack.c.l.b16 %v50
  %v222 = vunpack.c.h.b16 %v50
  %v223 = vunpack.c.l.b16 %v51
  %v224 = vunpack.c.h.b16 %v51
  %v225 = vunpack.c.l.b16 %v52
  %v226 = vunpack.c.h.b16 %v52
  %v227 = vunpack.c.l.b16 %v53
  %v228 = vunpack.c.h.b16 %v53
  %v229 = vunpack.c.l.b16 %v54
  %v230 = vunpack.c.h.b16 %v54
  %v231 = vunpack.c.l.b16 %v55
  %v232 = vunpack.c.h.b16 %v55
  %v233 = vunpack.c.l.b16 %v56
  %v234 = vunpack.c.h.b16 %v56
  %v235 = vunpack.c.l.b16 %v57
  %v236 = vunpack.c.h.b16 %v57
  %v237 = vunpack.c.l.b16 %v58
  %v238 = vunpack.c.h.b16 %v58
  %v239 = vunpack.c.l.b16 %v59
  %v240 = vunpack.c.h.b16 %v59
  %v241 = vunpack.c.l.b16 %v60
  %v242 = vunpack.c.h.b16 %v60
  %v243 = vunpack.c.l.b16 %v61
  %v244 = vunpack.c.h.b16 %v61
  %v245 = vunpack.c.l.b16 %v62
  %v246 = vunpack.c.h.b16 %v62
  %v247 = vunpack.c.l.b16 %v63
  %v248 = vunpack.c.h.b16 %v63
  %v249 = vunpack.c.l.b16 %v64
  %v250 = vunpack.c.h.b16 %v64
  %v251 = vunpack.c.l.b16 %v65
  %v252 = vunpack.c.h.b16 %v65
  %v253 = vunpack.c.l.b16 %v66
  %v254 = vunpack.c.h.b16 %v66
  %v255 = vunpack.c.l.b16 %v67
  %v256 = vunpack.c.h.b16 %v67
  %v257 = vunpack.c.l.b16 %v68
  %v258 = vunpack.c.h.b16 %v68
  %v259 = vunpack.c.l.b16 %v69
  %v260 = vunpack.c.h.b16 %v69
  %v261 = vunpack.c.l.b16 %v70
  %v262 = vunpack.c.h.b16 %v70
  %v263 = vunpack.c.l.b16 %v71
  %v264 = vunpack.c.h.b16 %v71
  %v265 = vunpack.c.l.b16 %v72
  %v266 = vunpack.c.h.b16 %v72
  %v267 = vunpack.c.l.b16 %v73
  %v268 = vunpack.c.h.b16 %v73
  %v269 = vunpack.c.l.b16 %v74
  %v270 = vunpack.c.h.b16 %v74
  %v271 = vunpack.c.l.b16 %v75
  %v272 = vunpack.c.h.b16 %v75
  %v273 = vunpack.c.l.b16 %v76
  %v274 = vunpack.c.h.b16 %v76
  %v275 = vunpack.c.l.b16 %v77
  %v276 = vunpack.c.h.b16 %v77
  %v277 = vunpack.c.l.b16 %v78
  %v278 = vunpack.c.h.b16 %v78
  %v279 = vunpack.c.l.b16 %v79
  %v280 = vunpack.c.h.b16 %v79
  %v281 = vunpack.c.l.b16 %v80
  %v282 = vunpack.c.h.b16 %v80
  %v283 = vunpack.c.l.b16 %v81
  %v284 = vunpack.c.h.b16 %v81
  %v285 = vpack.c.b16 %v161, %v157
  %v286 = vpack.c.b16 %v162, %v158
  %v287 = vpack.c.b16 %v163, %v159
  %v288 = vpack.c.b16 %v164, %v160
  %v289 = vpack.c.b16 %v169, %v165
  %v290 = vpack.c.b16 %v170, %v166
  %v291 = vpack.c.b16 %v171, %v167
  %v292 = vpack.c.b16 %v172, %v168
  %v293 = vpack.c.b16 %v177, %v173
  %v294 = vpack.c.b16 %v178, %v174
  %v295 = vpack.c.b16 %v179, %v175
  %v296 = vpack.c.b16 %v180, %v176
  %v297 = vpack.c.b16 %v185, %v181
  %v298 = vpack.c.b16 %v186, %v182
  %v299 = vpack.c.b16 %v187, %v183
  %v300 = vpack.c.b16 %v188, %v184
  %v301 = vpack.c.b16 %v193, %v189
  %v302 = vpack.c.b16 %v194, %v190
  %v303 = vpack.c.b16 %v195, %v191
  %v304 = vpack.c.b16 %v196, %v192
  %v305 = vpack.c.b16 %v201, %v197
  %v306 = vpack.c.b16 %v202, %v198
  %v307 = vpack.c.b16 %v203, %v199
  %v308 = vpack.c.b16 %v204, %v200
  %v309 = vpack.c.b16 %v209, %v205
  %v310 = vpack.c.b16 %v210, %v206
  %v311 = vpack.c.b16 %v211, %v207
  %v312 = vpack.c.b16 %v212, %v208
  %v313 = vpack.c.b16 %v217, %v213
  %v314 = vpack.c.b16 %v218, %v214
  %v315 = vpack.c.b16 %v219, %v215
  %v316 = vpack.c.b16 %v220, %v216
  %v317 = vpack.c.b16 %v225, %v221
  %v318 = vpack.c.b16 %v226, %v222
  %v319 = vpack.c.b16 %v227, %v223
  %v320 = vpack.c.b16 %v228, %v224
  %v321 = vpack.c.b16 %v233, %v229
  %v322 = vpack.c.b16 %v234, %v230
  %v323 = vpack.c.b16 %v235, %v231
  %v324 = vpack.c.b16 %v236, %v232
  %v325 = vpack.c.b16 %v241, %v237
  %v326 = vpack.c.b16 %v242, %v238
  %v327 = vpack.c.b16 %v243, %v239
  %v328 = vpack.c.b16 %v244, %v240
  %v329 = vpack.c.b16 %v249, %v245
  %v330 = vpack.c.b16 %v250, %v246
  %v331 = vpack.c.b16 %v251, %v247
  %v332 = vpack.c.b16 %v252, %v248
  %v333 = vpack.c.b16 %v257, %v253
  %v334 = vpack.c.b16 %v258, %v254
  %v335 = vpack.c.b16 %v259, %v255
  %v336 = vpack.c.b16 %v260, %v256
  %v337 = vpack.c.b16 %v265, %v261
  %v338 = vpack.c.b16 %v266, %v262
  %v339 = vpack.c.b16 %v267, %v263
  %v340 = vpack.c.b16 %v268, %v264
  %v341 = vpack.c.b16 %v273, %v269
  %v342 = vpack.c.b16 %v274, %v270
  %v343 = vpack.c.b16 %v275, %v271
  %v344 = vpack.c.b16 %v276, %v272
  %v345 = vpack.c.b16 %v281, %v277
  %v346 = vpack.c.b16 %v282, %v278
  %v347 = vpack.c.b16 %v283, %v279
  %v348 = vpack.c.b16 %v284, %v280
  %413 = vmatprep.subr.bf16.mxu0 %v314
  %414 = vmatpush1.bf16.msra.mxu0 %v313
  %415 = vmatprep.subr.bf16.mxu0 %v310
  %416 = vmatpush1.bf16.msra.mxu0 %v309
  %417 = vmatprep.subr.bf16.mxu0 %v306
  %418 = vmatpush1.bf16.msra.mxu0 %v305
  %419 = vmatprep.subr.bf16.mxu0 %v302
  %420 = vmatpush1.bf16.msra.mxu0 %v301
  %421 = vmatprep.subr.bf16.mxu0 %v298
  %422 = vmatpush1.bf16.msra.mxu0 %v297
  %423 = vmatprep.subr.bf16.mxu0 %v294
  %424 = vmatpush1.bf16.msra.mxu0 %v293
  %425 = vmatprep.subr.bf16.mxu0 %v290
  %426 = vmatpush1.bf16.msra.mxu0 %v289
  %427 = vmatprep.subr.bf16.mxu0 %v286
  %428 = vmatpush1.bf16.msra.mxu0 %v285
  %429 = vmatprep.subr.bf16.mxu0 %v346
  %430 = vmatpush2.bf16.msra.mxu0 %v345
  %431 = vmatprep.subr.bf16.mxu0 %v342
  %432 = vmatpush2.bf16.msra.mxu0 %v341
  %433 = vmatprep.subr.bf16.mxu0 %v338
  %434 = vmatpush2.bf16.msra.mxu0 %v337
  %435 = vmatprep.subr.bf16.mxu0 %v334
  %436 = vmatpush2.bf16.msra.mxu0 %v333
  %437 = vmatprep.subr.bf16.mxu0 %v330
  %438 = vmatpush2.bf16.msra.mxu0 %v329
  %439 = vmatprep.subr.bf16.mxu0 %v326
  %440 = vmatpush2.bf16.msra.mxu0 %v325
  %441 = vmatprep.subr.bf16.mxu0 %v322
  %442 = vmatpush2.bf16.msra.mxu0 %v321
  %443 = vmatprep.subr.bf16.mxu0 %v318
  %444 = vmatpush2.bf16.msra.mxu0 %v317
  %445 = vmatprep.mubr.bf16.mxu0 %v90
  %446 = vmatmul.mubr.bf16.gmra.mxu0 %v89
  %v447 = vpop.f32.mrf.mxu0
  %v448 = vadd.f32 0.0, %v447
  %v449 = vpop.f32.mrf.mxu0
  %v450 = vadd.f32 0.0, %v449
  %v451 = vpop.f32.mrf.mxu0
  %v452 = vpop.f32.mrf.mxu0
  %453 = vdwg.mxu0
  %454 = vmatprep.subr.bf16.mxu0 %v316
  %455 = vmatpush1.bf16.msra.mxu0 %v315
  %456 = vmatprep.subr.bf16.mxu0 %v312
  %457 = vmatpush1.bf16.msra.mxu0 %v311
  %458 = vmatprep.subr.bf16.mxu0 %v308
  %459 = vmatpush1.bf16.msra.mxu0 %v307
  %460 = vmatprep.subr.bf16.mxu0 %v304
  %461 = vmatpush1.bf16.msra.mxu0 %v303
  %462 = vmatprep.subr.bf16.mxu0 %v300
  %463 = vmatpush1.bf16.msra.mxu0 %v299
  %464 = vmatprep.subr.bf16.mxu0 %v296
  %465 = vmatpush1.bf16.msra.mxu0 %v295
  %466 = vmatprep.subr.bf16.mxu0 %v292
  %467 = vmatpush1.bf16.msra.mxu0 %v291
  %468 = vmatprep.subr.bf16.mxu0 %v288
  %469 = vmatpush1.bf16.msra.mxu0 %v287
  %470 = vmatprep.subr.bf16.mxu0 %v348
  %471 = vmatpush2.bf16.msra.mxu0 %v347
  %472 = vmatprep.subr.bf16.mxu0 %v344
  %473 = vmatpush2.bf16.msra.mxu0 %v343
  %474 = vmatprep.subr.bf16.mxu0 %v340
  %475 = vmatpush2.bf16.msra.mxu0 %v339
  %476 = vmatprep.subr.bf16.mxu0 %v336
  %477 = vmatpush2.bf16.msra.mxu0 %v335
  %478 = vmatprep.subr.bf16.mxu0 %v332
  %479 = vmatpush2.bf16.msra.mxu0 %v331
  %480 = vmatprep.subr.bf16.mxu0 %v328
  %481 = vmatpush2.bf16.msra.mxu0 %v327
  %482 = vmatprep.subr.bf16.mxu0 %v324
  %483 = vmatpush2.bf16.msra.mxu0 %v323
  %484 = vmatprep.subr.bf16.mxu0 %v320
  %485 = vmatpush2.bf16.msra.mxu0 %v319
  %486 = vmatprep.mubr.bf16.mxu0 %v90
  %487 = vmatmul.mubr.bf16.gmra.mxu0 %v89
  %v488 = vpop.f32.mrf.mxu0
  %v489 = vadd.f32 0.0, %v488
  %v490 = vpop.f32.mrf.mxu0
  %v491 = vadd.f32 0.0, %v490
  %v492 = vpop.f32.mrf.mxu0
  %v493 = vpop.f32.mrf.mxu0
  %494 = vdwg.mxu0
  %v495 = vld [vmem:[%s2] sm:$0xf]
  %497 = vset.pattern.permute.xlu0 0
  %498 = vperm.xlu0 %497, %v495
  %v499 = vpop.permute.xlu0 %498
  %v501 = vmul.f32 %v448, %v499
  %v502 = vmul.f32 %v450, %v499
  %v503 = vmul.f32 %v489, %v499
  %v504 = vmul.f32 %v491, %v499
  %v505 = vld [vmem:[%s3] sm:$0xf]
  %507 = vset.pattern.permute.xlu0 0
  %508 = vperm.xlu0 %507, %v505
  %v509 = vpop.permute.xlu0 %508
  %v511 = vadd.f32 %v501, %v509
  %v512 = vadd.f32 %v502, %v509
  %v513 = vadd.f32 %v503, %v509
  %v514 = vadd.f32 %v504, %v509
  %v515 = vxor.u32 %v511, 2147483648
  %v516 = vxor.u32 %v512, 2147483648
  %v517 = vxor.u32 %v513, 2147483648
  %v518 = vxor.u32 %v514, 2147483648
  %v519 = vmul.f32 %v515, 1.442695
  %v520 = vpow.pop %v519
  %v521 = vmul.f32 %v516, 1.442695
  %v522 = vpow.pop %v521
  %v523 = vmul.f32 %v517, 1.442695
  %v524 = vpow.pop %v523
  %v525 = vmul.f32 %v518, 1.442695
  %v526 = vpow.pop %v525
  %v527 = vadd.f32 %v520, 1.0
  %v528 = vadd.f32 %v522, 1.0
  %v529 = vadd.f32 %v524, 1.0
  %v530 = vadd.f32 %v526, 1.0
  %v531 = vrcp.pop %v527
  %v532 = vmul.f32 1.0, %v531
  %v533 = vrcp.pop %v528
  %v534 = vmul.f32 1.0, %v533
  %v535 = vrcp.pop %v529
  %v536 = vmul.f32 1.0, %v535
  %v537 = vrcp.pop %v530
  %v538 = vmul.f32 1.0, %v537
  %v543 = vcombine.low %v532, %v534
  %v544 = vcombine.low %v536, %v538
  %547 = vst [vmem:[%s4] sm:$0xff] %v543
  %vm548 = vcmask 1043456
  %vm549 = vcmask 64516
  %vm550 = vmor %vm549, %vm548
  %551 = vst.msk [vmem:[%s4 + $0x8] sm:$0xff] %vm550, %v544
  // Predicated region
  $region18: #{auto_encoder_forward.11} parent=0 // pred_check
    _
  $region19: #{auto_encoder_forward.11} parent=0 // pred_check_branch
    %553 = sbr.rel (0) target = $region21
  $region20: #{auto_encoder_forward.11} parent=0 // pred_region
    _
  $region21: #{auto_encoder_forward.11} parent=0 // pred_fallthru
    _
  // Predicated region
  $region22: #{auto_encoder_forward.11} parent=0 // pred_check
    _
  $region23: #{auto_encoder_forward.11} parent=0 // pred_check_branch
    %555 = sbr.rel (0) target = $region25
  $region24: #{auto_encoder_forward.11} parent=0 // pred_region
    _
  $region25: #{auto_encoder_forward.11} parent=0 // pred_fallthru
    _

</llo_original>
